<compile_context>
chip_gen: v5e
topology: v5e:2x2
jax: 0.10.0
libtpu: 0.0.40
codegen_flags: <defaults>
</compile_context>

<pallas_src>
import functools

import jax
import jax.numpy as jnp
from jax.experimental import pallas as pl
from jax.experimental.pallas import tpu as pltpu


# ------------------------------ small helpers -------------------------------

def _round_up(x, m):
    return (x + m - 1) // m * m


def _act(y, act):
    if act == "relu":
        return jnp.maximum(y, 0.0)
    if act == "relu6":
        return jnp.minimum(jnp.maximum(y, 0.0), 6.0)
    return y


def _chip_vmem_capacity():
    """Physical VMEM bytes of the current chip (conservative fallback: v7x 64 MiB)."""
    try:
        info = pltpu.get_tpu_info()
        for attr in ("vmem_capacity_bytes", "vmem_bytes", "vmem_size_bytes"):
            v = getattr(info, attr, None)
            if v:
                return int(v)
    except Exception:
        pass
    return 64 * 1024 * 1024


def _matmul_vmem_budget():
    """(tile-working-set budget, compiler vmem_limit_bytes) per chip generation."""
    cap = _chip_vmem_capacity()
    if cap >= 96 * 1024 * 1024:            # v5e / v6e: 128 MiB physical VMEM
        return 20 * 1024 * 1024, 100 * 1024 * 1024
    return 6 * 1024 * 1024, 32 * 1024 * 1024   # v7x: 64 MiB physical VMEM


def _choose_tm(M, K, Cout, budget_bytes):
    """M-tile: VMEM-budgeted (incl. resident weight), MXU-friendly rounding, and
    small enough that the grid has >= 2 blocks where possible (2 TCs / pipelining)."""
    m8 = _round_up(M, 8)
    per_row = (K + Cout) * 2 * 2            # bf16 in + out rows, double buffered
    fixed = K * Cout * 2 + Cout * 4         # resident bf16 weight block + f32 bias
    avail = max(budget_bytes - fixed, 8 * per_row)
    tm = avail // per_row
    if tm >= 512:
        tm = tm // 256 * 256                # 256-wide MXU tiles on v6e/v7x
    else:
        tm = max(8, tm // 8 * 8)
    tm = min(tm, 4096)
    half = max(8, _round_up(m8 // 2, 8))    # aim for >= 2 grid blocks
    return min(tm, half, m8)


# ----------------------------- Pallas kernels ------------------------------

def _matmul_bias_act_kernel(x_ref, w_ref, b_ref, o_ref, *, act):
    # x: [TM, K] bf16, w: [K, Cp] bf16 (BN scale pre-folded, Cp % 128 == 0),
    # b: [1, Cp] f32 -> o: [TM, Cp] (lane-dense stores).
    y = jnp.dot(x_ref[...], w_ref[...], preferred_element_type=jnp.float32)
    y = y + b_ref[...]
    o_ref[...] = _act(y, act).astype(o_ref.dtype)


def matmul_bias_act(x2d, w, bias, act="none", out_dtype=jnp.bfloat16):
    """Tiled matmul + bias + activation (bf16 MXU operands, f32 accumulation)."""
    M, K = x2d.shape
    Cout = w.shape[1]
    cp = _round_up(Cout, 128)               # lane-dense output (no masked stores)
    if cp != Cout:
        w = jnp.pad(w, ((0, 0), (0, cp - Cout)))
        bias = jnp.pad(bias, ((0, cp - Cout),))
    budget, vmem_limit = _matmul_vmem_budget()
    tm = _choose_tm(M, K, cp, budget)
    m_pad = -(-M // tm) * tm
    if m_pad != M:
        x2d = jnp.pad(x2d, ((0, m_pad - M), (0, 0)))

    kern = functools.partial(_matmul_bias_act_kernel, act=act)
    cost = pl.CostEstimate(
        flops=2 * m_pad * K * cp,
        transcendentals=0,
        bytes_accessed=int((m_pad * K + K * cp + m_pad * cp) * 2 + cp * 4),
    )
    out = pl.pallas_call(
        kern,
        out_shape=jax.ShapeDtypeStruct((m_pad, cp), out_dtype),
        grid=(m_pad // tm,),
        in_specs=[
            pl.BlockSpec((tm, K), lambda i: (i, 0)),
            pl.BlockSpec((K, cp), lambda i: (0, 0)),
            pl.BlockSpec((1, cp), lambda i: (0, 0)),
        ],
        out_specs=pl.BlockSpec((tm, cp), lambda i: (i, 0)),
        compiler_params=pltpu.CompilerParams(
            dimension_semantics=("parallel",),
            vmem_limit_bytes=vmem_limit,
        ),
        cost_estimate=cost,
    )(x2d, w, bias.reshape(1, cp))
    return out[:M, :Cout]


def _sepconv_kernel(x_ref, dww_ref, dwb_ref, pww_ref, pwb_ref, o_ref,
                    *, pre_relu, post_relu):
    # Fused SepConv for one image:
    #   depthwise 3x3 (stride 1, pad 1, folded BN) [+ optional pre-ReLU on the input]
    #   -> kept in VMEM/registers -> pointwise 1x1 matmul (folded BN) [+ post-ReLU].
    # x: [1, H+2, W+2, C] zero-padded bf16; dww: [9, C] f32; dwb: [1, C] f32;
    # pww: [C, Cp] bf16 (Cp % 128 == 0); pwb: [1, Cp] f32; o: [1, H, W, Cp].
    _, H, W, cp = o_ref.shape
    C = x_ref.shape[-1]
    xb = x_ref[...]                       # bf16, no full f32 copy
    dww = dww_ref[...]                    # (9, C) f32
    acc = jnp.zeros((1, H, W, C), jnp.float32)
    for kh in range(3):
        for kw in range(3):
            tap = xb[:, kh:kh + H, kw:kw + W, :].astype(jnp.float32)
            if pre_relu:
                # relu(0) == 0, so ReLU after zero-padding == padding after ReLU
                tap = jnp.maximum(tap, 0.0)
            acc = acc + tap * dww[kh * 3 + kw].reshape(1, 1, 1, C)
    hdw = acc + dwb_ref[...].reshape(1, 1, 1, C)          # depthwise + BN result
    # Pointwise 1x1 on the MXU; the intermediate never touches HBM.
    h2 = hdw.reshape(H * W, C).astype(jnp.bfloat16)
    y = jnp.dot(h2, pww_ref[...], preferred_element_type=jnp.float32) + pwb_ref[...]
    if post_relu:
        y = jnp.maximum(y, 0.0)
    o_ref[...] = y.reshape(1, H, W, cp).astype(o_ref.dtype)


def sepconv_fused(x, params, pre_relu=False, post_relu=False, out_dtype=jnp.bfloat16):
    """SepConv: depthwise3x3+BN then pointwise1x1+BN, fused in one pallas_call."""
    dw_w, dw_scale, dw_bias, pw_w, pw_scale, pw_bias = params
    N, H, W, C = x.shape
    Cout = pw_w.shape[-1]
    cp = _round_up(Cout, 128)
    _, vmem_limit = _matmul_vmem_budget()

    xp = jnp.pad(x.astype(jnp.bfloat16), ((0, 0), (1, 1), (1, 1), (0, 0)))
    dww = (dw_w * dw_scale[None, :]).astype(jnp.float32)                 # (9, C)
    pwm = (pw_w.reshape(C, Cout) * pw_scale[None, :]).astype(jnp.bfloat16)
    pwm = jnp.pad(pwm, ((0, 0), (0, cp - Cout)))
    pwb = jnp.pad(pw_bias, ((0, cp - Cout),)).reshape(1, cp)

    kern = functools.partial(_sepconv_kernel, pre_relu=pre_relu, post_relu=post_relu)
    out = pl.pallas_call(
        kern,
        out_shape=jax.ShapeDtypeStruct((N, H, W, cp), out_dtype),
        grid=(N,),
        in_specs=[
            pl.BlockSpec((1, H + 2, W + 2, C), lambda n: (n, 0, 0, 0)),
            pl.BlockSpec((9, C), lambda n: (0, 0)),
            pl.BlockSpec((1, C), lambda n: (0, 0)),
            pl.BlockSpec((C, cp), lambda n: (0, 0)),
            pl.BlockSpec((1, cp), lambda n: (0, 0)),
        ],
        out_specs=pl.BlockSpec((1, H, W, cp), lambda n: (n, 0, 0, 0)),
        compiler_params=pltpu.CompilerParams(
            dimension_semantics=("parallel",),
            vmem_limit_bytes=vmem_limit,
        ),
    )(xp, dww, dw_bias.reshape(1, C), pwm, pwb)
    return out[..., :Cout]


def _maxpool_add_kernel(p00_ref, p01_ref, p10_ref, p11_ref, s_ref, o_ref):
    # MaxPool2d(3, stride=2, pad=1) fused with the residual add.
    # The stride-2 decimation was done in the wrapper (4 parity phases); here every
    # tap is a unit-stride static slice of a phase block (no strided ref loads).
    _, Ho, Wo, C = o_ref.shape
    phases = {(0, 0): p00_ref[...], (0, 1): p01_ref[...],
              (1, 0): p10_ref[...], (1, 1): p11_ref[...]}
    m = None
    for kh in range(3):
        for kw in range(3):
            ph = phases[(kh % 2, kw % 2)]
            tap = ph[:, kh // 2:kh // 2 + Ho, kw // 2:kw // 2 + Wo, :]
            tap = tap.astype(jnp.float32)
            m = tap if m is None else jnp.maximum(m, tap)
    o_ref[...] = (m + s_ref[...].astype(jnp.float32)).astype(o_ref.dtype)


def maxpool3x3_s2_add(x, shortcut, out_dtype=jnp.bfloat16):
    """MaxPool2d(kernel=3, stride=2, padding=1) + residual add, in one kernel."""
    N, H, W, C = x.shape
    Ho = (H + 2 - 3) // 2 + 1
    Wo = (W + 2 - 3) // 2 + 1
    neg = jnp.asarray(-jnp.inf, x.dtype)
    # -inf padding is safe: every 3x3/stride-2 window contains >= 1 valid element.
    xp = jnp.pad(x, ((0, 0), (1, 1), (1, 1), (0, 0)), constant_values=neg)

    def phase(r, c):  # parity-decimated view, padded to a fixed (Ho+1, Wo+1) shape
        p = xp[:, r::2, c::2, :]
        return jnp.pad(
            p,
            ((0, 0), (0, Ho + 1 - p.shape[1]), (0, Wo + 1 - p.shape[2]), (0, 0)),
            constant_values=neg)

    p00, p01, p10, p11 = phase(0, 0), phase(0, 1), phase(1, 0), phase(1, 1)
    spec_p = pl.BlockSpec((1, Ho + 1, Wo + 1, C), lambda n: (n, 0, 0, 0))
    spec_o = pl.BlockSpec((1, Ho, Wo, C), lambda n: (n, 0, 0, 0))
    return pl.pallas_call(
        _maxpool_add_kernel,
        out_shape=jax.ShapeDtypeStruct((N, Ho, Wo, C), out_dtype),
        grid=(N,),
        in_specs=[spec_p, spec_p, spec_p, spec_p, spec_o],
        out_specs=spec_o,
        compiler_params=pltpu.CompilerParams(dimension_semantics=("parallel",)),
    )(p00, p01, p10, p11, shortcut)


# --------------------------- conv building blocks ---------------------------

def conv_bn_act(x, w_hwio, scale, bias, *, k, s, p, act, out_dtype=jnp.bfloat16):
    """Dense conv (groups=1): patch layout in JAX (glue), matmul+bias+act in Pallas.
    BN scale is folded into the weight matrix; operands are bf16."""
    N, H, W, C = x.shape
    Cout = w_hwio.shape[-1]
    Ho = (H + 2 * p - k) // s + 1
    Wo = (W + 2 * p - k) // s + 1
    xb = x.astype(jnp.bfloat16)
    if p > 0:
        xb = jnp.pad(xb, ((0, 0), (p, p), (p, p), (0, 0)))
    if k == 1 and s == 1:
        patches = xb.reshape(N * H * W, C)          # free reshape, no inflation
    else:
        # TODO(synk): move this tap expansion in-kernel (tap grid axis + accumulator)
        #             to avoid the k*k HBM inflation for the two 3x3 stem convs.
        cols = []
        for kh in range(k):
            for kw in range(k):
                cols.append(
                    xb[:, kh:kh + s * (Ho - 1) + 1:s, kw:kw + s * (Wo - 1) + 1:s, :])
        patches = jnp.concatenate(cols, axis=-1).reshape(N * Ho * Wo, k * k * C)
    # Column order (kh, kw, cin) matches w_hwio.reshape(k*k*C, Cout).
    wmat = (w_hwio.reshape(k * k * C, Cout) * scale[None, :]).astype(jnp.bfloat16)
    y = matmul_bias_act(patches, wmat, bias, act=act, out_dtype=out_dtype)
    return y.reshape(N, Ho, Wo, Cout)


# ------------------------------- parameters --------------------------------

def _fold_bn(key, c):
    k1, k2, k3, k4 = jax.random.split(key, 4)
    gamma = jax.random.uniform(k1, (c,), jnp.float32, 0.8, 1.2)
    beta = 0.1 * jax.random.normal(k2, (c,), jnp.float32)
    mean = 0.1 * jax.random.normal(k3, (c,), jnp.float32)
    var = jax.random.uniform(k4, (c,), jnp.float32, 0.5, 1.5)
    scale = gamma / jnp.sqrt(var + 1e-5)
    bias = beta - mean * scale
    return scale, bias


def _conv_w(key, k, cin, cout):
    return jax.random.normal(key, (k, k, cin, cout), jnp.float32) / jnp.sqrt(
        float(k * k * cin))


def _dw_w(key, c):
    return jax.random.normal(key, (9, c), jnp.float32) / 3.0


def init_entryflow(key, nchannels):
    n0, n1, n2, n3, n4 = nchannels
    keys = iter(jax.random.split(key, 64))
    p = {}
    p["conv1_w"] = _conv_w(next(keys), 3, 3, n0)
    p["conv1_bn"] = _fold_bn(next(keys), n0)
    p["conv2_w"] = _conv_w(next(keys), 3, n0, n1)
    p["conv2_bn"] = _fold_bn(next(keys), n1)

    def sep(cin, cout):
        dw = _dw_w(next(keys), cin)
        dws, dwb = _fold_bn(next(keys), cin)
        pw = _conv_w(next(keys), 1, cin, cout)
        pws, pwb = _fold_bn(next(keys), cout)
        return (dw, dws, dwb, pw, pws, pwb)

    p["c3_sep1"] = sep(n1, n2)
    p["c3_sep2"] = sep(n2, n2)
    p["c3s_w"] = _conv_w(next(keys), 1, n1, n2)
    p["c3s_bn"] = _fold_bn(next(keys), n2)

    p["c4_sep1"] = sep(n2, n3)
    p["c4_sep2"] = sep(n3, n3)
    p["c4s_w"] = _conv_w(next(keys), 1, n2, n3)
    p["c4s_bn"] = _fold_bn(next(keys), n3)

    p["c5_sep1"] = sep(n3, n4)
    p["c5_sep2"] = sep(n4, n4)
    p["c5s_w"] = _conv_w(next(keys), 1, n3, n4)
    p["c5s_bn"] = _fold_bn(next(keys), n4)
    return p


# -------------------------------- forward ----------------------------------

def entryflow_forward(params, x_nchw):
    x = jnp.transpose(x_nchw, (0, 2, 3, 1))  # NCHW -> NHWC

    # conv1: ConvBlock(3, n0, 3, s=2, p=1) = conv + BN + relu6
    x1 = conv_bn_act(x, params["conv1_w"], *params["conv1_bn"],
                     k=3, s=2, p=1, act="relu6")
    # conv2: ConvBlock(n0, n1, 3, p=1)
    x2 = conv_bn_act(x1, params["conv2_w"], *params["conv2_bn"],
                     k=3, s=1, p=1, act="relu6")

    # conv3 = SepConv, ReLU, SepConv, ReLU, MaxPool ; conv3s = 1x1 s2 conv + BN
    h = sepconv_fused(x2, params["c3_sep1"], pre_relu=False, post_relu=True)
    h = sepconv_fused(h, params["c3_sep2"], pre_relu=False, post_relu=True)
    x3s = conv_bn_act(x2, params["c3s_w"], *params["c3s_bn"],
                      k=1, s=2, p=0, act="none")
    x3 = maxpool3x3_s2_add(h, x3s)

    # conv4 = ReLU, SepConv, ReLU, SepConv, ReLU, MaxPool ; conv4s on raw x3
    h = sepconv_fused(x3, params["c4_sep1"], pre_relu=True, post_relu=True)
    h = sepconv_fused(h, params["c4_sep2"], pre_relu=False, post_relu=True)
    x4s = conv_bn_act(x3, params["c4s_w"], *params["c4s_bn"],
                      k=1, s=2, p=0, act="none")
    x4 = maxpool3x3_s2_add(h, x4s)

    # conv5 = ReLU, SepConv, ReLU, SepConv, ReLU, MaxPool ; conv5s on raw x4
    h = sepconv_fused(x4, params["c5_sep1"], pre_relu=True, post_relu=True)
    h = sepconv_fused(h, params["c5_sep2"], pre_relu=False, post_relu=True)
    x5s = conv_bn_act(x4, params["c5s_w"], *params["c5s_bn"],
                      k=1, s=2, p=0, act="none")
    x5 = maxpool3x3_s2_add(h, x5s)

    return jnp.transpose(x5, (0, 3, 1, 2)).astype(jnp.float32)  # NHWC -> NCHW


if __name__ == "__main__":
    key = jax.random.PRNGKey(0)
    kx, kp = jax.random.split(key)
    nchannels = [8, 16, 16, 32, 32]
    # PyTorch-style NCHW input with 3 channels (conv1 expects 3 input channels)
    x = jax.random.normal(kx, (2, 3, 16, 16), jnp.float32)
    params = init_entryflow(kp, nchannels)

    out = jax.jit(entryflow_forward)(params, x)
    out = jax.block_until_ready(out)
    assert out.shape == (2, nchannels[4], 1, 1), out.shape
    assert bool(jnp.all(jnp.isfinite(out)))
    print("KERNEL_OK")
</pallas_src>

<mosaic_0001>
module attributes {stable_mosaic.version = 11 : i64} {
  func.func @_matmul_bias_act_kernel(%arg0: i32, %arg1: memref<64x27xbf16, #tpu.memory_space<vmem>>, %arg2: memref<27x128xbf16, #tpu.memory_space<vmem>>, %arg3: memref<1x128xf32, #tpu.memory_space<vmem>>, %arg4: memref<64x128xbf16, #tpu.memory_space<vmem>>) attributes {dimension_semantics = [#tpu.dimension_semantics<parallel>], iteration_bounds = array<i64: 2>, scalar_prefetch = 0 : i64, scratch_operands = 0 : i64, tpu.core_type = #tpu.core_type<tc>, window_params = [{transform_indices = @transform_0, window_bounds = array<i64: 64, 27>}, {pipeline_mode = #tpu.pipeline_mode<synchronous>, transform_indices = @transform_1, window_bounds = array<i64: 27, 128>}, {pipeline_mode = #tpu.pipeline_mode<synchronous>, transform_indices = @transform_2, window_bounds = array<i64: 1, 128>}, {transform_indices = @transform_3, window_bounds = array<i64: 64, 128>}]} {
    %c0 = arith.constant 0 : index
    %c0_0 = arith.constant 0 : index
    %0 = vector.load %arg1[%c0, %c0_0] : memref<64x27xbf16, #tpu.memory_space<vmem>>, vector<64x27xbf16>
    %c0_1 = arith.constant 0 : index
    %c0_2 = arith.constant 0 : index
    %1 = vector.load %arg2[%c0_1, %c0_2] : memref<27x128xbf16, #tpu.memory_space<vmem>>, vector<27x128xbf16>
    %cst = arith.constant dense<0.000000e+00> : vector<64x128xf32>
    %2 = tpu.matmul %0, %1, %cst {dimension_numbers = #tpu.dot_dimension_numbers<[1], [0], [0], [1], [0, 0, 1, 1], [], []>} : vector<64x27xbf16>, vector<27x128xbf16>, vector<64x128xf32> -> vector<64x128xf32>
    %c0_3 = arith.constant 0 : index
    %c0_4 = arith.constant 0 : index
    %3 = vector.load %arg3[%c0_3, %c0_4] : memref<1x128xf32, #tpu.memory_space<vmem>>, vector<1x128xf32>
    %4 = vector.broadcast %3 : vector<1x128xf32> to vector<64x128xf32>
    %5 = arith.addf %2, %4 : vector<64x128xf32>
    %cst_5 = arith.constant 0.000000e+00 : f32
    %6 = vector.broadcast %cst_5 : f32 to vector<64x128xf32>
    %7 = arith.maximumf %5, %6 : vector<64x128xf32>
    %cst_6 = arith.constant 6.000000e+00 : f32
    %8 = vector.broadcast %cst_6 : f32 to vector<64x128xf32>
    %9 = arith.minimumf %7, %8 : vector<64x128xf32>
    %10 = arith.truncf %9 : vector<64x128xf32> to vector<64x128xbf16>
    %c0_7 = arith.constant 0 : index
    %c0_8 = arith.constant 0 : index
    %11 = vector.load %arg4[%c0_7, %c0_8] : memref<64x128xbf16, #tpu.memory_space<vmem>>, vector<64x128xbf16>
    tpu.vector_store %arg4[%c0_7, %c0_8], %10 {strides = array<i32>} : memref<64x128xbf16, #tpu.memory_space<vmem>>, vector<64x128xbf16>,
    return
  }
  func.func @transform_0(%arg0: i32) -> (i32, i32) {
    %c0_i32 = arith.constant 0 : i32
    %c0_i32_0 = arith.constant 0 : i32
    return %arg0, %c0_i32 : i32, i32
  }
  func.func @transform_1(%arg0: i32) -> (i32, i32) {
    %c0_i32 = arith.constant 0 : i32
    %c0_i32_0 = arith.constant 0 : i32
    %c0_i32_1 = arith.constant 0 : i32
    return %c0_i32, %c0_i32_0 : i32, i32
  }
  func.func @transform_2(%arg0: i32) -> (i32, i32) {
    %c0_i32 = arith.constant 0 : i32
    %c0_i32_0 = arith.constant 0 : i32
    %c0_i32_1 = arith.constant 0 : i32
    return %c0_i32, %c0_i32_0 : i32, i32
  }
  func.func @transform_3(%arg0: i32) -> (i32, i32) {
    %c0_i32 = arith.constant 0 : i32
    %c0_i32_0 = arith.constant 0 : i32
    return %arg0, %c0_i32 : i32, i32
  }
}

module attributes {stable_mosaic.version = 11 : i64} {
  func.func @_matmul_bias_act_kernel(%arg0: i32, %arg1: memref<64x72xbf16, #tpu.memory_space<vmem>>, %arg2: memref<72x128xbf16, #tpu.memory_space<vmem>>, %arg3: memref<1x128xf32, #tpu.memory_space<vmem>>, %arg4: memref<64x128xbf16, #tpu.memory_space<vmem>>) attributes {dimension_semantics = [#tpu.dimension_semantics<parallel>], iteration_bounds = array<i64: 2>, scalar_prefetch = 0 : i64, scratch_operands = 0 : i64, tpu.core_type = #tpu.core_type<tc>, window_params = [{transform_indices = @transform_0, window_bounds = array<i64: 64, 72>}, {pipeline_mode = #tpu.pipeline_mode<synchronous>, transform_indices = @transform_1, window_bounds = array<i64: 72, 128>}, {pipeline_mode = #tpu.pipeline_mode<synchronous>, transform_indices = @transform_2, window_bounds = array<i64: 1, 128>}, {transform_indices = @transform_3, window_bounds = array<i64: 64, 128>}]} {
    %c0 = arith.constant 0 : index
    %c0_0 = arith.constant 0 : index
    %0 = vector.load %arg1[%c0, %c0_0] : memref<64x72xbf16, #tpu.memory_space<vmem>>, vector<64x72xbf16>
    %c0_1 = arith.constant 0 : index
    %c0_2 = arith.constant 0 : index
    %1 = vector.load %arg2[%c0_1, %c0_2] : memref<72x128xbf16, #tpu.memory_space<vmem>>, vector<72x128xbf16>
    %cst = arith.constant dense<0.000000e+00> : vector<64x128xf32>
    %2 = tpu.matmul %0, %1, %cst {dimension_numbers = #tpu.dot_dimension_numbers<[1], [0], [0], [1], [0, 0, 1, 1], [], []>} : vector<64x72xbf16>, vector<72x128xbf16>, vector<64x128xf32> -> vector<64x128xf32>
    %c0_3 = arith.constant 0 : index
    %c0_4 = arith.constant 0 : index
    %3 = vector.load %arg3[%c0_3, %c0_4] : memref<1x128xf32, #tpu.memory_space<vmem>>, vector<1x128xf32>
    %4 = vector.broadcast %3 : vector<1x128xf32> to vector<64x128xf32>
    %5 = arith.addf %2, %4 : vector<64x128xf32>
    %cst_5 = arith.constant 0.000000e+00 : f32
    %6 = vector.broadcast %cst_5 : f32 to vector<64x128xf32>
    %7 = arith.maximumf %5, %6 : vector<64x128xf32>
    %cst_6 = arith.constant 6.000000e+00 : f32
    %8 = vector.broadcast %cst_6 : f32 to vector<64x128xf32>
    %9 = arith.minimumf %7, %8 : vector<64x128xf32>
    %10 = arith.truncf %9 : vector<64x128xf32> to vector<64x128xbf16>
    %c0_7 = arith.constant 0 : index
    %c0_8 = arith.constant 0 : index
    %11 = vector.load %arg4[%c0_7, %c0_8] : memref<64x128xbf16, #tpu.memory_space<vmem>>, vector<64x128xbf16>
    tpu.vector_store %arg4[%c0_7, %c0_8], %10 {strides = array<i32>} : memref<64x128xbf16, #tpu.memory_space<vmem>>, vector<64x128xbf16>,
    return
  }
  func.func @transform_0(%arg0: i32) -> (i32, i32) {
    %c0_i32 = arith.constant 0 : i32
    %c0_i32_0 = arith.constant 0 : i32
    return %arg0, %c0_i32 : i32, i32
  }
  func.func @transform_1(%arg0: i32) -> (i32, i32) {
    %c0_i32 = arith.constant 0 : i32
    %c0_i32_0 = arith.constant 0 : i32
    %c0_i32_1 = arith.constant 0 : i32
    return %c0_i32, %c0_i32_0 : i32, i32
  }
  func.func @transform_2(%arg0: i32) -> (i32, i32) {
    %c0_i32 = arith.constant 0 : i32
    %c0_i32_0 = arith.constant 0 : i32
    %c0_i32_1 = arith.constant 0 : i32
    return %c0_i32, %c0_i32_0 : i32, i32
  }
  func.func @transform_3(%arg0: i32) -> (i32, i32) {
    %c0_i32 = arith.constant 0 : i32
    %c0_i32_0 = arith.constant 0 : i32
    return %arg0, %c0_i32 : i32, i32
  }
}

module attributes {stable_mosaic.version = 11 : i64} {
  func.func @_sepconv_kernel(%arg0: i32, %arg1: memref<1x10x10x16xbf16, #tpu.memory_space<vmem>>, %arg2: memref<9x16xf32, #tpu.memory_space<vmem>>, %arg3: memref<1x16xf32, #tpu.memory_space<vmem>>, %arg4: memref<16x128xbf16, #tpu.memory_space<vmem>>, %arg5: memref<1x128xf32, #tpu.memory_space<vmem>>, %arg6: memref<1x8x8x128xbf16, #tpu.memory_space<vmem>>) attributes {dimension_semantics = [#tpu.dimension_semantics<parallel>], iteration_bounds = array<i64: 2>, scalar_prefetch = 0 : i64, scratch_operands = 0 : i64, tpu.core_type = #tpu.core_type<tc>, window_params = [{transform_indices = @transform_0, window_bounds = array<i64: 1, 10, 10, 16>}, {pipeline_mode = #tpu.pipeline_mode<synchronous>, transform_indices = @transform_1, window_bounds = array<i64: 9, 16>}, {pipeline_mode = #tpu.pipeline_mode<synchronous>, transform_indices = @transform_2, window_bounds = array<i64: 1, 16>}, {pipeline_mode = #tpu.pipeline_mode<synchronous>, transform_indices = @transform_3, window_bounds = array<i64: 16, 128>}, {pipeline_mode = #tpu.pipeline_mode<synchronous>, transform_indices = @transform_4, window_bounds = array<i64: 1, 128>}, {transform_indices = @transform_5, window_bounds = array<i64: 1, 8, 8, 128>}]} {
    %c0 = arith.constant 0 : index
    %c0_0 = arith.constant 0 : index
    %c0_1 = arith.constant 0 : index
    %c0_2 = arith.constant 0 : index
    %0 = vector.load %arg1[%c0, %c0_0, %c0_1, %c0_2] : memref<1x10x10x16xbf16, #tpu.memory_space<vmem>>, vector<1x10x10x16xbf16>
    %c0_3 = arith.constant 0 : index
    %c0_4 = arith.constant 0 : index
    %1 = vector.load %arg2[%c0_3, %c0_4] : memref<9x16xf32, #tpu.memory_space<vmem>>, vector<9x16xf32>
    %cst = arith.constant 0.000000e+00 : f32
    %2 = vector.broadcast %cst : f32 to vector<1x8x8x16xf32>
    %3 = vector.extract_strided_slice %0 {offsets = [0, 0, 0, 0], sizes = [1, 8, 8, 16], strides = [1, 1, 1, 1]} : vector<1x10x10x16xbf16> to vector<1x8x8x16xbf16>
    %4 = arith.extf %3 : vector<1x8x8x16xbf16> to vector<1x8x8x16xf32>
    %5 = vector.extract_strided_slice %1 {offsets = [0, 0], sizes = [1, 16], strides = [1, 1]} : vector<9x16xf32> to vector<1x16xf32>
    %6 = vector.shape_cast %5 : vector<1x16xf32> to vector<16xf32>
    %7 = vector.shape_cast %6 : vector<16xf32> to vector<1x1x1x16xf32>
    %8 = vector.broadcast %7 : vector<1x1x1x16xf32> to vector<1x8x8x16xf32>
    %9 = arith.mulf %4, %8 : vector<1x8x8x16xf32>
    %10 = arith.addf %2, %9 : vector<1x8x8x16xf32>
    %11 = vector.extract_strided_slice %0 {offsets = [0, 0, 1, 0], sizes = [1, 8, 8, 16], strides = [1, 1, 1, 1]} : vector<1x10x10x16xbf16> to vector<1x8x8x16xbf16>
    %12 = arith.extf %11 : vector<1x8x8x16xbf16> to vector<1x8x8x16xf32>
    %13 = vector.extract_strided_slice %1 {offsets = [1, 0], sizes = [1, 16], strides = [1, 1]} : vector<9x16xf32> to vector<1x16xf32>
    %14 = vector.shape_cast %13 : vector<1x16xf32> to vector<16xf32>
    %15 = vector.shape_cast %14 : vector<16xf32> to vector<1x1x1x16xf32>
    %16 = vector.broadcast %15 : vector<1x1x1x16xf32> to vector<1x8x8x16xf32>
    %17 = arith.mulf %12, %16 : vector<1x8x8x16xf32>
    %18 = arith.addf %10, %17 : vector<1x8x8x16xf32>
    %19 = vector.extract_strided_slice %0 {offsets = [0, 0, 2, 0], sizes = [1, 8, 8, 16], strides = [1, 1, 1, 1]} : vector<1x10x10x16xbf16> to vector<1x8x8x16xbf16>
    %20 = arith.extf %19 : vector<1x8x8x16xbf16> to vector<1x8x8x16xf32>
    %21 = vector.extract_strided_slice %1 {offsets = [2, 0], sizes = [1, 16], strides = [1, 1]} : vector<9x16xf32> to vector<1x16xf32>
    %22 = vector.shape_cast %21 : vector<1x16xf32> to vector<16xf32>
    %23 = vector.shape_cast %22 : vector<16xf32> to vector<1x1x1x16xf32>
    %24 = vector.broadcast %23 : vector<1x1x1x16xf32> to vector<1x8x8x16xf32>
    %25 = arith.mulf %20, %24 : vector<1x8x8x16xf32>
    %26 = arith.addf %18, %25 : vector<1x8x8x16xf32>
    %27 = vector.extract_strided_slice %0 {offsets = [0, 1, 0, 0], sizes = [1, 8, 8, 16], strides = [1, 1, 1, 1]} : vector<1x10x10x16xbf16> to vector<1x8x8x16xbf16>
    %28 = arith.extf %27 : vector<1x8x8x16xbf16> to vector<1x8x8x16xf32>
    %29 = vector.extract_strided_slice %1 {offsets = [3, 0], sizes = [1, 16], strides = [1, 1]} : vector<9x16xf32> to vector<1x16xf32>
    %30 = vector.shape_cast %29 : vector<1x16xf32> to vector<16xf32>
    %31 = vector.shape_cast %30 : vector<16xf32> to vector<1x1x1x16xf32>
    %32 = vector.broadcast %31 : vector<1x1x1x16xf32> to vector<1x8x8x16xf32>
    %33 = arith.mulf %28, %32 : vector<1x8x8x16xf32>
    %34 = arith.addf %26, %33 : vector<1x8x8x16xf32>
    %35 = vector.extract_strided_slice %0 {offsets = [0, 1, 1, 0], sizes = [1, 8, 8, 16], strides = [1, 1, 1, 1]} : vector<1x10x10x16xbf16> to vector<1x8x8x16xbf16>
    %36 = arith.extf %35 : vector<1x8x8x16xbf16> to vector<1x8x8x16xf32>
    %37 = vector.extract_strided_slice %1 {offsets = [4, 0], sizes = [1, 16], strides = [1, 1]} : vector<9x16xf32> to vector<1x16xf32>
    %38 = vector.shape_cast %37 : vector<1x16xf32> to vector<16xf32>
    %39 = vector.shape_cast %38 : vector<16xf32> to vector<1x1x1x16xf32>
    %40 = vector.broadcast %39 : vector<1x1x1x16xf32> to vector<1x8x8x16xf32>
    %41 = arith.mulf %36, %40 : vector<1x8x8x16xf32>
    %42 = arith.addf %34, %41 : vector<1x8x8x16xf32>
    %43 = vector.extract_strided_slice %0 {offsets = [0, 1, 2, 0], sizes = [1, 8, 8, 16], strides = [1, 1, 1, 1]} : vector<1x10x10x16xbf16> to vector<1x8x8x16xbf16>
    %44 = arith.extf %43 : vector<1x8x8x16xbf16> to vector<1x8x8x16xf32>
    %45 = vector.extract_strided_slice %1 {offsets = [5, 0], sizes = [1, 16], strides = [1, 1]} : vector<9x16xf32> to vector<1x16xf32>
    %46 = vector.shape_cast %45 : vector<1x16xf32> to vector<16xf32>
    %47 = vector.shape_cast %46 : vector<16xf32> to vector<1x1x1x16xf32>
    %48 = vector.broadcast %47 : vector<1x1x1x16xf32> to vector<1x8x8x16xf32>
    %49 = arith.mulf %44, %48 : vector<1x8x8x16xf32>
    %50 = arith.addf %42, %49 : vector<1x8x8x16xf32>
    %51 = vector.extract_strided_slice %0 {offsets = [0, 2, 0, 0], sizes = [1, 8, 8, 16], strides = [1, 1, 1, 1]} : vector<1x10x10x16xbf16> to vector<1x8x8x16xbf16>
    %52 = arith.extf %51 : vector<1x8x8x16xbf16> to vector<1x8x8x16xf32>
    %53 = vector.extract_strided_slice %1 {offsets = [6, 0], sizes = [1, 16], strides = [1, 1]} : vector<9x16xf32> to vector<1x16xf32>
    %54 = vector.shape_cast %53 : vector<1x16xf32> to vector<16xf32>
    %55 = vector.shape_cast %54 : vector<16xf32> to vector<1x1x1x16xf32>
    %56 = vector.broadcast %55 : vector<1x1x1x16xf32> to vector<1x8x8x16xf32>
    %57 = arith.mulf %52, %56 : vector<1x8x8x16xf32>
    %58 = arith.addf %50, %57 : vector<1x8x8x16xf32>
    %59 = vector.extract_strided_slice %0 {offsets = [0, 2, 1, 0], sizes = [1, 8, 8, 16], strides = [1, 1, 1, 1]} : vector<1x10x10x16xbf16> to vector<1x8x8x16xbf16>
    %60 = arith.extf %59 : vector<1x8x8x16xbf16> to vector<1x8x8x16xf32>
    %61 = vector.extract_strided_slice %1 {offsets = [7, 0], sizes = [1, 16], strides = [1, 1]} : vector<9x16xf32> to vector<1x16xf32>
    %62 = vector.shape_cast %61 : vector<1x16xf32> to vector<16xf32>
    %63 = vector.shape_cast %62 : vector<16xf32> to vector<1x1x1x16xf32>
    %64 = vector.broadcast %63 : vector<1x1x1x16xf32> to vector<1x8x8x16xf32>
    %65 = arith.mulf %60, %64 : vector<1x8x8x16xf32>
    %66 = arith.addf %58, %65 : vector<1x8x8x16xf32>
    %67 = vector.extract_strided_slice %0 {offsets = [0, 2, 2, 0], sizes = [1, 8, 8, 16], strides = [1, 1, 1, 1]} : vector<1x10x10x16xbf16> to vector<1x8x8x16xbf16>
    %68 = arith.extf %67 : vector<1x8x8x16xbf16> to vector<1x8x8x16xf32>
    %69 = vector.extract_strided_slice %1 {offsets = [8, 0], sizes = [1, 16], strides = [1, 1]} : vector<9x16xf32> to vector<1x16xf32>
    %70 = vector.shape_cast %69 : vector<1x16xf32> to vector<16xf32>
    %71 = vector.shape_cast %70 : vector<16xf32> to vector<1x1x1x16xf32>
    %72 = vector.broadcast %71 : vector<1x1x1x16xf32> to vector<1x8x8x16xf32>
    %73 = arith.mulf %68, %72 : vector<1x8x8x16xf32>
    %74 = arith.addf %66, %73 : vector<1x8x8x16xf32>
    %c0_5 = arith.constant 0 : index
    %c0_6 = arith.constant 0 : index
    %75 = vector.load %arg3[%c0_5, %c0_6] : memref<1x16xf32, #tpu.memory_space<vmem>>, vector<1x16xf32>
    %76 = vector.shape_cast %75 : vector<1x16xf32> to vector<1x1x1x16xf32>
    %77 = vector.broadcast %76 : vector<1x1x1x16xf32> to vector<1x8x8x16xf32>
    %78 = arith.addf %74, %77 : vector<1x8x8x16xf32>
    %79 = vector.shape_cast %78 : vector<1x8x8x16xf32> to vector<64x16xf32>
    %80 = arith.truncf %79 : vector<64x16xf32> to vector<64x16xbf16>
    %c0_7 = arith.constant 0 : index
    %c0_8 = arith.constant 0 : index
    %81 = vector.load %arg4[%c0_7, %c0_8] : memref<16x128xbf16, #tpu.memory_space<vmem>>, vector<16x128xbf16>
    %cst_9 = arith.constant dense<0.000000e+00> : vector<64x128xf32>
    %82 = tpu.matmul %80, %81, %cst_9 {dimension_numbers = #tpu.dot_dimension_numbers<[1], [0], [0], [1], [0, 0, 1, 1], [], []>} : vector<64x16xbf16>, vector<16x128xbf16>, vector<64x128xf32> -> vector<64x128xf32>
    %c0_10 = arith.constant 0 : index
    %c0_11 = arith.constant 0 : index
    %83 = vector.load %arg5[%c0_10, %c0_11] : memref<1x128xf32, #tpu.memory_space<vmem>>, vector<1x128xf32>
    %84 = vector.broadcast %83 : vector<1x128xf32> to vector<64x128xf32>
    %85 = arith.addf %82, %84 : vector<64x128xf32>
    %cst_12 = arith.constant 0.000000e+00 : f32
    %86 = vector.broadcast %cst_12 : f32 to vector<64x128xf32>
    %87 = arith.maximumf %85, %86 : vector<64x128xf32>
    %88 = vector.shape_cast %87 : vector<64x128xf32> to vector<1x8x8x128xf32>
    %89 = arith.truncf %88 : vector<1x8x8x128xf32> to vector<1x8x8x128xbf16>
    %c0_13 = arith.constant 0 : index
    %c0_14 = arith.constant 0 : index
    %c0_15 = arith.constant 0 : index
    %c0_16 = arith.constant 0 : index
    %90 = vector.load %arg6[%c0_13, %c0_14, %c0_15, %c0_16] : memref<1x8x8x128xbf16, #tpu.memory_space<vmem>>, vector<1x8x8x128xbf16>
    tpu.vector_store %arg6[%c0_13, %c0_14, %c0_15, %c0_16], %89 {strides = array<i32>} : memref<1x8x8x128xbf16, #tpu.memory_space<vmem>>, vector<1x8x8x128xbf16>,
    return
  }
  func.func @transform_0(%arg0: i32) -> (i32, i32, i32, i32) {
    %c0_i32 = arith.constant 0 : i32
    %c0_i32_0 = arith.constant 0 : i32
    %c0_i32_1 = arith.constant 0 : i32
    %c0_i32_2 = arith.constant 0 : i32
    return %arg0, %c0_i32, %c0_i32_0, %c0_i32_1 : i32, i32, i32, i32
  }
  func.func @transform_1(%arg0: i32) -> (i32, i32) {
    %c0_i32 = arith.constant 0 : i32
    %c0_i32_0 = arith.constant 0 : i32
    %c0_i32_1 = arith.constant 0 : i32
    return %c0_i32, %c0_i32_0 : i32, i32
  }
  func.func @transform_2(%arg0: i32) -> (i32, i32) {
    %c0_i32 = arith.constant 0 : i32
    %c0_i32_0 = arith.constant 0 : i32
    %c0_i32_1 = arith.constant 0 : i32
    return %c0_i32, %c0_i32_0 : i32, i32
  }
  func.func @transform_3(%arg0: i32) -> (i32, i32) {
    %c0_i32 = arith.constant 0 : i32
    %c0_i32_0 = arith.constant 0 : i32
    %c0_i32_1 = arith.constant 0 : i32
    return %c0_i32, %c0_i32_0 : i32, i32
  }
  func.func @transform_4(%arg0: i32) -> (i32, i32) {
    %c0_i32 = arith.constant 0 : i32
    %c0_i32_0 = arith.constant 0 : i32
    %c0_i32_1 = arith.constant 0 : i32
    return %c0_i32, %c0_i32_0 : i32, i32
  }
  func.func @transform_5(%arg0: i32) -> (i32, i32, i32, i32) {
    %c0_i32 = arith.constant 0 : i32
    %c0_i32_0 = arith.constant 0 : i32
    %c0_i32_1 = arith.constant 0 : i32
    %c0_i32_2 = arith.constant 0 : i32
    return %arg0, %c0_i32, %c0_i32_0, %c0_i32_1 : i32, i32, i32, i32
  }
}

module attributes {stable_mosaic.version = 11 : i64} {
  func.func @_maxpool_add_kernel(%arg0: i32, %arg1: memref<1x5x5x16xbf16, #tpu.memory_space<vmem>>, %arg2: memref<1x5x5x16xbf16, #tpu.memory_space<vmem>>, %arg3: memref<1x5x5x16xbf16, #tpu.memory_space<vmem>>, %arg4: memref<1x5x5x16xbf16, #tpu.memory_space<vmem>>, %arg5: memref<1x4x4x16xbf16, #tpu.memory_space<vmem>>, %arg6: memref<1x4x4x16xbf16, #tpu.memory_space<vmem>>) attributes {dimension_semantics = [#tpu.dimension_semantics<parallel>], iteration_bounds = array<i64: 2>, scalar_prefetch = 0 : i64, scratch_operands = 0 : i64, tpu.core_type = #tpu.core_type<tc>, window_params = [{transform_indices = @transform_0, window_bounds = array<i64: 1, 5, 5, 16>}, {transform_indices = @transform_1, window_bounds = array<i64: 1, 5, 5, 16>}, {transform_indices = @transform_2, window_bounds = array<i64: 1, 5, 5, 16>}, {transform_indices = @transform_3, window_bounds = array<i64: 1, 5, 5, 16>}, {transform_indices = @transform_4, window_bounds = array<i64: 1, 4, 4, 16>}, {transform_indices = @transform_5, window_bounds = array<i64: 1, 4, 4, 16>}]} {
    %c0 = arith.constant 0 : index
    %c0_0 = arith.constant 0 : index
    %c0_1 = arith.constant 0 : index
    %c0_2 = arith.constant 0 : index
    %0 = vector.load %arg1[%c0, %c0_0, %c0_1, %c0_2] : memref<1x5x5x16xbf16, #tpu.memory_space<vmem>>, vector<1x5x5x16xbf16>
    %c0_3 = arith.constant 0 : index
    %c0_4 = arith.constant 0 : index
    %c0_5 = arith.constant 0 : index
    %c0_6 = arith.constant 0 : index
    %1 = vector.load %arg2[%c0_3, %c0_4, %c0_5, %c0_6] : memref<1x5x5x16xbf16, #tpu.memory_space<vmem>>, vector<1x5x5x16xbf16>
    %c0_7 = arith.constant 0 : index
    %c0_8 = arith.constant 0 : index
    %c0_9 = arith.constant 0 : index
    %c0_10 = arith.constant 0 : index
    %2 = vector.load %arg3[%c0_7, %c0_8, %c0_9, %c0_10] : memref<1x5x5x16xbf16, #tpu.memory_space<vmem>>, vector<1x5x5x16xbf16>
    %c0_11 = arith.constant 0 : index
    %c0_12 = arith.constant 0 : index
    %c0_13 = arith.constant 0 : index
    %c0_14 = arith.constant 0 : index
    %3 = vector.load %arg4[%c0_11, %c0_12, %c0_13, %c0_14] : memref<1x5x5x16xbf16, #tpu.memory_space<vmem>>, vector<1x5x5x16xbf16>
    %4 = vector.extract_strided_slice %0 {offsets = [0, 0, 0, 0], sizes = [1, 4, 4, 16], strides = [1, 1, 1, 1]} : vector<1x5x5x16xbf16> to vector<1x4x4x16xbf16>
    %5 = arith.extf %4 : vector<1x4x4x16xbf16> to vector<1x4x4x16xf32>
    %6 = vector.extract_strided_slice %1 {offsets = [0, 0, 0, 0], sizes = [1, 4, 4, 16], strides = [1, 1, 1, 1]} : vector<1x5x5x16xbf16> to vector<1x4x4x16xbf16>
    %7 = arith.extf %6 : vector<1x4x4x16xbf16> to vector<1x4x4x16xf32>
    %8 = arith.maximumf %5, %7 : vector<1x4x4x16xf32>
    %9 = vector.extract_strided_slice %0 {offsets = [0, 0, 1, 0], sizes = [1, 4, 4, 16], strides = [1, 1, 1, 1]} : vector<1x5x5x16xbf16> to vector<1x4x4x16xbf16>
    %10 = arith.extf %9 : vector<1x4x4x16xbf16> to vector<1x4x4x16xf32>
    %11 = arith.maximumf %8, %10 : vector<1x4x4x16xf32>
    %12 = vector.extract_strided_slice %2 {offsets = [0, 0, 0, 0], sizes = [1, 4, 4, 16], strides = [1, 1, 1, 1]} : vector<1x5x5x16xbf16> to vector<1x4x4x16xbf16>
    %13 = arith.extf %12 : vector<1x4x4x16xbf16> to vector<1x4x4x16xf32>
    %14 = arith.maximumf %11, %13 : vector<1x4x4x16xf32>
    %15 = vector.extract_strided_slice %3 {offsets = [0, 0, 0, 0], sizes = [1, 4, 4, 16], strides = [1, 1, 1, 1]} : vector<1x5x5x16xbf16> to vector<1x4x4x16xbf16>
    %16 = arith.extf %15 : vector<1x4x4x16xbf16> to vector<1x4x4x16xf32>
    %17 = arith.maximumf %14, %16 : vector<1x4x4x16xf32>
    %18 = vector.extract_strided_slice %2 {offsets = [0, 0, 1, 0], sizes = [1, 4, 4, 16], strides = [1, 1, 1, 1]} : vector<1x5x5x16xbf16> to vector<1x4x4x16xbf16>
    %19 = arith.extf %18 : vector<1x4x4x16xbf16> to vector<1x4x4x16xf32>
    %20 = arith.maximumf %17, %19 : vector<1x4x4x16xf32>
    %21 = vector.extract_strided_slice %0 {offsets = [0, 1, 0, 0], sizes = [1, 4, 4, 16], strides = [1, 1, 1, 1]} : vector<1x5x5x16xbf16> to vector<1x4x4x16xbf16>
    %22 = arith.extf %21 : vector<1x4x4x16xbf16> to vector<1x4x4x16xf32>
    %23 = arith.maximumf %20, %22 : vector<1x4x4x16xf32>
    %24 = vector.extract_strided_slice %1 {offsets = [0, 1, 0, 0], sizes = [1, 4, 4, 16], strides = [1, 1, 1, 1]} : vector<1x5x5x16xbf16> to vector<1x4x4x16xbf16>
    %25 = arith.extf %24 : vector<1x4x4x16xbf16> to vector<1x4x4x16xf32>
    %26 = arith.maximumf %23, %25 : vector<1x4x4x16xf32>
    %27 = vector.extract_strided_slice %0 {offsets = [0, 1, 1, 0], sizes = [1, 4, 4, 16], strides = [1, 1, 1, 1]} : vector<1x5x5x16xbf16> to vector<1x4x4x16xbf16>
    %28 = arith.extf %27 : vector<1x4x4x16xbf16> to vector<1x4x4x16xf32>
    %29 = arith.maximumf %26, %28 : vector<1x4x4x16xf32>
    %c0_15 = arith.constant 0 : index
    %c0_16 = arith.constant 0 : index
    %c0_17 = arith.constant 0 : index
    %c0_18 = arith.constant 0 : index
    %30 = vector.load %arg5[%c0_15, %c0_16, %c0_17, %c0_18] : memref<1x4x4x16xbf16, #tpu.memory_space<vmem>>, vector<1x4x4x16xbf16>
    %31 = arith.extf %30 : vector<1x4x4x16xbf16> to vector<1x4x4x16xf32>
    %32 = arith.addf %29, %31 : vector<1x4x4x16xf32>
    %33 = arith.truncf %32 : vector<1x4x4x16xf32> to vector<1x4x4x16xbf16>
    %c0_19 = arith.constant 0 : index
    %c0_20 = arith.constant 0 : index
    %c0_21 = arith.constant 0 : index
    %c0_22 = arith.constant 0 : index
    %34 = vector.load %arg6[%c0_19, %c0_20, %c0_21, %c0_22] : memref<1x4x4x16xbf16, #tpu.memory_space<vmem>>, vector<1x4x4x16xbf16>
    tpu.vector_store %arg6[%c0_19, %c0_20, %c0_21, %c0_22], %33 {strides = array<i32>} : memref<1x4x4x16xbf16, #tpu.memory_space<vmem>>, vector<1x4x4x16xbf16>,
    return
  }
  func.func @transform_0(%arg0: i32) -> (i32, i32, i32, i32) {
    %c0_i32 = arith.constant 0 : i32
    %c0_i32_0 = arith.constant 0 : i32
    %c0_i32_1 = arith.constant 0 : i32
    %c0_i32_2 = arith.constant 0 : i32
    return %arg0, %c0_i32, %c0_i32_0, %c0_i32_1 : i32, i32, i32, i32
  }
  func.func @transform_1(%arg0: i32) -> (i32, i32, i32, i32) {
    %c0_i32 = arith.constant 0 : i32
    %c0_i32_0 = arith.constant 0 : i32
    %c0_i32_1 = arith.constant 0 : i32
    %c0_i32_2 = arith.constant 0 : i32
    return %arg0, %c0_i32, %c0_i32_0, %c0_i32_1 : i32, i32, i32, i32
  }
  func.func @transform_2(%arg0: i32) -> (i32, i32, i32, i32) {
    %c0_i32 = arith.constant 0 : i32
    %c0_i32_0 = arith.constant 0 : i32
    %c0_i32_1 = arith.constant 0 : i32
    %c0_i32_2 = arith.constant 0 : i32
    return %arg0, %c0_i32, %c0_i32_0, %c0_i32_1 : i32, i32, i32, i32
  }
  func.func @transform_3(%arg0: i32) -> (i32, i32, i32, i32) {
    %c0_i32 = arith.constant 0 : i32
    %c0_i32_0 = arith.constant 0 : i32
    %c0_i32_1 = arith.constant 0 : i32
    %c0_i32_2 = arith.constant 0 : i32
    return %arg0, %c0_i32, %c0_i32_0, %c0_i32_1 : i32, i32, i32, i32
  }
  func.func @transform_4(%arg0: i32) -> (i32, i32, i32, i32) {
    %c0_i32 = arith.constant 0 : i32
    %c0_i32_0 = arith.constant 0 : i32
    %c0_i32_1 = arith.constant 0 : i32
    %c0_i32_2 = arith.constant 0 : i32
    return %arg0, %c0_i32, %c0_i32_0, %c0_i32_1 : i32, i32, i32, i32
  }
  func.func @transform_5(%arg0: i32) -> (i32, i32, i32, i32) {
    %c0_i32 = arith.constant 0 : i32
    %c0_i32_0 = arith.constant 0 : i32
    %c0_i32_1 = arith.constant 0 : i32
    %c0_i32_2 = arith.constant 0 : i32
    return %arg0, %c0_i32, %c0_i32_0, %c0_i32_1 : i32, i32, i32, i32
  }
}

module attributes {stable_mosaic.version = 11 : i64} {
  func.func @_matmul_bias_act_kernel(%arg0: i32, %arg1: memref<16x16xbf16, #tpu.memory_space<vmem>>, %arg2: memref<16x128xbf16, #tpu.memory_space<vmem>>, %arg3: memref<1x128xf32, #tpu.memory_space<vmem>>, %arg4: memref<16x128xbf16, #tpu.memory_space<vmem>>) attributes {dimension_semantics = [#tpu.dimension_semantics<parallel>], iteration_bounds = array<i64: 2>, scalar_prefetch = 0 : i64, scratch_operands = 0 : i64, tpu.core_type = #tpu.core_type<tc>, window_params = [{transform_indices = @transform_0, window_bounds = array<i64: 16, 16>}, {pipeline_mode = #tpu.pipeline_mode<synchronous>, transform_indices = @transform_1, window_bounds = array<i64: 16, 128>}, {pipeline_mode = #tpu.pipeline_mode<synchronous>, transform_indices = @transform_2, window_bounds = array<i64: 1, 128>}, {transform_indices = @transform_3, window_bounds = array<i64: 16, 128>}]} {
    %c0 = arith.constant 0 : index
    %c0_0 = arith.constant 0 : index
    %0 = vector.load %arg1[%c0, %c0_0] : memref<16x16xbf16, #tpu.memory_space<vmem>>, vector<16x16xbf16>
    %c0_1 = arith.constant 0 : index
    %c0_2 = arith.constant 0 : index
    %1 = vector.load %arg2[%c0_1, %c0_2] : memref<16x128xbf16, #tpu.memory_space<vmem>>, vector<16x128xbf16>
    %cst = arith.constant dense<0.000000e+00> : vector<16x128xf32>
    %2 = tpu.matmul %0, %1, %cst {dimension_numbers = #tpu.dot_dimension_numbers<[1], [0], [0], [1], [0, 0, 1, 1], [], []>} : vector<16x16xbf16>, vector<16x128xbf16>, vector<16x128xf32> -> vector<16x128xf32>
    %c0_3 = arith.constant 0 : index
    %c0_4 = arith.constant 0 : index
    %3 = vector.load %arg3[%c0_3, %c0_4] : memref<1x128xf32, #tpu.memory_space<vmem>>, vector<1x128xf32>
    %4 = vector.broadcast %3 : vector<1x128xf32> to vector<16x128xf32>
    %5 = arith.addf %2, %4 : vector<16x128xf32>
    %6 = arith.truncf %5 : vector<16x128xf32> to vector<16x128xbf16>
    %c0_5 = arith.constant 0 : index
    %c0_6 = arith.constant 0 : index
    %7 = vector.load %arg4[%c0_5, %c0_6] : memref<16x128xbf16, #tpu.memory_space<vmem>>, vector<16x128xbf16>
    tpu.vector_store %arg4[%c0_5, %c0_6], %6 {strides = array<i32>} : memref<16x128xbf16, #tpu.memory_space<vmem>>, vector<16x128xbf16>,
    return
  }
  func.func @transform_0(%arg0: i32) -> (i32, i32) {
    %c0_i32 = arith.constant 0 : i32
    %c0_i32_0 = arith.constant 0 : i32
    return %arg0, %c0_i32 : i32, i32
  }
  func.func @transform_1(%arg0: i32) -> (i32, i32) {
    %c0_i32 = arith.constant 0 : i32
    %c0_i32_0 = arith.constant 0 : i32
    %c0_i32_1 = arith.constant 0 : i32
    return %c0_i32, %c0_i32_0 : i32, i32
  }
  func.func @transform_2(%arg0: i32) -> (i32, i32) {
    %c0_i32 = arith.constant 0 : i32
    %c0_i32_0 = arith.constant 0 : i32
    %c0_i32_1 = arith.constant 0 : i32
    return %c0_i32, %c0_i32_0 : i32, i32
  }
  func.func @transform_3(%arg0: i32) -> (i32, i32) {
    %c0_i32 = arith.constant 0 : i32
    %c0_i32_0 = arith.constant 0 : i32
    return %arg0, %c0_i32 : i32, i32
  }
}

module attributes {stable_mosaic.version = 11 : i64} {
  func.func @_sepconv_kernel(%arg0: i32, %arg1: memref<1x6x6x16xbf16, #tpu.memory_space<vmem>>, %arg2: memref<9x16xf32, #tpu.memory_space<vmem>>, %arg3: memref<1x16xf32, #tpu.memory_space<vmem>>, %arg4: memref<16x128xbf16, #tpu.memory_space<vmem>>, %arg5: memref<1x128xf32, #tpu.memory_space<vmem>>, %arg6: memref<1x4x4x128xbf16, #tpu.memory_space<vmem>>) attributes {dimension_semantics = [#tpu.dimension_semantics<parallel>], iteration_bounds = array<i64: 2>, scalar_prefetch = 0 : i64, scratch_operands = 0 : i64, tpu.core_type = #tpu.core_type<tc>, window_params = [{transform_indices = @transform_0, window_bounds = array<i64: 1, 6, 6, 16>}, {pipeline_mode = #tpu.pipeline_mode<synchronous>, transform_indices = @transform_1, window_bounds = array<i64: 9, 16>}, {pipeline_mode = #tpu.pipeline_mode<synchronous>, transform_indices = @transform_2, window_bounds = array<i64: 1, 16>}, {pipeline_mode = #tpu.pipeline_mode<synchronous>, transform_indices = @transform_3, window_bounds = array<i64: 16, 128>}, {pipeline_mode = #tpu.pipeline_mode<synchronous>, transform_indices = @transform_4, window_bounds = array<i64: 1, 128>}, {transform_indices = @transform_5, window_bounds = array<i64: 1, 4, 4, 128>}]} {
    %c0 = arith.constant 0 : index
    %c0_0 = arith.constant 0 : index
    %c0_1 = arith.constant 0 : index
    %c0_2 = arith.constant 0 : index
    %0 = vector.load %arg1[%c0, %c0_0, %c0_1, %c0_2] : memref<1x6x6x16xbf16, #tpu.memory_space<vmem>>, vector<1x6x6x16xbf16>
    %c0_3 = arith.constant 0 : index
    %c0_4 = arith.constant 0 : index
    %1 = vector.load %arg2[%c0_3, %c0_4] : memref<9x16xf32, #tpu.memory_space<vmem>>, vector<9x16xf32>
    %cst = arith.constant 0.000000e+00 : f32
    %2 = vector.broadcast %cst : f32 to vector<1x4x4x16xf32>
    %3 = vector.extract_strided_slice %0 {offsets = [0, 0, 0, 0], sizes = [1, 4, 4, 16], strides = [1, 1, 1, 1]} : vector<1x6x6x16xbf16> to vector<1x4x4x16xbf16>
    %4 = arith.extf %3 : vector<1x4x4x16xbf16> to vector<1x4x4x16xf32>
    %cst_5 = arith.constant 0.000000e+00 : f32
    %5 = vector.broadcast %cst_5 : f32 to vector<1x4x4x16xf32>
    %6 = arith.maximumf %4, %5 : vector<1x4x4x16xf32>
    %7 = vector.extract_strided_slice %1 {offsets = [0, 0], sizes = [1, 16], strides = [1, 1]} : vector<9x16xf32> to vector<1x16xf32>
    %8 = vector.shape_cast %7 : vector<1x16xf32> to vector<16xf32>
    %9 = vector.shape_cast %8 : vector<16xf32> to vector<1x1x1x16xf32>
    %10 = vector.broadcast %9 : vector<1x1x1x16xf32> to vector<1x4x4x16xf32>
    %11 = arith.mulf %6, %10 : vector<1x4x4x16xf32>
    %12 = arith.addf %2, %11 : vector<1x4x4x16xf32>
    %13 = vector.extract_strided_slice %0 {offsets = [0, 0, 1, 0], sizes = [1, 4, 4, 16], strides = [1, 1, 1, 1]} : vector<1x6x6x16xbf16> to vector<1x4x4x16xbf16>
    %14 = arith.extf %13 : vector<1x4x4x16xbf16> to vector<1x4x4x16xf32>
    %cst_6 = arith.constant 0.000000e+00 : f32
    %15 = vector.broadcast %cst_6 : f32 to vector<1x4x4x16xf32>
    %16 = arith.maximumf %14, %15 : vector<1x4x4x16xf32>
    %17 = vector.extract_strided_slice %1 {offsets = [1, 0], sizes = [1, 16], strides = [1, 1]} : vector<9x16xf32> to vector<1x16xf32>
    %18 = vector.shape_cast %17 : vector<1x16xf32> to vector<16xf32>
    %19 = vector.shape_cast %18 : vector<16xf32> to vector<1x1x1x16xf32>
    %20 = vector.broadcast %19 : vector<1x1x1x16xf32> to vector<1x4x4x16xf32>
    %21 = arith.mulf %16, %20 : vector<1x4x4x16xf32>
    %22 = arith.addf %12, %21 : vector<1x4x4x16xf32>
    %23 = vector.extract_strided_slice %0 {offsets = [0, 0, 2, 0], sizes = [1, 4, 4, 16], strides = [1, 1, 1, 1]} : vector<1x6x6x16xbf16> to vector<1x4x4x16xbf16>
    %24 = arith.extf %23 : vector<1x4x4x16xbf16> to vector<1x4x4x16xf32>
    %cst_7 = arith.constant 0.000000e+00 : f32
    %25 = vector.broadcast %cst_7 : f32 to vector<1x4x4x16xf32>
    %26 = arith.maximumf %24, %25 : vector<1x4x4x16xf32>
    %27 = vector.extract_strided_slice %1 {offsets = [2, 0], sizes = [1, 16], strides = [1, 1]} : vector<9x16xf32> to vector<1x16xf32>
    %28 = vector.shape_cast %27 : vector<1x16xf32> to vector<16xf32>
    %29 = vector.shape_cast %28 : vector<16xf32> to vector<1x1x1x16xf32>
    %30 = vector.broadcast %29 : vector<1x1x1x16xf32> to vector<1x4x4x16xf32>
    %31 = arith.mulf %26, %30 : vector<1x4x4x16xf32>
    %32 = arith.addf %22, %31 : vector<1x4x4x16xf32>
    %33 = vector.extract_strided_slice %0 {offsets = [0, 1, 0, 0], sizes = [1, 4, 4, 16], strides = [1, 1, 1, 1]} : vector<1x6x6x16xbf16> to vector<1x4x4x16xbf16>
    %34 = arith.extf %33 : vector<1x4x4x16xbf16> to vector<1x4x4x16xf32>
    %cst_8 = arith.constant 0.000000e+00 : f32
    %35 = vector.broadcast %cst_8 : f32 to vector<1x4x4x16xf32>
    %36 = arith.maximumf %34, %35 : vector<1x4x4x16xf32>
    %37 = vector.extract_strided_slice %1 {offsets = [3, 0], sizes = [1, 16], strides = [1, 1]} : vector<9x16xf32> to vector<1x16xf32>
    %38 = vector.shape_cast %37 : vector<1x16xf32> to vector<16xf32>
    %39 = vector.shape_cast %38 : vector<16xf32> to vector<1x1x1x16xf32>
    %40 = vector.broadcast %39 : vector<1x1x1x16xf32> to vector<1x4x4x16xf32>
    %41 = arith.mulf %36, %40 : vector<1x4x4x16xf32>
    %42 = arith.addf %32, %41 : vector<1x4x4x16xf32>
    %43 = vector.extract_strided_slice %0 {offsets = [0, 1, 1, 0], sizes = [1, 4, 4, 16], strides = [1, 1, 1, 1]} : vector<1x6x6x16xbf16> to vector<1x4x4x16xbf16>
    %44 = arith.extf %43 : vector<1x4x4x16xbf16> to vector<1x4x4x16xf32>
    %cst_9 = arith.constant 0.000000e+00 : f32
    %45 = vector.broadcast %cst_9 : f32 to vector<1x4x4x16xf32>
    %46 = arith.maximumf %44, %45 : vector<1x4x4x16xf32>
    %47 = vector.extract_strided_slice %1 {offsets = [4, 0], sizes = [1, 16], strides = [1, 1]} : vector<9x16xf32> to vector<1x16xf32>
    %48 = vector.shape_cast %47 : vector<1x16xf32> to vector<16xf32>
    %49 = vector.shape_cast %48 : vector<16xf32> to vector<1x1x1x16xf32>
    %50 = vector.broadcast %49 : vector<1x1x1x16xf32> to vector<1x4x4x16xf32>
    %51 = arith.mulf %46, %50 : vector<1x4x4x16xf32>
    %52 = arith.addf %42, %51 : vector<1x4x4x16xf32>
    %53 = vector.extract_strided_slice %0 {offsets = [0, 1, 2, 0], sizes = [1, 4, 4, 16], strides = [1, 1, 1, 1]} : vector<1x6x6x16xbf16> to vector<1x4x4x16xbf16>
    %54 = arith.extf %53 : vector<1x4x4x16xbf16> to vector<1x4x4x16xf32>
    %cst_10 = arith.constant 0.000000e+00 : f32
    %55 = vector.broadcast %cst_10 : f32 to vector<1x4x4x16xf32>
    %56 = arith.maximumf %54, %55 : vector<1x4x4x16xf32>
    %57 = vector.extract_strided_slice %1 {offsets = [5, 0], sizes = [1, 16], strides = [1, 1]} : vector<9x16xf32> to vector<1x16xf32>
    %58 = vector.shape_cast %57 : vector<1x16xf32> to vector<16xf32>
    %59 = vector.shape_cast %58 : vector<16xf32> to vector<1x1x1x16xf32>
    %60 = vector.broadcast %59 : vector<1x1x1x16xf32> to vector<1x4x4x16xf32>
    %61 = arith.mulf %56, %60 : vector<1x4x4x16xf32>
    %62 = arith.addf %52, %61 : vector<1x4x4x16xf32>
    %63 = vector.extract_strided_slice %0 {offsets = [0, 2, 0, 0], sizes = [1, 4, 4, 16], strides = [1, 1, 1, 1]} : vector<1x6x6x16xbf16> to vector<1x4x4x16xbf16>
    %64 = arith.extf %63 : vector<1x4x4x16xbf16> to vector<1x4x4x16xf32>
    %cst_11 = arith.constant 0.000000e+00 : f32
    %65 = vector.broadcast %cst_11 : f32 to vector<1x4x4x16xf32>
    %66 = arith.maximumf %64, %65 : vector<1x4x4x16xf32>
    %67 = vector.extract_strided_slice %1 {offsets = [6, 0], sizes = [1, 16], strides = [1, 1]} : vector<9x16xf32> to vector<1x16xf32>
    %68 = vector.shape_cast %67 : vector<1x16xf32> to vector<16xf32>
    %69 = vector.shape_cast %68 : vector<16xf32> to vector<1x1x1x16xf32>
    %70 = vector.broadcast %69 : vector<1x1x1x16xf32> to vector<1x4x4x16xf32>
    %71 = arith.mulf %66, %70 : vector<1x4x4x16xf32>
    %72 = arith.addf %62, %71 : vector<1x4x4x16xf32>
    %73 = vector.extract_strided_slice %0 {offsets = [0, 2, 1, 0], sizes = [1, 4, 4, 16], strides = [1, 1, 1, 1]} : vector<1x6x6x16xbf16> to vector<1x4x4x16xbf16>
    %74 = arith.extf %73 : vector<1x4x4x16xbf16> to vector<1x4x4x16xf32>
    %cst_12 = arith.constant 0.000000e+00 : f32
    %75 = vector.broadcast %cst_12 : f32 to vector<1x4x4x16xf32>
    %76 = arith.maximumf %74, %75 : vector<1x4x4x16xf32>
    %77 = vector.extract_strided_slice %1 {offsets = [7, 0], sizes = [1, 16], strides = [1, 1]} : vector<9x16xf32> to vector<1x16xf32>
    %78 = vector.shape_cast %77 : vector<1x16xf32> to vector<16xf32>
    %79 = vector.shape_cast %78 : vector<16xf32> to vector<1x1x1x16xf32>
    %80 = vector.broadcast %79 : vector<1x1x1x16xf32> to vector<1x4x4x16xf32>
    %81 = arith.mulf %76, %80 : vector<1x4x4x16xf32>
    %82 = arith.addf %72, %81 : vector<1x4x4x16xf32>
    %83 = vector.extract_strided_slice %0 {offsets = [0, 2, 2, 0], sizes = [1, 4, 4, 16], strides = [1, 1, 1, 1]} : vector<1x6x6x16xbf16> to vector<1x4x4x16xbf16>
    %84 = arith.extf %83 : vector<1x4x4x16xbf16> to vector<1x4x4x16xf32>
    %cst_13 = arith.constant 0.000000e+00 : f32
    %85 = vector.broadcast %cst_13 : f32 to vector<1x4x4x16xf32>
    %86 = arith.maximumf %84, %85 : vector<1x4x4x16xf32>
    %87 = vector.extract_strided_slice %1 {offsets = [8, 0], sizes = [1, 16], strides = [1, 1]} : vector<9x16xf32> to vector<1x16xf32>
    %88 = vector.shape_cast %87 : vector<1x16xf32> to vector<16xf32>
    %89 = vector.shape_cast %88 : vector<16xf32> to vector<1x1x1x16xf32>
    %90 = vector.broadcast %89 : vector<1x1x1x16xf32> to vector<1x4x4x16xf32>
    %91 = arith.mulf %86, %90 : vector<1x4x4x16xf32>
    %92 = arith.addf %82, %91 : vector<1x4x4x16xf32>
    %c0_14 = arith.constant 0 : index
    %c0_15 = arith.constant 0 : index
    %93 = vector.load %arg3[%c0_14, %c0_15] : memref<1x16xf32, #tpu.memory_space<vmem>>, vector<1x16xf32>
    %94 = vector.shape_cast %93 : vector<1x16xf32> to vector<1x1x1x16xf32>
    %95 = vector.broadcast %94 : vector<1x1x1x16xf32> to vector<1x4x4x16xf32>
    %96 = arith.addf %92, %95 : vector<1x4x4x16xf32>
    %97 = vector.shape_cast %96 : vector<1x4x4x16xf32> to vector<16x16xf32>
    %98 = arith.truncf %97 : vector<16x16xf32> to vector<16x16xbf16>
    %c0_16 = arith.constant 0 : index
    %c0_17 = arith.constant 0 : index
    %99 = vector.load %arg4[%c0_16, %c0_17] : memref<16x128xbf16, #tpu.memory_space<vmem>>, vector<16x128xbf16>
    %cst_18 = arith.constant dense<0.000000e+00> : vector<16x128xf32>
    %100 = tpu.matmul %98, %99, %cst_18 {dimension_numbers = #tpu.dot_dimension_numbers<[1], [0], [0], [1], [0, 0, 1, 1], [], []>} : vector<16x16xbf16>, vector<16x128xbf16>, vector<16x128xf32> -> vector<16x128xf32>
    %c0_19 = arith.constant 0 : index
    %c0_20 = arith.constant 0 : index
    %101 = vector.load %arg5[%c0_19, %c0_20] : memref<1x128xf32, #tpu.memory_space<vmem>>, vector<1x128xf32>
    %102 = vector.broadcast %101 : vector<1x128xf32> to vector<16x128xf32>
    %103 = arith.addf %100, %102 : vector<16x128xf32>
    %cst_21 = arith.constant 0.000000e+00 : f32
    %104 = vector.broadcast %cst_21 : f32 to vector<16x128xf32>
    %105 = arith.maximumf %103, %104 : vector<16x128xf32>
    %106 = vector.shape_cast %105 : vector<16x128xf32> to vector<1x4x4x128xf32>
    %107 = arith.truncf %106 : vector<1x4x4x128xf32> to vector<1x4x4x128xbf16>
    %c0_22 = arith.constant 0 : index
    %c0_23 = arith.constant 0 : index
    %c0_24 = arith.constant 0 : index
    %c0_25 = arith.constant 0 : index
    %108 = vector.load %arg6[%c0_22, %c0_23, %c0_24, %c0_25] : memref<1x4x4x128xbf16, #tpu.memory_space<vmem>>, vector<1x4x4x128xbf16>
    tpu.vector_store %arg6[%c0_22, %c0_23, %c0_24, %c0_25], %107 {strides = array<i32>} : memref<1x4x4x128xbf16, #tpu.memory_space<vmem>>, vector<1x4x4x128xbf16>,
    return
  }
  func.func @transform_0(%arg0: i32) -> (i32, i32, i32, i32) {
    %c0_i32 = arith.constant 0 : i32
    %c0_i32_0 = arith.constant 0 : i32
    %c0_i32_1 = arith.constant 0 : i32
    %c0_i32_2 = arith.constant 0 : i32
    return %arg0, %c0_i32, %c0_i32_0, %c0_i32_1 : i32, i32, i32, i32
  }
  func.func @transform_1(%arg0: i32) -> (i32, i32) {
    %c0_i32 = arith.constant 0 : i32
    %c0_i32_0 = arith.constant 0 : i32
    %c0_i32_1 = arith.constant 0 : i32
    return %c0_i32, %c0_i32_0 : i32, i32
  }
  func.func @transform_2(%arg0: i32) -> (i32, i32) {
    %c0_i32 = arith.constant 0 : i32
    %c0_i32_0 = arith.constant 0 : i32
    %c0_i32_1 = arith.constant 0 : i32
    return %c0_i32, %c0_i32_0 : i32, i32
  }
  func.func @transform_3(%arg0: i32) -> (i32, i32) {
    %c0_i32 = arith.constant 0 : i32
    %c0_i32_0 = arith.constant 0 : i32
    %c0_i32_1 = arith.constant 0 : i32
    return %c0_i32, %c0_i32_0 : i32, i32
  }
  func.func @transform_4(%arg0: i32) -> (i32, i32) {
    %c0_i32 = arith.constant 0 : i32
    %c0_i32_0 = arith.constant 0 : i32
    %c0_i32_1 = arith.constant 0 : i32
    return %c0_i32, %c0_i32_0 : i32, i32
  }
  func.func @transform_5(%arg0: i32) -> (i32, i32, i32, i32) {
    %c0_i32 = arith.constant 0 : i32
    %c0_i32_0 = arith.constant 0 : i32
    %c0_i32_1 = arith.constant 0 : i32
    %c0_i32_2 = arith.constant 0 : i32
    return %arg0, %c0_i32, %c0_i32_0, %c0_i32_1 : i32, i32, i32, i32
  }
}

module attributes {stable_mosaic.version = 11 : i64} {
  func.func @_sepconv_kernel(%arg0: i32, %arg1: memref<1x6x6x32xbf16, #tpu.memory_space<vmem>>, %arg2: memref<9x32xf32, #tpu.memory_space<vmem>>, %arg3: memref<1x32xf32, #tpu.memory_space<vmem>>, %arg4: memref<32x128xbf16, #tpu.memory_space<vmem>>, %arg5: memref<1x128xf32, #tpu.memory_space<vmem>>, %arg6: memref<1x4x4x128xbf16, #tpu.memory_space<vmem>>) attributes {dimension_semantics = [#tpu.dimension_semantics<parallel>], iteration_bounds = array<i64: 2>, scalar_prefetch = 0 : i64, scratch_operands = 0 : i64, tpu.core_type = #tpu.core_type<tc>, window_params = [{transform_indices = @transform_0, window_bounds = array<i64: 1, 6, 6, 32>}, {pipeline_mode = #tpu.pipeline_mode<synchronous>, transform_indices = @transform_1, window_bounds = array<i64: 9, 32>}, {pipeline_mode = #tpu.pipeline_mode<synchronous>, transform_indices = @transform_2, window_bounds = array<i64: 1, 32>}, {pipeline_mode = #tpu.pipeline_mode<synchronous>, transform_indices = @transform_3, window_bounds = array<i64: 32, 128>}, {pipeline_mode = #tpu.pipeline_mode<synchronous>, transform_indices = @transform_4, window_bounds = array<i64: 1, 128>}, {transform_indices = @transform_5, window_bounds = array<i64: 1, 4, 4, 128>}]} {
    %c0 = arith.constant 0 : index
    %c0_0 = arith.constant 0 : index
    %c0_1 = arith.constant 0 : index
    %c0_2 = arith.constant 0 : index
    %0 = vector.load %arg1[%c0, %c0_0, %c0_1, %c0_2] : memref<1x6x6x32xbf16, #tpu.memory_space<vmem>>, vector<1x6x6x32xbf16>
    %c0_3 = arith.constant 0 : index
    %c0_4 = arith.constant 0 : index
    %1 = vector.load %arg2[%c0_3, %c0_4] : memref<9x32xf32, #tpu.memory_space<vmem>>, vector<9x32xf32>
    %cst = arith.constant 0.000000e+00 : f32
    %2 = vector.broadcast %cst : f32 to vector<1x4x4x32xf32>
    %3 = vector.extract_strided_slice %0 {offsets = [0, 0, 0, 0], sizes = [1, 4, 4, 32], strides = [1, 1, 1, 1]} : vector<1x6x6x32xbf16> to vector<1x4x4x32xbf16>
    %4 = arith.extf %3 : vector<1x4x4x32xbf16> to vector<1x4x4x32xf32>
    %5 = vector.extract_strided_slice %1 {offsets = [0, 0], sizes = [1, 32], strides = [1, 1]} : vector<9x32xf32> to vector<1x32xf32>
    %6 = vector.shape_cast %5 : vector<1x32xf32> to vector<32xf32>
    %7 = vector.shape_cast %6 : vector<32xf32> to vector<1x1x1x32xf32>
    %8 = vector.broadcast %7 : vector<1x1x1x32xf32> to vector<1x4x4x32xf32>
    %9 = arith.mulf %4, %8 : vector<1x4x4x32xf32>
    %10 = arith.addf %2, %9 : vector<1x4x4x32xf32>
    %11 = vector.extract_strided_slice %0 {offsets = [0, 0, 1, 0], sizes = [1, 4, 4, 32], strides = [1, 1, 1, 1]} : vector<1x6x6x32xbf16> to vector<1x4x4x32xbf16>
    %12 = arith.extf %11 : vector<1x4x4x32xbf16> to vector<1x4x4x32xf32>
    %13 = vector.extract_strided_slice %1 {offsets = [1, 0], sizes = [1, 32], strides = [1, 1]} : vector<9x32xf32> to vector<1x32xf32>
    %14 = vector.shape_cast %13 : vector<1x32xf32> to vector<32xf32>
    %15 = vector.shape_cast %14 : vector<32xf32> to vector<1x1x1x32xf32>
    %16 = vector.broadcast %15 : vector<1x1x1x32xf32> to vector<1x4x4x32xf32>
    %17 = arith.mulf %12, %16 : vector<1x4x4x32xf32>
    %18 = arith.addf %10, %17 : vector<1x4x4x32xf32>
    %19 = vector.extract_strided_slice %0 {offsets = [0, 0, 2, 0], sizes = [1, 4, 4, 32], strides = [1, 1, 1, 1]} : vector<1x6x6x32xbf16> to vector<1x4x4x32xbf16>
    %20 = arith.extf %19 : vector<1x4x4x32xbf16> to vector<1x4x4x32xf32>
    %21 = vector.extract_strided_slice %1 {offsets = [2, 0], sizes = [1, 32], strides = [1, 1]} : vector<9x32xf32> to vector<1x32xf32>
    %22 = vector.shape_cast %21 : vector<1x32xf32> to vector<32xf32>
    %23 = vector.shape_cast %22 : vector<32xf32> to vector<1x1x1x32xf32>
    %24 = vector.broadcast %23 : vector<1x1x1x32xf32> to vector<1x4x4x32xf32>
    %25 = arith.mulf %20, %24 : vector<1x4x4x32xf32>
    %26 = arith.addf %18, %25 : vector<1x4x4x32xf32>
    %27 = vector.extract_strided_slice %0 {offsets = [0, 1, 0, 0], sizes = [1, 4, 4, 32], strides = [1, 1, 1, 1]} : vector<1x6x6x32xbf16> to vector<1x4x4x32xbf16>
    %28 = arith.extf %27 : vector<1x4x4x32xbf16> to vector<1x4x4x32xf32>
    %29 = vector.extract_strided_slice %1 {offsets = [3, 0], sizes = [1, 32], strides = [1, 1]} : vector<9x32xf32> to vector<1x32xf32>
    %30 = vector.shape_cast %29 : vector<1x32xf32> to vector<32xf32>
    %31 = vector.shape_cast %30 : vector<32xf32> to vector<1x1x1x32xf32>
    %32 = vector.broadcast %31 : vector<1x1x1x32xf32> to vector<1x4x4x32xf32>
    %33 = arith.mulf %28, %32 : vector<1x4x4x32xf32>
    %34 = arith.addf %26, %33 : vector<1x4x4x32xf32>
    %35 = vector.extract_strided_slice %0 {offsets = [0, 1, 1, 0], sizes = [1, 4, 4, 32], strides = [1, 1, 1, 1]} : vector<1x6x6x32xbf16> to vector<1x4x4x32xbf16>
    %36 = arith.extf %35 : vector<1x4x4x32xbf16> to vector<1x4x4x32xf32>
    %37 = vector.extract_strided_slice %1 {offsets = [4, 0], sizes = [1, 32], strides = [1, 1]} : vector<9x32xf32> to vector<1x32xf32>
    %38 = vector.shape_cast %37 : vector<1x32xf32> to vector<32xf32>
    %39 = vector.shape_cast %38 : vector<32xf32> to vector<1x1x1x32xf32>
    %40 = vector.broadcast %39 : vector<1x1x1x32xf32> to vector<1x4x4x32xf32>
    %41 = arith.mulf %36, %40 : vector<1x4x4x32xf32>
    %42 = arith.addf %34, %41 : vector<1x4x4x32xf32>
    %43 = vector.extract_strided_slice %0 {offsets = [0, 1, 2, 0], sizes = [1, 4, 4, 32], strides = [1, 1, 1, 1]} : vector<1x6x6x32xbf16> to vector<1x4x4x32xbf16>
    %44 = arith.extf %43 : vector<1x4x4x32xbf16> to vector<1x4x4x32xf32>
    %45 = vector.extract_strided_slice %1 {offsets = [5, 0], sizes = [1, 32], strides = [1, 1]} : vector<9x32xf32> to vector<1x32xf32>
    %46 = vector.shape_cast %45 : vector<1x32xf32> to vector<32xf32>
    %47 = vector.shape_cast %46 : vector<32xf32> to vector<1x1x1x32xf32>
    %48 = vector.broadcast %47 : vector<1x1x1x32xf32> to vector<1x4x4x32xf32>
    %49 = arith.mulf %44, %48 : vector<1x4x4x32xf32>
    %50 = arith.addf %42, %49 : vector<1x4x4x32xf32>
    %51 = vector.extract_strided_slice %0 {offsets = [0, 2, 0, 0], sizes = [1, 4, 4, 32], strides = [1, 1, 1, 1]} : vector<1x6x6x32xbf16> to vector<1x4x4x32xbf16>
    %52 = arith.extf %51 : vector<1x4x4x32xbf16> to vector<1x4x4x32xf32>
    %53 = vector.extract_strided_slice %1 {offsets = [6, 0], sizes = [1, 32], strides = [1, 1]} : vector<9x32xf32> to vector<1x32xf32>
    %54 = vector.shape_cast %53 : vector<1x32xf32> to vector<32xf32>
    %55 = vector.shape_cast %54 : vector<32xf32> to vector<1x1x1x32xf32>
    %56 = vector.broadcast %55 : vector<1x1x1x32xf32> to vector<1x4x4x32xf32>
    %57 = arith.mulf %52, %56 : vector<1x4x4x32xf32>
    %58 = arith.addf %50, %57 : vector<1x4x4x32xf32>
    %59 = vector.extract_strided_slice %0 {offsets = [0, 2, 1, 0], sizes = [1, 4, 4, 32], strides = [1, 1, 1, 1]} : vector<1x6x6x32xbf16> to vector<1x4x4x32xbf16>
    %60 = arith.extf %59 : vector<1x4x4x32xbf16> to vector<1x4x4x32xf32>
    %61 = vector.extract_strided_slice %1 {offsets = [7, 0], sizes = [1, 32], strides = [1, 1]} : vector<9x32xf32> to vector<1x32xf32>
    %62 = vector.shape_cast %61 : vector<1x32xf32> to vector<32xf32>
    %63 = vector.shape_cast %62 : vector<32xf32> to vector<1x1x1x32xf32>
    %64 = vector.broadcast %63 : vector<1x1x1x32xf32> to vector<1x4x4x32xf32>
    %65 = arith.mulf %60, %64 : vector<1x4x4x32xf32>
    %66 = arith.addf %58, %65 : vector<1x4x4x32xf32>
    %67 = vector.extract_strided_slice %0 {offsets = [0, 2, 2, 0], sizes = [1, 4, 4, 32], strides = [1, 1, 1, 1]} : vector<1x6x6x32xbf16> to vector<1x4x4x32xbf16>
    %68 = arith.extf %67 : vector<1x4x4x32xbf16> to vector<1x4x4x32xf32>
    %69 = vector.extract_strided_slice %1 {offsets = [8, 0], sizes = [1, 32], strides = [1, 1]} : vector<9x32xf32> to vector<1x32xf32>
    %70 = vector.shape_cast %69 : vector<1x32xf32> to vector<32xf32>
    %71 = vector.shape_cast %70 : vector<32xf32> to vector<1x1x1x32xf32>
    %72 = vector.broadcast %71 : vector<1x1x1x32xf32> to vector<1x4x4x32xf32>
    %73 = arith.mulf %68, %72 : vector<1x4x4x32xf32>
    %74 = arith.addf %66, %73 : vector<1x4x4x32xf32>
    %c0_5 = arith.constant 0 : index
    %c0_6 = arith.constant 0 : index
    %75 = vector.load %arg3[%c0_5, %c0_6] : memref<1x32xf32, #tpu.memory_space<vmem>>, vector<1x32xf32>
    %76 = vector.shape_cast %75 : vector<1x32xf32> to vector<1x1x1x32xf32>
    %77 = vector.broadcast %76 : vector<1x1x1x32xf32> to vector<1x4x4x32xf32>
    %78 = arith.addf %74, %77 : vector<1x4x4x32xf32>
    %79 = vector.shape_cast %78 : vector<1x4x4x32xf32> to vector<16x32xf32>
    %80 = arith.truncf %79 : vector<16x32xf32> to vector<16x32xbf16>
    %c0_7 = arith.constant 0 : index
    %c0_8 = arith.constant 0 : index
    %81 = vector.load %arg4[%c0_7, %c0_8] : memref<32x128xbf16, #tpu.memory_space<vmem>>, vector<32x128xbf16>
    %cst_9 = arith.constant dense<0.000000e+00> : vector<16x128xf32>
    %82 = tpu.matmul %80, %81, %cst_9 {dimension_numbers = #tpu.dot_dimension_numbers<[1], [0], [0], [1], [0, 0, 1, 1], [], []>} : vector<16x32xbf16>, vector<32x128xbf16>, vector<16x128xf32> -> vector<16x128xf32>
    %c0_10 = arith.constant 0 : index
    %c0_11 = arith.constant 0 : index
    %83 = vector.load %arg5[%c0_10, %c0_11] : memref<1x128xf32, #tpu.memory_space<vmem>>, vector<1x128xf32>
    %84 = vector.broadcast %83 : vector<1x128xf32> to vector<16x128xf32>
    %85 = arith.addf %82, %84 : vector<16x128xf32>
    %cst_12 = arith.constant 0.000000e+00 : f32
    %86 = vector.broadcast %cst_12 : f32 to vector<16x128xf32>
    %87 = arith.maximumf %85, %86 : vector<16x128xf32>
    %88 = vector.shape_cast %87 : vector<16x128xf32> to vector<1x4x4x128xf32>
    %89 = arith.truncf %88 : vector<1x4x4x128xf32> to vector<1x4x4x128xbf16>
    %c0_13 = arith.constant 0 : index
    %c0_14 = arith.constant 0 : index
    %c0_15 = arith.constant 0 : index
    %c0_16 = arith.constant 0 : index
    %90 = vector.load %arg6[%c0_13, %c0_14, %c0_15, %c0_16] : memref<1x4x4x128xbf16, #tpu.memory_space<vmem>>, vector<1x4x4x128xbf16>
    tpu.vector_store %arg6[%c0_13, %c0_14, %c0_15, %c0_16], %89 {strides = array<i32>} : memref<1x4x4x128xbf16, #tpu.memory_space<vmem>>, vector<1x4x4x128xbf16>,
    return
  }
  func.func @transform_0(%arg0: i32) -> (i32, i32, i32, i32) {
    %c0_i32 = arith.constant 0 : i32
    %c0_i32_0 = arith.constant 0 : i32
    %c0_i32_1 = arith.constant 0 : i32
    %c0_i32_2 = arith.constant 0 : i32
    return %arg0, %c0_i32, %c0_i32_0, %c0_i32_1 : i32, i32, i32, i32
  }
  func.func @transform_1(%arg0: i32) -> (i32, i32) {
    %c0_i32 = arith.constant 0 : i32
    %c0_i32_0 = arith.constant 0 : i32
    %c0_i32_1 = arith.constant 0 : i32
    return %c0_i32, %c0_i32_0 : i32, i32
  }
  func.func @transform_2(%arg0: i32) -> (i32, i32) {
    %c0_i32 = arith.constant 0 : i32
    %c0_i32_0 = arith.constant 0 : i32
    %c0_i32_1 = arith.constant 0 : i32
    return %c0_i32, %c0_i32_0 : i32, i32
  }
  func.func @transform_3(%arg0: i32) -> (i32, i32) {
    %c0_i32 = arith.constant 0 : i32
    %c0_i32_0 = arith.constant 0 : i32
    %c0_i32_1 = arith.constant 0 : i32
    return %c0_i32, %c0_i32_0 : i32, i32
  }
  func.func @transform_4(%arg0: i32) -> (i32, i32) {
    %c0_i32 = arith.constant 0 : i32
    %c0_i32_0 = arith.constant 0 : i32
    %c0_i32_1 = arith.constant 0 : i32
    return %c0_i32, %c0_i32_0 : i32, i32
  }
  func.func @transform_5(%arg0: i32) -> (i32, i32, i32, i32) {
    %c0_i32 = arith.constant 0 : i32
    %c0_i32_0 = arith.constant 0 : i32
    %c0_i32_1 = arith.constant 0 : i32
    %c0_i32_2 = arith.constant 0 : i32
    return %arg0, %c0_i32, %c0_i32_0, %c0_i32_1 : i32, i32, i32, i32
  }
}

module attributes {stable_mosaic.version = 11 : i64} {
  func.func @_matmul_bias_act_kernel(%arg0: i32, %arg1: memref<8x16xbf16, #tpu.memory_space<vmem>>, %arg2: memref<16x128xbf16, #tpu.memory_space<vmem>>, %arg3: memref<1x128xf32, #tpu.memory_space<vmem>>, %arg4: memref<8x128xbf16, #tpu.memory_space<vmem>>) attributes {dimension_semantics = [#tpu.dimension_semantics<parallel>], iteration_bounds = array<i64: 1>, scalar_prefetch = 0 : i64, scratch_operands = 0 : i64, tpu.core_type = #tpu.core_type<tc>, window_params = [{transform_indices = @transform_0, window_bounds = array<i64: 8, 16>}, {pipeline_mode = #tpu.pipeline_mode<synchronous>, transform_indices = @transform_1, window_bounds = array<i64: 16, 128>}, {pipeline_mode = #tpu.pipeline_mode<synchronous>, transform_indices = @transform_2, window_bounds = array<i64: 1, 128>}, {transform_indices = @transform_3, window_bounds = array<i64: 8, 128>}]} {
    %c0 = arith.constant 0 : index
    %c0_0 = arith.constant 0 : index
    %0 = vector.load %arg1[%c0, %c0_0] : memref<8x16xbf16, #tpu.memory_space<vmem>>, vector<8x16xbf16>
    %c0_1 = arith.constant 0 : index
    %c0_2 = arith.constant 0 : index
    %1 = vector.load %arg2[%c0_1, %c0_2] : memref<16x128xbf16, #tpu.memory_space<vmem>>, vector<16x128xbf16>
    %cst = arith.constant dense<0.000000e+00> : vector<8x128xf32>
    %2 = tpu.matmul %0, %1, %cst {dimension_numbers = #tpu.dot_dimension_numbers<[1], [0], [0], [1], [0, 0, 1, 1], [], []>} : vector<8x16xbf16>, vector<16x128xbf16>, vector<8x128xf32> -> vector<8x128xf32>
    %c0_3 = arith.constant 0 : index
    %c0_4 = arith.constant 0 : index
    %3 = vector.load %arg3[%c0_3, %c0_4] : memref<1x128xf32, #tpu.memory_space<vmem>>, vector<1x128xf32>
    %4 = vector.broadcast %3 : vector<1x128xf32> to vector<8x128xf32>
    %5 = arith.addf %2, %4 : vector<8x128xf32>
    %6 = arith.truncf %5 : vector<8x128xf32> to vector<8x128xbf16>
    %c0_5 = arith.constant 0 : index
    %c0_6 = arith.constant 0 : index
    %7 = vector.load %arg4[%c0_5, %c0_6] : memref<8x128xbf16, #tpu.memory_space<vmem>>, vector<8x128xbf16>
    tpu.vector_store %arg4[%c0_5, %c0_6], %6 {strides = array<i32>} : memref<8x128xbf16, #tpu.memory_space<vmem>>, vector<8x128xbf16>,
    return
  }
  func.func @transform_0(%arg0: i32) -> (i32, i32) {
    %c0_i32 = arith.constant 0 : i32
    %c0_i32_0 = arith.constant 0 : i32
    return %arg0, %c0_i32 : i32, i32
  }
  func.func @transform_1(%arg0: i32) -> (i32, i32) {
    %c0_i32 = arith.constant 0 : i32
    %c0_i32_0 = arith.constant 0 : i32
    %c0_i32_1 = arith.constant 0 : i32
    return %c0_i32, %c0_i32_0 : i32, i32
  }
  func.func @transform_2(%arg0: i32) -> (i32, i32) {
    %c0_i32 = arith.constant 0 : i32
    %c0_i32_0 = arith.constant 0 : i32
    %c0_i32_1 = arith.constant 0 : i32
    return %c0_i32, %c0_i32_0 : i32, i32
  }
  func.func @transform_3(%arg0: i32) -> (i32, i32) {
    %c0_i32 = arith.constant 0 : i32
    %c0_i32_0 = arith.constant 0 : i32
    return %arg0, %c0_i32 : i32, i32
  }
}

module attributes {stable_mosaic.version = 11 : i64} {
  func.func @_maxpool_add_kernel(%arg0: i32, %arg1: memref<1x3x3x32xbf16, #tpu.memory_space<vmem>>, %arg2: memref<1x3x3x32xbf16, #tpu.memory_space<vmem>>, %arg3: memref<1x3x3x32xbf16, #tpu.memory_space<vmem>>, %arg4: memref<1x3x3x32xbf16, #tpu.memory_space<vmem>>, %arg5: memref<1x2x2x32xbf16, #tpu.memory_space<vmem>>, %arg6: memref<1x2x2x32xbf16, #tpu.memory_space<vmem>>) attributes {dimension_semantics = [#tpu.dimension_semantics<parallel>], iteration_bounds = array<i64: 2>, scalar_prefetch = 0 : i64, scratch_operands = 0 : i64, tpu.core_type = #tpu.core_type<tc>, window_params = [{transform_indices = @transform_0, window_bounds = array<i64: 1, 3, 3, 32>}, {transform_indices = @transform_1, window_bounds = array<i64: 1, 3, 3, 32>}, {transform_indices = @transform_2, window_bounds = array<i64: 1, 3, 3, 32>}, {transform_indices = @transform_3, window_bounds = array<i64: 1, 3, 3, 32>}, {transform_indices = @transform_4, window_bounds = array<i64: 1, 2, 2, 32>}, {transform_indices = @transform_5, window_bounds = array<i64: 1, 2, 2, 32>}]} {
    %c0 = arith.constant 0 : index
    %c0_0 = arith.constant 0 : index
    %c0_1 = arith.constant 0 : index
    %c0_2 = arith.constant 0 : index
    %0 = vector.load %arg1[%c0, %c0_0, %c0_1, %c0_2] : memref<1x3x3x32xbf16, #tpu.memory_space<vmem>>, vector<1x3x3x32xbf16>
    %c0_3 = arith.constant 0 : index
    %c0_4 = arith.constant 0 : index
    %c0_5 = arith.constant 0 : index
    %c0_6 = arith.constant 0 : index
    %1 = vector.load %arg2[%c0_3, %c0_4, %c0_5, %c0_6] : memref<1x3x3x32xbf16, #tpu.memory_space<vmem>>, vector<1x3x3x32xbf16>
    %c0_7 = arith.constant 0 : index
    %c0_8 = arith.constant 0 : index
    %c0_9 = arith.constant 0 : index
    %c0_10 = arith.constant 0 : index
    %2 = vector.load %arg3[%c0_7, %c0_8, %c0_9, %c0_10] : memref<1x3x3x32xbf16, #tpu.memory_space<vmem>>, vector<1x3x3x32xbf16>
    %c0_11 = arith.constant 0 : index
    %c0_12 = arith.constant 0 : index
    %c0_13 = arith.constant 0 : index
    %c0_14 = arith.constant 0 : index
    %3 = vector.load %arg4[%c0_11, %c0_12, %c0_13, %c0_14] : memref<1x3x3x32xbf16, #tpu.memory_space<vmem>>, vector<1x3x3x32xbf16>
    %4 = vector.extract_strided_slice %0 {offsets = [0, 0, 0, 0], sizes = [1, 2, 2, 32], strides = [1, 1, 1, 1]} : vector<1x3x3x32xbf16> to vector<1x2x2x32xbf16>
    %5 = arith.extf %4 : vector<1x2x2x32xbf16> to vector<1x2x2x32xf32>
    %6 = vector.extract_strided_slice %1 {offsets = [0, 0, 0, 0], sizes = [1, 2, 2, 32], strides = [1, 1, 1, 1]} : vector<1x3x3x32xbf16> to vector<1x2x2x32xbf16>
    %7 = arith.extf %6 : vector<1x2x2x32xbf16> to vector<1x2x2x32xf32>
    %8 = arith.maximumf %5, %7 : vector<1x2x2x32xf32>
    %9 = vector.extract_strided_slice %0 {offsets = [0, 0, 1, 0], sizes = [1, 2, 2, 32], strides = [1, 1, 1, 1]} : vector<1x3x3x32xbf16> to vector<1x2x2x32xbf16>
    %10 = arith.extf %9 : vector<1x2x2x32xbf16> to vector<1x2x2x32xf32>
    %11 = arith.maximumf %8, %10 : vector<1x2x2x32xf32>
    %12 = vector.extract_strided_slice %2 {offsets = [0, 0, 0, 0], sizes = [1, 2, 2, 32], strides = [1, 1, 1, 1]} : vector<1x3x3x32xbf16> to vector<1x2x2x32xbf16>
    %13 = arith.extf %12 : vector<1x2x2x32xbf16> to vector<1x2x2x32xf32>
    %14 = arith.maximumf %11, %13 : vector<1x2x2x32xf32>
    %15 = vector.extract_strided_slice %3 {offsets = [0, 0, 0, 0], sizes = [1, 2, 2, 32], strides = [1, 1, 1, 1]} : vector<1x3x3x32xbf16> to vector<1x2x2x32xbf16>
    %16 = arith.extf %15 : vector<1x2x2x32xbf16> to vector<1x2x2x32xf32>
    %17 = arith.maximumf %14, %16 : vector<1x2x2x32xf32>
    %18 = vector.extract_strided_slice %2 {offsets = [0, 0, 1, 0], sizes = [1, 2, 2, 32], strides = [1, 1, 1, 1]} : vector<1x3x3x32xbf16> to vector<1x2x2x32xbf16>
    %19 = arith.extf %18 : vector<1x2x2x32xbf16> to vector<1x2x2x32xf32>
    %20 = arith.maximumf %17, %19 : vector<1x2x2x32xf32>
    %21 = vector.extract_strided_slice %0 {offsets = [0, 1, 0, 0], sizes = [1, 2, 2, 32], strides = [1, 1, 1, 1]} : vector<1x3x3x32xbf16> to vector<1x2x2x32xbf16>
    %22 = arith.extf %21 : vector<1x2x2x32xbf16> to vector<1x2x2x32xf32>
    %23 = arith.maximumf %20, %22 : vector<1x2x2x32xf32>
    %24 = vector.extract_strided_slice %1 {offsets = [0, 1, 0, 0], sizes = [1, 2, 2, 32], strides = [1, 1, 1, 1]} : vector<1x3x3x32xbf16> to vector<1x2x2x32xbf16>
    %25 = arith.extf %24 : vector<1x2x2x32xbf16> to vector<1x2x2x32xf32>
    %26 = arith.maximumf %23, %25 : vector<1x2x2x32xf32>
    %27 = vector.extract_strided_slice %0 {offsets = [0, 1, 1, 0], sizes = [1, 2, 2, 32], strides = [1, 1, 1, 1]} : vector<1x3x3x32xbf16> to vector<1x2x2x32xbf16>
    %28 = arith.extf %27 : vector<1x2x2x32xbf16> to vector<1x2x2x32xf32>
    %29 = arith.maximumf %26, %28 : vector<1x2x2x32xf32>
    %c0_15 = arith.constant 0 : index
    %c0_16 = arith.constant 0 : index
    %c0_17 = arith.constant 0 : index
    %c0_18 = arith.constant 0 : index
    %30 = vector.load %arg5[%c0_15, %c0_16, %c0_17, %c0_18] : memref<1x2x2x32xbf16, #tpu.memory_space<vmem>>, vector<1x2x2x32xbf16>
    %31 = arith.extf %30 : vector<1x2x2x32xbf16> to vector<1x2x2x32xf32>
    %32 = arith.addf %29, %31 : vector<1x2x2x32xf32>
    %33 = arith.truncf %32 : vector<1x2x2x32xf32> to vector<1x2x2x32xbf16>
    %c0_19 = arith.constant 0 : index
    %c0_20 = arith.constant 0 : index
    %c0_21 = arith.constant 0 : index
    %c0_22 = arith.constant 0 : index
    %34 = vector.load %arg6[%c0_19, %c0_20, %c0_21, %c0_22] : memref<1x2x2x32xbf16, #tpu.memory_space<vmem>>, vector<1x2x2x32xbf16>
    tpu.vector_store %arg6[%c0_19, %c0_20, %c0_21, %c0_22], %33 {strides = array<i32>} : memref<1x2x2x32xbf16, #tpu.memory_space<vmem>>, vector<1x2x2x32xbf16>,
    return
  }
  func.func @transform_0(%arg0: i32) -> (i32, i32, i32, i32) {
    %c0_i32 = arith.constant 0 : i32
    %c0_i32_0 = arith.constant 0 : i32
    %c0_i32_1 = arith.constant 0 : i32
    %c0_i32_2 = arith.constant 0 : i32
    return %arg0, %c0_i32, %c0_i32_0, %c0_i32_1 : i32, i32, i32, i32
  }
  func.func @transform_1(%arg0: i32) -> (i32, i32, i32, i32) {
    %c0_i32 = arith.constant 0 : i32
    %c0_i32_0 = arith.constant 0 : i32
    %c0_i32_1 = arith.constant 0 : i32
    %c0_i32_2 = arith.constant 0 : i32
    return %arg0, %c0_i32, %c0_i32_0, %c0_i32_1 : i32, i32, i32, i32
  }
  func.func @transform_2(%arg0: i32) -> (i32, i32, i32, i32) {
    %c0_i32 = arith.constant 0 : i32
    %c0_i32_0 = arith.constant 0 : i32
    %c0_i32_1 = arith.constant 0 : i32
    %c0_i32_2 = arith.constant 0 : i32
    return %arg0, %c0_i32, %c0_i32_0, %c0_i32_1 : i32, i32, i32, i32
  }
  func.func @transform_3(%arg0: i32) -> (i32, i32, i32, i32) {
    %c0_i32 = arith.constant 0 : i32
    %c0_i32_0 = arith.constant 0 : i32
    %c0_i32_1 = arith.constant 0 : i32
    %c0_i32_2 = arith.constant 0 : i32
    return %arg0, %c0_i32, %c0_i32_0, %c0_i32_1 : i32, i32, i32, i32
  }
  func.func @transform_4(%arg0: i32) -> (i32, i32, i32, i32) {
    %c0_i32 = arith.constant 0 : i32
    %c0_i32_0 = arith.constant 0 : i32
    %c0_i32_1 = arith.constant 0 : i32
    %c0_i32_2 = arith.constant 0 : i32
    return %arg0, %c0_i32, %c0_i32_0, %c0_i32_1 : i32, i32, i32, i32
  }
  func.func @transform_5(%arg0: i32) -> (i32, i32, i32, i32) {
    %c0_i32 = arith.constant 0 : i32
    %c0_i32_0 = arith.constant 0 : i32
    %c0_i32_1 = arith.constant 0 : i32
    %c0_i32_2 = arith.constant 0 : i32
    return %arg0, %c0_i32, %c0_i32_0, %c0_i32_1 : i32, i32, i32, i32
  }
}

module attributes {stable_mosaic.version = 11 : i64} {
  func.func @_sepconv_kernel(%arg0: i32, %arg1: memref<1x4x4x32xbf16, #tpu.memory_space<vmem>>, %arg2: memref<9x32xf32, #tpu.memory_space<vmem>>, %arg3: memref<1x32xf32, #tpu.memory_space<vmem>>, %arg4: memref<32x128xbf16, #tpu.memory_space<vmem>>, %arg5: memref<1x128xf32, #tpu.memory_space<vmem>>, %arg6: memref<1x2x2x128xbf16, #tpu.memory_space<vmem>>) attributes {dimension_semantics = [#tpu.dimension_semantics<parallel>], iteration_bounds = array<i64: 2>, scalar_prefetch = 0 : i64, scratch_operands = 0 : i64, tpu.core_type = #tpu.core_type<tc>, window_params = [{transform_indices = @transform_0, window_bounds = array<i64: 1, 4, 4, 32>}, {pipeline_mode = #tpu.pipeline_mode<synchronous>, transform_indices = @transform_1, window_bounds = array<i64: 9, 32>}, {pipeline_mode = #tpu.pipeline_mode<synchronous>, transform_indices = @transform_2, window_bounds = array<i64: 1, 32>}, {pipeline_mode = #tpu.pipeline_mode<synchronous>, transform_indices = @transform_3, window_bounds = array<i64: 32, 128>}, {pipeline_mode = #tpu.pipeline_mode<synchronous>, transform_indices = @transform_4, window_bounds = array<i64: 1, 128>}, {transform_indices = @transform_5, window_bounds = array<i64: 1, 2, 2, 128>}]} {
    %c0 = arith.constant 0 : index
    %c0_0 = arith.constant 0 : index
    %c0_1 = arith.constant 0 : index
    %c0_2 = arith.constant 0 : index
    %0 = vector.load %arg1[%c0, %c0_0, %c0_1, %c0_2] : memref<1x4x4x32xbf16, #tpu.memory_space<vmem>>, vector<1x4x4x32xbf16>
    %c0_3 = arith.constant 0 : index
    %c0_4 = arith.constant 0 : index
    %1 = vector.load %arg2[%c0_3, %c0_4] : memref<9x32xf32, #tpu.memory_space<vmem>>, vector<9x32xf32>
    %cst = arith.constant 0.000000e+00 : f32
    %2 = vector.broadcast %cst : f32 to vector<1x2x2x32xf32>
    %3 = vector.extract_strided_slice %0 {offsets = [0, 0, 0, 0], sizes = [1, 2, 2, 32], strides = [1, 1, 1, 1]} : vector<1x4x4x32xbf16> to vector<1x2x2x32xbf16>
    %4 = arith.extf %3 : vector<1x2x2x32xbf16> to vector<1x2x2x32xf32>
    %cst_5 = arith.constant 0.000000e+00 : f32
    %5 = vector.broadcast %cst_5 : f32 to vector<1x2x2x32xf32>
    %6 = arith.maximumf %4, %5 : vector<1x2x2x32xf32>
    %7 = vector.extract_strided_slice %1 {offsets = [0, 0], sizes = [1, 32], strides = [1, 1]} : vector<9x32xf32> to vector<1x32xf32>
    %8 = vector.shape_cast %7 : vector<1x32xf32> to vector<32xf32>
    %9 = vector.shape_cast %8 : vector<32xf32> to vector<1x1x1x32xf32>
    %10 = vector.broadcast %9 : vector<1x1x1x32xf32> to vector<1x2x2x32xf32>
    %11 = arith.mulf %6, %10 : vector<1x2x2x32xf32>
    %12 = arith.addf %2, %11 : vector<1x2x2x32xf32>
    %13 = vector.extract_strided_slice %0 {offsets = [0, 0, 1, 0], sizes = [1, 2, 2, 32], strides = [1, 1, 1, 1]} : vector<1x4x4x32xbf16> to vector<1x2x2x32xbf16>
    %14 = arith.extf %13 : vector<1x2x2x32xbf16> to vector<1x2x2x32xf32>
    %cst_6 = arith.constant 0.000000e+00 : f32
    %15 = vector.broadcast %cst_6 : f32 to vector<1x2x2x32xf32>
    %16 = arith.maximumf %14, %15 : vector<1x2x2x32xf32>
    %17 = vector.extract_strided_slice %1 {offsets = [1, 0], sizes = [1, 32], strides = [1, 1]} : vector<9x32xf32> to vector<1x32xf32>
    %18 = vector.shape_cast %17 : vector<1x32xf32> to vector<32xf32>
    %19 = vector.shape_cast %18 : vector<32xf32> to vector<1x1x1x32xf32>
    %20 = vector.broadcast %19 : vector<1x1x1x32xf32> to vector<1x2x2x32xf32>
    %21 = arith.mulf %16, %20 : vector<1x2x2x32xf32>
    %22 = arith.addf %12, %21 : vector<1x2x2x32xf32>
    %23 = vector.extract_strided_slice %0 {offsets = [0, 0, 2, 0], sizes = [1, 2, 2, 32], strides = [1, 1, 1, 1]} : vector<1x4x4x32xbf16> to vector<1x2x2x32xbf16>
    %24 = arith.extf %23 : vector<1x2x2x32xbf16> to vector<1x2x2x32xf32>
    %cst_7 = arith.constant 0.000000e+00 : f32
    %25 = vector.broadcast %cst_7 : f32 to vector<1x2x2x32xf32>
    %26 = arith.maximumf %24, %25 : vector<1x2x2x32xf32>
    %27 = vector.extract_strided_slice %1 {offsets = [2, 0], sizes = [1, 32], strides = [1, 1]} : vector<9x32xf32> to vector<1x32xf32>
    %28 = vector.shape_cast %27 : vector<1x32xf32> to vector<32xf32>
    %29 = vector.shape_cast %28 : vector<32xf32> to vector<1x1x1x32xf32>
    %30 = vector.broadcast %29 : vector<1x1x1x32xf32> to vector<1x2x2x32xf32>
    %31 = arith.mulf %26, %30 : vector<1x2x2x32xf32>
    %32 = arith.addf %22, %31 : vector<1x2x2x32xf32>
    %33 = vector.extract_strided_slice %0 {offsets = [0, 1, 0, 0], sizes = [1, 2, 2, 32], strides = [1, 1, 1, 1]} : vector<1x4x4x32xbf16> to vector<1x2x2x32xbf16>
    %34 = arith.extf %33 : vector<1x2x2x32xbf16> to vector<1x2x2x32xf32>
    %cst_8 = arith.constant 0.000000e+00 : f32
    %35 = vector.broadcast %cst_8 : f32 to vector<1x2x2x32xf32>
    %36 = arith.maximumf %34, %35 : vector<1x2x2x32xf32>
    %37 = vector.extract_strided_slice %1 {offsets = [3, 0], sizes = [1, 32], strides = [1, 1]} : vector<9x32xf32> to vector<1x32xf32>
    %38 = vector.shape_cast %37 : vector<1x32xf32> to vector<32xf32>
    %39 = vector.shape_cast %38 : vector<32xf32> to vector<1x1x1x32xf32>
    %40 = vector.broadcast %39 : vector<1x1x1x32xf32> to vector<1x2x2x32xf32>
    %41 = arith.mulf %36, %40 : vector<1x2x2x32xf32>
    %42 = arith.addf %32, %41 : vector<1x2x2x32xf32>
    %43 = vector.extract_strided_slice %0 {offsets = [0, 1, 1, 0], sizes = [1, 2, 2, 32], strides = [1, 1, 1, 1]} : vector<1x4x4x32xbf16> to vector<1x2x2x32xbf16>
    %44 = arith.extf %43 : vector<1x2x2x32xbf16> to vector<1x2x2x32xf32>
    %cst_9 = arith.constant 0.000000e+00 : f32
    %45 = vector.broadcast %cst_9 : f32 to vector<1x2x2x32xf32>
    %46 = arith.maximumf %44, %45 : vector<1x2x2x32xf32>
    %47 = vector.extract_strided_slice %1 {offsets = [4, 0], sizes = [1, 32], strides = [1, 1]} : vector<9x32xf32> to vector<1x32xf32>
    %48 = vector.shape_cast %47 : vector<1x32xf32> to vector<32xf32>
    %49 = vector.shape_cast %48 : vector<32xf32> to vector<1x1x1x32xf32>
    %50 = vector.broadcast %49 : vector<1x1x1x32xf32> to vector<1x2x2x32xf32>
    %51 = arith.mulf %46, %50 : vector<1x2x2x32xf32>
    %52 = arith.addf %42, %51 : vector<1x2x2x32xf32>
    %53 = vector.extract_strided_slice %0 {offsets = [0, 1, 2, 0], sizes = [1, 2, 2, 32], strides = [1, 1, 1, 1]} : vector<1x4x4x32xbf16> to vector<1x2x2x32xbf16>
    %54 = arith.extf %53 : vector<1x2x2x32xbf16> to vector<1x2x2x32xf32>
    %cst_10 = arith.constant 0.000000e+00 : f32
    %55 = vector.broadcast %cst_10 : f32 to vector<1x2x2x32xf32>
    %56 = arith.maximumf %54, %55 : vector<1x2x2x32xf32>
    %57 = vector.extract_strided_slice %1 {offsets = [5, 0], sizes = [1, 32], strides = [1, 1]} : vector<9x32xf32> to vector<1x32xf32>
    %58 = vector.shape_cast %57 : vector<1x32xf32> to vector<32xf32>
    %59 = vector.shape_cast %58 : vector<32xf32> to vector<1x1x1x32xf32>
    %60 = vector.broadcast %59 : vector<1x1x1x32xf32> to vector<1x2x2x32xf32>
    %61 = arith.mulf %56, %60 : vector<1x2x2x32xf32>
    %62 = arith.addf %52, %61 : vector<1x2x2x32xf32>
    %63 = vector.extract_strided_slice %0 {offsets = [0, 2, 0, 0], sizes = [1, 2, 2, 32], strides = [1, 1, 1, 1]} : vector<1x4x4x32xbf16> to vector<1x2x2x32xbf16>
    %64 = arith.extf %63 : vector<1x2x2x32xbf16> to vector<1x2x2x32xf32>
    %cst_11 = arith.constant 0.000000e+00 : f32
    %65 = vector.broadcast %cst_11 : f32 to vector<1x2x2x32xf32>
    %66 = arith.maximumf %64, %65 : vector<1x2x2x32xf32>
    %67 = vector.extract_strided_slice %1 {offsets = [6, 0], sizes = [1, 32], strides = [1, 1]} : vector<9x32xf32> to vector<1x32xf32>
    %68 = vector.shape_cast %67 : vector<1x32xf32> to vector<32xf32>
    %69 = vector.shape_cast %68 : vector<32xf32> to vector<1x1x1x32xf32>
    %70 = vector.broadcast %69 : vector<1x1x1x32xf32> to vector<1x2x2x32xf32>
    %71 = arith.mulf %66, %70 : vector<1x2x2x32xf32>
    %72 = arith.addf %62, %71 : vector<1x2x2x32xf32>
    %73 = vector.extract_strided_slice %0 {offsets = [0, 2, 1, 0], sizes = [1, 2, 2, 32], strides = [1, 1, 1, 1]} : vector<1x4x4x32xbf16> to vector<1x2x2x32xbf16>
    %74 = arith.extf %73 : vector<1x2x2x32xbf16> to vector<1x2x2x32xf32>
    %cst_12 = arith.constant 0.000000e+00 : f32
    %75 = vector.broadcast %cst_12 : f32 to vector<1x2x2x32xf32>
    %76 = arith.maximumf %74, %75 : vector<1x2x2x32xf32>
    %77 = vector.extract_strided_slice %1 {offsets = [7, 0], sizes = [1, 32], strides = [1, 1]} : vector<9x32xf32> to vector<1x32xf32>
    %78 = vector.shape_cast %77 : vector<1x32xf32> to vector<32xf32>
    %79 = vector.shape_cast %78 : vector<32xf32> to vector<1x1x1x32xf32>
    %80 = vector.broadcast %79 : vector<1x1x1x32xf32> to vector<1x2x2x32xf32>
    %81 = arith.mulf %76, %80 : vector<1x2x2x32xf32>
    %82 = arith.addf %72, %81 : vector<1x2x2x32xf32>
    %83 = vector.extract_strided_slice %0 {offsets = [0, 2, 2, 0], sizes = [1, 2, 2, 32], strides = [1, 1, 1, 1]} : vector<1x4x4x32xbf16> to vector<1x2x2x32xbf16>
    %84 = arith.extf %83 : vector<1x2x2x32xbf16> to vector<1x2x2x32xf32>
    %cst_13 = arith.constant 0.000000e+00 : f32
    %85 = vector.broadcast %cst_13 : f32 to vector<1x2x2x32xf32>
    %86 = arith.maximumf %84, %85 : vector<1x2x2x32xf32>
    %87 = vector.extract_strided_slice %1 {offsets = [8, 0], sizes = [1, 32], strides = [1, 1]} : vector<9x32xf32> to vector<1x32xf32>
    %88 = vector.shape_cast %87 : vector<1x32xf32> to vector<32xf32>
    %89 = vector.shape_cast %88 : vector<32xf32> to vector<1x1x1x32xf32>
    %90 = vector.broadcast %89 : vector<1x1x1x32xf32> to vector<1x2x2x32xf32>
    %91 = arith.mulf %86, %90 : vector<1x2x2x32xf32>
    %92 = arith.addf %82, %91 : vector<1x2x2x32xf32>
    %c0_14 = arith.constant 0 : index
    %c0_15 = arith.constant 0 : index
    %93 = vector.load %arg3[%c0_14, %c0_15] : memref<1x32xf32, #tpu.memory_space<vmem>>, vector<1x32xf32>
    %94 = vector.shape_cast %93 : vector<1x32xf32> to vector<1x1x1x32xf32>
    %95 = vector.broadcast %94 : vector<1x1x1x32xf32> to vector<1x2x2x32xf32>
    %96 = arith.addf %92, %95 : vector<1x2x2x32xf32>
    %97 = vector.shape_cast %96 : vector<1x2x2x32xf32> to vector<4x32xf32>
    %98 = arith.truncf %97 : vector<4x32xf32> to vector<4x32xbf16>
    %c0_16 = arith.constant 0 : index
    %c0_17 = arith.constant 0 : index
    %99 = vector.load %arg4[%c0_16, %c0_17] : memref<32x128xbf16, #tpu.memory_space<vmem>>, vector<32x128xbf16>
    %cst_18 = arith.constant dense<0.000000e+00> : vector<4x128xf32>
    %100 = tpu.matmul %98, %99, %cst_18 {dimension_numbers = #tpu.dot_dimension_numbers<[1], [0], [0], [1], [0, 0, 1, 1], [], []>} : vector<4x32xbf16>, vector<32x128xbf16>, vector<4x128xf32> -> vector<4x128xf32>
    %c0_19 = arith.constant 0 : index
    %c0_20 = arith.constant 0 : index
    %101 = vector.load %arg5[%c0_19, %c0_20] : memref<1x128xf32, #tpu.memory_space<vmem>>, vector<1x128xf32>
    %102 = vector.broadcast %101 : vector<1x128xf32> to vector<4x128xf32>
    %103 = arith.addf %100, %102 : vector<4x128xf32>
    %cst_21 = arith.constant 0.000000e+00 : f32
    %104 = vector.broadcast %cst_21 : f32 to vector<4x128xf32>
    %105 = arith.maximumf %103, %104 : vector<4x128xf32>
    %106 = vector.shape_cast %105 : vector<4x128xf32> to vector<1x2x2x128xf32>
    %107 = arith.truncf %106 : vector<1x2x2x128xf32> to vector<1x2x2x128xbf16>
    %c0_22 = arith.constant 0 : index
    %c0_23 = arith.constant 0 : index
    %c0_24 = arith.constant 0 : index
    %c0_25 = arith.constant 0 : index
    %108 = vector.load %arg6[%c0_22, %c0_23, %c0_24, %c0_25] : memref<1x2x2x128xbf16, #tpu.memory_space<vmem>>, vector<1x2x2x128xbf16>
    tpu.vector_store %arg6[%c0_22, %c0_23, %c0_24, %c0_25], %107 {strides = array<i32>} : memref<1x2x2x128xbf16, #tpu.memory_space<vmem>>, vector<1x2x2x128xbf16>,
    return
  }
  func.func @transform_0(%arg0: i32) -> (i32, i32, i32, i32) {
    %c0_i32 = arith.constant 0 : i32
    %c0_i32_0 = arith.constant 0 : i32
    %c0_i32_1 = arith.constant 0 : i32
    %c0_i32_2 = arith.constant 0 : i32
    return %arg0, %c0_i32, %c0_i32_0, %c0_i32_1 : i32, i32, i32, i32
  }
  func.func @transform_1(%arg0: i32) -> (i32, i32) {
    %c0_i32 = arith.constant 0 : i32
    %c0_i32_0 = arith.constant 0 : i32
    %c0_i32_1 = arith.constant 0 : i32
    return %c0_i32, %c0_i32_0 : i32, i32
  }
  func.func @transform_2(%arg0: i32) -> (i32, i32) {
    %c0_i32 = arith.constant 0 : i32
    %c0_i32_0 = arith.constant 0 : i32
    %c0_i32_1 = arith.constant 0 : i32
    return %c0_i32, %c0_i32_0 : i32, i32
  }
  func.func @transform_3(%arg0: i32) -> (i32, i32) {
    %c0_i32 = arith.constant 0 : i32
    %c0_i32_0 = arith.constant 0 : i32
    %c0_i32_1 = arith.constant 0 : i32
    return %c0_i32, %c0_i32_0 : i32, i32
  }
  func.func @transform_4(%arg0: i32) -> (i32, i32) {
    %c0_i32 = arith.constant 0 : i32
    %c0_i32_0 = arith.constant 0 : i32
    %c0_i32_1 = arith.constant 0 : i32
    return %c0_i32, %c0_i32_0 : i32, i32
  }
  func.func @transform_5(%arg0: i32) -> (i32, i32, i32, i32) {
    %c0_i32 = arith.constant 0 : i32
    %c0_i32_0 = arith.constant 0 : i32
    %c0_i32_1 = arith.constant 0 : i32
    %c0_i32_2 = arith.constant 0 : i32
    return %arg0, %c0_i32, %c0_i32_0, %c0_i32_1 : i32, i32, i32, i32
  }
}

module attributes {stable_mosaic.version = 11 : i64} {
  func.func @_sepconv_kernel(%arg0: i32, %arg1: memref<1x4x4x32xbf16, #tpu.memory_space<vmem>>, %arg2: memref<9x32xf32, #tpu.memory_space<vmem>>, %arg3: memref<1x32xf32, #tpu.memory_space<vmem>>, %arg4: memref<32x128xbf16, #tpu.memory_space<vmem>>, %arg5: memref<1x128xf32, #tpu.memory_space<vmem>>, %arg6: memref<1x2x2x128xbf16, #tpu.memory_space<vmem>>) attributes {dimension_semantics = [#tpu.dimension_semantics<parallel>], iteration_bounds = array<i64: 2>, scalar_prefetch = 0 : i64, scratch_operands = 0 : i64, tpu.core_type = #tpu.core_type<tc>, window_params = [{transform_indices = @transform_0, window_bounds = array<i64: 1, 4, 4, 32>}, {pipeline_mode = #tpu.pipeline_mode<synchronous>, transform_indices = @transform_1, window_bounds = array<i64: 9, 32>}, {pipeline_mode = #tpu.pipeline_mode<synchronous>, transform_indices = @transform_2, window_bounds = array<i64: 1, 32>}, {pipeline_mode = #tpu.pipeline_mode<synchronous>, transform_indices = @transform_3, window_bounds = array<i64: 32, 128>}, {pipeline_mode = #tpu.pipeline_mode<synchronous>, transform_indices = @transform_4, window_bounds = array<i64: 1, 128>}, {transform_indices = @transform_5, window_bounds = array<i64: 1, 2, 2, 128>}]} {
    %c0 = arith.constant 0 : index
    %c0_0 = arith.constant 0 : index
    %c0_1 = arith.constant 0 : index
    %c0_2 = arith.constant 0 : index
    %0 = vector.load %arg1[%c0, %c0_0, %c0_1, %c0_2] : memref<1x4x4x32xbf16, #tpu.memory_space<vmem>>, vector<1x4x4x32xbf16>
    %c0_3 = arith.constant 0 : index
    %c0_4 = arith.constant 0 : index
    %1 = vector.load %arg2[%c0_3, %c0_4] : memref<9x32xf32, #tpu.memory_space<vmem>>, vector<9x32xf32>
    %cst = arith.constant 0.000000e+00 : f32
    %2 = vector.broadcast %cst : f32 to vector<1x2x2x32xf32>
    %3 = vector.extract_strided_slice %0 {offsets = [0, 0, 0, 0], sizes = [1, 2, 2, 32], strides = [1, 1, 1, 1]} : vector<1x4x4x32xbf16> to vector<1x2x2x32xbf16>
    %4 = arith.extf %3 : vector<1x2x2x32xbf16> to vector<1x2x2x32xf32>
    %5 = vector.extract_strided_slice %1 {offsets = [0, 0], sizes = [1, 32], strides = [1, 1]} : vector<9x32xf32> to vector<1x32xf32>
    %6 = vector.shape_cast %5 : vector<1x32xf32> to vector<32xf32>
    %7 = vector.shape_cast %6 : vector<32xf32> to vector<1x1x1x32xf32>
    %8 = vector.broadcast %7 : vector<1x1x1x32xf32> to vector<1x2x2x32xf32>
    %9 = arith.mulf %4, %8 : vector<1x2x2x32xf32>
    %10 = arith.addf %2, %9 : vector<1x2x2x32xf32>
    %11 = vector.extract_strided_slice %0 {offsets = [0, 0, 1, 0], sizes = [1, 2, 2, 32], strides = [1, 1, 1, 1]} : vector<1x4x4x32xbf16> to vector<1x2x2x32xbf16>
    %12 = arith.extf %11 : vector<1x2x2x32xbf16> to vector<1x2x2x32xf32>
    %13 = vector.extract_strided_slice %1 {offsets = [1, 0], sizes = [1, 32], strides = [1, 1]} : vector<9x32xf32> to vector<1x32xf32>
    %14 = vector.shape_cast %13 : vector<1x32xf32> to vector<32xf32>
    %15 = vector.shape_cast %14 : vector<32xf32> to vector<1x1x1x32xf32>
    %16 = vector.broadcast %15 : vector<1x1x1x32xf32> to vector<1x2x2x32xf32>
    %17 = arith.mulf %12, %16 : vector<1x2x2x32xf32>
    %18 = arith.addf %10, %17 : vector<1x2x2x32xf32>
    %19 = vector.extract_strided_slice %0 {offsets = [0, 0, 2, 0], sizes = [1, 2, 2, 32], strides = [1, 1, 1, 1]} : vector<1x4x4x32xbf16> to vector<1x2x2x32xbf16>
    %20 = arith.extf %19 : vector<1x2x2x32xbf16> to vector<1x2x2x32xf32>
    %21 = vector.extract_strided_slice %1 {offsets = [2, 0], sizes = [1, 32], strides = [1, 1]} : vector<9x32xf32> to vector<1x32xf32>
    %22 = vector.shape_cast %21 : vector<1x32xf32> to vector<32xf32>
    %23 = vector.shape_cast %22 : vector<32xf32> to vector<1x1x1x32xf32>
    %24 = vector.broadcast %23 : vector<1x1x1x32xf32> to vector<1x2x2x32xf32>
    %25 = arith.mulf %20, %24 : vector<1x2x2x32xf32>
    %26 = arith.addf %18, %25 : vector<1x2x2x32xf32>
    %27 = vector.extract_strided_slice %0 {offsets = [0, 1, 0, 0], sizes = [1, 2, 2, 32], strides = [1, 1, 1, 1]} : vector<1x4x4x32xbf16> to vector<1x2x2x32xbf16>
    %28 = arith.extf %27 : vector<1x2x2x32xbf16> to vector<1x2x2x32xf32>
    %29 = vector.extract_strided_slice %1 {offsets = [3, 0], sizes = [1, 32], strides = [1, 1]} : vector<9x32xf32> to vector<1x32xf32>
    %30 = vector.shape_cast %29 : vector<1x32xf32> to vector<32xf32>
    %31 = vector.shape_cast %30 : vector<32xf32> to vector<1x1x1x32xf32>
    %32 = vector.broadcast %31 : vector<1x1x1x32xf32> to vector<1x2x2x32xf32>
    %33 = arith.mulf %28, %32 : vector<1x2x2x32xf32>
    %34 = arith.addf %26, %33 : vector<1x2x2x32xf32>
    %35 = vector.extract_strided_slice %0 {offsets = [0, 1, 1, 0], sizes = [1, 2, 2, 32], strides = [1, 1, 1, 1]} : vector<1x4x4x32xbf16> to vector<1x2x2x32xbf16>
    %36 = arith.extf %35 : vector<1x2x2x32xbf16> to vector<1x2x2x32xf32>
    %37 = vector.extract_strided_slice %1 {offsets = [4, 0], sizes = [1, 32], strides = [1, 1]} : vector<9x32xf32> to vector<1x32xf32>
    %38 = vector.shape_cast %37 : vector<1x32xf32> to vector<32xf32>
    %39 = vector.shape_cast %38 : vector<32xf32> to vector<1x1x1x32xf32>
    %40 = vector.broadcast %39 : vector<1x1x1x32xf32> to vector<1x2x2x32xf32>
    %41 = arith.mulf %36, %40 : vector<1x2x2x32xf32>
    %42 = arith.addf %34, %41 : vector<1x2x2x32xf32>
    %43 = vector.extract_strided_slice %0 {offsets = [0, 1, 2, 0], sizes = [1, 2, 2, 32], strides = [1, 1, 1, 1]} : vector<1x4x4x32xbf16> to vector<1x2x2x32xbf16>
    %44 = arith.extf %43 : vector<1x2x2x32xbf16> to vector<1x2x2x32xf32>
    %45 = vector.extract_strided_slice %1 {offsets = [5, 0], sizes = [1, 32], strides = [1, 1]} : vector<9x32xf32> to vector<1x32xf32>
    %46 = vector.shape_cast %45 : vector<1x32xf32> to vector<32xf32>
    %47 = vector.shape_cast %46 : vector<32xf32> to vector<1x1x1x32xf32>
    %48 = vector.broadcast %47 : vector<1x1x1x32xf32> to vector<1x2x2x32xf32>
    %49 = arith.mulf %44, %48 : vector<1x2x2x32xf32>
    %50 = arith.addf %42, %49 : vector<1x2x2x32xf32>
    %51 = vector.extract_strided_slice %0 {offsets = [0, 2, 0, 0], sizes = [1, 2, 2, 32], strides = [1, 1, 1, 1]} : vector<1x4x4x32xbf16> to vector<1x2x2x32xbf16>
    %52 = arith.extf %51 : vector<1x2x2x32xbf16> to vector<1x2x2x32xf32>
    %53 = vector.extract_strided_slice %1 {offsets = [6, 0], sizes = [1, 32], strides = [1, 1]} : vector<9x32xf32> to vector<1x32xf32>
    %54 = vector.shape_cast %53 : vector<1x32xf32> to vector<32xf32>
    %55 = vector.shape_cast %54 : vector<32xf32> to vector<1x1x1x32xf32>
    %56 = vector.broadcast %55 : vector<1x1x1x32xf32> to vector<1x2x2x32xf32>
    %57 = arith.mulf %52, %56 : vector<1x2x2x32xf32>
    %58 = arith.addf %50, %57 : vector<1x2x2x32xf32>
    %59 = vector.extract_strided_slice %0 {offsets = [0, 2, 1, 0], sizes = [1, 2, 2, 32], strides = [1, 1, 1, 1]} : vector<1x4x4x32xbf16> to vector<1x2x2x32xbf16>
    %60 = arith.extf %59 : vector<1x2x2x32xbf16> to vector<1x2x2x32xf32>
    %61 = vector.extract_strided_slice %1 {offsets = [7, 0], sizes = [1, 32], strides = [1, 1]} : vector<9x32xf32> to vector<1x32xf32>
    %62 = vector.shape_cast %61 : vector<1x32xf32> to vector<32xf32>
    %63 = vector.shape_cast %62 : vector<32xf32> to vector<1x1x1x32xf32>
    %64 = vector.broadcast %63 : vector<1x1x1x32xf32> to vector<1x2x2x32xf32>
    %65 = arith.mulf %60, %64 : vector<1x2x2x32xf32>
    %66 = arith.addf %58, %65 : vector<1x2x2x32xf32>
    %67 = vector.extract_strided_slice %0 {offsets = [0, 2, 2, 0], sizes = [1, 2, 2, 32], strides = [1, 1, 1, 1]} : vector<1x4x4x32xbf16> to vector<1x2x2x32xbf16>
    %68 = arith.extf %67 : vector<1x2x2x32xbf16> to vector<1x2x2x32xf32>
    %69 = vector.extract_strided_slice %1 {offsets = [8, 0], sizes = [1, 32], strides = [1, 1]} : vector<9x32xf32> to vector<1x32xf32>
    %70 = vector.shape_cast %69 : vector<1x32xf32> to vector<32xf32>
    %71 = vector.shape_cast %70 : vector<32xf32> to vector<1x1x1x32xf32>
    %72 = vector.broadcast %71 : vector<1x1x1x32xf32> to vector<1x2x2x32xf32>
    %73 = arith.mulf %68, %72 : vector<1x2x2x32xf32>
    %74 = arith.addf %66, %73 : vector<1x2x2x32xf32>
    %c0_5 = arith.constant 0 : index
    %c0_6 = arith.constant 0 : index
    %75 = vector.load %arg3[%c0_5, %c0_6] : memref<1x32xf32, #tpu.memory_space<vmem>>, vector<1x32xf32>
    %76 = vector.shape_cast %75 : vector<1x32xf32> to vector<1x1x1x32xf32>
    %77 = vector.broadcast %76 : vector<1x1x1x32xf32> to vector<1x2x2x32xf32>
    %78 = arith.addf %74, %77 : vector<1x2x2x32xf32>
    %79 = vector.shape_cast %78 : vector<1x2x2x32xf32> to vector<4x32xf32>
    %80 = arith.truncf %79 : vector<4x32xf32> to vector<4x32xbf16>
    %c0_7 = arith.constant 0 : index
    %c0_8 = arith.constant 0 : index
    %81 = vector.load %arg4[%c0_7, %c0_8] : memref<32x128xbf16, #tpu.memory_space<vmem>>, vector<32x128xbf16>
    %cst_9 = arith.constant dense<0.000000e+00> : vector<4x128xf32>
    %82 = tpu.matmul %80, %81, %cst_9 {dimension_numbers = #tpu.dot_dimension_numbers<[1], [0], [0], [1], [0, 0, 1, 1], [], []>} : vector<4x32xbf16>, vector<32x128xbf16>, vector<4x128xf32> -> vector<4x128xf32>
    %c0_10 = arith.constant 0 : index
    %c0_11 = arith.constant 0 : index
    %83 = vector.load %arg5[%c0_10, %c0_11] : memref<1x128xf32, #tpu.memory_space<vmem>>, vector<1x128xf32>
    %84 = vector.broadcast %83 : vector<1x128xf32> to vector<4x128xf32>
    %85 = arith.addf %82, %84 : vector<4x128xf32>
    %cst_12 = arith.constant 0.000000e+00 : f32
    %86 = vector.broadcast %cst_12 : f32 to vector<4x128xf32>
    %87 = arith.maximumf %85, %86 : vector<4x128xf32>
    %88 = vector.shape_cast %87 : vector<4x128xf32> to vector<1x2x2x128xf32>
    %89 = arith.truncf %88 : vector<1x2x2x128xf32> to vector<1x2x2x128xbf16>
    %c0_13 = arith.constant 0 : index
    %c0_14 = arith.constant 0 : index
    %c0_15 = arith.constant 0 : index
    %c0_16 = arith.constant 0 : index
    %90 = vector.load %arg6[%c0_13, %c0_14, %c0_15, %c0_16] : memref<1x2x2x128xbf16, #tpu.memory_space<vmem>>, vector<1x2x2x128xbf16>
    tpu.vector_store %arg6[%c0_13, %c0_14, %c0_15, %c0_16], %89 {strides = array<i32>} : memref<1x2x2x128xbf16, #tpu.memory_space<vmem>>, vector<1x2x2x128xbf16>,
    return
  }
  func.func @transform_0(%arg0: i32) -> (i32, i32, i32, i32) {
    %c0_i32 = arith.constant 0 : i32
    %c0_i32_0 = arith.constant 0 : i32
    %c0_i32_1 = arith.constant 0 : i32
    %c0_i32_2 = arith.constant 0 : i32
    return %arg0, %c0_i32, %c0_i32_0, %c0_i32_1 : i32, i32, i32, i32
  }
  func.func @transform_1(%arg0: i32) -> (i32, i32) {
    %c0_i32 = arith.constant 0 : i32
    %c0_i32_0 = arith.constant 0 : i32
    %c0_i32_1 = arith.constant 0 : i32
    return %c0_i32, %c0_i32_0 : i32, i32
  }
  func.func @transform_2(%arg0: i32) -> (i32, i32) {
    %c0_i32 = arith.constant 0 : i32
    %c0_i32_0 = arith.constant 0 : i32
    %c0_i32_1 = arith.constant 0 : i32
    return %c0_i32, %c0_i32_0 : i32, i32
  }
  func.func @transform_3(%arg0: i32) -> (i32, i32) {
    %c0_i32 = arith.constant 0 : i32
    %c0_i32_0 = arith.constant 0 : i32
    %c0_i32_1 = arith.constant 0 : i32
    return %c0_i32, %c0_i32_0 : i32, i32
  }
  func.func @transform_4(%arg0: i32) -> (i32, i32) {
    %c0_i32 = arith.constant 0 : i32
    %c0_i32_0 = arith.constant 0 : i32
    %c0_i32_1 = arith.constant 0 : i32
    return %c0_i32, %c0_i32_0 : i32, i32
  }
  func.func @transform_5(%arg0: i32) -> (i32, i32, i32, i32) {
    %c0_i32 = arith.constant 0 : i32
    %c0_i32_0 = arith.constant 0 : i32
    %c0_i32_1 = arith.constant 0 : i32
    %c0_i32_2 = arith.constant 0 : i32
    return %arg0, %c0_i32, %c0_i32_0, %c0_i32_1 : i32, i32, i32, i32
  }
}

module attributes {stable_mosaic.version = 11 : i64} {
  func.func @_matmul_bias_act_kernel(%arg0: i32, %arg1: memref<8x32xbf16, #tpu.memory_space<vmem>>, %arg2: memref<32x128xbf16, #tpu.memory_space<vmem>>, %arg3: memref<1x128xf32, #tpu.memory_space<vmem>>, %arg4: memref<8x128xbf16, #tpu.memory_space<vmem>>) attributes {dimension_semantics = [#tpu.dimension_semantics<parallel>], iteration_bounds = array<i64: 1>, scalar_prefetch = 0 : i64, scratch_operands = 0 : i64, tpu.core_type = #tpu.core_type<tc>, window_params = [{transform_indices = @transform_0, window_bounds = array<i64: 8, 32>}, {pipeline_mode = #tpu.pipeline_mode<synchronous>, transform_indices = @transform_1, window_bounds = array<i64: 32, 128>}, {pipeline_mode = #tpu.pipeline_mode<synchronous>, transform_indices = @transform_2, window_bounds = array<i64: 1, 128>}, {transform_indices = @transform_3, window_bounds = array<i64: 8, 128>}]} {
    %c0 = arith.constant 0 : index
    %c0_0 = arith.constant 0 : index
    %0 = vector.load %arg1[%c0, %c0_0] : memref<8x32xbf16, #tpu.memory_space<vmem>>, vector<8x32xbf16>
    %c0_1 = arith.constant 0 : index
    %c0_2 = arith.constant 0 : index
    %1 = vector.load %arg2[%c0_1, %c0_2] : memref<32x128xbf16, #tpu.memory_space<vmem>>, vector<32x128xbf16>
    %cst = arith.constant dense<0.000000e+00> : vector<8x128xf32>
    %2 = tpu.matmul %0, %1, %cst {dimension_numbers = #tpu.dot_dimension_numbers<[1], [0], [0], [1], [0, 0, 1, 1], [], []>} : vector<8x32xbf16>, vector<32x128xbf16>, vector<8x128xf32> -> vector<8x128xf32>
    %c0_3 = arith.constant 0 : index
    %c0_4 = arith.constant 0 : index
    %3 = vector.load %arg3[%c0_3, %c0_4] : memref<1x128xf32, #tpu.memory_space<vmem>>, vector<1x128xf32>
    %4 = vector.broadcast %3 : vector<1x128xf32> to vector<8x128xf32>
    %5 = arith.addf %2, %4 : vector<8x128xf32>
    %6 = arith.truncf %5 : vector<8x128xf32> to vector<8x128xbf16>
    %c0_5 = arith.constant 0 : index
    %c0_6 = arith.constant 0 : index
    %7 = vector.load %arg4[%c0_5, %c0_6] : memref<8x128xbf16, #tpu.memory_space<vmem>>, vector<8x128xbf16>
    tpu.vector_store %arg4[%c0_5, %c0_6], %6 {strides = array<i32>} : memref<8x128xbf16, #tpu.memory_space<vmem>>, vector<8x128xbf16>,
    return
  }
  func.func @transform_0(%arg0: i32) -> (i32, i32) {
    %c0_i32 = arith.constant 0 : i32
    %c0_i32_0 = arith.constant 0 : i32
    return %arg0, %c0_i32 : i32, i32
  }
  func.func @transform_1(%arg0: i32) -> (i32, i32) {
    %c0_i32 = arith.constant 0 : i32
    %c0_i32_0 = arith.constant 0 : i32
    %c0_i32_1 = arith.constant 0 : i32
    return %c0_i32, %c0_i32_0 : i32, i32
  }
  func.func @transform_2(%arg0: i32) -> (i32, i32) {
    %c0_i32 = arith.constant 0 : i32
    %c0_i32_0 = arith.constant 0 : i32
    %c0_i32_1 = arith.constant 0 : i32
    return %c0_i32, %c0_i32_0 : i32, i32
  }
  func.func @transform_3(%arg0: i32) -> (i32, i32) {
    %c0_i32 = arith.constant 0 : i32
    %c0_i32_0 = arith.constant 0 : i32
    return %arg0, %c0_i32 : i32, i32
  }
}

module attributes {stable_mosaic.version = 11 : i64} {
  func.func @_maxpool_add_kernel(%arg0: i32, %arg1: memref<1x2x2x32xbf16, #tpu.memory_space<vmem>>, %arg2: memref<1x2x2x32xbf16, #tpu.memory_space<vmem>>, %arg3: memref<1x2x2x32xbf16, #tpu.memory_space<vmem>>, %arg4: memref<1x2x2x32xbf16, #tpu.memory_space<vmem>>, %arg5: memref<1x1x1x32xbf16, #tpu.memory_space<vmem>>, %arg6: memref<1x1x1x32xbf16, #tpu.memory_space<vmem>>) attributes {dimension_semantics = [#tpu.dimension_semantics<parallel>], iteration_bounds = array<i64: 2>, scalar_prefetch = 0 : i64, scratch_operands = 0 : i64, tpu.core_type = #tpu.core_type<tc>, window_params = [{transform_indices = @transform_0, window_bounds = array<i64: 1, 2, 2, 32>}, {transform_indices = @transform_1, window_bounds = array<i64: 1, 2, 2, 32>}, {transform_indices = @transform_2, window_bounds = array<i64: 1, 2, 2, 32>}, {transform_indices = @transform_3, window_bounds = array<i64: 1, 2, 2, 32>}, {transform_indices = @transform_4, window_bounds = array<i64: 1, 1, 1, 32>}, {transform_indices = @transform_5, window_bounds = array<i64: 1, 1, 1, 32>}]} {
    %c0 = arith.constant 0 : index
    %c0_0 = arith.constant 0 : index
    %c0_1 = arith.constant 0 : index
    %c0_2 = arith.constant 0 : index
    %0 = vector.load %arg1[%c0, %c0_0, %c0_1, %c0_2] : memref<1x2x2x32xbf16, #tpu.memory_space<vmem>>, vector<1x2x2x32xbf16>
    %c0_3 = arith.constant 0 : index
    %c0_4 = arith.constant 0 : index
    %c0_5 = arith.constant 0 : index
    %c0_6 = arith.constant 0 : index
    %1 = vector.load %arg2[%c0_3, %c0_4, %c0_5, %c0_6] : memref<1x2x2x32xbf16, #tpu.memory_space<vmem>>, vector<1x2x2x32xbf16>
    %c0_7 = arith.constant 0 : index
    %c0_8 = arith.constant 0 : index
    %c0_9 = arith.constant 0 : index
    %c0_10 = arith.constant 0 : index
    %2 = vector.load %arg3[%c0_7, %c0_8, %c0_9, %c0_10] : memref<1x2x2x32xbf16, #tpu.memory_space<vmem>>, vector<1x2x2x32xbf16>
    %c0_11 = arith.constant 0 : index
    %c0_12 = arith.constant 0 : index
    %c0_13 = arith.constant 0 : index
    %c0_14 = arith.constant 0 : index
    %3 = vector.load %arg4[%c0_11, %c0_12, %c0_13, %c0_14] : memref<1x2x2x32xbf16, #tpu.memory_space<vmem>>, vector<1x2x2x32xbf16>
    %4 = vector.extract_strided_slice %0 {offsets = [0, 0, 0, 0], sizes = [1, 1, 1, 32], strides = [1, 1, 1, 1]} : vector<1x2x2x32xbf16> to vector<1x1x1x32xbf16>
    %5 = arith.extf %4 : vector<1x1x1x32xbf16> to vector<1x1x1x32xf32>
    %6 = vector.extract_strided_slice %1 {offsets = [0, 0, 0, 0], sizes = [1, 1, 1, 32], strides = [1, 1, 1, 1]} : vector<1x2x2x32xbf16> to vector<1x1x1x32xbf16>
    %7 = arith.extf %6 : vector<1x1x1x32xbf16> to vector<1x1x1x32xf32>
    %8 = arith.maximumf %5, %7 : vector<1x1x1x32xf32>
    %9 = vector.extract_strided_slice %0 {offsets = [0, 0, 1, 0], sizes = [1, 1, 1, 32], strides = [1, 1, 1, 1]} : vector<1x2x2x32xbf16> to vector<1x1x1x32xbf16>
    %10 = arith.extf %9 : vector<1x1x1x32xbf16> to vector<1x1x1x32xf32>
    %11 = arith.maximumf %8, %10 : vector<1x1x1x32xf32>
    %12 = vector.extract_strided_slice %2 {offsets = [0, 0, 0, 0], sizes = [1, 1, 1, 32], strides = [1, 1, 1, 1]} : vector<1x2x2x32xbf16> to vector<1x1x1x32xbf16>
    %13 = arith.extf %12 : vector<1x1x1x32xbf16> to vector<1x1x1x32xf32>
    %14 = arith.maximumf %11, %13 : vector<1x1x1x32xf32>
    %15 = vector.extract_strided_slice %3 {offsets = [0, 0, 0, 0], sizes = [1, 1, 1, 32], strides = [1, 1, 1, 1]} : vector<1x2x2x32xbf16> to vector<1x1x1x32xbf16>
    %16 = arith.extf %15 : vector<1x1x1x32xbf16> to vector<1x1x1x32xf32>
    %17 = arith.maximumf %14, %16 : vector<1x1x1x32xf32>
    %18 = vector.extract_strided_slice %2 {offsets = [0, 0, 1, 0], sizes = [1, 1, 1, 32], strides = [1, 1, 1, 1]} : vector<1x2x2x32xbf16> to vector<1x1x1x32xbf16>
    %19 = arith.extf %18 : vector<1x1x1x32xbf16> to vector<1x1x1x32xf32>
    %20 = arith.maximumf %17, %19 : vector<1x1x1x32xf32>
    %21 = vector.extract_strided_slice %0 {offsets = [0, 1, 0, 0], sizes = [1, 1, 1, 32], strides = [1, 1, 1, 1]} : vector<1x2x2x32xbf16> to vector<1x1x1x32xbf16>
    %22 = arith.extf %21 : vector<1x1x1x32xbf16> to vector<1x1x1x32xf32>
    %23 = arith.maximumf %20, %22 : vector<1x1x1x32xf32>
    %24 = vector.extract_strided_slice %1 {offsets = [0, 1, 0, 0], sizes = [1, 1, 1, 32], strides = [1, 1, 1, 1]} : vector<1x2x2x32xbf16> to vector<1x1x1x32xbf16>
    %25 = arith.extf %24 : vector<1x1x1x32xbf16> to vector<1x1x1x32xf32>
    %26 = arith.maximumf %23, %25 : vector<1x1x1x32xf32>
    %27 = vector.extract_strided_slice %0 {offsets = [0, 1, 1, 0], sizes = [1, 1, 1, 32], strides = [1, 1, 1, 1]} : vector<1x2x2x32xbf16> to vector<1x1x1x32xbf16>
    %28 = arith.extf %27 : vector<1x1x1x32xbf16> to vector<1x1x1x32xf32>
    %29 = arith.maximumf %26, %28 : vector<1x1x1x32xf32>
    %c0_15 = arith.constant 0 : index
    %c0_16 = arith.constant 0 : index
    %c0_17 = arith.constant 0 : index
    %c0_18 = arith.constant 0 : index
    %30 = vector.load %arg5[%c0_15, %c0_16, %c0_17, %c0_18] : memref<1x1x1x32xbf16, #tpu.memory_space<vmem>>, vector<1x1x1x32xbf16>
    %31 = arith.extf %30 : vector<1x1x1x32xbf16> to vector<1x1x1x32xf32>
    %32 = arith.addf %29, %31 : vector<1x1x1x32xf32>
    %33 = arith.truncf %32 : vector<1x1x1x32xf32> to vector<1x1x1x32xbf16>
    %c0_19 = arith.constant 0 : index
    %c0_20 = arith.constant 0 : index
    %c0_21 = arith.constant 0 : index
    %c0_22 = arith.constant 0 : index
    %34 = vector.load %arg6[%c0_19, %c0_20, %c0_21, %c0_22] : memref<1x1x1x32xbf16, #tpu.memory_space<vmem>>, vector<1x1x1x32xbf16>
    tpu.vector_store %arg6[%c0_19, %c0_20, %c0_21, %c0_22], %33 {strides = array<i32>} : memref<1x1x1x32xbf16, #tpu.memory_space<vmem>>, vector<1x1x1x32xbf16>,
    return
  }
  func.func @transform_0(%arg0: i32) -> (i32, i32, i32, i32) {
    %c0_i32 = arith.constant 0 : i32
    %c0_i32_0 = arith.constant 0 : i32
    %c0_i32_1 = arith.constant 0 : i32
    %c0_i32_2 = arith.constant 0 : i32
    return %arg0, %c0_i32, %c0_i32_0, %c0_i32_1 : i32, i32, i32, i32
  }
  func.func @transform_1(%arg0: i32) -> (i32, i32, i32, i32) {
    %c0_i32 = arith.constant 0 : i32
    %c0_i32_0 = arith.constant 0 : i32
    %c0_i32_1 = arith.constant 0 : i32
    %c0_i32_2 = arith.constant 0 : i32
    return %arg0, %c0_i32, %c0_i32_0, %c0_i32_1 : i32, i32, i32, i32
  }
  func.func @transform_2(%arg0: i32) -> (i32, i32, i32, i32) {
    %c0_i32 = arith.constant 0 : i32
    %c0_i32_0 = arith.constant 0 : i32
    %c0_i32_1 = arith.constant 0 : i32
    %c0_i32_2 = arith.constant 0 : i32
    return %arg0, %c0_i32, %c0_i32_0, %c0_i32_1 : i32, i32, i32, i32
  }
  func.func @transform_3(%arg0: i32) -> (i32, i32, i32, i32) {
    %c0_i32 = arith.constant 0 : i32
    %c0_i32_0 = arith.constant 0 : i32
    %c0_i32_1 = arith.constant 0 : i32
    %c0_i32_2 = arith.constant 0 : i32
    return %arg0, %c0_i32, %c0_i32_0, %c0_i32_1 : i32, i32, i32, i32
  }
  func.func @transform_4(%arg0: i32) -> (i32, i32, i32, i32) {
    %c0_i32 = arith.constant 0 : i32
    %c0_i32_0 = arith.constant 0 : i32
    %c0_i32_1 = arith.constant 0 : i32
    %c0_i32_2 = arith.constant 0 : i32
    return %arg0, %c0_i32, %c0_i32_0, %c0_i32_1 : i32, i32, i32, i32
  }
  func.func @transform_5(%arg0: i32) -> (i32, i32, i32, i32) {
    %c0_i32 = arith.constant 0 : i32
    %c0_i32_0 = arith.constant 0 : i32
    %c0_i32_1 = arith.constant 0 : i32
    %c0_i32_2 = arith.constant 0 : i32
    return %arg0, %c0_i32, %c0_i32_0, %c0_i32_1 : i32, i32, i32, i32
  }
}

</mosaic_0001>

<llo_original>
// kernel: entryflow_forward.14
$region0: #{entryflow_forward.14}
  #allocation0 [shape = 'u32[]', space=smem, size = 0x4, offset = 0x4, fixed_abs, tag = 'smem constant byte address 0x4 - core index']
  #allocation1 [shape = 'u32[72,128]{1,0:T(1,128)}', space=vmem, size = 0x9000, scoped, tag = 'internal scratch']
  %s0 = inlined_call_operand.vmem [shape: bf16[128,27], index: 0, kind: input, shape index: {}]
  %s1 = inlined_call_operand.vmem [shape: bf16[27,128], index: 1, kind: input, shape index: {}]
  %s2 = inlined_call_operand.vmem [shape: f32[1,128], index: 2, kind: input, shape index: {}]
  %s3 = inlined_call_operand.vmem [shape: bf16[128,128], index: 3, kind: output, shape index: {}]
  %s4 = sld [smem:[#allocation0]]
  $region45: #{entryflow_forward.14} parent=0
    _
  %s6 = ssub.s32 1, %s4
  %s7 = scalar_select 0, %s6, %s4
  loop: start=0, step=1, limit=4
  $region2: #{entryflow_forward.14} parent=0 // loop_pre_header
    _
  $region3: #{entryflow_forward.14} parent=0 // loop_header
    %s9 = sphi 0, %s13
    %p10 = scmp.ge.s32.totalorder %s9, 4
    %s19 = sphi 0, %s21
    %s22 = sphi 0, %s19
    %s23 = sphi 0, %s22
    %s39 = sphi 0, %s23
    %s43 = sphi 0, %s43
    %s45 = sphi 0, %s43
    %s46 = sphi 0, %s45
    %s60 = sphi 0, %s46
    %s64 = sphi 0, %s64
    %s66 = sphi 0, %s64
    %s67 = sphi 0, %s66
    %s81 = sphi 0, %s67
    %s87 = sphi 0, %s89
    %s90 = sphi 0, %s87
    %s91 = sphi 0, %s90
    %s107 = sphi 0, %s91
  $region4: #{entryflow_forward.14} parent=0 // loop_header_branch
    %12 = sbr.rel (%p10) target = $region8
  $region5: #{entryflow_forward.14} parent=0 // loop_body
    %s14 = ssub.s32 %s9, 1
    %s15 = ssub.s32 %s9, 2
    %s16 = sadd.s32 %s9, 1
    %s17 = ssub.s32 %s9, %s16
    %p18 = scmp.eq.s32.totalorder %s17, 0
    %s20 = sadd.s32 %s19, 1
    %s21 = scalar_select %p18, %s19, %s20
    %p24 = pneg %p18
    %p25 = scmp.eq.s32.totalorder %s9, 1
    %p26 = por %p24, %p25
    %p27 = scmp.ne.s32.totalorder %s19, %s22
    %p28 = scmp.eq.s32.totalorder %s9, 0
    %p29 = por %p27, %p28
    %p30 = scmp.ne.s32.totalorder %s19, %s22
    %p31 = scmp.eq.s32.totalorder %s14, 1
    %p32 = por %p30, %p31
    %p33 = scmp.ne.s32.totalorder %s22, %s23
    %p34 = scmp.eq.s32.totalorder %s14, 0
    %p35 = por %p33, %p34
    %p36 = scmp.ne.s32.totalorder %s22, %s23
    %p37 = scmp.eq.s32.totalorder %s15, 1
    %p38 = por %p36, %p37
    %p40 = scmp.ne.s32.totalorder %s23, %s39
    %p41 = scmp.eq.s32.totalorder %s15, 0
    %p42 = por %p40, %p41
    %s44 = sadd.s32 %s43, 1
    %p47 = scmp.eq.s32.totalorder %s9, 1
    %p48 = scmp.ne.s32.totalorder %s43, %s45
    %p49 = scmp.eq.s32.totalorder %s9, 0
    %p50 = por %p48, %p49
    %p51 = scmp.ne.s32.totalorder %s43, %s45
    %p52 = scmp.eq.s32.totalorder %s14, 1
    %p53 = por %p51, %p52
    %p54 = scmp.ne.s32.totalorder %s45, %s46
    %p55 = scmp.eq.s32.totalorder %s14, 0
    %p56 = por %p54, %p55
    %p57 = scmp.ne.s32.totalorder %s45, %s46
    %p58 = scmp.eq.s32.totalorder %s15, 1
    %p59 = por %p57, %p58
    %p61 = scmp.ne.s32.totalorder %s46, %s60
    %p62 = scmp.eq.s32.totalorder %s15, 0
    %p63 = por %p61, %p62
    %s65 = sadd.s32 %s64, 1
    %p68 = scmp.eq.s32.totalorder %s9, 1
    %p69 = scmp.ne.s32.totalorder %s64, %s66
    %p70 = scmp.eq.s32.totalorder %s9, 0
    %p71 = por %p69, %p70
    %p72 = scmp.ne.s32.totalorder %s64, %s66
    %p73 = scmp.eq.s32.totalorder %s14, 1
    %p74 = por %p72, %p73
    %p75 = scmp.ne.s32.totalorder %s66, %s67
    %p76 = scmp.eq.s32.totalorder %s14, 0
    %p77 = por %p75, %p76
    %p78 = scmp.ne.s32.totalorder %s66, %s67
    %p79 = scmp.eq.s32.totalorder %s15, 1
    %p80 = por %p78, %p79
    %p82 = scmp.ne.s32.totalorder %s67, %s81
    %p83 = scmp.eq.s32.totalorder %s15, 0
    %p84 = por %p82, %p83
    %s85 = ssub.s32 %s9, %s16
    %p86 = scmp.eq.s32.totalorder %s85, 0
    %s88 = sadd.s32 %s87, 1
    %s89 = scalar_select %p86, %s87, %s88
    %p92 = pneg %p86
    %p93 = scmp.eq.s32.totalorder %s9, 1
    %p94 = por %p92, %p93
    %p95 = scmp.ne.s32.totalorder %s87, %s90
    %p96 = scmp.eq.s32.totalorder %s9, 0
    %p97 = por %p95, %p96
    %p98 = scmp.ne.s32.totalorder %s87, %s90
    %p99 = scmp.eq.s32.totalorder %s14, 1
    %p100 = por %p98, %p99
    %p101 = scmp.ne.s32.totalorder %s90, %s91
    %p102 = scmp.eq.s32.totalorder %s14, 0
    %p103 = por %p101, %p102
    %p104 = scmp.ne.s32.totalorder %s90, %s91
    %p105 = scmp.eq.s32.totalorder %s15, 1
    %p106 = por %p104, %p105
    %p108 = scmp.ne.s32.totalorder %s91, %s107
    %p109 = scmp.eq.s32.totalorder %s15, 0
    %p110 = por %p108, %p109
    %p111 = scmp.le.s32.totalorder 1, %s9
    %p112 = scmp.lt.s32.totalorder %s9, 3
    %p113 = pnand %p111, %p112
    %p114 = pneg %p113
    // Predicated region
    $region9: #{entryflow_forward.14} parent=5 // pred_check
      _
    $region10: #{entryflow_forward.14} parent=5 // pred_check_branch
      %116 = sbr.rel (%p113) target = $region12
    $region11: #{entryflow_forward.14} parent=5 // pred_region
      %s117 = ssub.s32 %s9, 1
      // Predicated region
      $region13: #{entryflow_forward.14} parent=11 // pred_check
        %p118 = pneg %p56
      $region14: #{entryflow_forward.14} parent=11 // pred_check_branch
        %120 = sbr.rel (%p118) target = $region16
      $region15: #{entryflow_forward.14} parent=11 // pred_region
        _
      $region16: #{entryflow_forward.14} parent=11 // pred_fallthru
        _
      // Predicated region
      $region17: #{entryflow_forward.14} parent=11 // pred_check
        %p121 = pneg %p77
      $region18: #{entryflow_forward.14} parent=11 // pred_check_branch
        %123 = sbr.rel (%p121) target = $region20
      $region19: #{entryflow_forward.14} parent=11 // pred_region
        _
      $region20: #{entryflow_forward.14} parent=11 // pred_fallthru
        _
    $region12: #{entryflow_forward.14} parent=5 // pred_fallthru
      _
    %p124 = scmp.lt.s32.totalorder %s9, 2
    // Predicated region
    $region21: #{entryflow_forward.14} parent=5 // pred_check
      %p125 = pneg %p124
    $region22: #{entryflow_forward.14} parent=5 // pred_check_branch
      %127 = sbr.rel (%p125) target = $region24
    $region23: #{entryflow_forward.14} parent=5 // pred_region
      // Predicated region
      $region25: #{entryflow_forward.14} parent=23 // pred_check
        %p128 = pneg %p29
      $region26: #{entryflow_forward.14} parent=23 // pred_check_branch
        %130 = sbr.rel (%p128) target = $region28
      $region27: #{entryflow_forward.14} parent=23 // pred_region
        %s131 = smul.u32 8, %s9
        %p132 = scmp.lt.s32.totalorder %s131, 15
        %s133 = scalar_select %p132, %s131, 15
        %s134 = smul.addr %s133, 4
        %s135 = scalar_lea.vmem %s0, %s134
        %s136 = smul.u32 8, %s9
      $region28: #{entryflow_forward.14} parent=23 // pred_fallthru
        _
    $region24: #{entryflow_forward.14} parent=5 // pred_fallthru
      _
    %p137 = scmp.le.s32.totalorder 1, %s9
    %p138 = scmp.lt.s32.totalorder %s9, 3
    %p139 = pnand %p137, %p138
    %p140 = pneg %p139
    // Predicated region
    $region29: #{entryflow_forward.14} parent=5 // pred_check
      _
    $region30: #{entryflow_forward.14} parent=5 // pred_check_branch
      %142 = sbr.rel (%p139) target = $region32
    $region31: #{entryflow_forward.14} parent=5 // pred_region
      %s143 = ssub.s32 %s9, 1
      %s144 = smul.u32 8, %s14
      %p145 = scmp.lt.s32.totalorder %s144, 15
      %s146 = scalar_select %p145, %s144, 15
      %s147 = smul.addr %s146, 4
      %s148 = scalar_lea.vmem %s0, %s147
      %p149 = pneg %p35
      %p150 = pneg %p32
      %p151 = pneg %p56
      %p152 = pneg %p53
      %p153 = pneg %p77
      %p154 = pneg %p74
      %p155 = pneg %p103
      %p156 = pneg %p100
      %s157 = smul.u32 8, %s14
      %p158 = scmp.lt.s32.totalorder %s157, 15
      %s159 = scalar_select %p158, %s157, 15
      %s160 = smul.addr %s159, 4
      %s161 = scalar_lea.vmem %s3, %s160
      %s162 = smul.u32 8, %s14
      %p163 = scmp.lt.s32.totalorder %s162, 15
      %s164 = scalar_select %p163, %s162, 15
      %s165 = smul.addr %s164, 4
      %s166 = scalar_lea.vmem %s0, %s165
      %s167 = smul.u32 8, %s14
      %s168 = smul.u32 8, %s14
      %p169 = scmp.lt.s32.totalorder %s168, 15
      %s170 = scalar_select %p169, %s168, 15
      %s171 = smul.addr %s170, 4
      %s172 = scalar_lea.vmem %s3, %s171
      %s173 = smul.u32 8, %s14
      %v175 = vld [vmem:[%s166] sm:$0xf]
      %v176 = vld [vmem:[%s166 + $0x4] sm:$0xf]
      %v177 = vld [vmem:[%s166 + $0x8] sm:$0xf]
      %v178 = vld [vmem:[%s166 + $0xc] sm:$0xf]
      %v179 = vld [vmem:[%s166 + $0x10] sm:$0xf]
      %v180 = vld [vmem:[%s166 + $0x14] sm:$0xf]
      %v181 = vld [vmem:[%s166 + $0x18] sm:$0xf]
      %v182 = vld [vmem:[%s166 + $0x1c] sm:$0xf]
      %v183 = vld [vmem:[%s1] sm:$0xf]
      %v184 = vld [vmem:[%s1 + $0x4] sm:$0xf]
      %v185 = vld [vmem:[%s1 + $0x8] sm:$0xf]
      %v186 = vld [vmem:[%s1 + $0xc] sm:$0x3]
      %v187 = vld [vmem:[%s2] sm:$0x1]
      %v189 = vperm.slane %v187, 0
      %v199 = vunpack.c.l.b16 %v175
      %v200 = vunpack.c.l.b16 %v176
      %v201 = vunpack.c.l.b16 %v177
      %v202 = vunpack.c.l.b16 %v178
      %v203 = vunpack.c.l.b16 %v179
      %v204 = vunpack.c.l.b16 %v180
      %v205 = vunpack.c.l.b16 %v181
      %v206 = vunpack.c.l.b16 %v182
      %v207 = vpack.c.b16 %v200, %v199
      %v208 = vpack.c.b16 %v202, %v201
      %v209 = vpack.c.b16 %v204, %v203
      %v210 = vpack.c.b16 %v206, %v205
      %v215 = vunpack.c.l.b16 %v183
      %v216 = vunpack.c.l.b16 %v184
      %v217 = vunpack.c.l.b16 %v185
      %v218 = vunpack.c.l.b16 %v186
      %v219 = vpack.c.b16 %v216, %v215
      %v220 = vpack.c.b16 %v218, %v217
      %vm222 = vcmask 220160
      %v224 = vsel %vm222, %v207, 0
      %v227 = vsel %vm222, %v208, 0
      %v230 = vsel %vm222, %v209, 0
      %v233 = vsel %vm222, %v210, 0
      %vm235 = vcmask 1044480
      %vm236 = vcmask 1045504
      %v237 = vsel %vm235, 4294967295, 65535
      %v238 = vsel %vm236, %v237, 0
      %v240 = vand.u32 %v220, %v238
      %242 = vmatpush.bf16.msra.mxu0 0
      %243 = vmatpush.bf16.msra.mxu0 0
      %244 = vmatpush.bf16.msra.mxu0 0
      %245 = vmatpush.bf16.msra.mxu0 0
      %246 = vmatpush.bf16.msra.mxu0 0
      %247 = vmatpush.bf16.msra.mxu0 0
      %248 = vmatpush.bf16.msra.mxu0 %v240
      %249 = vmatpush.bf16.msra.mxu0 %v219
      %250 = vmatmul.bf16.gmra.mxu0 %v224
      %v251 = vpop.f32.mrf.mxu0
      %v252 = vadd.f32 %v189, %v251
      %v253 = vpop.f32.mrf.mxu0
      %v254 = vadd.f32 %v189, %v253
      %255 = vmatmul.bf16.gmra.mxu0 %v227
      %v256 = vpop.f32.mrf.mxu0
      %v257 = vadd.f32 %v189, %v256
      %v258 = vpop.f32.mrf.mxu0
      %v259 = vadd.f32 %v189, %v258
      %260 = vmatmul.bf16.gmra.mxu0 %v230
      %v261 = vpop.f32.mrf.mxu0
      %v262 = vadd.f32 %v189, %v261
      %v263 = vpop.f32.mrf.mxu0
      %v264 = vadd.f32 %v189, %v263
      %265 = vmatmul.bf16.gmra.mxu0 %v233
      %v266 = vpop.f32.mrf.mxu0
      %v267 = vadd.f32 %v189, %v266
      %v268 = vpop.f32.mrf.mxu0
      %v269 = vadd.f32 %v189, %v268
      %270 = vdwg.mxu0
      %v271 = vmax.f32 %v252, 0.0
      %v272 = vmax.f32 %v254, 0.0
      %v273 = vmax.f32 %v257, 0.0
      %v274 = vmax.f32 %v259, 0.0
      %v275 = vmax.f32 %v262, 0.0
      %v276 = vmax.f32 %v264, 0.0
      %v277 = vmax.f32 %v267, 0.0
      %v278 = vmax.f32 %v269, 0.0
      %v279 = vmin.f32 %v271, 6.0
      %v280 = vmin.f32 %v272, 6.0
      %v281 = vmin.f32 %v273, 6.0
      %v282 = vmin.f32 %v274, 6.0
      %v283 = vmin.f32 %v275, 6.0
      %v284 = vmin.f32 %v276, 6.0
      %v285 = vmin.f32 %v277, 6.0
      %v286 = vmin.f32 %v278, 6.0
      %v287 = vpack.c.bf16 %v279, %v279
      %v288 = vpack.c.bf16 %v280, %v280
      %v289 = vpack.c.bf16 %v281, %v281
      %v290 = vpack.c.bf16 %v282, %v282
      %v291 = vpack.c.bf16 %v283, %v283
      %v292 = vpack.c.bf16 %v284, %v284
      %v293 = vpack.c.bf16 %v285, %v285
      %v294 = vpack.c.bf16 %v286, %v286
      %295 = vst [vmem:[%s172] sm:$0xf] %v287
      %296 = vst [vmem:[%s172 + $0x4] sm:$0xf] %v288
      %297 = vst [vmem:[%s172 + $0x8] sm:$0xf] %v289
      %298 = vst [vmem:[%s172 + $0xc] sm:$0xf] %v290
      %299 = vst [vmem:[%s172 + $0x10] sm:$0xf] %v291
      %300 = vst [vmem:[%s172 + $0x14] sm:$0xf] %v292
      %301 = vst [vmem:[%s172 + $0x18] sm:$0xf] %v293
      %302 = vst [vmem:[%s172 + $0x1c] sm:$0xf] %v294
      %s303 = smul.u32 8, %s14
      %p304 = scmp.lt.s32.totalorder %s303, 15
      %s305 = scalar_select %p304, %s303, 15
      %s306 = smul.addr %s305, 4
      %s307 = scalar_lea.vmem %s3, %s306
      // Predicated region
      $region33: #{entryflow_forward.14} parent=31 // pred_check
        %p308 = pneg %p100
      $region34: #{entryflow_forward.14} parent=31 // pred_check_branch
        %310 = sbr.rel (%p308) target = $region36
      $region35: #{entryflow_forward.14} parent=31 // pred_region
        %s311 = smul.u32 8, %s14
      $region36: #{entryflow_forward.14} parent=31 // pred_fallthru
        _
    $region32: #{entryflow_forward.14} parent=5 // pred_fallthru
      _
    %p312 = scmp.le.s32.totalorder 2, %s9
    // Predicated region
    $region37: #{entryflow_forward.14} parent=5 // pred_check
      %p313 = pneg %p312
    $region38: #{entryflow_forward.14} parent=5 // pred_check_branch
      %315 = sbr.rel (%p313) target = $region40
    $region39: #{entryflow_forward.14} parent=5 // pred_region
      %s316 = ssub.s32 %s9, 2
      // Predicated region
      $region41: #{entryflow_forward.14} parent=39 // pred_check
        %p317 = pneg %p106
      $region42: #{entryflow_forward.14} parent=39 // pred_check_branch
        %319 = sbr.rel (%p317) target = $region44
      $region43: #{entryflow_forward.14} parent=39 // pred_region
        %s320 = smul.u32 8, %s15
        %p321 = scmp.lt.s32.totalorder %s320, 15
        %s322 = scalar_select %p321, %s320, 15
        %s323 = smul.addr %s322, 4
        %s324 = scalar_lea.vmem %s3, %s323
      $region44: #{entryflow_forward.14} parent=39 // pred_fallthru
        _
    $region40: #{entryflow_forward.14} parent=5 // pred_fallthru
      _
  $region6: #{entryflow_forward.14} parent=0 // loop_footer
    %s13 = sadd.s32 1, %s9
  $region7: #{entryflow_forward.14} parent=0 // loop_footer_branch
    %8 = sbr.rel target = $region3
  $region8: #{entryflow_forward.14} parent=0 // loop_exit
    _

// kernel: entryflow_forward.15
$region0: #{entryflow_forward.15}
  #allocation0 [shape = 'u32[]', space=smem, size = 0x4, offset = 0x4, fixed_abs, tag = 'smem constant byte address 0x4 - core index']
  #allocation1 [shape = 'u32[72,128]{1,0:T(1,128)}', space=vmem, size = 0x9000, scoped, tag = 'internal scratch']
  %s0 = inlined_call_operand.vmem [shape: bf16[128,72], index: 0, kind: input, shape index: {}]
  %s1 = inlined_call_operand.vmem [shape: bf16[72,128], index: 1, kind: input, shape index: {}]
  %s2 = inlined_call_operand.vmem [shape: f32[1,128], index: 2, kind: input, shape index: {}]
  %s3 = inlined_call_operand.vmem [shape: bf16[128,128], index: 3, kind: output, shape index: {}]
  %s4 = sld [smem:[#allocation0]]
  $region45: #{entryflow_forward.15} parent=0
    _
  %s6 = ssub.s32 1, %s4
  %s7 = scalar_select 0, %s6, %s4
  loop: start=0, step=1, limit=4
  $region2: #{entryflow_forward.15} parent=0 // loop_pre_header
    _
  $region3: #{entryflow_forward.15} parent=0 // loop_header
    %s9 = sphi 0, %s13
    %p10 = scmp.ge.s32.totalorder %s9, 4
    %s19 = sphi 0, %s21
    %s22 = sphi 0, %s19
    %s23 = sphi 0, %s22
    %s39 = sphi 0, %s23
    %s43 = sphi 0, %s43
    %s45 = sphi 0, %s43
    %s46 = sphi 0, %s45
    %s60 = sphi 0, %s46
    %s64 = sphi 0, %s64
    %s66 = sphi 0, %s64
    %s67 = sphi 0, %s66
    %s81 = sphi 0, %s67
    %s87 = sphi 0, %s89
    %s90 = sphi 0, %s87
    %s91 = sphi 0, %s90
    %s107 = sphi 0, %s91
  $region4: #{entryflow_forward.15} parent=0 // loop_header_branch
    %12 = sbr.rel (%p10) target = $region8
  $region5: #{entryflow_forward.15} parent=0 // loop_body
    %s14 = ssub.s32 %s9, 1
    %s15 = ssub.s32 %s9, 2
    %s16 = sadd.s32 %s9, 1
    %s17 = ssub.s32 %s9, %s16
    %p18 = scmp.eq.s32.totalorder %s17, 0
    %s20 = sadd.s32 %s19, 1
    %s21 = scalar_select %p18, %s19, %s20
    %p24 = pneg %p18
    %p25 = scmp.eq.s32.totalorder %s9, 1
    %p26 = por %p24, %p25
    %p27 = scmp.ne.s32.totalorder %s19, %s22
    %p28 = scmp.eq.s32.totalorder %s9, 0
    %p29 = por %p27, %p28
    %p30 = scmp.ne.s32.totalorder %s19, %s22
    %p31 = scmp.eq.s32.totalorder %s14, 1
    %p32 = por %p30, %p31
    %p33 = scmp.ne.s32.totalorder %s22, %s23
    %p34 = scmp.eq.s32.totalorder %s14, 0
    %p35 = por %p33, %p34
    %p36 = scmp.ne.s32.totalorder %s22, %s23
    %p37 = scmp.eq.s32.totalorder %s15, 1
    %p38 = por %p36, %p37
    %p40 = scmp.ne.s32.totalorder %s23, %s39
    %p41 = scmp.eq.s32.totalorder %s15, 0
    %p42 = por %p40, %p41
    %s44 = sadd.s32 %s43, 1
    %p47 = scmp.eq.s32.totalorder %s9, 1
    %p48 = scmp.ne.s32.totalorder %s43, %s45
    %p49 = scmp.eq.s32.totalorder %s9, 0
    %p50 = por %p48, %p49
    %p51 = scmp.ne.s32.totalorder %s43, %s45
    %p52 = scmp.eq.s32.totalorder %s14, 1
    %p53 = por %p51, %p52
    %p54 = scmp.ne.s32.totalorder %s45, %s46
    %p55 = scmp.eq.s32.totalorder %s14, 0
    %p56 = por %p54, %p55
    %p57 = scmp.ne.s32.totalorder %s45, %s46
    %p58 = scmp.eq.s32.totalorder %s15, 1
    %p59 = por %p57, %p58
    %p61 = scmp.ne.s32.totalorder %s46, %s60
    %p62 = scmp.eq.s32.totalorder %s15, 0
    %p63 = por %p61, %p62
    %s65 = sadd.s32 %s64, 1
    %p68 = scmp.eq.s32.totalorder %s9, 1
    %p69 = scmp.ne.s32.totalorder %s64, %s66
    %p70 = scmp.eq.s32.totalorder %s9, 0
    %p71 = por %p69, %p70
    %p72 = scmp.ne.s32.totalorder %s64, %s66
    %p73 = scmp.eq.s32.totalorder %s14, 1
    %p74 = por %p72, %p73
    %p75 = scmp.ne.s32.totalorder %s66, %s67
    %p76 = scmp.eq.s32.totalorder %s14, 0
    %p77 = por %p75, %p76
    %p78 = scmp.ne.s32.totalorder %s66, %s67
    %p79 = scmp.eq.s32.totalorder %s15, 1
    %p80 = por %p78, %p79
    %p82 = scmp.ne.s32.totalorder %s67, %s81
    %p83 = scmp.eq.s32.totalorder %s15, 0
    %p84 = por %p82, %p83
    %s85 = ssub.s32 %s9, %s16
    %p86 = scmp.eq.s32.totalorder %s85, 0
    %s88 = sadd.s32 %s87, 1
    %s89 = scalar_select %p86, %s87, %s88
    %p92 = pneg %p86
    %p93 = scmp.eq.s32.totalorder %s9, 1
    %p94 = por %p92, %p93
    %p95 = scmp.ne.s32.totalorder %s87, %s90
    %p96 = scmp.eq.s32.totalorder %s9, 0
    %p97 = por %p95, %p96
    %p98 = scmp.ne.s32.totalorder %s87, %s90
    %p99 = scmp.eq.s32.totalorder %s14, 1
    %p100 = por %p98, %p99
    %p101 = scmp.ne.s32.totalorder %s90, %s91
    %p102 = scmp.eq.s32.totalorder %s14, 0
    %p103 = por %p101, %p102
    %p104 = scmp.ne.s32.totalorder %s90, %s91
    %p105 = scmp.eq.s32.totalorder %s15, 1
    %p106 = por %p104, %p105
    %p108 = scmp.ne.s32.totalorder %s91, %s107
    %p109 = scmp.eq.s32.totalorder %s15, 0
    %p110 = por %p108, %p109
    %p111 = scmp.le.s32.totalorder 1, %s9
    %p112 = scmp.lt.s32.totalorder %s9, 3
    %p113 = pnand %p111, %p112
    %p114 = pneg %p113
    // Predicated region
    $region9: #{entryflow_forward.15} parent=5 // pred_check
      _
    $region10: #{entryflow_forward.15} parent=5 // pred_check_branch
      %116 = sbr.rel (%p113) target = $region12
    $region11: #{entryflow_forward.15} parent=5 // pred_region
      %s117 = ssub.s32 %s9, 1
      // Predicated region
      $region13: #{entryflow_forward.15} parent=11 // pred_check
        %p118 = pneg %p56
      $region14: #{entryflow_forward.15} parent=11 // pred_check_branch
        %120 = sbr.rel (%p118) target = $region16
      $region15: #{entryflow_forward.15} parent=11 // pred_region
        _
      $region16: #{entryflow_forward.15} parent=11 // pred_fallthru
        _
      // Predicated region
      $region17: #{entryflow_forward.15} parent=11 // pred_check
        %p121 = pneg %p77
      $region18: #{entryflow_forward.15} parent=11 // pred_check_branch
        %123 = sbr.rel (%p121) target = $region20
      $region19: #{entryflow_forward.15} parent=11 // pred_region
        _
      $region20: #{entryflow_forward.15} parent=11 // pred_fallthru
        _
    $region12: #{entryflow_forward.15} parent=5 // pred_fallthru
      _
    %p124 = scmp.lt.s32.totalorder %s9, 2
    // Predicated region
    $region21: #{entryflow_forward.15} parent=5 // pred_check
      %p125 = pneg %p124
    $region22: #{entryflow_forward.15} parent=5 // pred_check_branch
      %127 = sbr.rel (%p125) target = $region24
    $region23: #{entryflow_forward.15} parent=5 // pred_region
      // Predicated region
      $region25: #{entryflow_forward.15} parent=23 // pred_check
        %p128 = pneg %p29
      $region26: #{entryflow_forward.15} parent=23 // pred_check_branch
        %130 = sbr.rel (%p128) target = $region28
      $region27: #{entryflow_forward.15} parent=23 // pred_region
        %s131 = smul.u32 8, %s9
        %p132 = scmp.lt.s32.totalorder %s131, 15
        %s133 = scalar_select %p132, %s131, 15
        %s134 = smul.addr %s133, 4
        %s135 = scalar_lea.vmem %s0, %s134
        %s136 = smul.u32 8, %s9
      $region28: #{entryflow_forward.15} parent=23 // pred_fallthru
        _
    $region24: #{entryflow_forward.15} parent=5 // pred_fallthru
      _
    %p137 = scmp.le.s32.totalorder 1, %s9
    %p138 = scmp.lt.s32.totalorder %s9, 3
    %p139 = pnand %p137, %p138
    %p140 = pneg %p139
    // Predicated region
    $region29: #{entryflow_forward.15} parent=5 // pred_check
      _
    $region30: #{entryflow_forward.15} parent=5 // pred_check_branch
      %142 = sbr.rel (%p139) target = $region32
    $region31: #{entryflow_forward.15} parent=5 // pred_region
      %s143 = ssub.s32 %s9, 1
      %s144 = smul.u32 8, %s14
      %p145 = scmp.lt.s32.totalorder %s144, 15
      %s146 = scalar_select %p145, %s144, 15
      %s147 = smul.addr %s146, 4
      %s148 = scalar_lea.vmem %s0, %s147
      %p149 = pneg %p35
      %p150 = pneg %p32
      %p151 = pneg %p56
      %p152 = pneg %p53
      %p153 = pneg %p77
      %p154 = pneg %p74
      %p155 = pneg %p103
      %p156 = pneg %p100
      %s157 = smul.u32 8, %s14
      %p158 = scmp.lt.s32.totalorder %s157, 15
      %s159 = scalar_select %p158, %s157, 15
      %s160 = smul.addr %s159, 4
      %s161 = scalar_lea.vmem %s3, %s160
      %s162 = smul.u32 8, %s14
      %p163 = scmp.lt.s32.totalorder %s162, 15
      %s164 = scalar_select %p163, %s162, 15
      %s165 = smul.addr %s164, 4
      %s166 = scalar_lea.vmem %s0, %s165
      %s167 = smul.u32 8, %s14
      %s168 = smul.u32 8, %s14
      %p169 = scmp.lt.s32.totalorder %s168, 15
      %s170 = scalar_select %p169, %s168, 15
      %s171 = smul.addr %s170, 4
      %s172 = scalar_lea.vmem %s3, %s171
      %s173 = smul.u32 8, %s14
      %v175 = vld [vmem:[%s166] sm:$0xf]
      %v176 = vld [vmem:[%s166 + $0x4] sm:$0xf]
      %v177 = vld [vmem:[%s166 + $0x8] sm:$0xf]
      %v178 = vld [vmem:[%s166 + $0xc] sm:$0xf]
      %v179 = vld [vmem:[%s166 + $0x10] sm:$0xf]
      %v180 = vld [vmem:[%s166 + $0x14] sm:$0xf]
      %v181 = vld [vmem:[%s166 + $0x18] sm:$0xf]
      %v182 = vld [vmem:[%s166 + $0x1c] sm:$0xf]
      %v183 = vld [vmem:[%s1] sm:$0xf]
      %v184 = vld [vmem:[%s1 + $0x4] sm:$0xf]
      %v185 = vld [vmem:[%s1 + $0x8] sm:$0xf]
      %v186 = vld [vmem:[%s1 + $0xc] sm:$0xf]
      %v187 = vld [vmem:[%s1 + $0x10] sm:$0xf]
      %v188 = vld [vmem:[%s1 + $0x14] sm:$0xf]
      %v189 = vld [vmem:[%s1 + $0x18] sm:$0xf]
      %v190 = vld [vmem:[%s1 + $0x1c] sm:$0xf]
      %v191 = vld [vmem:[%s1 + $0x20] sm:$0xf]
      %v192 = vld [vmem:[%s2] sm:$0x1]
      %v194 = vperm.slane %v192, 0
      %v204 = vunpack.c.l.b16 %v175
      %v205 = vunpack.c.l.b16 %v176
      %v206 = vunpack.c.l.b16 %v177
      %v207 = vunpack.c.l.b16 %v178
      %v208 = vunpack.c.l.b16 %v179
      %v209 = vunpack.c.l.b16 %v180
      %v210 = vunpack.c.l.b16 %v181
      %v211 = vunpack.c.l.b16 %v182
      %v212 = vpack.c.b16 %v205, %v204
      %v213 = vpack.c.b16 %v207, %v206
      %v214 = vpack.c.b16 %v209, %v208
      %v215 = vpack.c.b16 %v211, %v210
      %v225 = vunpack.c.l.b16 %v183
      %v226 = vunpack.c.l.b16 %v184
      %v227 = vunpack.c.l.b16 %v185
      %v228 = vunpack.c.l.b16 %v186
      %v229 = vunpack.c.l.b16 %v187
      %v230 = vunpack.c.l.b16 %v188
      %v231 = vunpack.c.l.b16 %v189
      %v232 = vunpack.c.l.b16 %v190
      %v233 = vunpack.c.l.b16 %v191
      %v234 = vpack.c.b16 %v226, %v225
      %v235 = vpack.c.b16 %v228, %v227
      %v236 = vpack.c.b16 %v230, %v229
      %v237 = vpack.c.b16 %v232, %v231
      %v238 = vpack.c.b16 %v233, %v233
      %vm243 = vcmask 588800
      %v245 = vsel %vm243, %v212, 0
      %v248 = vsel %vm243, %v213, 0
      %v251 = vsel %vm243, %v214, 0
      %v254 = vsel %vm243, %v215, 0
      %vm256 = vcmask 1043456
      %v258 = vsel %vm256, %v238, 0
      %260 = vmatpush.bf16.msra.mxu0 0
      %261 = vmatpush.bf16.msra.mxu0 0
      %262 = vmatpush.bf16.msra.mxu0 0
      %263 = vmatpush.bf16.msra.mxu0 %v258
      %264 = vmatpush.bf16.msra.mxu0 %v237
      %265 = vmatpush.bf16.msra.mxu0 %v236
      %266 = vmatpush.bf16.msra.mxu0 %v235
      %267 = vmatpush.bf16.msra.mxu0 %v234
      %268 = vmatmul.bf16.gmra.mxu0 %v245
      %v269 = vpop.f32.mrf.mxu0
      %v270 = vadd.f32 %v194, %v269
      %v271 = vpop.f32.mrf.mxu0
      %v272 = vadd.f32 %v194, %v271
      %273 = vmatmul.bf16.gmra.mxu0 %v248
      %v274 = vpop.f32.mrf.mxu0
      %v275 = vadd.f32 %v194, %v274
      %v276 = vpop.f32.mrf.mxu0
      %v277 = vadd.f32 %v194, %v276
      %278 = vmatmul.bf16.gmra.mxu0 %v251
      %v279 = vpop.f32.mrf.mxu0
      %v280 = vadd.f32 %v194, %v279
      %v281 = vpop.f32.mrf.mxu0
      %v282 = vadd.f32 %v194, %v281
      %283 = vmatmul.bf16.gmra.mxu0 %v254
      %v284 = vpop.f32.mrf.mxu0
      %v285 = vadd.f32 %v194, %v284
      %v286 = vpop.f32.mrf.mxu0
      %v287 = vadd.f32 %v194, %v286
      %288 = vdwg.mxu0
      %v289 = vmax.f32 %v270, 0.0
      %v290 = vmax.f32 %v272, 0.0
      %v291 = vmax.f32 %v275, 0.0
      %v292 = vmax.f32 %v277, 0.0
      %v293 = vmax.f32 %v280, 0.0
      %v294 = vmax.f32 %v282, 0.0
      %v295 = vmax.f32 %v285, 0.0
      %v296 = vmax.f32 %v287, 0.0
      %v297 = vmin.f32 %v289, 6.0
      %v298 = vmin.f32 %v290, 6.0
      %v299 = vmin.f32 %v291, 6.0
      %v300 = vmin.f32 %v292, 6.0
      %v301 = vmin.f32 %v293, 6.0
      %v302 = vmin.f32 %v294, 6.0
      %v303 = vmin.f32 %v295, 6.0
      %v304 = vmin.f32 %v296, 6.0
      %v305 = vpack.c.bf16 %v297, %v297
      %v306 = vpack.c.bf16 %v298, %v298
      %v307 = vpack.c.bf16 %v299, %v299
      %v308 = vpack.c.bf16 %v300, %v300
      %v309 = vpack.c.bf16 %v301, %v301
      %v310 = vpack.c.bf16 %v302, %v302
      %v311 = vpack.c.bf16 %v303, %v303
      %v312 = vpack.c.bf16 %v304, %v304
      %313 = vst [vmem:[%s172] sm:$0xf] %v305
      %314 = vst [vmem:[%s172 + $0x4] sm:$0xf] %v306
      %315 = vst [vmem:[%s172 + $0x8] sm:$0xf] %v307
      %316 = vst [vmem:[%s172 + $0xc] sm:$0xf] %v308
      %317 = vst [vmem:[%s172 + $0x10] sm:$0xf] %v309
      %318 = vst [vmem:[%s172 + $0x14] sm:$0xf] %v310
      %319 = vst [vmem:[%s172 + $0x18] sm:$0xf] %v311
      %320 = vst [vmem:[%s172 + $0x1c] sm:$0xf] %v312
      %s321 = smul.u32 8, %s14
      %p322 = scmp.lt.s32.totalorder %s321, 15
      %s323 = scalar_select %p322, %s321, 15
      %s324 = smul.addr %s323, 4
      %s325 = scalar_lea.vmem %s3, %s324
      // Predicated region
      $region33: #{entryflow_forward.15} parent=31 // pred_check
        %p326 = pneg %p100
      $region34: #{entryflow_forward.15} parent=31 // pred_check_branch
        %328 = sbr.rel (%p326) target = $region36
      $region35: #{entryflow_forward.15} parent=31 // pred_region
        %s329 = smul.u32 8, %s14
      $region36: #{entryflow_forward.15} parent=31 // pred_fallthru
        _
    $region32: #{entryflow_forward.15} parent=5 // pred_fallthru
      _
    %p330 = scmp.le.s32.totalorder 2, %s9
    // Predicated region
    $region37: #{entryflow_forward.15} parent=5 // pred_check
      %p331 = pneg %p330
    $region38: #{entryflow_forward.15} parent=5 // pred_check_branch
      %333 = sbr.rel (%p331) target = $region40
    $region39: #{entryflow_forward.15} parent=5 // pred_region
      %s334 = ssub.s32 %s9, 2
      // Predicated region
      $region41: #{entryflow_forward.15} parent=39 // pred_check
        %p335 = pneg %p106
      $region42: #{entryflow_forward.15} parent=39 // pred_check_branch
        %337 = sbr.rel (%p335) target = $region44
      $region43: #{entryflow_forward.15} parent=39 // pred_region
        %s338 = smul.u32 8, %s15
        %p339 = scmp.lt.s32.totalorder %s338, 15
        %s340 = scalar_select %p339, %s338, 15
        %s341 = smul.addr %s340, 4
        %s342 = scalar_lea.vmem %s3, %s341
      $region44: #{entryflow_forward.15} parent=39 // pred_fallthru
        _
    $region40: #{entryflow_forward.15} parent=5 // pred_fallthru
      _
  $region6: #{entryflow_forward.15} parent=0 // loop_footer
    %s13 = sadd.s32 1, %s9
  $region7: #{entryflow_forward.15} parent=0 // loop_footer_branch
    %8 = sbr.rel target = $region3
  $region8: #{entryflow_forward.15} parent=0 // loop_exit
    _

// kernel: entryflow_forward.18
$region0: #{entryflow_forward.18}
  #allocation0 [shape = 'u32[]', space=smem, size = 0x4, offset = 0x4, fixed_abs, tag = 'smem constant byte address 0x4 - core index']
  #allocation1 [shape = 'u32[72,128]{1,0:T(1,128)}', space=vmem, size = 0x9000, scoped, tag = 'internal scratch']
  %s0 = inlined_call_operand.vmem [shape: bf16[32,16], index: 0, kind: input, shape index: {}]
  %s1 = inlined_call_operand.vmem [shape: bf16[16,128], index: 1, kind: input, shape index: {}]
  %s2 = inlined_call_operand.vmem [shape: f32[1,128], index: 2, kind: input, shape index: {}]
  %s3 = inlined_call_operand.vmem [shape: bf16[32,128], index: 3, kind: output, shape index: {}]
  %s4 = sld [smem:[#allocation0]]
  $region45: #{entryflow_forward.18} parent=0
    _
  %s6 = ssub.s32 1, %s4
  %s7 = scalar_select 0, %s6, %s4
  loop: start=0, step=1, limit=4
  $region2: #{entryflow_forward.18} parent=0 // loop_pre_header
    _
  $region3: #{entryflow_forward.18} parent=0 // loop_header
    %s9 = sphi 0, %s13
    %p10 = scmp.ge.s32.totalorder %s9, 4
    %s19 = sphi 0, %s21
    %s22 = sphi 0, %s19
    %s23 = sphi 0, %s22
    %s39 = sphi 0, %s23
    %s43 = sphi 0, %s43
    %s45 = sphi 0, %s43
    %s46 = sphi 0, %s45
    %s60 = sphi 0, %s46
    %s64 = sphi 0, %s64
    %s66 = sphi 0, %s64
    %s67 = sphi 0, %s66
    %s81 = sphi 0, %s67
    %s87 = sphi 0, %s89
    %s90 = sphi 0, %s87
    %s91 = sphi 0, %s90
    %s107 = sphi 0, %s91
  $region4: #{entryflow_forward.18} parent=0 // loop_header_branch
    %12 = sbr.rel (%p10) target = $region8
  $region5: #{entryflow_forward.18} parent=0 // loop_body
    %s14 = ssub.s32 %s9, 1
    %s15 = ssub.s32 %s9, 2
    %s16 = sadd.s32 %s9, 1
    %s17 = ssub.s32 %s9, %s16
    %p18 = scmp.eq.s32.totalorder %s17, 0
    %s20 = sadd.s32 %s19, 1
    %s21 = scalar_select %p18, %s19, %s20
    %p24 = pneg %p18
    %p25 = scmp.eq.s32.totalorder %s9, 1
    %p26 = por %p24, %p25
    %p27 = scmp.ne.s32.totalorder %s19, %s22
    %p28 = scmp.eq.s32.totalorder %s9, 0
    %p29 = por %p27, %p28
    %p30 = scmp.ne.s32.totalorder %s19, %s22
    %p31 = scmp.eq.s32.totalorder %s14, 1
    %p32 = por %p30, %p31
    %p33 = scmp.ne.s32.totalorder %s22, %s23
    %p34 = scmp.eq.s32.totalorder %s14, 0
    %p35 = por %p33, %p34
    %p36 = scmp.ne.s32.totalorder %s22, %s23
    %p37 = scmp.eq.s32.totalorder %s15, 1
    %p38 = por %p36, %p37
    %p40 = scmp.ne.s32.totalorder %s23, %s39
    %p41 = scmp.eq.s32.totalorder %s15, 0
    %p42 = por %p40, %p41
    %s44 = sadd.s32 %s43, 1
    %p47 = scmp.eq.s32.totalorder %s9, 1
    %p48 = scmp.ne.s32.totalorder %s43, %s45
    %p49 = scmp.eq.s32.totalorder %s9, 0
    %p50 = por %p48, %p49
    %p51 = scmp.ne.s32.totalorder %s43, %s45
    %p52 = scmp.eq.s32.totalorder %s14, 1
    %p53 = por %p51, %p52
    %p54 = scmp.ne.s32.totalorder %s45, %s46
    %p55 = scmp.eq.s32.totalorder %s14, 0
    %p56 = por %p54, %p55
    %p57 = scmp.ne.s32.totalorder %s45, %s46
    %p58 = scmp.eq.s32.totalorder %s15, 1
    %p59 = por %p57, %p58
    %p61 = scmp.ne.s32.totalorder %s46, %s60
    %p62 = scmp.eq.s32.totalorder %s15, 0
    %p63 = por %p61, %p62
    %s65 = sadd.s32 %s64, 1
    %p68 = scmp.eq.s32.totalorder %s9, 1
    %p69 = scmp.ne.s32.totalorder %s64, %s66
    %p70 = scmp.eq.s32.totalorder %s9, 0
    %p71 = por %p69, %p70
    %p72 = scmp.ne.s32.totalorder %s64, %s66
    %p73 = scmp.eq.s32.totalorder %s14, 1
    %p74 = por %p72, %p73
    %p75 = scmp.ne.s32.totalorder %s66, %s67
    %p76 = scmp.eq.s32.totalorder %s14, 0
    %p77 = por %p75, %p76
    %p78 = scmp.ne.s32.totalorder %s66, %s67
    %p79 = scmp.eq.s32.totalorder %s15, 1
    %p80 = por %p78, %p79
    %p82 = scmp.ne.s32.totalorder %s67, %s81
    %p83 = scmp.eq.s32.totalorder %s15, 0
    %p84 = por %p82, %p83
    %s85 = ssub.s32 %s9, %s16
    %p86 = scmp.eq.s32.totalorder %s85, 0
    %s88 = sadd.s32 %s87, 1
    %s89 = scalar_select %p86, %s87, %s88
    %p92 = pneg %p86
    %p93 = scmp.eq.s32.totalorder %s9, 1
    %p94 = por %p92, %p93
    %p95 = scmp.ne.s32.totalorder %s87, %s90
    %p96 = scmp.eq.s32.totalorder %s9, 0
    %p97 = por %p95, %p96
    %p98 = scmp.ne.s32.totalorder %s87, %s90
    %p99 = scmp.eq.s32.totalorder %s14, 1
    %p100 = por %p98, %p99
    %p101 = scmp.ne.s32.totalorder %s90, %s91
    %p102 = scmp.eq.s32.totalorder %s14, 0
    %p103 = por %p101, %p102
    %p104 = scmp.ne.s32.totalorder %s90, %s91
    %p105 = scmp.eq.s32.totalorder %s15, 1
    %p106 = por %p104, %p105
    %p108 = scmp.ne.s32.totalorder %s91, %s107
    %p109 = scmp.eq.s32.totalorder %s15, 0
    %p110 = por %p108, %p109
    %p111 = scmp.le.s32.totalorder 1, %s9
    %p112 = scmp.lt.s32.totalorder %s9, 3
    %p113 = pnand %p111, %p112
    %p114 = pneg %p113
    // Predicated region
    $region9: #{entryflow_forward.18} parent=5 // pred_check
      _
    $region10: #{entryflow_forward.18} parent=5 // pred_check_branch
      %116 = sbr.rel (%p113) target = $region12
    $region11: #{entryflow_forward.18} parent=5 // pred_region
      %s117 = ssub.s32 %s9, 1
      // Predicated region
      $region13: #{entryflow_forward.18} parent=11 // pred_check
        %p118 = pneg %p56
      $region14: #{entryflow_forward.18} parent=11 // pred_check_branch
        %120 = sbr.rel (%p118) target = $region16
      $region15: #{entryflow_forward.18} parent=11 // pred_region
        _
      $region16: #{entryflow_forward.18} parent=11 // pred_fallthru
        _
      // Predicated region
      $region17: #{entryflow_forward.18} parent=11 // pred_check
        %p121 = pneg %p77
      $region18: #{entryflow_forward.18} parent=11 // pred_check_branch
        %123 = sbr.rel (%p121) target = $region20
      $region19: #{entryflow_forward.18} parent=11 // pred_region
        _
      $region20: #{entryflow_forward.18} parent=11 // pred_fallthru
        _
    $region12: #{entryflow_forward.18} parent=5 // pred_fallthru
      _
    %p124 = scmp.lt.s32.totalorder %s9, 2
    // Predicated region
    $region21: #{entryflow_forward.18} parent=5 // pred_check
      %p125 = pneg %p124
    $region22: #{entryflow_forward.18} parent=5 // pred_check_branch
      %127 = sbr.rel (%p125) target = $region24
    $region23: #{entryflow_forward.18} parent=5 // pred_region
      // Predicated region
      $region25: #{entryflow_forward.18} parent=23 // pred_check
        %p128 = pneg %p29
      $region26: #{entryflow_forward.18} parent=23 // pred_check_branch
        %130 = sbr.rel (%p128) target = $region28
      $region27: #{entryflow_forward.18} parent=23 // pred_region
        %s131 = smul.u32 2, %s9
        %p132 = scmp.lt.s32.totalorder %s131, 3
        %s133 = scalar_select %p132, %s131, 3
        %s134 = smul.addr %s133, 4
        %s135 = scalar_lea.vmem %s0, %s134
        %s136 = smul.u32 2, %s9
      $region28: #{entryflow_forward.18} parent=23 // pred_fallthru
        _
    $region24: #{entryflow_forward.18} parent=5 // pred_fallthru
      _
    %p137 = scmp.le.s32.totalorder 1, %s9
    %p138 = scmp.lt.s32.totalorder %s9, 3
    %p139 = pnand %p137, %p138
    %p140 = pneg %p139
    // Predicated region
    $region29: #{entryflow_forward.18} parent=5 // pred_check
      _
    $region30: #{entryflow_forward.18} parent=5 // pred_check_branch
      %142 = sbr.rel (%p139) target = $region32
    $region31: #{entryflow_forward.18} parent=5 // pred_region
      %s143 = ssub.s32 %s9, 1
      %s144 = smul.u32 2, %s14
      %p145 = scmp.lt.s32.totalorder %s144, 3
      %s146 = scalar_select %p145, %s144, 3
      %s147 = smul.addr %s146, 4
      %s148 = scalar_lea.vmem %s0, %s147
      %p149 = pneg %p35
      %p150 = pneg %p32
      %p151 = pneg %p56
      %p152 = pneg %p53
      %p153 = pneg %p77
      %p154 = pneg %p74
      %p155 = pneg %p103
      %p156 = pneg %p100
      %s157 = smul.u32 2, %s14
      %p158 = scmp.lt.s32.totalorder %s157, 3
      %s159 = scalar_select %p158, %s157, 3
      %s160 = smul.addr %s159, 4
      %s161 = scalar_lea.vmem %s3, %s160
      %s162 = smul.u32 2, %s14
      %p163 = scmp.lt.s32.totalorder %s162, 3
      %s164 = scalar_select %p163, %s162, 3
      %s165 = smul.addr %s164, 4
      %s166 = scalar_lea.vmem %s0, %s165
      %s167 = smul.u32 2, %s14
      %s168 = smul.u32 2, %s14
      %p169 = scmp.lt.s32.totalorder %s168, 3
      %s170 = scalar_select %p169, %s168, 3
      %s171 = smul.addr %s170, 4
      %s172 = scalar_lea.vmem %s3, %s171
      %s173 = smul.u32 2, %s14
      %v175 = vld [vmem:[%s166] sm:$0xf]
      %v176 = vld [vmem:[%s166 + $0x4] sm:$0xf]
      %v177 = vld [vmem:[%s1] sm:$0xf]
      %v178 = vld [vmem:[%s1 + $0x4] sm:$0xf]
      %v179 = vld [vmem:[%s2] sm:$0x1]
      %v181 = vperm.slane %v179, 0
      %v185 = vunpack.c.l.b16 %v175
      %v186 = vunpack.c.l.b16 %v176
      %v187 = vpack.c.b16 %v186, %v185
      %v190 = vunpack.c.l.b16 %v177
      %v191 = vunpack.c.l.b16 %v178
      %v192 = vpack.c.b16 %v191, %v190
      %vm194 = vcmask 130048
      %v196 = vsel %vm194, %v187, 0
      %198 = vmatpush.bf16.msra.mxu0 0
      %199 = vmatpush.bf16.msra.mxu0 0
      %200 = vmatpush.bf16.msra.mxu0 0
      %201 = vmatpush.bf16.msra.mxu0 0
      %202 = vmatpush.bf16.msra.mxu0 0
      %203 = vmatpush.bf16.msra.mxu0 0
      %204 = vmatpush.bf16.msra.mxu0 0
      %205 = vmatpush.bf16.msra.mxu0 %v192
      %206 = vmatmul.bf16.gmra.mxu0 %v196
      %v207 = vpop.f32.mrf.mxu0
      %v208 = vadd.f32 %v181, %v207
      %v209 = vpop.f32.mrf.mxu0
      %v210 = vadd.f32 %v181, %v209
      %211 = vdwg.mxu0
      %v212 = vpack.c.bf16 %v208, %v208
      %v213 = vpack.c.bf16 %v210, %v210
      %214 = vst [vmem:[%s172] sm:$0xf] %v212
      %215 = vst [vmem:[%s172 + $0x4] sm:$0xf] %v213
      %s216 = smul.u32 2, %s14
      %p217 = scmp.lt.s32.totalorder %s216, 3
      %s218 = scalar_select %p217, %s216, 3
      %s219 = smul.addr %s218, 4
      %s220 = scalar_lea.vmem %s3, %s219
      // Predicated region
      $region33: #{entryflow_forward.18} parent=31 // pred_check
        %p221 = pneg %p100
      $region34: #{entryflow_forward.18} parent=31 // pred_check_branch
        %223 = sbr.rel (%p221) target = $region36
      $region35: #{entryflow_forward.18} parent=31 // pred_region
        %s224 = smul.u32 2, %s14
      $region36: #{entryflow_forward.18} parent=31 // pred_fallthru
        _
    $region32: #{entryflow_forward.18} parent=5 // pred_fallthru
      _
    %p225 = scmp.le.s32.totalorder 2, %s9
    // Predicated region
    $region37: #{entryflow_forward.18} parent=5 // pred_check
      %p226 = pneg %p225
    $region38: #{entryflow_forward.18} parent=5 // pred_check_branch
      %228 = sbr.rel (%p226) target = $region40
    $region39: #{entryflow_forward.18} parent=5 // pred_region
      %s229 = ssub.s32 %s9, 2
      // Predicated region
      $region41: #{entryflow_forward.18} parent=39 // pred_check
        %p230 = pneg %p106
      $region42: #{entryflow_forward.18} parent=39 // pred_check_branch
        %232 = sbr.rel (%p230) target = $region44
      $region43: #{entryflow_forward.18} parent=39 // pred_region
        %s233 = smul.u32 2, %s15
        %p234 = scmp.lt.s32.totalorder %s233, 3
        %s235 = scalar_select %p234, %s233, 3
        %s236 = smul.addr %s235, 4
        %s237 = scalar_lea.vmem %s3, %s236
      $region44: #{entryflow_forward.18} parent=39 // pred_fallthru
        _
    $region40: #{entryflow_forward.18} parent=5 // pred_fallthru
      _
  $region6: #{entryflow_forward.18} parent=0 // loop_footer
    %s13 = sadd.s32 1, %s9
  $region7: #{entryflow_forward.18} parent=0 // loop_footer_branch
    %8 = sbr.rel target = $region3
  $region8: #{entryflow_forward.18} parent=0 // loop_exit
    _

// kernel: entryflow_forward.16
$region0: #{entryflow_forward.16}
  #allocation0 [shape = 'u32[]', space=smem, size = 0x4, offset = 0x4, fixed_abs, tag = 'smem constant byte address 0x4 - core index']
  #allocation1 [shape = 'u32[72,128]{1,0:T(1,128)}', space=vmem, size = 0x9000, scoped, tag = 'internal scratch']
  %s0 = inlined_call_operand.vmem [shape: bf16[2,10,10,16], index: 0, kind: input, shape index: {}]
  %s1 = inlined_call_operand.vmem [shape: f32[9,16], index: 1, kind: input, shape index: {}]
  %s2 = inlined_call_operand.vmem [shape: f32[1,16], index: 2, kind: input, shape index: {}]
  %s3 = inlined_call_operand.vmem [shape: bf16[16,128], index: 3, kind: input, shape index: {}]
  %s4 = inlined_call_operand.vmem [shape: f32[1,128], index: 4, kind: input, shape index: {}]
  %s5 = inlined_call_operand.vmem [shape: bf16[2,8,8,128], index: 5, kind: output, shape index: {}]
  %s6 = sld [smem:[#allocation0]]
  $region53: #{entryflow_forward.16} parent=0
    _
  %s8 = ssub.s32 1, %s6
  %s9 = scalar_select 0, %s8, %s6
  loop: start=0, step=1, limit=4
  $region2: #{entryflow_forward.16} parent=0 // loop_pre_header
    _
  $region3: #{entryflow_forward.16} parent=0 // loop_header
    %s11 = sphi 0, %s15
    %p12 = scmp.ge.s32.totalorder %s11, 4
    %s21 = sphi 0, %s23
    %s24 = sphi 0, %s21
    %s25 = sphi 0, %s24
    %s41 = sphi 0, %s25
    %s45 = sphi 0, %s45
    %s47 = sphi 0, %s45
    %s48 = sphi 0, %s47
    %s62 = sphi 0, %s48
    %s66 = sphi 0, %s66
    %s68 = sphi 0, %s66
    %s69 = sphi 0, %s68
    %s83 = sphi 0, %s69
    %s87 = sphi 0, %s87
    %s89 = sphi 0, %s87
    %s90 = sphi 0, %s89
    %s104 = sphi 0, %s90
    %s108 = sphi 0, %s108
    %s110 = sphi 0, %s108
    %s111 = sphi 0, %s110
    %s125 = sphi 0, %s111
    %s131 = sphi 0, %s133
    %s134 = sphi 0, %s131
    %s135 = sphi 0, %s134
    %s151 = sphi 0, %s135
  $region4: #{entryflow_forward.16} parent=0 // loop_header_branch
    %14 = sbr.rel (%p12) target = $region8
  $region5: #{entryflow_forward.16} parent=0 // loop_body
    %s16 = ssub.s32 %s11, 1
    %s17 = ssub.s32 %s11, 2
    %s18 = sadd.s32 %s11, 1
    %s19 = ssub.s32 %s11, %s18
    %p20 = scmp.eq.s32.totalorder %s19, 0
    %s22 = sadd.s32 %s21, 1
    %s23 = scalar_select %p20, %s21, %s22
    %p26 = pneg %p20
    %p27 = scmp.eq.s32.totalorder %s11, 1
    %p28 = por %p26, %p27
    %p29 = scmp.ne.s32.totalorder %s21, %s24
    %p30 = scmp.eq.s32.totalorder %s11, 0
    %p31 = por %p29, %p30
    %p32 = scmp.ne.s32.totalorder %s21, %s24
    %p33 = scmp.eq.s32.totalorder %s16, 1
    %p34 = por %p32, %p33
    %p35 = scmp.ne.s32.totalorder %s24, %s25
    %p36 = scmp.eq.s32.totalorder %s16, 0
    %p37 = por %p35, %p36
    %p38 = scmp.ne.s32.totalorder %s24, %s25
    %p39 = scmp.eq.s32.totalorder %s17, 1
    %p40 = por %p38, %p39
    %p42 = scmp.ne.s32.totalorder %s25, %s41
    %p43 = scmp.eq.s32.totalorder %s17, 0
    %p44 = por %p42, %p43
    %s46 = sadd.s32 %s45, 1
    %p49 = scmp.eq.s32.totalorder %s11, 1
    %p50 = scmp.ne.s32.totalorder %s45, %s47
    %p51 = scmp.eq.s32.totalorder %s11, 0
    %p52 = por %p50, %p51
    %p53 = scmp.ne.s32.totalorder %s45, %s47
    %p54 = scmp.eq.s32.totalorder %s16, 1
    %p55 = por %p53, %p54
    %p56 = scmp.ne.s32.totalorder %s47, %s48
    %p57 = scmp.eq.s32.totalorder %s16, 0
    %p58 = por %p56, %p57
    %p59 = scmp.ne.s32.totalorder %s47, %s48
    %p60 = scmp.eq.s32.totalorder %s17, 1
    %p61 = por %p59, %p60
    %p63 = scmp.ne.s32.totalorder %s48, %s62
    %p64 = scmp.eq.s32.totalorder %s17, 0
    %p65 = por %p63, %p64
    %s67 = sadd.s32 %s66, 1
    %p70 = scmp.eq.s32.totalorder %s11, 1
    %p71 = scmp.ne.s32.totalorder %s66, %s68
    %p72 = scmp.eq.s32.totalorder %s11, 0
    %p73 = por %p71, %p72
    %p74 = scmp.ne.s32.totalorder %s66, %s68
    %p75 = scmp.eq.s32.totalorder %s16, 1
    %p76 = por %p74, %p75
    %p77 = scmp.ne.s32.totalorder %s68, %s69
    %p78 = scmp.eq.s32.totalorder %s16, 0
    %p79 = por %p77, %p78
    %p80 = scmp.ne.s32.totalorder %s68, %s69
    %p81 = scmp.eq.s32.totalorder %s17, 1
    %p82 = por %p80, %p81
    %p84 = scmp.ne.s32.totalorder %s69, %s83
    %p85 = scmp.eq.s32.totalorder %s17, 0
    %p86 = por %p84, %p85
    %s88 = sadd.s32 %s87, 1
    %p91 = scmp.eq.s32.totalorder %s11, 1
    %p92 = scmp.ne.s32.totalorder %s87, %s89
    %p93 = scmp.eq.s32.totalorder %s11, 0
    %p94 = por %p92, %p93
    %p95 = scmp.ne.s32.totalorder %s87, %s89
    %p96 = scmp.eq.s32.totalorder %s16, 1
    %p97 = por %p95, %p96
    %p98 = scmp.ne.s32.totalorder %s89, %s90
    %p99 = scmp.eq.s32.totalorder %s16, 0
    %p100 = por %p98, %p99
    %p101 = scmp.ne.s32.totalorder %s89, %s90
    %p102 = scmp.eq.s32.totalorder %s17, 1
    %p103 = por %p101, %p102
    %p105 = scmp.ne.s32.totalorder %s90, %s104
    %p106 = scmp.eq.s32.totalorder %s17, 0
    %p107 = por %p105, %p106
    %s109 = sadd.s32 %s108, 1
    %p112 = scmp.eq.s32.totalorder %s11, 1
    %p113 = scmp.ne.s32.totalorder %s108, %s110
    %p114 = scmp.eq.s32.totalorder %s11, 0
    %p115 = por %p113, %p114
    %p116 = scmp.ne.s32.totalorder %s108, %s110
    %p117 = scmp.eq.s32.totalorder %s16, 1
    %p118 = por %p116, %p117
    %p119 = scmp.ne.s32.totalorder %s110, %s111
    %p120 = scmp.eq.s32.totalorder %s16, 0
    %p121 = por %p119, %p120
    %p122 = scmp.ne.s32.totalorder %s110, %s111
    %p123 = scmp.eq.s32.totalorder %s17, 1
    %p124 = por %p122, %p123
    %p126 = scmp.ne.s32.totalorder %s111, %s125
    %p127 = scmp.eq.s32.totalorder %s17, 0
    %p128 = por %p126, %p127
    %s129 = ssub.s32 %s11, %s18
    %p130 = scmp.eq.s32.totalorder %s129, 0
    %s132 = sadd.s32 %s131, 1
    %s133 = scalar_select %p130, %s131, %s132
    %p136 = pneg %p130
    %p137 = scmp.eq.s32.totalorder %s11, 1
    %p138 = por %p136, %p137
    %p139 = scmp.ne.s32.totalorder %s131, %s134
    %p140 = scmp.eq.s32.totalorder %s11, 0
    %p141 = por %p139, %p140
    %p142 = scmp.ne.s32.totalorder %s131, %s134
    %p143 = scmp.eq.s32.totalorder %s16, 1
    %p144 = por %p142, %p143
    %p145 = scmp.ne.s32.totalorder %s134, %s135
    %p146 = scmp.eq.s32.totalorder %s16, 0
    %p147 = por %p145, %p146
    %p148 = scmp.ne.s32.totalorder %s134, %s135
    %p149 = scmp.eq.s32.totalorder %s17, 1
    %p150 = por %p148, %p149
    %p152 = scmp.ne.s32.totalorder %s135, %s151
    %p153 = scmp.eq.s32.totalorder %s17, 0
    %p154 = por %p152, %p153
    %p155 = scmp.le.s32.totalorder 1, %s11
    %p156 = scmp.lt.s32.totalorder %s11, 3
    %p157 = pnand %p155, %p156
    %p158 = pneg %p157
    // Predicated region
    $region9: #{entryflow_forward.16} parent=5 // pred_check
      _
    $region10: #{entryflow_forward.16} parent=5 // pred_check_branch
      %160 = sbr.rel (%p157) target = $region12
    $region11: #{entryflow_forward.16} parent=5 // pred_region
      %s161 = ssub.s32 %s11, 1
      // Predicated region
      $region13: #{entryflow_forward.16} parent=11 // pred_check
        %p162 = pneg %p58
      $region14: #{entryflow_forward.16} parent=11 // pred_check_branch
        %164 = sbr.rel (%p162) target = $region16
      $region15: #{entryflow_forward.16} parent=11 // pred_region
        _
      $region16: #{entryflow_forward.16} parent=11 // pred_fallthru
        _
      // Predicated region
      $region17: #{entryflow_forward.16} parent=11 // pred_check
        %p165 = pneg %p79
      $region18: #{entryflow_forward.16} parent=11 // pred_check_branch
        %167 = sbr.rel (%p165) target = $region20
      $region19: #{entryflow_forward.16} parent=11 // pred_region
        _
      $region20: #{entryflow_forward.16} parent=11 // pred_fallthru
        _
      // Predicated region
      $region21: #{entryflow_forward.16} parent=11 // pred_check
        %p168 = pneg %p100
      $region22: #{entryflow_forward.16} parent=11 // pred_check_branch
        %170 = sbr.rel (%p168) target = $region24
      $region23: #{entryflow_forward.16} parent=11 // pred_region
        _
      $region24: #{entryflow_forward.16} parent=11 // pred_fallthru
        _
      // Predicated region
      $region25: #{entryflow_forward.16} parent=11 // pred_check
        %p171 = pneg %p121
      $region26: #{entryflow_forward.16} parent=11 // pred_check_branch
        %173 = sbr.rel (%p171) target = $region28
      $region27: #{entryflow_forward.16} parent=11 // pred_region
        _
      $region28: #{entryflow_forward.16} parent=11 // pred_fallthru
        _
    $region12: #{entryflow_forward.16} parent=5 // pred_fallthru
      _
    %p174 = scmp.lt.s32.totalorder %s11, 2
    // Predicated region
    $region29: #{entryflow_forward.16} parent=5 // pred_check
      %p175 = pneg %p174
    $region30: #{entryflow_forward.16} parent=5 // pred_check_branch
      %177 = sbr.rel (%p175) target = $region32
    $region31: #{entryflow_forward.16} parent=5 // pred_region
      // Predicated region
      $region33: #{entryflow_forward.16} parent=31 // pred_check
        %p178 = pneg %p31
      $region34: #{entryflow_forward.16} parent=31 // pred_check_branch
        %180 = sbr.rel (%p178) target = $region36
      $region35: #{entryflow_forward.16} parent=31 // pred_region
        %p181 = scmp.lt.s32.totalorder %s11, 1
        %s182 = scalar_select %p181, %s11, 1
        %s183 = smul.addr %s182, 20
        %s184 = smul.addr %s183, 4
        %s185 = scalar_lea.vmem %s0, %s184
      $region36: #{entryflow_forward.16} parent=31 // pred_fallthru
        _
    $region32: #{entryflow_forward.16} parent=5 // pred_fallthru
      _
    %p186 = scmp.le.s32.totalorder 1, %s11
    %p187 = scmp.lt.s32.totalorder %s11, 3
    %p188 = pnand %p186, %p187
    %p189 = pneg %p188
    // Predicated region
    $region37: #{entryflow_forward.16} parent=5 // pred_check
      _
    $region38: #{entryflow_forward.16} parent=5 // pred_check_branch
      %191 = sbr.rel (%p188) target = $region40
    $region39: #{entryflow_forward.16} parent=5 // pred_region
      %s192 = ssub.s32 %s11, 1
      %p193 = scmp.lt.s32.totalorder %s16, 1
      %s194 = scalar_select %p193, %s16, 1
      %s195 = smul.addr %s194, 20
      %s196 = smul.addr %s195, 4
      %s197 = scalar_lea.vmem %s0, %s196
      %p198 = pneg %p37
      %p199 = pneg %p34
      %p200 = pneg %p58
      %p201 = pneg %p55
      %p202 = pneg %p79
      %p203 = pneg %p76
      %p204 = pneg %p100
      %p205 = pneg %p97
      %p206 = pneg %p121
      %p207 = pneg %p118
      %p208 = pneg %p147
      %p209 = pneg %p144
      %p210 = scmp.lt.s32.totalorder %s16, 1
      %s211 = scalar_select %p210, %s16, 1
      %s212 = smul.addr %s211, 8
      %s213 = smul.addr %s212, 4
      %s214 = scalar_lea.vmem %s5, %s213
      %p215 = scmp.lt.s32.totalorder %s16, 1
      %s216 = scalar_select %p215, %s16, 1
      %s217 = smul.addr %s216, 20
      %s218 = smul.addr %s217, 4
      %s219 = scalar_lea.vmem %s0, %s218
      %p220 = scmp.lt.s32.totalorder %s16, 1
      %s221 = scalar_select %p220, %s16, 1
      %s222 = smul.addr %s221, 8
      %s223 = smul.addr %s222, 4
      %s224 = scalar_lea.vmem %s5, %s223
      %v226 = vld [vmem:[%s219] sm:$0xf]
      %v227 = vld [vmem:[%s219 + $0x4] sm:$0x1]
      %v228 = vld [vmem:[%s219 + $0x8] sm:$0xf]
      %v229 = vld [vmem:[%s219 + $0xc] sm:$0x1]
      %v230 = vld [vmem:[%s219 + $0x10] sm:$0xf]
      %v231 = vld [vmem:[%s219 + $0x14] sm:$0x1]
      %v232 = vld [vmem:[%s219 + $0x18] sm:$0xf]
      %v233 = vld [vmem:[%s219 + $0x1c] sm:$0x1]
      %v234 = vld [vmem:[%s219 + $0x20] sm:$0xf]
      %v235 = vld [vmem:[%s219 + $0x24] sm:$0x1]
      %v236 = vld [vmem:[%s219 + $0x28] sm:$0xf]
      %v237 = vld [vmem:[%s219 + $0x2c] sm:$0x1]
      %v238 = vld [vmem:[%s219 + $0x30] sm:$0xf]
      %v239 = vld [vmem:[%s219 + $0x34] sm:$0x1]
      %v240 = vld [vmem:[%s219 + $0x38] sm:$0xf]
      %v241 = vld [vmem:[%s219 + $0x3c] sm:$0x1]
      %v242 = vld [vmem:[%s219 + $0x40] sm:$0xf]
      %v243 = vld [vmem:[%s219 + $0x44] sm:$0x1]
      %v244 = vld [vmem:[%s219 + $0x48] sm:$0xf]
      %v245 = vld [vmem:[%s219 + $0x4c] sm:$0x1]
      %v246 = vld [vmem:[%s1] sm:$0xff]
      %v247 = vld [vmem:[%s1 + $0x8] sm:$0x1]
      %v248 = vunpack.c.l.bf16 %v226
      %v249 = vunpack.c.l.bf16 %v228
      %v250 = vunpack.c.l.bf16 %v230
      %v251 = vunpack.c.l.bf16 %v232
      %v252 = vunpack.c.l.bf16 %v234
      %v253 = vunpack.c.l.bf16 %v236
      %v254 = vunpack.c.l.bf16 %v238
      %v255 = vunpack.c.l.bf16 %v240
      %v256 = vperm.slane %v246, 0
      %v257 = vmul.f32 %v248, %v256
      %v258 = vmul.f32 %v249, %v256
      %v259 = vmul.f32 %v250, %v256
      %v260 = vmul.f32 %v251, %v256
      %v261 = vmul.f32 %v252, %v256
      %v262 = vmul.f32 %v253, %v256
      %v263 = vmul.f32 %v254, %v256
      %v264 = vmul.f32 %v255, %v256
      %v265 = vadd.f32 %v257, 0.0
      %v266 = vadd.f32 %v258, 0.0
      %v267 = vadd.f32 %v259, 0.0
      %v268 = vadd.f32 %v260, 0.0
      %v269 = vadd.f32 %v261, 0.0
      %v270 = vadd.f32 %v262, 0.0
      %v271 = vadd.f32 %v263, 0.0
      %v272 = vadd.f32 %v264, 0.0
      %v273 = vunpack.c.l.bf16 %v227
      %v274 = vunpack.c.l.bf16 %v229
      %v275 = vunpack.c.l.bf16 %v231
      %v276 = vunpack.c.l.bf16 %v233
      %v277 = vunpack.c.l.bf16 %v235
      %v278 = vunpack.c.l.bf16 %v237
      %v279 = vunpack.c.l.bf16 %v239
      %v280 = vunpack.c.l.bf16 %v241
      %v281 = vperm.slane %v246, 1
      %v282 = vmul.f32 %v248, %v281
      %v283 = vmul.f32 %v273, %v281
      %v284 = vmul.f32 %v249, %v281
      %v285 = vmul.f32 %v274, %v281
      %v286 = vmul.f32 %v250, %v281
      %v287 = vmul.f32 %v275, %v281
      %v288 = vmul.f32 %v251, %v281
      %v289 = vmul.f32 %v276, %v281
      %v290 = vmul.f32 %v252, %v281
      %v291 = vmul.f32 %v277, %v281
      %v292 = vmul.f32 %v253, %v281
      %v293 = vmul.f32 %v278, %v281
      %v294 = vmul.f32 %v254, %v281
      %v295 = vmul.f32 %v279, %v281
      %v296 = vmul.f32 %v255, %v281
      %v297 = vmul.f32 %v280, %v281
      %vm314 = vcmask 1046528
      %v315 = vrot.slane %v282, 1
      %v316 = vrot.slane %v283, 1
      %v317 = vsel %vm314, %v315, %v316
      %v318 = vrot.slane %v284, 1
      %v319 = vrot.slane %v285, 1
      %v320 = vsel %vm314, %v318, %v319
      %v321 = vrot.slane %v286, 1
      %v322 = vrot.slane %v287, 1
      %v323 = vsel %vm314, %v321, %v322
      %v324 = vrot.slane %v288, 1
      %v325 = vrot.slane %v289, 1
      %v326 = vsel %vm314, %v324, %v325
      %v327 = vrot.slane %v290, 1
      %v328 = vrot.slane %v291, 1
      %v329 = vsel %vm314, %v327, %v328
      %v330 = vrot.slane %v292, 1
      %v331 = vrot.slane %v293, 1
      %v332 = vsel %vm314, %v330, %v331
      %v333 = vrot.slane %v294, 1
      %v334 = vrot.slane %v295, 1
      %v335 = vsel %vm314, %v333, %v334
      %v336 = vrot.slane %v296, 1
      %v337 = vrot.slane %v297, 1
      %v338 = vsel %vm314, %v336, %v337
      %v347 = vadd.f32 %v265, %v317
      %v348 = vadd.f32 %v266, %v320
      %v349 = vadd.f32 %v267, %v323
      %v350 = vadd.f32 %v268, %v326
      %v351 = vadd.f32 %v269, %v329
      %v352 = vadd.f32 %v270, %v332
      %v353 = vadd.f32 %v271, %v335
      %v354 = vadd.f32 %v272, %v338
      %v355 = vperm.slane %v246, 2
      %v356 = vmul.f32 %v248, %v355
      %v357 = vmul.f32 %v273, %v355
      %v358 = vmul.f32 %v249, %v355
      %v359 = vmul.f32 %v274, %v355
      %v360 = vmul.f32 %v250, %v355
      %v361 = vmul.f32 %v275, %v355
      %v362 = vmul.f32 %v251, %v355
      %v363 = vmul.f32 %v276, %v355
      %v364 = vmul.f32 %v252, %v355
      %v365 = vmul.f32 %v277, %v355
      %v366 = vmul.f32 %v253, %v355
      %v367 = vmul.f32 %v278, %v355
      %v368 = vmul.f32 %v254, %v355
      %v369 = vmul.f32 %v279, %v355
      %v370 = vmul.f32 %v255, %v355
      %v371 = vmul.f32 %v280, %v355
      %vm388 = vcmask 1045504
      %v389 = vrot.slane %v356, 2
      %v390 = vrot.slane %v357, 2
      %v391 = vsel %vm388, %v389, %v390
      %v392 = vrot.slane %v358, 2
      %v393 = vrot.slane %v359, 2
      %v394 = vsel %vm388, %v392, %v393
      %v395 = vrot.slane %v360, 2
      %v396 = vrot.slane %v361, 2
      %v397 = vsel %vm388, %v395, %v396
      %v398 = vrot.slane %v362, 2
      %v399 = vrot.slane %v363, 2
      %v400 = vsel %vm388, %v398, %v399
      %v401 = vrot.slane %v364, 2
      %v402 = vrot.slane %v365, 2
      %v403 = vsel %vm388, %v401, %v402
      %v404 = vrot.slane %v366, 2
      %v405 = vrot.slane %v367, 2
      %v406 = vsel %vm388, %v404, %v405
      %v407 = vrot.slane %v368, 2
      %v408 = vrot.slane %v369, 2
      %v409 = vsel %vm388, %v407, %v408
      %v410 = vrot.slane %v370, 2
      %v411 = vrot.slane %v371, 2
      %v412 = vsel %vm388, %v410, %v411
      %v421 = vadd.f32 %v347, %v391
      %v422 = vadd.f32 %v348, %v394
      %v423 = vadd.f32 %v349, %v397
      %v424 = vadd.f32 %v350, %v400
      %v425 = vadd.f32 %v351, %v403
      %v426 = vadd.f32 %v352, %v406
      %v427 = vadd.f32 %v353, %v409
      %v428 = vadd.f32 %v354, %v412
      %v429 = vunpack.c.l.bf16 %v242
      %v430 = vperm.slane %v246, 3
      %v431 = vmul.f32 %v249, %v430
      %v432 = vmul.f32 %v250, %v430
      %v433 = vmul.f32 %v251, %v430
      %v434 = vmul.f32 %v252, %v430
      %v435 = vmul.f32 %v253, %v430
      %v436 = vmul.f32 %v254, %v430
      %v437 = vmul.f32 %v255, %v430
      %v438 = vmul.f32 %v429, %v430
      %v439 = vadd.f32 %v421, %v431
      %v440 = vadd.f32 %v422, %v432
      %v441 = vadd.f32 %v423, %v433
      %v442 = vadd.f32 %v424, %v434
      %v443 = vadd.f32 %v425, %v435
      %v444 = vadd.f32 %v426, %v436
      %v445 = vadd.f32 %v427, %v437
      %v446 = vadd.f32 %v428, %v438
      %v447 = vunpack.c.l.bf16 %v243
      %v448 = vperm.slane %v246, 4
      %v449 = vmul.f32 %v249, %v448
      %v450 = vmul.f32 %v274, %v448
      %v451 = vmul.f32 %v250, %v448
      %v452 = vmul.f32 %v275, %v448
      %v453 = vmul.f32 %v251, %v448
      %v454 = vmul.f32 %v276, %v448
      %v455 = vmul.f32 %v252, %v448
      %v456 = vmul.f32 %v277, %v448
      %v457 = vmul.f32 %v253, %v448
      %v458 = vmul.f32 %v278, %v448
      %v459 = vmul.f32 %v254, %v448
      %v460 = vmul.f32 %v279, %v448
      %v461 = vmul.f32 %v255, %v448
      %v462 = vmul.f32 %v280, %v448
      %v463 = vmul.f32 %v429, %v448
      %v464 = vmul.f32 %v447, %v448
      %v481 = vrot.slane %v449, 1
      %v482 = vrot.slane %v450, 1
      %v483 = vsel %vm314, %v481, %v482
      %v484 = vrot.slane %v451, 1
      %v485 = vrot.slane %v452, 1
      %v486 = vsel %vm314, %v484, %v485
      %v487 = vrot.slane %v453, 1
      %v488 = vrot.slane %v454, 1
      %v489 = vsel %vm314, %v487, %v488
      %v490 = vrot.slane %v455, 1
      %v491 = vrot.slane %v456, 1
      %v492 = vsel %vm314, %v490, %v491
      %v493 = vrot.slane %v457, 1
      %v494 = vrot.slane %v458, 1
      %v495 = vsel %vm314, %v493, %v494
      %v496 = vrot.slane %v459, 1
      %v497 = vrot.slane %v460, 1
      %v498 = vsel %vm314, %v496, %v497
      %v499 = vrot.slane %v461, 1
      %v500 = vrot.slane %v462, 1
      %v501 = vsel %vm314, %v499, %v500
      %v502 = vrot.slane %v463, 1
      %v503 = vrot.slane %v464, 1
      %v504 = vsel %vm314, %v502, %v503
      %v513 = vadd.f32 %v439, %v483
      %v514 = vadd.f32 %v440, %v486
      %v515 = vadd.f32 %v441, %v489
      %v516 = vadd.f32 %v442, %v492
      %v517 = vadd.f32 %v443, %v495
      %v518 = vadd.f32 %v444, %v498
      %v519 = vadd.f32 %v445, %v501
      %v520 = vadd.f32 %v446, %v504
      %v521 = vperm.slane %v246, 5
      %v522 = vmul.f32 %v249, %v521
      %v523 = vmul.f32 %v274, %v521
      %v524 = vmul.f32 %v250, %v521
      %v525 = vmul.f32 %v275, %v521
      %v526 = vmul.f32 %v251, %v521
      %v527 = vmul.f32 %v276, %v521
      %v528 = vmul.f32 %v252, %v521
      %v529 = vmul.f32 %v277, %v521
      %v530 = vmul.f32 %v253, %v521
      %v531 = vmul.f32 %v278, %v521
      %v532 = vmul.f32 %v254, %v521
      %v533 = vmul.f32 %v279, %v521
      %v534 = vmul.f32 %v255, %v521
      %v535 = vmul.f32 %v280, %v521
      %v536 = vmul.f32 %v429, %v521
      %v537 = vmul.f32 %v447, %v521
      %v554 = vrot.slane %v522, 2
      %v555 = vrot.slane %v523, 2
      %v556 = vsel %vm388, %v554, %v555
      %v557 = vrot.slane %v524, 2
      %v558 = vrot.slane %v525, 2
      %v559 = vsel %vm388, %v557, %v558
      %v560 = vrot.slane %v526, 2
      %v561 = vrot.slane %v527, 2
      %v562 = vsel %vm388, %v560, %v561
      %v563 = vrot.slane %v528, 2
      %v564 = vrot.slane %v529, 2
      %v565 = vsel %vm388, %v563, %v564
      %v566 = vrot.slane %v530, 2
      %v567 = vrot.slane %v531, 2
      %v568 = vsel %vm388, %v566, %v567
      %v569 = vrot.slane %v532, 2
      %v570 = vrot.slane %v533, 2
      %v571 = vsel %vm388, %v569, %v570
      %v572 = vrot.slane %v534, 2
      %v573 = vrot.slane %v535, 2
      %v574 = vsel %vm388, %v572, %v573
      %v575 = vrot.slane %v536, 2
      %v576 = vrot.slane %v537, 2
      %v577 = vsel %vm388, %v575, %v576
      %v586 = vadd.f32 %v513, %v556
      %v587 = vadd.f32 %v514, %v559
      %v588 = vadd.f32 %v515, %v562
      %v589 = vadd.f32 %v516, %v565
      %v590 = vadd.f32 %v517, %v568
      %v591 = vadd.f32 %v518, %v571
      %v592 = vadd.f32 %v519, %v574
      %v593 = vadd.f32 %v520, %v577
      %v594 = vunpack.c.l.bf16 %v244
      %v595 = vperm.slane %v246, 6
      %v596 = vmul.f32 %v250, %v595
      %v597 = vmul.f32 %v251, %v595
      %v598 = vmul.f32 %v252, %v595
      %v599 = vmul.f32 %v253, %v595
      %v600 = vmul.f32 %v254, %v595
      %v601 = vmul.f32 %v255, %v595
      %v602 = vmul.f32 %v429, %v595
      %v603 = vmul.f32 %v594, %v595
      %v604 = vadd.f32 %v586, %v596
      %v605 = vadd.f32 %v587, %v597
      %v606 = vadd.f32 %v588, %v598
      %v607 = vadd.f32 %v589, %v599
      %v608 = vadd.f32 %v590, %v600
      %v609 = vadd.f32 %v591, %v601
      %v610 = vadd.f32 %v592, %v602
      %v611 = vadd.f32 %v593, %v603
      %v612 = vunpack.c.l.bf16 %v245
      %v613 = vperm.slane %v246, 7
      %v614 = vmul.f32 %v250, %v613
      %v615 = vmul.f32 %v275, %v613
      %v616 = vmul.f32 %v251, %v613
      %v617 = vmul.f32 %v276, %v613
      %v618 = vmul.f32 %v252, %v613
      %v619 = vmul.f32 %v277, %v613
      %v620 = vmul.f32 %v253, %v613
      %v621 = vmul.f32 %v278, %v613
      %v622 = vmul.f32 %v254, %v613
      %v623 = vmul.f32 %v279, %v613
      %v624 = vmul.f32 %v255, %v613
      %v625 = vmul.f32 %v280, %v613
      %v626 = vmul.f32 %v429, %v613
      %v627 = vmul.f32 %v447, %v613
      %v628 = vmul.f32 %v594, %v613
      %v629 = vmul.f32 %v612, %v613
      %v646 = vrot.slane %v614, 1
      %v647 = vrot.slane %v615, 1
      %v648 = vsel %vm314, %v646, %v647
      %v649 = vrot.slane %v616, 1
      %v650 = vrot.slane %v617, 1
      %v651 = vsel %vm314, %v649, %v650
      %v652 = vrot.slane %v618, 1
      %v653 = vrot.slane %v619, 1
      %v654 = vsel %vm314, %v652, %v653
      %v655 = vrot.slane %v620, 1
      %v656 = vrot.slane %v621, 1
      %v657 = vsel %vm314, %v655, %v656
      %v658 = vrot.slane %v622, 1
      %v659 = vrot.slane %v623, 1
      %v660 = vsel %vm314, %v658, %v659
      %v661 = vrot.slane %v624, 1
      %v662 = vrot.slane %v625, 1
      %v663 = vsel %vm314, %v661, %v662
      %v664 = vrot.slane %v626, 1
      %v665 = vrot.slane %v627, 1
      %v666 = vsel %vm314, %v664, %v665
      %v667 = vrot.slane %v628, 1
      %v668 = vrot.slane %v629, 1
      %v669 = vsel %vm314, %v667, %v668
      %v678 = vadd.f32 %v604, %v648
      %v679 = vadd.f32 %v605, %v651
      %v680 = vadd.f32 %v606, %v654
      %v681 = vadd.f32 %v607, %v657
      %v682 = vadd.f32 %v608, %v660
      %v683 = vadd.f32 %v609, %v663
      %v684 = vadd.f32 %v610, %v666
      %v685 = vadd.f32 %v611, %v669
      %v686 = vperm.slane %v247, 0
      %v687 = vmul.f32 %v250, %v686
      %v688 = vmul.f32 %v275, %v686
      %v689 = vmul.f32 %v251, %v686
      %v690 = vmul.f32 %v276, %v686
      %v691 = vmul.f32 %v252, %v686
      %v692 = vmul.f32 %v277, %v686
      %v693 = vmul.f32 %v253, %v686
      %v694 = vmul.f32 %v278, %v686
      %v695 = vmul.f32 %v254, %v686
      %v696 = vmul.f32 %v279, %v686
      %v697 = vmul.f32 %v255, %v686
      %v698 = vmul.f32 %v280, %v686
      %v699 = vmul.f32 %v429, %v686
      %v700 = vmul.f32 %v447, %v686
      %v701 = vmul.f32 %v594, %v686
      %v702 = vmul.f32 %v612, %v686
      %v719 = vrot.slane %v687, 2
      %v720 = vrot.slane %v688, 2
      %v721 = vsel %vm388, %v719, %v720
      %v722 = vrot.slane %v689, 2
      %v723 = vrot.slane %v690, 2
      %v724 = vsel %vm388, %v722, %v723
      %v725 = vrot.slane %v691, 2
      %v726 = vrot.slane %v692, 2
      %v727 = vsel %vm388, %v725, %v726
      %v728 = vrot.slane %v693, 2
      %v729 = vrot.slane %v694, 2
      %v730 = vsel %vm388, %v728, %v729
      %v731 = vrot.slane %v695, 2
      %v732 = vrot.slane %v696, 2
      %v733 = vsel %vm388, %v731, %v732
      %v734 = vrot.slane %v697, 2
      %v735 = vrot.slane %v698, 2
      %v736 = vsel %vm388, %v734, %v735
      %v737 = vrot.slane %v699, 2
      %v738 = vrot.slane %v700, 2
      %v739 = vsel %vm388, %v737, %v738
      %v740 = vrot.slane %v701, 2
      %v741 = vrot.slane %v702, 2
      %v742 = vsel %vm388, %v740, %v741
      %v751 = vadd.f32 %v678, %v721
      %v752 = vadd.f32 %v679, %v724
      %v753 = vadd.f32 %v680, %v727
      %v754 = vadd.f32 %v681, %v730
      %v755 = vadd.f32 %v682, %v733
      %v756 = vadd.f32 %v683, %v736
      %v757 = vadd.f32 %v684, %v739
      %v758 = vadd.f32 %v685, %v742
      %v759 = vld [vmem:[%s2] sm:$0x1]
      %v761 = vperm.slane %v759, 0
      %v763 = vadd.f32 %v751, %v761
      %v764 = vadd.f32 %v752, %v761
      %v765 = vadd.f32 %v753, %v761
      %v766 = vadd.f32 %v754, %v761
      %v767 = vadd.f32 %v755, %v761
      %v768 = vadd.f32 %v756, %v761
      %v769 = vadd.f32 %v757, %v761
      %v770 = vadd.f32 %v758, %v761
      %v771 = vpack.c.bf16 %v764, %v763
      %v772 = vpack.c.bf16 %v766, %v765
      %v773 = vpack.c.bf16 %v768, %v767
      %v774 = vpack.c.bf16 %v770, %v769
      %v775 = vld [vmem:[%s3] sm:$0xf]
      %v776 = vld [vmem:[%s3 + $0x4] sm:$0xf]
      %v777 = vld [vmem:[%s4] sm:$0x1]
      %v779 = vperm.slane %v777, 0
      %v783 = vunpack.c.l.b16 %v775
      %v784 = vunpack.c.l.b16 %v776
      %v785 = vpack.c.b16 %v784, %v783
      %vm787 = vcmask 130048
      %v789 = vsel %vm787, %v771, 0
      %v792 = vsel %vm787, %v772, 0
      %v795 = vsel %vm787, %v773, 0
      %v798 = vsel %vm787, %v774, 0
      %800 = vmatpush.bf16.msra.mxu0 0
      %801 = vmatpush.bf16.msra.mxu0 0
      %802 = vmatpush.bf16.msra.mxu0 0
      %803 = vmatpush.bf16.msra.mxu0 0
      %804 = vmatpush.bf16.msra.mxu0 0
      %805 = vmatpush.bf16.msra.mxu0 0
      %806 = vmatpush.bf16.msra.mxu0 0
      %807 = vmatpush.bf16.msra.mxu0 %v785
      %808 = vmatmul.bf16.gmra.mxu0 %v789
      %v809 = vpop.f32.mrf.mxu0
      %v810 = vadd.f32 %v779, %v809
      %v811 = vpop.f32.mrf.mxu0
      %v812 = vadd.f32 %v779, %v811
      %813 = vmatmul.bf16.gmra.mxu0 %v792
      %v814 = vpop.f32.mrf.mxu0
      %v815 = vadd.f32 %v779, %v814
      %v816 = vpop.f32.mrf.mxu0
      %v817 = vadd.f32 %v779, %v816
      %818 = vmatmul.bf16.gmra.mxu0 %v795
      %v819 = vpop.f32.mrf.mxu0
      %v820 = vadd.f32 %v779, %v819
      %v821 = vpop.f32.mrf.mxu0
      %v822 = vadd.f32 %v779, %v821
      %823 = vmatmul.bf16.gmra.mxu0 %v798
      %v824 = vpop.f32.mrf.mxu0
      %v825 = vadd.f32 %v779, %v824
      %v826 = vpop.f32.mrf.mxu0
      %v827 = vadd.f32 %v779, %v826
      %828 = vdwg.mxu0
      %v829 = vmax.f32 %v810, 0.0
      %v830 = vmax.f32 %v812, 0.0
      %v831 = vmax.f32 %v815, 0.0
      %v832 = vmax.f32 %v817, 0.0
      %v833 = vmax.f32 %v820, 0.0
      %v834 = vmax.f32 %v822, 0.0
      %v835 = vmax.f32 %v825, 0.0
      %v836 = vmax.f32 %v827, 0.0
      %v837 = vpack.c.bf16 %v829, %v829
      %v838 = vpack.c.bf16 %v830, %v830
      %v839 = vpack.c.bf16 %v831, %v831
      %v840 = vpack.c.bf16 %v832, %v832
      %v841 = vpack.c.bf16 %v833, %v833
      %v842 = vpack.c.bf16 %v834, %v834
      %v843 = vpack.c.bf16 %v835, %v835
      %v844 = vpack.c.bf16 %v836, %v836
      %845 = vst [vmem:[%s224] sm:$0xf] %v837
      %846 = vst [vmem:[%s224 + $0x4] sm:$0xf] %v838
      %847 = vst [vmem:[%s224 + $0x8] sm:$0xf] %v839
      %848 = vst [vmem:[%s224 + $0xc] sm:$0xf] %v840
      %849 = vst [vmem:[%s224 + $0x10] sm:$0xf] %v841
      %850 = vst [vmem:[%s224 + $0x14] sm:$0xf] %v842
      %851 = vst [vmem:[%s224 + $0x18] sm:$0xf] %v843
      %852 = vst [vmem:[%s224 + $0x1c] sm:$0xf] %v844
      %p853 = scmp.lt.s32.totalorder %s16, 1
      %s854 = scalar_select %p853, %s16, 1
      %s855 = smul.addr %s854, 8
      %s856 = smul.addr %s855, 4
      %s857 = scalar_lea.vmem %s5, %s856
      // Predicated region
      $region41: #{entryflow_forward.16} parent=39 // pred_check
        %p858 = pneg %p144
      $region42: #{entryflow_forward.16} parent=39 // pred_check_branch
        %860 = sbr.rel (%p858) target = $region44
      $region43: #{entryflow_forward.16} parent=39 // pred_region
        _
      $region44: #{entryflow_forward.16} parent=39 // pred_fallthru
        _
    $region40: #{entryflow_forward.16} parent=5 // pred_fallthru
      _
    %p861 = scmp.le.s32.totalorder 2, %s11
    // Predicated region
    $region45: #{entryflow_forward.16} parent=5 // pred_check
      %p862 = pneg %p861
    $region46: #{entryflow_forward.16} parent=5 // pred_check_branch
      %864 = sbr.rel (%p862) target = $region48
    $region47: #{entryflow_forward.16} parent=5 // pred_region
      %s865 = ssub.s32 %s11, 2
      // Predicated region
      $region49: #{entryflow_forward.16} parent=47 // pred_check
        %p866 = pneg %p150
      $region50: #{entryflow_forward.16} parent=47 // pred_check_branch
        %868 = sbr.rel (%p866) target = $region52
      $region51: #{entryflow_forward.16} parent=47 // pred_region
        %p869 = scmp.lt.s32.totalorder %s17, 1
        %s870 = scalar_select %p869, %s17, 1
        %s871 = smul.addr %s870, 8
        %s872 = smul.addr %s871, 4
        %s873 = scalar_lea.vmem %s5, %s872
      $region52: #{entryflow_forward.16} parent=47 // pred_fallthru
        _
    $region48: #{entryflow_forward.16} parent=5 // pred_fallthru
      _
  $region6: #{entryflow_forward.16} parent=0 // loop_footer
    %s15 = sadd.s32 1, %s11
  $region7: #{entryflow_forward.16} parent=0 // loop_footer_branch
    %10 = sbr.rel target = $region3
  $region8: #{entryflow_forward.16} parent=0 // loop_exit
    _

// kernel: entryflow_forward.19
$region0: #{entryflow_forward.19}
  #allocation0 [shape = 'u32[]', space=smem, size = 0x4, offset = 0x4, fixed_abs, tag = 'smem constant byte address 0x4 - core index']
  #allocation1 [shape = 'u32[72,128]{1,0:T(1,128)}', space=vmem, size = 0x9000, scoped, tag = 'internal scratch']
  %s0 = inlined_call_operand.vmem [shape: bf16[2,5,5,16], index: 0, kind: input, shape index: {}]
  %s1 = inlined_call_operand.vmem [shape: bf16[2,5,5,16], index: 1, kind: input, shape index: {}]
  %s2 = inlined_call_operand.vmem [shape: bf16[2,5,5,16], index: 2, kind: input, shape index: {}]
  %s3 = inlined_call_operand.vmem [shape: bf16[2,5,5,16], index: 3, kind: input, shape index: {}]
  %s4 = inlined_call_operand.vmem [shape: bf16[2,4,4,16], index: 4, kind: input, shape index: {}]
  %s5 = inlined_call_operand.vmem [shape: bf16[2,4,4,16], index: 5, kind: output, shape index: {}]
  %s6 = sld [smem:[#allocation0]]
  $region53: #{entryflow_forward.19} parent=0
    _
  %s8 = ssub.s32 1, %s6
  %s9 = scalar_select 0, %s8, %s6
  loop: start=0, step=1, limit=4
  $region2: #{entryflow_forward.19} parent=0 // loop_pre_header
    _
  $region3: #{entryflow_forward.19} parent=0 // loop_header
    %s11 = sphi 0, %s15
    %p12 = scmp.ge.s32.totalorder %s11, 4
    %s21 = sphi 0, %s23
    %s24 = sphi 0, %s21
    %s25 = sphi 0, %s24
    %s41 = sphi 0, %s25
    %s47 = sphi 0, %s49
    %s50 = sphi 0, %s47
    %s51 = sphi 0, %s50
    %s67 = sphi 0, %s51
    %s73 = sphi 0, %s75
    %s76 = sphi 0, %s73
    %s77 = sphi 0, %s76
    %s93 = sphi 0, %s77
    %s99 = sphi 0, %s101
    %s102 = sphi 0, %s99
    %s103 = sphi 0, %s102
    %s119 = sphi 0, %s103
    %s125 = sphi 0, %s127
    %s128 = sphi 0, %s125
    %s129 = sphi 0, %s128
    %s145 = sphi 0, %s129
    %s151 = sphi 0, %s153
    %s154 = sphi 0, %s151
    %s155 = sphi 0, %s154
    %s171 = sphi 0, %s155
  $region4: #{entryflow_forward.19} parent=0 // loop_header_branch
    %14 = sbr.rel (%p12) target = $region8
  $region5: #{entryflow_forward.19} parent=0 // loop_body
    %s16 = ssub.s32 %s11, 1
    %s17 = ssub.s32 %s11, 2
    %s18 = sadd.s32 %s11, 1
    %s19 = ssub.s32 %s11, %s18
    %p20 = scmp.eq.s32.totalorder %s19, 0
    %s22 = sadd.s32 %s21, 1
    %s23 = scalar_select %p20, %s21, %s22
    %p26 = pneg %p20
    %p27 = scmp.eq.s32.totalorder %s11, 1
    %p28 = por %p26, %p27
    %p29 = scmp.ne.s32.totalorder %s21, %s24
    %p30 = scmp.eq.s32.totalorder %s11, 0
    %p31 = por %p29, %p30
    %p32 = scmp.ne.s32.totalorder %s21, %s24
    %p33 = scmp.eq.s32.totalorder %s16, 1
    %p34 = por %p32, %p33
    %p35 = scmp.ne.s32.totalorder %s24, %s25
    %p36 = scmp.eq.s32.totalorder %s16, 0
    %p37 = por %p35, %p36
    %p38 = scmp.ne.s32.totalorder %s24, %s25
    %p39 = scmp.eq.s32.totalorder %s17, 1
    %p40 = por %p38, %p39
    %p42 = scmp.ne.s32.totalorder %s25, %s41
    %p43 = scmp.eq.s32.totalorder %s17, 0
    %p44 = por %p42, %p43
    %s45 = ssub.s32 %s11, %s18
    %p46 = scmp.eq.s32.totalorder %s45, 0
    %s48 = sadd.s32 %s47, 1
    %s49 = scalar_select %p46, %s47, %s48
    %p52 = pneg %p46
    %p53 = scmp.eq.s32.totalorder %s11, 1
    %p54 = por %p52, %p53
    %p55 = scmp.ne.s32.totalorder %s47, %s50
    %p56 = scmp.eq.s32.totalorder %s11, 0
    %p57 = por %p55, %p56
    %p58 = scmp.ne.s32.totalorder %s47, %s50
    %p59 = scmp.eq.s32.totalorder %s16, 1
    %p60 = por %p58, %p59
    %p61 = scmp.ne.s32.totalorder %s50, %s51
    %p62 = scmp.eq.s32.totalorder %s16, 0
    %p63 = por %p61, %p62
    %p64 = scmp.ne.s32.totalorder %s50, %s51
    %p65 = scmp.eq.s32.totalorder %s17, 1
    %p66 = por %p64, %p65
    %p68 = scmp.ne.s32.totalorder %s51, %s67
    %p69 = scmp.eq.s32.totalorder %s17, 0
    %p70 = por %p68, %p69
    %s71 = ssub.s32 %s11, %s18
    %p72 = scmp.eq.s32.totalorder %s71, 0
    %s74 = sadd.s32 %s73, 1
    %s75 = scalar_select %p72, %s73, %s74
    %p78 = pneg %p72
    %p79 = scmp.eq.s32.totalorder %s11, 1
    %p80 = por %p78, %p79
    %p81 = scmp.ne.s32.totalorder %s73, %s76
    %p82 = scmp.eq.s32.totalorder %s11, 0
    %p83 = por %p81, %p82
    %p84 = scmp.ne.s32.totalorder %s73, %s76
    %p85 = scmp.eq.s32.totalorder %s16, 1
    %p86 = por %p84, %p85
    %p87 = scmp.ne.s32.totalorder %s76, %s77
    %p88 = scmp.eq.s32.totalorder %s16, 0
    %p89 = por %p87, %p88
    %p90 = scmp.ne.s32.totalorder %s76, %s77
    %p91 = scmp.eq.s32.totalorder %s17, 1
    %p92 = por %p90, %p91
    %p94 = scmp.ne.s32.totalorder %s77, %s93
    %p95 = scmp.eq.s32.totalorder %s17, 0
    %p96 = por %p94, %p95
    %s97 = ssub.s32 %s11, %s18
    %p98 = scmp.eq.s32.totalorder %s97, 0
    %s100 = sadd.s32 %s99, 1
    %s101 = scalar_select %p98, %s99, %s100
    %p104 = pneg %p98
    %p105 = scmp.eq.s32.totalorder %s11, 1
    %p106 = por %p104, %p105
    %p107 = scmp.ne.s32.totalorder %s99, %s102
    %p108 = scmp.eq.s32.totalorder %s11, 0
    %p109 = por %p107, %p108
    %p110 = scmp.ne.s32.totalorder %s99, %s102
    %p111 = scmp.eq.s32.totalorder %s16, 1
    %p112 = por %p110, %p111
    %p113 = scmp.ne.s32.totalorder %s102, %s103
    %p114 = scmp.eq.s32.totalorder %s16, 0
    %p115 = por %p113, %p114
    %p116 = scmp.ne.s32.totalorder %s102, %s103
    %p117 = scmp.eq.s32.totalorder %s17, 1
    %p118 = por %p116, %p117
    %p120 = scmp.ne.s32.totalorder %s103, %s119
    %p121 = scmp.eq.s32.totalorder %s17, 0
    %p122 = por %p120, %p121
    %s123 = ssub.s32 %s11, %s18
    %p124 = scmp.eq.s32.totalorder %s123, 0
    %s126 = sadd.s32 %s125, 1
    %s127 = scalar_select %p124, %s125, %s126
    %p130 = pneg %p124
    %p131 = scmp.eq.s32.totalorder %s11, 1
    %p132 = por %p130, %p131
    %p133 = scmp.ne.s32.totalorder %s125, %s128
    %p134 = scmp.eq.s32.totalorder %s11, 0
    %p135 = por %p133, %p134
    %p136 = scmp.ne.s32.totalorder %s125, %s128
    %p137 = scmp.eq.s32.totalorder %s16, 1
    %p138 = por %p136, %p137
    %p139 = scmp.ne.s32.totalorder %s128, %s129
    %p140 = scmp.eq.s32.totalorder %s16, 0
    %p141 = por %p139, %p140
    %p142 = scmp.ne.s32.totalorder %s128, %s129
    %p143 = scmp.eq.s32.totalorder %s17, 1
    %p144 = por %p142, %p143
    %p146 = scmp.ne.s32.totalorder %s129, %s145
    %p147 = scmp.eq.s32.totalorder %s17, 0
    %p148 = por %p146, %p147
    %s149 = ssub.s32 %s11, %s18
    %p150 = scmp.eq.s32.totalorder %s149, 0
    %s152 = sadd.s32 %s151, 1
    %s153 = scalar_select %p150, %s151, %s152
    %p156 = pneg %p150
    %p157 = scmp.eq.s32.totalorder %s11, 1
    %p158 = por %p156, %p157
    %p159 = scmp.ne.s32.totalorder %s151, %s154
    %p160 = scmp.eq.s32.totalorder %s11, 0
    %p161 = por %p159, %p160
    %p162 = scmp.ne.s32.totalorder %s151, %s154
    %p163 = scmp.eq.s32.totalorder %s16, 1
    %p164 = por %p162, %p163
    %p165 = scmp.ne.s32.totalorder %s154, %s155
    %p166 = scmp.eq.s32.totalorder %s16, 0
    %p167 = por %p165, %p166
    %p168 = scmp.ne.s32.totalorder %s154, %s155
    %p169 = scmp.eq.s32.totalorder %s17, 1
    %p170 = por %p168, %p169
    %p172 = scmp.ne.s32.totalorder %s155, %s171
    %p173 = scmp.eq.s32.totalorder %s17, 0
    %p174 = por %p172, %p173
    %p175 = scmp.le.s32.totalorder 1, %s11
    %p176 = scmp.lt.s32.totalorder %s11, 3
    %p177 = pnand %p175, %p176
    %p178 = pneg %p177
    // Predicated region
    $region9: #{entryflow_forward.19} parent=5 // pred_check
      _
    $region10: #{entryflow_forward.19} parent=5 // pred_check_branch
      %180 = sbr.rel (%p177) target = $region12
    $region11: #{entryflow_forward.19} parent=5 // pred_region
      %s181 = ssub.s32 %s11, 1
    $region12: #{entryflow_forward.19} parent=5 // pred_fallthru
      _
    %p182 = scmp.lt.s32.totalorder %s11, 2
    // Predicated region
    $region13: #{entryflow_forward.19} parent=5 // pred_check
      %p183 = pneg %p182
    $region14: #{entryflow_forward.19} parent=5 // pred_check_branch
      %185 = sbr.rel (%p183) target = $region16
    $region15: #{entryflow_forward.19} parent=5 // pred_region
      // Predicated region
      $region17: #{entryflow_forward.19} parent=15 // pred_check
        %p186 = pneg %p31
      $region18: #{entryflow_forward.19} parent=15 // pred_check_branch
        %188 = sbr.rel (%p186) target = $region20
      $region19: #{entryflow_forward.19} parent=15 // pred_region
        %p189 = scmp.lt.s32.totalorder %s11, 1
        %s190 = scalar_select %p189, %s11, 1
        %s191 = smul.addr %s190, 5
        %s192 = smul.addr %s191, 4
        %s193 = scalar_lea.vmem %s0, %s192
      $region20: #{entryflow_forward.19} parent=15 // pred_fallthru
        _
      // Predicated region
      $region21: #{entryflow_forward.19} parent=15 // pred_check
        %p194 = pneg %p57
      $region22: #{entryflow_forward.19} parent=15 // pred_check_branch
        %196 = sbr.rel (%p194) target = $region24
      $region23: #{entryflow_forward.19} parent=15 // pred_region
        %p197 = scmp.lt.s32.totalorder %s11, 1
        %s198 = scalar_select %p197, %s11, 1
        %s199 = smul.addr %s198, 5
        %s200 = smul.addr %s199, 4
        %s201 = scalar_lea.vmem %s1, %s200
      $region24: #{entryflow_forward.19} parent=15 // pred_fallthru
        _
      // Predicated region
      $region25: #{entryflow_forward.19} parent=15 // pred_check
        %p202 = pneg %p83
      $region26: #{entryflow_forward.19} parent=15 // pred_check_branch
        %204 = sbr.rel (%p202) target = $region28
      $region27: #{entryflow_forward.19} parent=15 // pred_region
        %p205 = scmp.lt.s32.totalorder %s11, 1
        %s206 = scalar_select %p205, %s11, 1
        %s207 = smul.addr %s206, 5
        %s208 = smul.addr %s207, 4
        %s209 = scalar_lea.vmem %s2, %s208
      $region28: #{entryflow_forward.19} parent=15 // pred_fallthru
        _
      // Predicated region
      $region29: #{entryflow_forward.19} parent=15 // pred_check
        %p210 = pneg %p109
      $region30: #{entryflow_forward.19} parent=15 // pred_check_branch
        %212 = sbr.rel (%p210) target = $region32
      $region31: #{entryflow_forward.19} parent=15 // pred_region
        %p213 = scmp.lt.s32.totalorder %s11, 1
        %s214 = scalar_select %p213, %s11, 1
        %s215 = smul.addr %s214, 5
        %s216 = smul.addr %s215, 4
        %s217 = scalar_lea.vmem %s3, %s216
      $region32: #{entryflow_forward.19} parent=15 // pred_fallthru
        _
      // Predicated region
      $region33: #{entryflow_forward.19} parent=15 // pred_check
        %p218 = pneg %p135
      $region34: #{entryflow_forward.19} parent=15 // pred_check_branch
        %220 = sbr.rel (%p218) target = $region36
      $region35: #{entryflow_forward.19} parent=15 // pred_region
        %p221 = scmp.lt.s32.totalorder %s11, 1
        %s222 = scalar_select %p221, %s11, 1
        %s223 = smul.addr %s222, 4
        %s224 = smul.addr %s223, 2
        %s225 = scalar_lea.vmem %s4, %s224
      $region36: #{entryflow_forward.19} parent=15 // pred_fallthru
        _
    $region16: #{entryflow_forward.19} parent=5 // pred_fallthru
      _
    %p226 = scmp.le.s32.totalorder 1, %s11
    %p227 = scmp.lt.s32.totalorder %s11, 3
    %p228 = pnand %p226, %p227
    %p229 = pneg %p228
    // Predicated region
    $region37: #{entryflow_forward.19} parent=5 // pred_check
      _
    $region38: #{entryflow_forward.19} parent=5 // pred_check_branch
      %231 = sbr.rel (%p228) target = $region40
    $region39: #{entryflow_forward.19} parent=5 // pred_region
      %s232 = ssub.s32 %s11, 1
      %p233 = scmp.lt.s32.totalorder %s16, 1
      %s234 = scalar_select %p233, %s16, 1
      %s235 = smul.addr %s234, 5
      %s236 = smul.addr %s235, 4
      %s237 = scalar_lea.vmem %s0, %s236
      %p238 = pneg %p37
      %p239 = pneg %p34
      %p240 = scmp.lt.s32.totalorder %s16, 1
      %s241 = scalar_select %p240, %s16, 1
      %s242 = smul.addr %s241, 5
      %s243 = smul.addr %s242, 4
      %s244 = scalar_lea.vmem %s1, %s243
      %p245 = pneg %p63
      %p246 = pneg %p60
      %p247 = scmp.lt.s32.totalorder %s16, 1
      %s248 = scalar_select %p247, %s16, 1
      %s249 = smul.addr %s248, 5
      %s250 = smul.addr %s249, 4
      %s251 = scalar_lea.vmem %s2, %s250
      %p252 = pneg %p89
      %p253 = pneg %p86
      %p254 = scmp.lt.s32.totalorder %s16, 1
      %s255 = scalar_select %p254, %s16, 1
      %s256 = smul.addr %s255, 5
      %s257 = smul.addr %s256, 4
      %s258 = scalar_lea.vmem %s3, %s257
      %p259 = pneg %p115
      %p260 = pneg %p112
      %p261 = scmp.lt.s32.totalorder %s16, 1
      %s262 = scalar_select %p261, %s16, 1
      %s263 = smul.addr %s262, 4
      %s264 = smul.addr %s263, 2
      %s265 = scalar_lea.vmem %s4, %s264
      %p266 = pneg %p141
      %p267 = pneg %p138
      %p268 = pneg %p167
      %p269 = pneg %p164
      %p270 = scmp.lt.s32.totalorder %s16, 1
      %s271 = scalar_select %p270, %s16, 1
      %s272 = smul.addr %s271, 4
      %s273 = smul.addr %s272, 2
      %s274 = scalar_lea.vmem %s5, %s273
      %p275 = scmp.lt.s32.totalorder %s16, 1
      %s276 = scalar_select %p275, %s16, 1
      %s277 = smul.addr %s276, 5
      %s278 = smul.addr %s277, 4
      %s279 = scalar_lea.vmem %s0, %s278
      %p280 = scmp.lt.s32.totalorder %s16, 1
      %s281 = scalar_select %p280, %s16, 1
      %s282 = smul.addr %s281, 5
      %s283 = smul.addr %s282, 4
      %s284 = scalar_lea.vmem %s1, %s283
      %p285 = scmp.lt.s32.totalorder %s16, 1
      %s286 = scalar_select %p285, %s16, 1
      %s287 = smul.addr %s286, 5
      %s288 = smul.addr %s287, 4
      %s289 = scalar_lea.vmem %s2, %s288
      %p290 = scmp.lt.s32.totalorder %s16, 1
      %s291 = scalar_select %p290, %s16, 1
      %s292 = smul.addr %s291, 5
      %s293 = smul.addr %s292, 4
      %s294 = scalar_lea.vmem %s3, %s293
      %p295 = scmp.lt.s32.totalorder %s16, 1
      %s296 = scalar_select %p295, %s16, 1
      %s297 = smul.addr %s296, 4
      %s298 = smul.addr %s297, 2
      %s299 = scalar_lea.vmem %s4, %s298
      %p300 = scmp.lt.s32.totalorder %s16, 1
      %s301 = scalar_select %p300, %s16, 1
      %s302 = smul.addr %s301, 4
      %s303 = smul.addr %s302, 2
      %s304 = scalar_lea.vmem %s5, %s303
      %v305 = vld [vmem:[%s279] sm:$0x7]
      %v306 = vld [vmem:[%s279 + $0x4] sm:$0x7]
      %v307 = vld [vmem:[%s279 + $0x8] sm:$0x7]
      %v308 = vld [vmem:[%s279 + $0xc] sm:$0x7]
      %v309 = vld [vmem:[%s279 + $0x10] sm:$0x7]
      %v310 = vld [vmem:[%s284] sm:$0x7]
      %v311 = vld [vmem:[%s284 + $0x4] sm:$0x7]
      %v312 = vld [vmem:[%s284 + $0x8] sm:$0x7]
      %v313 = vld [vmem:[%s284 + $0xc] sm:$0x7]
      %v314 = vld [vmem:[%s284 + $0x10] sm:$0x7]
      %v315 = vld [vmem:[%s289] sm:$0x7]
      %v316 = vld [vmem:[%s289 + $0x4] sm:$0x7]
      %v317 = vld [vmem:[%s289 + $0x8] sm:$0x7]
      %v318 = vld [vmem:[%s289 + $0xc] sm:$0x7]
      %v319 = vld [vmem:[%s294] sm:$0x7]
      %v320 = vld [vmem:[%s294 + $0x4] sm:$0x7]
      %v321 = vld [vmem:[%s294 + $0x8] sm:$0x7]
      %v322 = vld [vmem:[%s294 + $0xc] sm:$0x7]
      %v323 = vunpack.c.l.bf16 %v305
      %v324 = vunpack.c.l.bf16 %v306
      %v325 = vunpack.c.l.bf16 %v307
      %v326 = vunpack.c.l.bf16 %v308
      %v327 = vunpack.c.l.bf16 %v310
      %v328 = vunpack.c.l.bf16 %v311
      %v329 = vunpack.c.l.bf16 %v312
      %v330 = vunpack.c.l.bf16 %v313
      %v331 = vmax.f32 %v323, %v327
      %v332 = vmax.f32 %v324, %v328
      %v333 = vmax.f32 %v325, %v329
      %v334 = vmax.f32 %v326, %v330
      %v339 = vrot.slane %v323, 1
      %v340 = vrot.slane %v324, 1
      %v341 = vrot.slane %v325, 1
      %v342 = vrot.slane %v326, 1
      %v347 = vmax.f32 %v331, %v339
      %v348 = vmax.f32 %v332, %v340
      %v349 = vmax.f32 %v333, %v341
      %v350 = vmax.f32 %v334, %v342
      %v351 = vunpack.c.l.bf16 %v315
      %v352 = vunpack.c.l.bf16 %v316
      %v353 = vunpack.c.l.bf16 %v317
      %v354 = vunpack.c.l.bf16 %v318
      %v355 = vmax.f32 %v347, %v351
      %v356 = vmax.f32 %v348, %v352
      %v357 = vmax.f32 %v349, %v353
      %v358 = vmax.f32 %v350, %v354
      %v359 = vunpack.c.l.bf16 %v319
      %v360 = vunpack.c.l.bf16 %v320
      %v361 = vunpack.c.l.bf16 %v321
      %v362 = vunpack.c.l.bf16 %v322
      %v363 = vmax.f32 %v355, %v359
      %v364 = vmax.f32 %v356, %v360
      %v365 = vmax.f32 %v357, %v361
      %v366 = vmax.f32 %v358, %v362
      %v371 = vrot.slane %v351, 1
      %v372 = vrot.slane %v352, 1
      %v373 = vrot.slane %v353, 1
      %v374 = vrot.slane %v354, 1
      %v379 = vmax.f32 %v363, %v371
      %v380 = vmax.f32 %v364, %v372
      %v381 = vmax.f32 %v365, %v373
      %v382 = vmax.f32 %v366, %v374
      %v383 = vunpack.c.l.bf16 %v309
      %v384 = vmax.f32 %v379, %v324
      %v385 = vmax.f32 %v380, %v325
      %v386 = vmax.f32 %v381, %v326
      %v387 = vmax.f32 %v382, %v383
      %v388 = vunpack.c.l.bf16 %v314
      %v389 = vmax.f32 %v384, %v328
      %v390 = vmax.f32 %v385, %v329
      %v391 = vmax.f32 %v386, %v330
      %v392 = vmax.f32 %v387, %v388
      %v394 = vrot.slane %v383, 1
      %v396 = vmax.f32 %v389, %v340
      %v397 = vmax.f32 %v390, %v341
      %v398 = vmax.f32 %v391, %v342
      %v399 = vmax.f32 %v392, %v394
      %v400 = vld [vmem:[%s299] sm:$0x3]
      %v401 = vld [vmem:[%s299 + $0x2] sm:$0x3]
      %v402 = vld [vmem:[%s299 + $0x4] sm:$0x3]
      %v403 = vld [vmem:[%s299 + $0x6] sm:$0x3]
      %v404 = vunpack.c.l.bf16 %v400
      %v405 = vunpack.c.l.bf16 %v401
      %v406 = vunpack.c.l.bf16 %v402
      %v407 = vunpack.c.l.bf16 %v403
      %v408 = vadd.f32 %v396, %v404
      %v409 = vadd.f32 %v397, %v405
      %v410 = vadd.f32 %v398, %v406
      %v411 = vadd.f32 %v399, %v407
      %v412 = vpack.c.bf16 %v408, %v408
      %v413 = vpack.c.bf16 %v409, %v409
      %v414 = vpack.c.bf16 %v410, %v410
      %v415 = vpack.c.bf16 %v411, %v411
      %vm416 = vcmask 123904
      %417 = vst.msk [vmem:[%s304] sm:$0x3] %vm416, %v412
      %418 = vst.msk [vmem:[%s304 + $0x2] sm:$0x3] %vm416, %v413
      %419 = vst.msk [vmem:[%s304 + $0x4] sm:$0x3] %vm416, %v414
      %420 = vst.msk [vmem:[%s304 + $0x6] sm:$0x3] %vm416, %v415
      %p421 = scmp.lt.s32.totalorder %s16, 1
      %s422 = scalar_select %p421, %s16, 1
      %s423 = smul.addr %s422, 4
      %s424 = smul.addr %s423, 2
      %s425 = scalar_lea.vmem %s5, %s424
      // Predicated region
      $region41: #{entryflow_forward.19} parent=39 // pred_check
        %p426 = pneg %p164
      $region42: #{entryflow_forward.19} parent=39 // pred_check_branch
        %428 = sbr.rel (%p426) target = $region44
      $region43: #{entryflow_forward.19} parent=39 // pred_region
        _
      $region44: #{entryflow_forward.19} parent=39 // pred_fallthru
        _
    $region40: #{entryflow_forward.19} parent=5 // pred_fallthru
      _
    %p429 = scmp.le.s32.totalorder 2, %s11
    // Predicated region
    $region45: #{entryflow_forward.19} parent=5 // pred_check
      %p430 = pneg %p429
    $region46: #{entryflow_forward.19} parent=5 // pred_check_branch
      %432 = sbr.rel (%p430) target = $region48
    $region47: #{entryflow_forward.19} parent=5 // pred_region
      %s433 = ssub.s32 %s11, 2
      // Predicated region
      $region49: #{entryflow_forward.19} parent=47 // pred_check
        %p434 = pneg %p170
      $region50: #{entryflow_forward.19} parent=47 // pred_check_branch
        %436 = sbr.rel (%p434) target = $region52
      $region51: #{entryflow_forward.19} parent=47 // pred_region
        %p437 = scmp.lt.s32.totalorder %s17, 1
        %s438 = scalar_select %p437, %s17, 1
        %s439 = smul.addr %s438, 4
        %s440 = smul.addr %s439, 2
        %s441 = scalar_lea.vmem %s5, %s440
      $region52: #{entryflow_forward.19} parent=47 // pred_fallthru
        _
    $region48: #{entryflow_forward.19} parent=5 // pred_fallthru
      _
  $region6: #{entryflow_forward.19} parent=0 // loop_footer
    %s15 = sadd.s32 1, %s11
  $region7: #{entryflow_forward.19} parent=0 // loop_footer_branch
    %10 = sbr.rel target = $region3
  $region8: #{entryflow_forward.19} parent=0 // loop_exit
    _

// kernel: entryflow_forward.20
$region0: #{entryflow_forward.20}
  #allocation0 [shape = 'u32[]', space=smem, size = 0x4, offset = 0x4, fixed_abs, tag = 'smem constant byte address 0x4 - core index']
  #allocation1 [shape = 'u32[72,128]{1,0:T(1,128)}', space=vmem, size = 0x9000, scoped, tag = 'internal scratch']
  %s0 = inlined_call_operand.vmem [shape: bf16[2,6,6,16], index: 0, kind: input, shape index: {}]
  %s1 = inlined_call_operand.vmem [shape: f32[9,16], index: 1, kind: input, shape index: {}]
  %s2 = inlined_call_operand.vmem [shape: f32[1,16], index: 2, kind: input, shape index: {}]
  %s3 = inlined_call_operand.vmem [shape: bf16[16,128], index: 3, kind: input, shape index: {}]
  %s4 = inlined_call_operand.vmem [shape: f32[1,128], index: 4, kind: input, shape index: {}]
  %s5 = inlined_call_operand.vmem [shape: bf16[2,4,4,128], index: 5, kind: output, shape index: {}]
  %s6 = sld [smem:[#allocation0]]
  $region53: #{entryflow_forward.20} parent=0
    _
  %s8 = ssub.s32 1, %s6
  %s9 = scalar_select 0, %s8, %s6
  loop: start=0, step=1, limit=4
  $region2: #{entryflow_forward.20} parent=0 // loop_pre_header
    _
  $region3: #{entryflow_forward.20} parent=0 // loop_header
    %s11 = sphi 0, %s15
    %p12 = scmp.ge.s32.totalorder %s11, 4
    %s21 = sphi 0, %s23
    %s24 = sphi 0, %s21
    %s25 = sphi 0, %s24
    %s41 = sphi 0, %s25
    %s45 = sphi 0, %s45
    %s47 = sphi 0, %s45
    %s48 = sphi 0, %s47
    %s62 = sphi 0, %s48
    %s66 = sphi 0, %s66
    %s68 = sphi 0, %s66
    %s69 = sphi 0, %s68
    %s83 = sphi 0, %s69
    %s87 = sphi 0, %s87
    %s89 = sphi 0, %s87
    %s90 = sphi 0, %s89
    %s104 = sphi 0, %s90
    %s108 = sphi 0, %s108
    %s110 = sphi 0, %s108
    %s111 = sphi 0, %s110
    %s125 = sphi 0, %s111
    %s131 = sphi 0, %s133
    %s134 = sphi 0, %s131
    %s135 = sphi 0, %s134
    %s151 = sphi 0, %s135
  $region4: #{entryflow_forward.20} parent=0 // loop_header_branch
    %14 = sbr.rel (%p12) target = $region8
  $region5: #{entryflow_forward.20} parent=0 // loop_body
    %s16 = ssub.s32 %s11, 1
    %s17 = ssub.s32 %s11, 2
    %s18 = sadd.s32 %s11, 1
    %s19 = ssub.s32 %s11, %s18
    %p20 = scmp.eq.s32.totalorder %s19, 0
    %s22 = sadd.s32 %s21, 1
    %s23 = scalar_select %p20, %s21, %s22
    %p26 = pneg %p20
    %p27 = scmp.eq.s32.totalorder %s11, 1
    %p28 = por %p26, %p27
    %p29 = scmp.ne.s32.totalorder %s21, %s24
    %p30 = scmp.eq.s32.totalorder %s11, 0
    %p31 = por %p29, %p30
    %p32 = scmp.ne.s32.totalorder %s21, %s24
    %p33 = scmp.eq.s32.totalorder %s16, 1
    %p34 = por %p32, %p33
    %p35 = scmp.ne.s32.totalorder %s24, %s25
    %p36 = scmp.eq.s32.totalorder %s16, 0
    %p37 = por %p35, %p36
    %p38 = scmp.ne.s32.totalorder %s24, %s25
    %p39 = scmp.eq.s32.totalorder %s17, 1
    %p40 = por %p38, %p39
    %p42 = scmp.ne.s32.totalorder %s25, %s41
    %p43 = scmp.eq.s32.totalorder %s17, 0
    %p44 = por %p42, %p43
    %s46 = sadd.s32 %s45, 1
    %p49 = scmp.eq.s32.totalorder %s11, 1
    %p50 = scmp.ne.s32.totalorder %s45, %s47
    %p51 = scmp.eq.s32.totalorder %s11, 0
    %p52 = por %p50, %p51
    %p53 = scmp.ne.s32.totalorder %s45, %s47
    %p54 = scmp.eq.s32.totalorder %s16, 1
    %p55 = por %p53, %p54
    %p56 = scmp.ne.s32.totalorder %s47, %s48
    %p57 = scmp.eq.s32.totalorder %s16, 0
    %p58 = por %p56, %p57
    %p59 = scmp.ne.s32.totalorder %s47, %s48
    %p60 = scmp.eq.s32.totalorder %s17, 1
    %p61 = por %p59, %p60
    %p63 = scmp.ne.s32.totalorder %s48, %s62
    %p64 = scmp.eq.s32.totalorder %s17, 0
    %p65 = por %p63, %p64
    %s67 = sadd.s32 %s66, 1
    %p70 = scmp.eq.s32.totalorder %s11, 1
    %p71 = scmp.ne.s32.totalorder %s66, %s68
    %p72 = scmp.eq.s32.totalorder %s11, 0
    %p73 = por %p71, %p72
    %p74 = scmp.ne.s32.totalorder %s66, %s68
    %p75 = scmp.eq.s32.totalorder %s16, 1
    %p76 = por %p74, %p75
    %p77 = scmp.ne.s32.totalorder %s68, %s69
    %p78 = scmp.eq.s32.totalorder %s16, 0
    %p79 = por %p77, %p78
    %p80 = scmp.ne.s32.totalorder %s68, %s69
    %p81 = scmp.eq.s32.totalorder %s17, 1
    %p82 = por %p80, %p81
    %p84 = scmp.ne.s32.totalorder %s69, %s83
    %p85 = scmp.eq.s32.totalorder %s17, 0
    %p86 = por %p84, %p85
    %s88 = sadd.s32 %s87, 1
    %p91 = scmp.eq.s32.totalorder %s11, 1
    %p92 = scmp.ne.s32.totalorder %s87, %s89
    %p93 = scmp.eq.s32.totalorder %s11, 0
    %p94 = por %p92, %p93
    %p95 = scmp.ne.s32.totalorder %s87, %s89
    %p96 = scmp.eq.s32.totalorder %s16, 1
    %p97 = por %p95, %p96
    %p98 = scmp.ne.s32.totalorder %s89, %s90
    %p99 = scmp.eq.s32.totalorder %s16, 0
    %p100 = por %p98, %p99
    %p101 = scmp.ne.s32.totalorder %s89, %s90
    %p102 = scmp.eq.s32.totalorder %s17, 1
    %p103 = por %p101, %p102
    %p105 = scmp.ne.s32.totalorder %s90, %s104
    %p106 = scmp.eq.s32.totalorder %s17, 0
    %p107 = por %p105, %p106
    %s109 = sadd.s32 %s108, 1
    %p112 = scmp.eq.s32.totalorder %s11, 1
    %p113 = scmp.ne.s32.totalorder %s108, %s110
    %p114 = scmp.eq.s32.totalorder %s11, 0
    %p115 = por %p113, %p114
    %p116 = scmp.ne.s32.totalorder %s108, %s110
    %p117 = scmp.eq.s32.totalorder %s16, 1
    %p118 = por %p116, %p117
    %p119 = scmp.ne.s32.totalorder %s110, %s111
    %p120 = scmp.eq.s32.totalorder %s16, 0
    %p121 = por %p119, %p120
    %p122 = scmp.ne.s32.totalorder %s110, %s111
    %p123 = scmp.eq.s32.totalorder %s17, 1
    %p124 = por %p122, %p123
    %p126 = scmp.ne.s32.totalorder %s111, %s125
    %p127 = scmp.eq.s32.totalorder %s17, 0
    %p128 = por %p126, %p127
    %s129 = ssub.s32 %s11, %s18
    %p130 = scmp.eq.s32.totalorder %s129, 0
    %s132 = sadd.s32 %s131, 1
    %s133 = scalar_select %p130, %s131, %s132
    %p136 = pneg %p130
    %p137 = scmp.eq.s32.totalorder %s11, 1
    %p138 = por %p136, %p137
    %p139 = scmp.ne.s32.totalorder %s131, %s134
    %p140 = scmp.eq.s32.totalorder %s11, 0
    %p141 = por %p139, %p140
    %p142 = scmp.ne.s32.totalorder %s131, %s134
    %p143 = scmp.eq.s32.totalorder %s16, 1
    %p144 = por %p142, %p143
    %p145 = scmp.ne.s32.totalorder %s134, %s135
    %p146 = scmp.eq.s32.totalorder %s16, 0
    %p147 = por %p145, %p146
    %p148 = scmp.ne.s32.totalorder %s134, %s135
    %p149 = scmp.eq.s32.totalorder %s17, 1
    %p150 = por %p148, %p149
    %p152 = scmp.ne.s32.totalorder %s135, %s151
    %p153 = scmp.eq.s32.totalorder %s17, 0
    %p154 = por %p152, %p153
    %p155 = scmp.le.s32.totalorder 1, %s11
    %p156 = scmp.lt.s32.totalorder %s11, 3
    %p157 = pnand %p155, %p156
    %p158 = pneg %p157
    // Predicated region
    $region9: #{entryflow_forward.20} parent=5 // pred_check
      _
    $region10: #{entryflow_forward.20} parent=5 // pred_check_branch
      %160 = sbr.rel (%p157) target = $region12
    $region11: #{entryflow_forward.20} parent=5 // pred_region
      %s161 = ssub.s32 %s11, 1
      // Predicated region
      $region13: #{entryflow_forward.20} parent=11 // pred_check
        %p162 = pneg %p58
      $region14: #{entryflow_forward.20} parent=11 // pred_check_branch
        %164 = sbr.rel (%p162) target = $region16
      $region15: #{entryflow_forward.20} parent=11 // pred_region
        _
      $region16: #{entryflow_forward.20} parent=11 // pred_fallthru
        _
      // Predicated region
      $region17: #{entryflow_forward.20} parent=11 // pred_check
        %p165 = pneg %p79
      $region18: #{entryflow_forward.20} parent=11 // pred_check_branch
        %167 = sbr.rel (%p165) target = $region20
      $region19: #{entryflow_forward.20} parent=11 // pred_region
        _
      $region20: #{entryflow_forward.20} parent=11 // pred_fallthru
        _
      // Predicated region
      $region21: #{entryflow_forward.20} parent=11 // pred_check
        %p168 = pneg %p100
      $region22: #{entryflow_forward.20} parent=11 // pred_check_branch
        %170 = sbr.rel (%p168) target = $region24
      $region23: #{entryflow_forward.20} parent=11 // pred_region
        _
      $region24: #{entryflow_forward.20} parent=11 // pred_fallthru
        _
      // Predicated region
      $region25: #{entryflow_forward.20} parent=11 // pred_check
        %p171 = pneg %p121
      $region26: #{entryflow_forward.20} parent=11 // pred_check_branch
        %173 = sbr.rel (%p171) target = $region28
      $region27: #{entryflow_forward.20} parent=11 // pred_region
        _
      $region28: #{entryflow_forward.20} parent=11 // pred_fallthru
        _
    $region12: #{entryflow_forward.20} parent=5 // pred_fallthru
      _
    %p174 = scmp.lt.s32.totalorder %s11, 2
    // Predicated region
    $region29: #{entryflow_forward.20} parent=5 // pred_check
      %p175 = pneg %p174
    $region30: #{entryflow_forward.20} parent=5 // pred_check_branch
      %177 = sbr.rel (%p175) target = $region32
    $region31: #{entryflow_forward.20} parent=5 // pred_region
      // Predicated region
      $region33: #{entryflow_forward.20} parent=31 // pred_check
        %p178 = pneg %p31
      $region34: #{entryflow_forward.20} parent=31 // pred_check_branch
        %180 = sbr.rel (%p178) target = $region36
      $region35: #{entryflow_forward.20} parent=31 // pred_region
        %p181 = scmp.lt.s32.totalorder %s11, 1
        %s182 = scalar_select %p181, %s11, 1
        %s183 = smul.addr %s182, 6
        %s184 = smul.addr %s183, 4
        %s185 = scalar_lea.vmem %s0, %s184
      $region36: #{entryflow_forward.20} parent=31 // pred_fallthru
        _
    $region32: #{entryflow_forward.20} parent=5 // pred_fallthru
      _
    %p186 = scmp.le.s32.totalorder 1, %s11
    %p187 = scmp.lt.s32.totalorder %s11, 3
    %p188 = pnand %p186, %p187
    %p189 = pneg %p188
    // Predicated region
    $region37: #{entryflow_forward.20} parent=5 // pred_check
      _
    $region38: #{entryflow_forward.20} parent=5 // pred_check_branch
      %191 = sbr.rel (%p188) target = $region40
    $region39: #{entryflow_forward.20} parent=5 // pred_region
      %s192 = ssub.s32 %s11, 1
      %p193 = scmp.lt.s32.totalorder %s16, 1
      %s194 = scalar_select %p193, %s16, 1
      %s195 = smul.addr %s194, 6
      %s196 = smul.addr %s195, 4
      %s197 = scalar_lea.vmem %s0, %s196
      %p198 = pneg %p37
      %p199 = pneg %p34
      %p200 = pneg %p58
      %p201 = pneg %p55
      %p202 = pneg %p79
      %p203 = pneg %p76
      %p204 = pneg %p100
      %p205 = pneg %p97
      %p206 = pneg %p121
      %p207 = pneg %p118
      %p208 = pneg %p147
      %p209 = pneg %p144
      %p210 = scmp.lt.s32.totalorder %s16, 1
      %s211 = scalar_select %p210, %s16, 1
      %s212 = smul.addr %s211, 4
      %s213 = smul.addr %s212, 2
      %s214 = scalar_lea.vmem %s5, %s213
      %p215 = scmp.lt.s32.totalorder %s16, 1
      %s216 = scalar_select %p215, %s16, 1
      %s217 = smul.addr %s216, 6
      %s218 = smul.addr %s217, 4
      %s219 = scalar_lea.vmem %s0, %s218
      %p220 = scmp.lt.s32.totalorder %s16, 1
      %s221 = scalar_select %p220, %s16, 1
      %s222 = smul.addr %s221, 4
      %s223 = smul.addr %s222, 2
      %s224 = scalar_lea.vmem %s5, %s223
      %v226 = vld [vmem:[%s219] sm:$0x7]
      %v227 = vld [vmem:[%s219 + $0x4] sm:$0x7]
      %v228 = vld [vmem:[%s219 + $0x8] sm:$0x7]
      %v229 = vld [vmem:[%s219 + $0xc] sm:$0x7]
      %v230 = vld [vmem:[%s219 + $0x10] sm:$0x7]
      %v231 = vld [vmem:[%s219 + $0x14] sm:$0x7]
      %v232 = vld [vmem:[%s1] sm:$0xff]
      %v233 = vld [vmem:[%s1 + $0x8] sm:$0x1]
      %v234 = vunpack.c.l.bf16 %v226
      %v235 = vunpack.c.l.bf16 %v227
      %v236 = vunpack.c.l.bf16 %v228
      %v237 = vunpack.c.l.bf16 %v229
      %v238 = vmax.f32 %v234, 0.0
      %v239 = vmax.f32 %v235, 0.0
      %v240 = vmax.f32 %v236, 0.0
      %v241 = vmax.f32 %v237, 0.0
      %v242 = vperm.slane %v232, 0
      %v243 = vmul.f32 %v238, %v242
      %v244 = vmul.f32 %v239, %v242
      %v245 = vmul.f32 %v240, %v242
      %v246 = vmul.f32 %v241, %v242
      %v247 = vadd.f32 %v243, 0.0
      %v248 = vadd.f32 %v244, 0.0
      %v249 = vadd.f32 %v245, 0.0
      %v250 = vadd.f32 %v246, 0.0
      %v251 = vperm.slane %v232, 1
      %v252 = vmul.f32 %v238, %v251
      %v253 = vmul.f32 %v239, %v251
      %v254 = vmul.f32 %v240, %v251
      %v255 = vmul.f32 %v241, %v251
      %v260 = vrot.slane %v252, 1
      %v261 = vrot.slane %v253, 1
      %v262 = vrot.slane %v254, 1
      %v263 = vrot.slane %v255, 1
      %v268 = vadd.f32 %v247, %v260
      %v269 = vadd.f32 %v248, %v261
      %v270 = vadd.f32 %v249, %v262
      %v271 = vadd.f32 %v250, %v263
      %v272 = vperm.slane %v232, 2
      %v273 = vmul.f32 %v238, %v272
      %v274 = vmul.f32 %v239, %v272
      %v275 = vmul.f32 %v240, %v272
      %v276 = vmul.f32 %v241, %v272
      %v281 = vrot.slane %v273, 2
      %v282 = vrot.slane %v274, 2
      %v283 = vrot.slane %v275, 2
      %v284 = vrot.slane %v276, 2
      %v289 = vadd.f32 %v268, %v281
      %v290 = vadd.f32 %v269, %v282
      %v291 = vadd.f32 %v270, %v283
      %v292 = vadd.f32 %v271, %v284
      %v293 = vunpack.c.l.bf16 %v230
      %v294 = vmax.f32 %v293, 0.0
      %v295 = vperm.slane %v232, 3
      %v296 = vmul.f32 %v239, %v295
      %v297 = vmul.f32 %v240, %v295
      %v298 = vmul.f32 %v241, %v295
      %v299 = vmul.f32 %v294, %v295
      %v300 = vadd.f32 %v289, %v296
      %v301 = vadd.f32 %v290, %v297
      %v302 = vadd.f32 %v291, %v298
      %v303 = vadd.f32 %v292, %v299
      %v304 = vperm.slane %v232, 4
      %v305 = vmul.f32 %v239, %v304
      %v306 = vmul.f32 %v240, %v304
      %v307 = vmul.f32 %v241, %v304
      %v308 = vmul.f32 %v294, %v304
      %v313 = vrot.slane %v305, 1
      %v314 = vrot.slane %v306, 1
      %v315 = vrot.slane %v307, 1
      %v316 = vrot.slane %v308, 1
      %v321 = vadd.f32 %v300, %v313
      %v322 = vadd.f32 %v301, %v314
      %v323 = vadd.f32 %v302, %v315
      %v324 = vadd.f32 %v303, %v316
      %v325 = vperm.slane %v232, 5
      %v326 = vmul.f32 %v239, %v325
      %v327 = vmul.f32 %v240, %v325
      %v328 = vmul.f32 %v241, %v325
      %v329 = vmul.f32 %v294, %v325
      %v334 = vrot.slane %v326, 2
      %v335 = vrot.slane %v327, 2
      %v336 = vrot.slane %v328, 2
      %v337 = vrot.slane %v329, 2
      %v342 = vadd.f32 %v321, %v334
      %v343 = vadd.f32 %v322, %v335
      %v344 = vadd.f32 %v323, %v336
      %v345 = vadd.f32 %v324, %v337
      %v346 = vunpack.c.l.bf16 %v231
      %v347 = vmax.f32 %v346, 0.0
      %v348 = vperm.slane %v232, 6
      %v349 = vmul.f32 %v240, %v348
      %v350 = vmul.f32 %v241, %v348
      %v351 = vmul.f32 %v294, %v348
      %v352 = vmul.f32 %v347, %v348
      %v353 = vadd.f32 %v342, %v349
      %v354 = vadd.f32 %v343, %v350
      %v355 = vadd.f32 %v344, %v351
      %v356 = vadd.f32 %v345, %v352
      %v357 = vperm.slane %v232, 7
      %v358 = vmul.f32 %v240, %v357
      %v359 = vmul.f32 %v241, %v357
      %v360 = vmul.f32 %v294, %v357
      %v361 = vmul.f32 %v347, %v357
      %v366 = vrot.slane %v358, 1
      %v367 = vrot.slane %v359, 1
      %v368 = vrot.slane %v360, 1
      %v369 = vrot.slane %v361, 1
      %v374 = vadd.f32 %v353, %v366
      %v375 = vadd.f32 %v354, %v367
      %v376 = vadd.f32 %v355, %v368
      %v377 = vadd.f32 %v356, %v369
      %v378 = vperm.slane %v233, 0
      %v379 = vmul.f32 %v240, %v378
      %v380 = vmul.f32 %v241, %v378
      %v381 = vmul.f32 %v294, %v378
      %v382 = vmul.f32 %v347, %v378
      %v387 = vrot.slane %v379, 2
      %v388 = vrot.slane %v380, 2
      %v389 = vrot.slane %v381, 2
      %v390 = vrot.slane %v382, 2
      %v395 = vadd.f32 %v374, %v387
      %v396 = vadd.f32 %v375, %v388
      %v397 = vadd.f32 %v376, %v389
      %v398 = vadd.f32 %v377, %v390
      %v399 = vld [vmem:[%s2] sm:$0x1]
      %v401 = vperm.slane %v399, 0
      %v403 = vadd.f32 %v395, %v401
      %v404 = vadd.f32 %v396, %v401
      %v405 = vadd.f32 %v397, %v401
      %v406 = vadd.f32 %v398, %v401
      %411 = vst [vmem:[#allocation1] ss:$2 sm:$0xff] %v403
      %s412 = scalar_lea.vmem [#allocation1], 1
      %413 = vst [vmem:[%s412] ss:$2 sm:$0xff] %v404
      %s414 = scalar_lea.vmem [#allocation1], 16
      %415 = vst [vmem:[%s414] ss:$2 sm:$0xff] %v405
      %s416 = scalar_lea.vmem [#allocation1], 17
      %417 = vst [vmem:[%s416] ss:$2 sm:$0xff] %v406
      %v418 = vld.sshfl [vmem:[#allocation1] sm:$0xff pattern:$0x75316420]
      %v419 = vld.sshfl [vmem:[#allocation1 + $0x10] sm:$0xff pattern:$0x75316420]
      %v422 = vpack.c.bf16 %v419, %v418
      %v423 = vld [vmem:[%s3] sm:$0xf]
      %v424 = vld [vmem:[%s3 + $0x4] sm:$0xf]
      %v425 = vld [vmem:[%s4] sm:$0x1]
      %v427 = vperm.slane %v425, 0
      %v431 = vunpack.c.l.b16 %v423
      %v432 = vunpack.c.l.b16 %v424
      %v433 = vpack.c.b16 %v432, %v431
      %vm435 = vcmask 130048
      %v437 = vsel %vm435, %v422, 0
      %439 = vmatpush.bf16.msra.mxu0 0
      %440 = vmatpush.bf16.msra.mxu0 0
      %441 = vmatpush.bf16.msra.mxu0 0
      %442 = vmatpush.bf16.msra.mxu0 0
      %443 = vmatpush.bf16.msra.mxu0 0
      %444 = vmatpush.bf16.msra.mxu0 0
      %445 = vmatpush.bf16.msra.mxu0 0
      %446 = vmatpush.bf16.msra.mxu0 %v433
      %447 = vmatmul.bf16.gmra.mxu0 %v437
      %v448 = vpop.f32.mrf.mxu0
      %v449 = vadd.f32 %v427, %v448
      %v450 = vpop.f32.mrf.mxu0
      %v451 = vadd.f32 %v427, %v450
      %452 = vdwg.mxu0
      %v453 = vmax.f32 %v449, 0.0
      %v454 = vmax.f32 %v451, 0.0
      %v457 = vrot.slane %v453, 4
      %v458 = vrot.slane %v454, 4
      %v461 = vpack.c.bf16 %v453, %v453
      %v462 = vpack.c.bf16 %v457, %v457
      %v463 = vpack.c.bf16 %v454, %v454
      %v464 = vpack.c.bf16 %v458, %v458
      %465 = vst [vmem:[%s224] sm:$0x3] %v461
      %466 = vst [vmem:[%s224 + $0x2] sm:$0x3] %v462
      %467 = vst [vmem:[%s224 + $0x4] sm:$0x3] %v463
      %468 = vst [vmem:[%s224 + $0x6] sm:$0x3] %v464
      %p469 = scmp.lt.s32.totalorder %s16, 1
      %s470 = scalar_select %p469, %s16, 1
      %s471 = smul.addr %s470, 4
      %s472 = smul.addr %s471, 2
      %s473 = scalar_lea.vmem %s5, %s472
      // Predicated region
      $region41: #{entryflow_forward.20} parent=39 // pred_check
        %p474 = pneg %p144
      $region42: #{entryflow_forward.20} parent=39 // pred_check_branch
        %476 = sbr.rel (%p474) target = $region44
      $region43: #{entryflow_forward.20} parent=39 // pred_region
        _
      $region44: #{entryflow_forward.20} parent=39 // pred_fallthru
        _
    $region40: #{entryflow_forward.20} parent=5 // pred_fallthru
      _
    %p477 = scmp.le.s32.totalorder 2, %s11
    // Predicated region
    $region45: #{entryflow_forward.20} parent=5 // pred_check
      %p478 = pneg %p477
    $region46: #{entryflow_forward.20} parent=5 // pred_check_branch
      %480 = sbr.rel (%p478) target = $region48
    $region47: #{entryflow_forward.20} parent=5 // pred_region
      %s481 = ssub.s32 %s11, 2
      // Predicated region
      $region49: #{entryflow_forward.20} parent=47 // pred_check
        %p482 = pneg %p150
      $region50: #{entryflow_forward.20} parent=47 // pred_check_branch
        %484 = sbr.rel (%p482) target = $region52
      $region51: #{entryflow_forward.20} parent=47 // pred_region
        %p485 = scmp.lt.s32.totalorder %s17, 1
        %s486 = scalar_select %p485, %s17, 1
        %s487 = smul.addr %s486, 4
        %s488 = smul.addr %s487, 2
        %s489 = scalar_lea.vmem %s5, %s488
      $region52: #{entryflow_forward.20} parent=47 // pred_fallthru
        _
    $region48: #{entryflow_forward.20} parent=5 // pred_fallthru
      _
  $region6: #{entryflow_forward.20} parent=0 // loop_footer
    %s15 = sadd.s32 1, %s11
  $region7: #{entryflow_forward.20} parent=0 // loop_footer_branch
    %10 = sbr.rel target = $region3
  $region8: #{entryflow_forward.20} parent=0 // loop_exit
    _

// kernel: entryflow_forward.21
$region0: #{entryflow_forward.21}
  #allocation0 [shape = 'u32[]', space=smem, size = 0x4, offset = 0x4, fixed_abs, tag = 'smem constant byte address 0x4 - core index']
  #allocation1 [shape = 'u32[72,128]{1,0:T(1,128)}', space=vmem, size = 0x9000, scoped, tag = 'internal scratch']
  %s0 = inlined_call_operand.vmem [shape: bf16[2,6,6,32], index: 0, kind: input, shape index: {}]
  %s1 = inlined_call_operand.vmem [shape: f32[9,32], index: 1, kind: input, shape index: {}]
  %s2 = inlined_call_operand.vmem [shape: f32[1,32], index: 2, kind: input, shape index: {}]
  %s3 = inlined_call_operand.vmem [shape: bf16[32,128], index: 3, kind: input, shape index: {}]
  %s4 = inlined_call_operand.vmem [shape: f32[1,128], index: 4, kind: input, shape index: {}]
  %s5 = inlined_call_operand.vmem [shape: bf16[2,4,4,128], index: 5, kind: output, shape index: {}]
  %s6 = sld [smem:[#allocation0]]
  $region53: #{entryflow_forward.21} parent=0
    _
  %s8 = ssub.s32 1, %s6
  %s9 = scalar_select 0, %s8, %s6
  loop: start=0, step=1, limit=4
  $region2: #{entryflow_forward.21} parent=0 // loop_pre_header
    _
  $region3: #{entryflow_forward.21} parent=0 // loop_header
    %s11 = sphi 0, %s15
    %p12 = scmp.ge.s32.totalorder %s11, 4
    %s21 = sphi 0, %s23
    %s24 = sphi 0, %s21
    %s25 = sphi 0, %s24
    %s41 = sphi 0, %s25
    %s45 = sphi 0, %s45
    %s47 = sphi 0, %s45
    %s48 = sphi 0, %s47
    %s62 = sphi 0, %s48
    %s66 = sphi 0, %s66
    %s68 = sphi 0, %s66
    %s69 = sphi 0, %s68
    %s83 = sphi 0, %s69
    %s87 = sphi 0, %s87
    %s89 = sphi 0, %s87
    %s90 = sphi 0, %s89
    %s104 = sphi 0, %s90
    %s108 = sphi 0, %s108
    %s110 = sphi 0, %s108
    %s111 = sphi 0, %s110
    %s125 = sphi 0, %s111
    %s131 = sphi 0, %s133
    %s134 = sphi 0, %s131
    %s135 = sphi 0, %s134
    %s151 = sphi 0, %s135
  $region4: #{entryflow_forward.21} parent=0 // loop_header_branch
    %14 = sbr.rel (%p12) target = $region8
  $region5: #{entryflow_forward.21} parent=0 // loop_body
    %s16 = ssub.s32 %s11, 1
    %s17 = ssub.s32 %s11, 2
    %s18 = sadd.s32 %s11, 1
    %s19 = ssub.s32 %s11, %s18
    %p20 = scmp.eq.s32.totalorder %s19, 0
    %s22 = sadd.s32 %s21, 1
    %s23 = scalar_select %p20, %s21, %s22
    %p26 = pneg %p20
    %p27 = scmp.eq.s32.totalorder %s11, 1
    %p28 = por %p26, %p27
    %p29 = scmp.ne.s32.totalorder %s21, %s24
    %p30 = scmp.eq.s32.totalorder %s11, 0
    %p31 = por %p29, %p30
    %p32 = scmp.ne.s32.totalorder %s21, %s24
    %p33 = scmp.eq.s32.totalorder %s16, 1
    %p34 = por %p32, %p33
    %p35 = scmp.ne.s32.totalorder %s24, %s25
    %p36 = scmp.eq.s32.totalorder %s16, 0
    %p37 = por %p35, %p36
    %p38 = scmp.ne.s32.totalorder %s24, %s25
    %p39 = scmp.eq.s32.totalorder %s17, 1
    %p40 = por %p38, %p39
    %p42 = scmp.ne.s32.totalorder %s25, %s41
    %p43 = scmp.eq.s32.totalorder %s17, 0
    %p44 = por %p42, %p43
    %s46 = sadd.s32 %s45, 1
    %p49 = scmp.eq.s32.totalorder %s11, 1
    %p50 = scmp.ne.s32.totalorder %s45, %s47
    %p51 = scmp.eq.s32.totalorder %s11, 0
    %p52 = por %p50, %p51
    %p53 = scmp.ne.s32.totalorder %s45, %s47
    %p54 = scmp.eq.s32.totalorder %s16, 1
    %p55 = por %p53, %p54
    %p56 = scmp.ne.s32.totalorder %s47, %s48
    %p57 = scmp.eq.s32.totalorder %s16, 0
    %p58 = por %p56, %p57
    %p59 = scmp.ne.s32.totalorder %s47, %s48
    %p60 = scmp.eq.s32.totalorder %s17, 1
    %p61 = por %p59, %p60
    %p63 = scmp.ne.s32.totalorder %s48, %s62
    %p64 = scmp.eq.s32.totalorder %s17, 0
    %p65 = por %p63, %p64
    %s67 = sadd.s32 %s66, 1
    %p70 = scmp.eq.s32.totalorder %s11, 1
    %p71 = scmp.ne.s32.totalorder %s66, %s68
    %p72 = scmp.eq.s32.totalorder %s11, 0
    %p73 = por %p71, %p72
    %p74 = scmp.ne.s32.totalorder %s66, %s68
    %p75 = scmp.eq.s32.totalorder %s16, 1
    %p76 = por %p74, %p75
    %p77 = scmp.ne.s32.totalorder %s68, %s69
    %p78 = scmp.eq.s32.totalorder %s16, 0
    %p79 = por %p77, %p78
    %p80 = scmp.ne.s32.totalorder %s68, %s69
    %p81 = scmp.eq.s32.totalorder %s17, 1
    %p82 = por %p80, %p81
    %p84 = scmp.ne.s32.totalorder %s69, %s83
    %p85 = scmp.eq.s32.totalorder %s17, 0
    %p86 = por %p84, %p85
    %s88 = sadd.s32 %s87, 1
    %p91 = scmp.eq.s32.totalorder %s11, 1
    %p92 = scmp.ne.s32.totalorder %s87, %s89
    %p93 = scmp.eq.s32.totalorder %s11, 0
    %p94 = por %p92, %p93
    %p95 = scmp.ne.s32.totalorder %s87, %s89
    %p96 = scmp.eq.s32.totalorder %s16, 1
    %p97 = por %p95, %p96
    %p98 = scmp.ne.s32.totalorder %s89, %s90
    %p99 = scmp.eq.s32.totalorder %s16, 0
    %p100 = por %p98, %p99
    %p101 = scmp.ne.s32.totalorder %s89, %s90
    %p102 = scmp.eq.s32.totalorder %s17, 1
    %p103 = por %p101, %p102
    %p105 = scmp.ne.s32.totalorder %s90, %s104
    %p106 = scmp.eq.s32.totalorder %s17, 0
    %p107 = por %p105, %p106
    %s109 = sadd.s32 %s108, 1
    %p112 = scmp.eq.s32.totalorder %s11, 1
    %p113 = scmp.ne.s32.totalorder %s108, %s110
    %p114 = scmp.eq.s32.totalorder %s11, 0
    %p115 = por %p113, %p114
    %p116 = scmp.ne.s32.totalorder %s108, %s110
    %p117 = scmp.eq.s32.totalorder %s16, 1
    %p118 = por %p116, %p117
    %p119 = scmp.ne.s32.totalorder %s110, %s111
    %p120 = scmp.eq.s32.totalorder %s16, 0
    %p121 = por %p119, %p120
    %p122 = scmp.ne.s32.totalorder %s110, %s111
    %p123 = scmp.eq.s32.totalorder %s17, 1
    %p124 = por %p122, %p123
    %p126 = scmp.ne.s32.totalorder %s111, %s125
    %p127 = scmp.eq.s32.totalorder %s17, 0
    %p128 = por %p126, %p127
    %s129 = ssub.s32 %s11, %s18
    %p130 = scmp.eq.s32.totalorder %s129, 0
    %s132 = sadd.s32 %s131, 1
    %s133 = scalar_select %p130, %s131, %s132
    %p136 = pneg %p130
    %p137 = scmp.eq.s32.totalorder %s11, 1
    %p138 = por %p136, %p137
    %p139 = scmp.ne.s32.totalorder %s131, %s134
    %p140 = scmp.eq.s32.totalorder %s11, 0
    %p141 = por %p139, %p140
    %p142 = scmp.ne.s32.totalorder %s131, %s134
    %p143 = scmp.eq.s32.totalorder %s16, 1
    %p144 = por %p142, %p143
    %p145 = scmp.ne.s32.totalorder %s134, %s135
    %p146 = scmp.eq.s32.totalorder %s16, 0
    %p147 = por %p145, %p146
    %p148 = scmp.ne.s32.totalorder %s134, %s135
    %p149 = scmp.eq.s32.totalorder %s17, 1
    %p150 = por %p148, %p149
    %p152 = scmp.ne.s32.totalorder %s135, %s151
    %p153 = scmp.eq.s32.totalorder %s17, 0
    %p154 = por %p152, %p153
    %p155 = scmp.le.s32.totalorder 1, %s11
    %p156 = scmp.lt.s32.totalorder %s11, 3
    %p157 = pnand %p155, %p156
    %p158 = pneg %p157
    // Predicated region
    $region9: #{entryflow_forward.21} parent=5 // pred_check
      _
    $region10: #{entryflow_forward.21} parent=5 // pred_check_branch
      %160 = sbr.rel (%p157) target = $region12
    $region11: #{entryflow_forward.21} parent=5 // pred_region
      %s161 = ssub.s32 %s11, 1
      // Predicated region
      $region13: #{entryflow_forward.21} parent=11 // pred_check
        %p162 = pneg %p58
      $region14: #{entryflow_forward.21} parent=11 // pred_check_branch
        %164 = sbr.rel (%p162) target = $region16
      $region15: #{entryflow_forward.21} parent=11 // pred_region
        _
      $region16: #{entryflow_forward.21} parent=11 // pred_fallthru
        _
      // Predicated region
      $region17: #{entryflow_forward.21} parent=11 // pred_check
        %p165 = pneg %p79
      $region18: #{entryflow_forward.21} parent=11 // pred_check_branch
        %167 = sbr.rel (%p165) target = $region20
      $region19: #{entryflow_forward.21} parent=11 // pred_region
        _
      $region20: #{entryflow_forward.21} parent=11 // pred_fallthru
        _
      // Predicated region
      $region21: #{entryflow_forward.21} parent=11 // pred_check
        %p168 = pneg %p100
      $region22: #{entryflow_forward.21} parent=11 // pred_check_branch
        %170 = sbr.rel (%p168) target = $region24
      $region23: #{entryflow_forward.21} parent=11 // pred_region
        _
      $region24: #{entryflow_forward.21} parent=11 // pred_fallthru
        _
      // Predicated region
      $region25: #{entryflow_forward.21} parent=11 // pred_check
        %p171 = pneg %p121
      $region26: #{entryflow_forward.21} parent=11 // pred_check_branch
        %173 = sbr.rel (%p171) target = $region28
      $region27: #{entryflow_forward.21} parent=11 // pred_region
        _
      $region28: #{entryflow_forward.21} parent=11 // pred_fallthru
        _
    $region12: #{entryflow_forward.21} parent=5 // pred_fallthru
      _
    %p174 = scmp.lt.s32.totalorder %s11, 2
    // Predicated region
    $region29: #{entryflow_forward.21} parent=5 // pred_check
      %p175 = pneg %p174
    $region30: #{entryflow_forward.21} parent=5 // pred_check_branch
      %177 = sbr.rel (%p175) target = $region32
    $region31: #{entryflow_forward.21} parent=5 // pred_region
      // Predicated region
      $region33: #{entryflow_forward.21} parent=31 // pred_check
        %p178 = pneg %p31
      $region34: #{entryflow_forward.21} parent=31 // pred_check_branch
        %180 = sbr.rel (%p178) target = $region36
      $region35: #{entryflow_forward.21} parent=31 // pred_region
        %p181 = scmp.lt.s32.totalorder %s11, 1
        %s182 = scalar_select %p181, %s11, 1
        %s183 = smul.addr %s182, 6
        %s184 = smul.addr %s183, 4
        %s185 = scalar_lea.vmem %s0, %s184
      $region36: #{entryflow_forward.21} parent=31 // pred_fallthru
        _
    $region32: #{entryflow_forward.21} parent=5 // pred_fallthru
      _
    %p186 = scmp.le.s32.totalorder 1, %s11
    %p187 = scmp.lt.s32.totalorder %s11, 3
    %p188 = pnand %p186, %p187
    %p189 = pneg %p188
    // Predicated region
    $region37: #{entryflow_forward.21} parent=5 // pred_check
      _
    $region38: #{entryflow_forward.21} parent=5 // pred_check_branch
      %191 = sbr.rel (%p188) target = $region40
    $region39: #{entryflow_forward.21} parent=5 // pred_region
      %s192 = ssub.s32 %s11, 1
      %p193 = scmp.lt.s32.totalorder %s16, 1
      %s194 = scalar_select %p193, %s16, 1
      %s195 = smul.addr %s194, 6
      %s196 = smul.addr %s195, 4
      %s197 = scalar_lea.vmem %s0, %s196
      %p198 = pneg %p37
      %p199 = pneg %p34
      %p200 = pneg %p58
      %p201 = pneg %p55
      %p202 = pneg %p79
      %p203 = pneg %p76
      %p204 = pneg %p100
      %p205 = pneg %p97
      %p206 = pneg %p121
      %p207 = pneg %p118
      %p208 = pneg %p147
      %p209 = pneg %p144
      %p210 = scmp.lt.s32.totalorder %s16, 1
      %s211 = scalar_select %p210, %s16, 1
      %s212 = smul.addr %s211, 4
      %s213 = smul.addr %s212, 2
      %s214 = scalar_lea.vmem %s5, %s213
      %p215 = scmp.lt.s32.totalorder %s16, 1
      %s216 = scalar_select %p215, %s16, 1
      %s217 = smul.addr %s216, 6
      %s218 = smul.addr %s217, 4
      %s219 = scalar_lea.vmem %s0, %s218
      %p220 = scmp.lt.s32.totalorder %s16, 1
      %s221 = scalar_select %p220, %s16, 1
      %s222 = smul.addr %s221, 4
      %s223 = smul.addr %s222, 2
      %s224 = scalar_lea.vmem %s5, %s223
      %v226 = vld [vmem:[%s219] sm:$0x7]
      %v227 = vld [vmem:[%s219 + $0x4] sm:$0x7]
      %v228 = vld [vmem:[%s219 + $0x8] sm:$0x7]
      %v229 = vld [vmem:[%s219 + $0xc] sm:$0x7]
      %v230 = vld [vmem:[%s219 + $0x10] sm:$0x7]
      %v231 = vld [vmem:[%s219 + $0x14] sm:$0x7]
      %v232 = vld [vmem:[%s1] sm:$0xff]
      %v233 = vld [vmem:[%s1 + $0x8] sm:$0x1]
      %v234 = vunpack.c.l.bf16 %v226
      %v235 = vunpack.c.l.bf16 %v227
      %v236 = vunpack.c.l.bf16 %v228
      %v237 = vunpack.c.l.bf16 %v229
      %v238 = vperm.slane %v232, 0
      %v239 = vmul.f32 %v234, %v238
      %v240 = vmul.f32 %v235, %v238
      %v241 = vmul.f32 %v236, %v238
      %v242 = vmul.f32 %v237, %v238
      %v243 = vadd.f32 %v239, 0.0
      %v244 = vadd.f32 %v240, 0.0
      %v245 = vadd.f32 %v241, 0.0
      %v246 = vadd.f32 %v242, 0.0
      %v247 = vperm.slane %v232, 1
      %v248 = vmul.f32 %v234, %v247
      %v249 = vmul.f32 %v235, %v247
      %v250 = vmul.f32 %v236, %v247
      %v251 = vmul.f32 %v237, %v247
      %v256 = vrot.slane %v248, 1
      %v257 = vrot.slane %v249, 1
      %v258 = vrot.slane %v250, 1
      %v259 = vrot.slane %v251, 1
      %v264 = vadd.f32 %v243, %v256
      %v265 = vadd.f32 %v244, %v257
      %v266 = vadd.f32 %v245, %v258
      %v267 = vadd.f32 %v246, %v259
      %v268 = vperm.slane %v232, 2
      %v269 = vmul.f32 %v234, %v268
      %v270 = vmul.f32 %v235, %v268
      %v271 = vmul.f32 %v236, %v268
      %v272 = vmul.f32 %v237, %v268
      %v277 = vrot.slane %v269, 2
      %v278 = vrot.slane %v270, 2
      %v279 = vrot.slane %v271, 2
      %v280 = vrot.slane %v272, 2
      %v285 = vadd.f32 %v264, %v277
      %v286 = vadd.f32 %v265, %v278
      %v287 = vadd.f32 %v266, %v279
      %v288 = vadd.f32 %v267, %v280
      %v289 = vunpack.c.l.bf16 %v230
      %v290 = vperm.slane %v232, 3
      %v291 = vmul.f32 %v235, %v290
      %v292 = vmul.f32 %v236, %v290
      %v293 = vmul.f32 %v237, %v290
      %v294 = vmul.f32 %v289, %v290
      %v295 = vadd.f32 %v285, %v291
      %v296 = vadd.f32 %v286, %v292
      %v297 = vadd.f32 %v287, %v293
      %v298 = vadd.f32 %v288, %v294
      %v299 = vperm.slane %v232, 4
      %v300 = vmul.f32 %v235, %v299
      %v301 = vmul.f32 %v236, %v299
      %v302 = vmul.f32 %v237, %v299
      %v303 = vmul.f32 %v289, %v299
      %v308 = vrot.slane %v300, 1
      %v309 = vrot.slane %v301, 1
      %v310 = vrot.slane %v302, 1
      %v311 = vrot.slane %v303, 1
      %v316 = vadd.f32 %v295, %v308
      %v317 = vadd.f32 %v296, %v309
      %v318 = vadd.f32 %v297, %v310
      %v319 = vadd.f32 %v298, %v311
      %v320 = vperm.slane %v232, 5
      %v321 = vmul.f32 %v235, %v320
      %v322 = vmul.f32 %v236, %v320
      %v323 = vmul.f32 %v237, %v320
      %v324 = vmul.f32 %v289, %v320
      %v329 = vrot.slane %v321, 2
      %v330 = vrot.slane %v322, 2
      %v331 = vrot.slane %v323, 2
      %v332 = vrot.slane %v324, 2
      %v337 = vadd.f32 %v316, %v329
      %v338 = vadd.f32 %v317, %v330
      %v339 = vadd.f32 %v318, %v331
      %v340 = vadd.f32 %v319, %v332
      %v341 = vunpack.c.l.bf16 %v231
      %v342 = vperm.slane %v232, 6
      %v343 = vmul.f32 %v236, %v342
      %v344 = vmul.f32 %v237, %v342
      %v345 = vmul.f32 %v289, %v342
      %v346 = vmul.f32 %v341, %v342
      %v347 = vadd.f32 %v337, %v343
      %v348 = vadd.f32 %v338, %v344
      %v349 = vadd.f32 %v339, %v345
      %v350 = vadd.f32 %v340, %v346
      %v351 = vperm.slane %v232, 7
      %v352 = vmul.f32 %v236, %v351
      %v353 = vmul.f32 %v237, %v351
      %v354 = vmul.f32 %v289, %v351
      %v355 = vmul.f32 %v341, %v351
      %v360 = vrot.slane %v352, 1
      %v361 = vrot.slane %v353, 1
      %v362 = vrot.slane %v354, 1
      %v363 = vrot.slane %v355, 1
      %v368 = vadd.f32 %v347, %v360
      %v369 = vadd.f32 %v348, %v361
      %v370 = vadd.f32 %v349, %v362
      %v371 = vadd.f32 %v350, %v363
      %v372 = vperm.slane %v233, 0
      %v373 = vmul.f32 %v236, %v372
      %v374 = vmul.f32 %v237, %v372
      %v375 = vmul.f32 %v289, %v372
      %v376 = vmul.f32 %v341, %v372
      %v381 = vrot.slane %v373, 2
      %v382 = vrot.slane %v374, 2
      %v383 = vrot.slane %v375, 2
      %v384 = vrot.slane %v376, 2
      %v389 = vadd.f32 %v368, %v381
      %v390 = vadd.f32 %v369, %v382
      %v391 = vadd.f32 %v370, %v383
      %v392 = vadd.f32 %v371, %v384
      %v393 = vld [vmem:[%s2] sm:$0x1]
      %v395 = vperm.slane %v393, 0
      %v397 = vadd.f32 %v389, %v395
      %v398 = vadd.f32 %v390, %v395
      %v399 = vadd.f32 %v391, %v395
      %v400 = vadd.f32 %v392, %v395
      %405 = vst [vmem:[#allocation1] ss:$2 sm:$0xff] %v397
      %s406 = scalar_lea.vmem [#allocation1], 1
      %407 = vst [vmem:[%s406] ss:$2 sm:$0xff] %v398
      %s408 = scalar_lea.vmem [#allocation1], 16
      %409 = vst [vmem:[%s408] ss:$2 sm:$0xff] %v399
      %s410 = scalar_lea.vmem [#allocation1], 17
      %411 = vst [vmem:[%s410] ss:$2 sm:$0xff] %v400
      %v412 = vld.sshfl [vmem:[#allocation1] sm:$0xff pattern:$0x75316420]
      %v413 = vld.sshfl [vmem:[#allocation1 + $0x10] sm:$0xff pattern:$0x75316420]
      %v416 = vpack.c.bf16 %v413, %v412
      %v417 = vld [vmem:[%s3] sm:$0xf]
      %v418 = vld [vmem:[%s3 + $0x4] sm:$0xf]
      %v419 = vld [vmem:[%s3 + $0x8] sm:$0xf]
      %v420 = vld [vmem:[%s3 + $0xc] sm:$0xf]
      %v421 = vld [vmem:[%s4] sm:$0x1]
      %v423 = vperm.slane %v421, 0
      %v429 = vunpack.c.l.b16 %v417
      %v430 = vunpack.c.l.b16 %v418
      %v431 = vunpack.c.l.b16 %v419
      %v432 = vunpack.c.l.b16 %v420
      %v433 = vpack.c.b16 %v430, %v429
      %v434 = vpack.c.b16 %v432, %v431
      %vm437 = vcmask 261120
      %v439 = vsel %vm437, %v416, 0
      %441 = vmatpush.bf16.msra.mxu0 0
      %442 = vmatpush.bf16.msra.mxu0 0
      %443 = vmatpush.bf16.msra.mxu0 0
      %444 = vmatpush.bf16.msra.mxu0 0
      %445 = vmatpush.bf16.msra.mxu0 0
      %446 = vmatpush.bf16.msra.mxu0 0
      %447 = vmatpush.bf16.msra.mxu0 %v434
      %448 = vmatpush.bf16.msra.mxu0 %v433
      %449 = vmatmul.bf16.gmra.mxu0 %v439
      %v450 = vpop.f32.mrf.mxu0
      %v451 = vadd.f32 %v423, %v450
      %v452 = vpop.f32.mrf.mxu0
      %v453 = vadd.f32 %v423, %v452
      %454 = vdwg.mxu0
      %v455 = vmax.f32 %v451, 0.0
      %v456 = vmax.f32 %v453, 0.0
      %v459 = vrot.slane %v455, 4
      %v460 = vrot.slane %v456, 4
      %v463 = vpack.c.bf16 %v455, %v455
      %v464 = vpack.c.bf16 %v459, %v459
      %v465 = vpack.c.bf16 %v456, %v456
      %v466 = vpack.c.bf16 %v460, %v460
      %467 = vst [vmem:[%s224] sm:$0x3] %v463
      %468 = vst [vmem:[%s224 + $0x2] sm:$0x3] %v464
      %469 = vst [vmem:[%s224 + $0x4] sm:$0x3] %v465
      %470 = vst [vmem:[%s224 + $0x6] sm:$0x3] %v466
      %p471 = scmp.lt.s32.totalorder %s16, 1
      %s472 = scalar_select %p471, %s16, 1
      %s473 = smul.addr %s472, 4
      %s474 = smul.addr %s473, 2
      %s475 = scalar_lea.vmem %s5, %s474
      // Predicated region
      $region41: #{entryflow_forward.21} parent=39 // pred_check
        %p476 = pneg %p144
      $region42: #{entryflow_forward.21} parent=39 // pred_check_branch
        %478 = sbr.rel (%p476) target = $region44
      $region43: #{entryflow_forward.21} parent=39 // pred_region
        _
      $region44: #{entryflow_forward.21} parent=39 // pred_fallthru
        _
    $region40: #{entryflow_forward.21} parent=5 // pred_fallthru
      _
    %p479 = scmp.le.s32.totalorder 2, %s11
    // Predicated region
    $region45: #{entryflow_forward.21} parent=5 // pred_check
      %p480 = pneg %p479
    $region46: #{entryflow_forward.21} parent=5 // pred_check_branch
      %482 = sbr.rel (%p480) target = $region48
    $region47: #{entryflow_forward.21} parent=5 // pred_region
      %s483 = ssub.s32 %s11, 2
      // Predicated region
      $region49: #{entryflow_forward.21} parent=47 // pred_check
        %p484 = pneg %p150
      $region50: #{entryflow_forward.21} parent=47 // pred_check_branch
        %486 = sbr.rel (%p484) target = $region52
      $region51: #{entryflow_forward.21} parent=47 // pred_region
        %p487 = scmp.lt.s32.totalorder %s17, 1
        %s488 = scalar_select %p487, %s17, 1
        %s489 = smul.addr %s488, 4
        %s490 = smul.addr %s489, 2
        %s491 = scalar_lea.vmem %s5, %s490
      $region52: #{entryflow_forward.21} parent=47 // pred_fallthru
        _
    $region48: #{entryflow_forward.21} parent=5 // pred_fallthru
      _
  $region6: #{entryflow_forward.21} parent=0 // loop_footer
    %s15 = sadd.s32 1, %s11
  $region7: #{entryflow_forward.21} parent=0 // loop_footer_branch
    %10 = sbr.rel target = $region3
  $region8: #{entryflow_forward.21} parent=0 // loop_exit
    _

// kernel: entryflow_forward.22
$region0: #{entryflow_forward.22}
  #allocation0 [shape = 'u32[]', space=smem, size = 0x4, offset = 0x4, fixed_abs, tag = 'smem constant byte address 0x4 - core index']
  #allocation1 [shape = 'u32[72,128]{1,0:T(1,128)}', space=vmem, size = 0x9000, scoped, tag = 'internal scratch']
  %s0 = inlined_call_operand.vmem [shape: bf16[8,16], index: 0, kind: input, shape index: {}]
  %s1 = inlined_call_operand.vmem [shape: bf16[16,128], index: 1, kind: input, shape index: {}]
  %s2 = inlined_call_operand.vmem [shape: f32[1,128], index: 2, kind: input, shape index: {}]
  %s3 = inlined_call_operand.vmem [shape: bf16[8,128], index: 3, kind: output, shape index: {}]
  %s4 = sld [smem:[#allocation0]]
  $region22: #{entryflow_forward.22} parent=0
    _
  %s6 = ssub.s32 1, %s4
  %s7 = scalar_select 0, %s6, %s4
  // Predicated region
  $region2: #{entryflow_forward.22} parent=0 // pred_check
    _
  $region3: #{entryflow_forward.22} parent=0 // pred_check_branch
    %9 = sbr.rel (0) target = $region5
  $region4: #{entryflow_forward.22} parent=0 // pred_region
    _
  $region5: #{entryflow_forward.22} parent=0 // pred_fallthru
    _
  // Predicated region
  $region6: #{entryflow_forward.22} parent=0 // pred_check
    _
  $region7: #{entryflow_forward.22} parent=0 // pred_check_branch
    %11 = sbr.rel (0) target = $region9
  $region8: #{entryflow_forward.22} parent=0 // pred_region
    _
  $region9: #{entryflow_forward.22} parent=0 // pred_fallthru
    _
  // Predicated region
  $region10: #{entryflow_forward.22} parent=0 // pred_check
    _
  $region11: #{entryflow_forward.22} parent=0 // pred_check_branch
    %13 = sbr.rel (0) target = $region13
  $region12: #{entryflow_forward.22} parent=0 // pred_region
    _
  $region13: #{entryflow_forward.22} parent=0 // pred_fallthru
    _
  %v15 = vld [vmem:[%s0] sm:$0xf]
  %v16 = vld [vmem:[%s1] sm:$0xf]
  %v17 = vld [vmem:[%s1 + $0x4] sm:$0xf]
  %v18 = vld [vmem:[%s2] sm:$0x1]
  %v20 = vperm.slane %v18, 0
  %v24 = vunpack.c.l.b16 %v16
  %v25 = vunpack.c.l.b16 %v17
  %v26 = vpack.c.b16 %v25, %v24
  %vm28 = vcmask 130048
  %v30 = vsel %vm28, %v15, 0
  %32 = vmatpush.bf16.msra.mxu0 0
  %33 = vmatpush.bf16.msra.mxu0 0
  %34 = vmatpush.bf16.msra.mxu0 0
  %35 = vmatpush.bf16.msra.mxu0 0
  %36 = vmatpush.bf16.msra.mxu0 0
  %37 = vmatpush.bf16.msra.mxu0 0
  %38 = vmatpush.bf16.msra.mxu0 0
  %39 = vmatpush.bf16.msra.mxu0 %v26
  %40 = vmatmul.bf16.gmra.mxu0 %v30
  %v41 = vpop.f32.mrf.mxu0
  %v42 = vadd.f32 %v20, %v41
  %v43 = vpop.f32.mrf.mxu0
  %44 = vdwg.mxu0
  %v45 = vpack.c.bf16 %v42, %v42
  %46 = vst [vmem:[%s3] sm:$0xf] %v45
  // Predicated region
  $region14: #{entryflow_forward.22} parent=0 // pred_check
    _
  $region15: #{entryflow_forward.22} parent=0 // pred_check_branch
    %48 = sbr.rel (0) target = $region17
  $region16: #{entryflow_forward.22} parent=0 // pred_region
    _
  $region17: #{entryflow_forward.22} parent=0 // pred_fallthru
    _
  // Predicated region
  $region18: #{entryflow_forward.22} parent=0 // pred_check
    _
  $region19: #{entryflow_forward.22} parent=0 // pred_check_branch
    %50 = sbr.rel (0) target = $region21
  $region20: #{entryflow_forward.22} parent=0 // pred_region
    _
  $region21: #{entryflow_forward.22} parent=0 // pred_fallthru
    _

// kernel: entryflow_forward.23
$region0: #{entryflow_forward.23}
  #allocation0 [shape = 'u32[]', space=smem, size = 0x4, offset = 0x4, fixed_abs, tag = 'smem constant byte address 0x4 - core index']
  #allocation1 [shape = 'u32[72,128]{1,0:T(1,128)}', space=vmem, size = 0x9000, scoped, tag = 'internal scratch']
  %s0 = inlined_call_operand.vmem [shape: bf16[2,3,3,32], index: 0, kind: input, shape index: {}]
  %s1 = inlined_call_operand.vmem [shape: bf16[2,3,3,32], index: 1, kind: input, shape index: {}]
  %s2 = inlined_call_operand.vmem [shape: bf16[2,3,3,32], index: 2, kind: input, shape index: {}]
  %s3 = inlined_call_operand.vmem [shape: bf16[2,3,3,32], index: 3, kind: input, shape index: {}]
  %s4 = inlined_call_operand.vmem [shape: bf16[2,2,2,32], index: 4, kind: input, shape index: {}]
  %s5 = inlined_call_operand.vmem [shape: bf16[2,2,2,32], index: 5, kind: output, shape index: {}]
  %s6 = sld [smem:[#allocation0]]
  $region53: #{entryflow_forward.23} parent=0
    _
  %s8 = ssub.s32 1, %s6
  %s9 = scalar_select 0, %s8, %s6
  loop: start=0, step=1, limit=4
  $region2: #{entryflow_forward.23} parent=0 // loop_pre_header
    _
  $region3: #{entryflow_forward.23} parent=0 // loop_header
    %s11 = sphi 0, %s15
    %p12 = scmp.ge.s32.totalorder %s11, 4
    %s21 = sphi 0, %s23
    %s24 = sphi 0, %s21
    %s25 = sphi 0, %s24
    %s41 = sphi 0, %s25
    %s47 = sphi 0, %s49
    %s50 = sphi 0, %s47
    %s51 = sphi 0, %s50
    %s67 = sphi 0, %s51
    %s73 = sphi 0, %s75
    %s76 = sphi 0, %s73
    %s77 = sphi 0, %s76
    %s93 = sphi 0, %s77
    %s99 = sphi 0, %s101
    %s102 = sphi 0, %s99
    %s103 = sphi 0, %s102
    %s119 = sphi 0, %s103
    %s125 = sphi 0, %s127
    %s128 = sphi 0, %s125
    %s129 = sphi 0, %s128
    %s145 = sphi 0, %s129
    %s151 = sphi 0, %s153
    %s154 = sphi 0, %s151
    %s155 = sphi 0, %s154
    %s171 = sphi 0, %s155
  $region4: #{entryflow_forward.23} parent=0 // loop_header_branch
    %14 = sbr.rel (%p12) target = $region8
  $region5: #{entryflow_forward.23} parent=0 // loop_body
    %s16 = ssub.s32 %s11, 1
    %s17 = ssub.s32 %s11, 2
    %s18 = sadd.s32 %s11, 1
    %s19 = ssub.s32 %s11, %s18
    %p20 = scmp.eq.s32.totalorder %s19, 0
    %s22 = sadd.s32 %s21, 1
    %s23 = scalar_select %p20, %s21, %s22
    %p26 = pneg %p20
    %p27 = scmp.eq.s32.totalorder %s11, 1
    %p28 = por %p26, %p27
    %p29 = scmp.ne.s32.totalorder %s21, %s24
    %p30 = scmp.eq.s32.totalorder %s11, 0
    %p31 = por %p29, %p30
    %p32 = scmp.ne.s32.totalorder %s21, %s24
    %p33 = scmp.eq.s32.totalorder %s16, 1
    %p34 = por %p32, %p33
    %p35 = scmp.ne.s32.totalorder %s24, %s25
    %p36 = scmp.eq.s32.totalorder %s16, 0
    %p37 = por %p35, %p36
    %p38 = scmp.ne.s32.totalorder %s24, %s25
    %p39 = scmp.eq.s32.totalorder %s17, 1
    %p40 = por %p38, %p39
    %p42 = scmp.ne.s32.totalorder %s25, %s41
    %p43 = scmp.eq.s32.totalorder %s17, 0
    %p44 = por %p42, %p43
    %s45 = ssub.s32 %s11, %s18
    %p46 = scmp.eq.s32.totalorder %s45, 0
    %s48 = sadd.s32 %s47, 1
    %s49 = scalar_select %p46, %s47, %s48
    %p52 = pneg %p46
    %p53 = scmp.eq.s32.totalorder %s11, 1
    %p54 = por %p52, %p53
    %p55 = scmp.ne.s32.totalorder %s47, %s50
    %p56 = scmp.eq.s32.totalorder %s11, 0
    %p57 = por %p55, %p56
    %p58 = scmp.ne.s32.totalorder %s47, %s50
    %p59 = scmp.eq.s32.totalorder %s16, 1
    %p60 = por %p58, %p59
    %p61 = scmp.ne.s32.totalorder %s50, %s51
    %p62 = scmp.eq.s32.totalorder %s16, 0
    %p63 = por %p61, %p62
    %p64 = scmp.ne.s32.totalorder %s50, %s51
    %p65 = scmp.eq.s32.totalorder %s17, 1
    %p66 = por %p64, %p65
    %p68 = scmp.ne.s32.totalorder %s51, %s67
    %p69 = scmp.eq.s32.totalorder %s17, 0
    %p70 = por %p68, %p69
    %s71 = ssub.s32 %s11, %s18
    %p72 = scmp.eq.s32.totalorder %s71, 0
    %s74 = sadd.s32 %s73, 1
    %s75 = scalar_select %p72, %s73, %s74
    %p78 = pneg %p72
    %p79 = scmp.eq.s32.totalorder %s11, 1
    %p80 = por %p78, %p79
    %p81 = scmp.ne.s32.totalorder %s73, %s76
    %p82 = scmp.eq.s32.totalorder %s11, 0
    %p83 = por %p81, %p82
    %p84 = scmp.ne.s32.totalorder %s73, %s76
    %p85 = scmp.eq.s32.totalorder %s16, 1
    %p86 = por %p84, %p85
    %p87 = scmp.ne.s32.totalorder %s76, %s77
    %p88 = scmp.eq.s32.totalorder %s16, 0
    %p89 = por %p87, %p88
    %p90 = scmp.ne.s32.totalorder %s76, %s77
    %p91 = scmp.eq.s32.totalorder %s17, 1
    %p92 = por %p90, %p91
    %p94 = scmp.ne.s32.totalorder %s77, %s93
    %p95 = scmp.eq.s32.totalorder %s17, 0
    %p96 = por %p94, %p95
    %s97 = ssub.s32 %s11, %s18
    %p98 = scmp.eq.s32.totalorder %s97, 0
    %s100 = sadd.s32 %s99, 1
    %s101 = scalar_select %p98, %s99, %s100
    %p104 = pneg %p98
    %p105 = scmp.eq.s32.totalorder %s11, 1
    %p106 = por %p104, %p105
    %p107 = scmp.ne.s32.totalorder %s99, %s102
    %p108 = scmp.eq.s32.totalorder %s11, 0
    %p109 = por %p107, %p108
    %p110 = scmp.ne.s32.totalorder %s99, %s102
    %p111 = scmp.eq.s32.totalorder %s16, 1
    %p112 = por %p110, %p111
    %p113 = scmp.ne.s32.totalorder %s102, %s103
    %p114 = scmp.eq.s32.totalorder %s16, 0
    %p115 = por %p113, %p114
    %p116 = scmp.ne.s32.totalorder %s102, %s103
    %p117 = scmp.eq.s32.totalorder %s17, 1
    %p118 = por %p116, %p117
    %p120 = scmp.ne.s32.totalorder %s103, %s119
    %p121 = scmp.eq.s32.totalorder %s17, 0
    %p122 = por %p120, %p121
    %s123 = ssub.s32 %s11, %s18
    %p124 = scmp.eq.s32.totalorder %s123, 0
    %s126 = sadd.s32 %s125, 1
    %s127 = scalar_select %p124, %s125, %s126
    %p130 = pneg %p124
    %p131 = scmp.eq.s32.totalorder %s11, 1
    %p132 = por %p130, %p131
    %p133 = scmp.ne.s32.totalorder %s125, %s128
    %p134 = scmp.eq.s32.totalorder %s11, 0
    %p135 = por %p133, %p134
    %p136 = scmp.ne.s32.totalorder %s125, %s128
    %p137 = scmp.eq.s32.totalorder %s16, 1
    %p138 = por %p136, %p137
    %p139 = scmp.ne.s32.totalorder %s128, %s129
    %p140 = scmp.eq.s32.totalorder %s16, 0
    %p141 = por %p139, %p140
    %p142 = scmp.ne.s32.totalorder %s128, %s129
    %p143 = scmp.eq.s32.totalorder %s17, 1
    %p144 = por %p142, %p143
    %p146 = scmp.ne.s32.totalorder %s129, %s145
    %p147 = scmp.eq.s32.totalorder %s17, 0
    %p148 = por %p146, %p147
    %s149 = ssub.s32 %s11, %s18
    %p150 = scmp.eq.s32.totalorder %s149, 0
    %s152 = sadd.s32 %s151, 1
    %s153 = scalar_select %p150, %s151, %s152
    %p156 = pneg %p150
    %p157 = scmp.eq.s32.totalorder %s11, 1
    %p158 = por %p156, %p157
    %p159 = scmp.ne.s32.totalorder %s151, %s154
    %p160 = scmp.eq.s32.totalorder %s11, 0
    %p161 = por %p159, %p160
    %p162 = scmp.ne.s32.totalorder %s151, %s154
    %p163 = scmp.eq.s32.totalorder %s16, 1
    %p164 = por %p162, %p163
    %p165 = scmp.ne.s32.totalorder %s154, %s155
    %p166 = scmp.eq.s32.totalorder %s16, 0
    %p167 = por %p165, %p166
    %p168 = scmp.ne.s32.totalorder %s154, %s155
    %p169 = scmp.eq.s32.totalorder %s17, 1
    %p170 = por %p168, %p169
    %p172 = scmp.ne.s32.totalorder %s155, %s171
    %p173 = scmp.eq.s32.totalorder %s17, 0
    %p174 = por %p172, %p173
    %p175 = scmp.le.s32.totalorder 1, %s11
    %p176 = scmp.lt.s32.totalorder %s11, 3
    %p177 = pnand %p175, %p176
    %p178 = pneg %p177
    // Predicated region
    $region9: #{entryflow_forward.23} parent=5 // pred_check
      _
    $region10: #{entryflow_forward.23} parent=5 // pred_check_branch
      %180 = sbr.rel (%p177) target = $region12
    $region11: #{entryflow_forward.23} parent=5 // pred_region
      %s181 = ssub.s32 %s11, 1
    $region12: #{entryflow_forward.23} parent=5 // pred_fallthru
      _
    %p182 = scmp.lt.s32.totalorder %s11, 2
    // Predicated region
    $region13: #{entryflow_forward.23} parent=5 // pred_check
      %p183 = pneg %p182
    $region14: #{entryflow_forward.23} parent=5 // pred_check_branch
      %185 = sbr.rel (%p183) target = $region16
    $region15: #{entryflow_forward.23} parent=5 // pred_region
      // Predicated region
      $region17: #{entryflow_forward.23} parent=15 // pred_check
        %p186 = pneg %p31
      $region18: #{entryflow_forward.23} parent=15 // pred_check_branch
        %188 = sbr.rel (%p186) target = $region20
      $region19: #{entryflow_forward.23} parent=15 // pred_region
        %p189 = scmp.lt.s32.totalorder %s11, 1
        %s190 = scalar_select %p189, %s11, 1
        %s191 = smul.addr %s190, 3
        %s192 = smul.addr %s191, 2
        %s193 = scalar_lea.vmem %s0, %s192
      $region20: #{entryflow_forward.23} parent=15 // pred_fallthru
        _
      // Predicated region
      $region21: #{entryflow_forward.23} parent=15 // pred_check
        %p194 = pneg %p57
      $region22: #{entryflow_forward.23} parent=15 // pred_check_branch
        %196 = sbr.rel (%p194) target = $region24
      $region23: #{entryflow_forward.23} parent=15 // pred_region
        %p197 = scmp.lt.s32.totalorder %s11, 1
        %s198 = scalar_select %p197, %s11, 1
        %s199 = smul.addr %s198, 3
        %s200 = smul.addr %s199, 2
        %s201 = scalar_lea.vmem %s1, %s200
      $region24: #{entryflow_forward.23} parent=15 // pred_fallthru
        _
      // Predicated region
      $region25: #{entryflow_forward.23} parent=15 // pred_check
        %p202 = pneg %p83
      $region26: #{entryflow_forward.23} parent=15 // pred_check_branch
        %204 = sbr.rel (%p202) target = $region28
      $region27: #{entryflow_forward.23} parent=15 // pred_region
        %p205 = scmp.lt.s32.totalorder %s11, 1
        %s206 = scalar_select %p205, %s11, 1
        %s207 = smul.addr %s206, 3
        %s208 = smul.addr %s207, 2
        %s209 = scalar_lea.vmem %s2, %s208
      $region28: #{entryflow_forward.23} parent=15 // pred_fallthru
        _
      // Predicated region
      $region29: #{entryflow_forward.23} parent=15 // pred_check
        %p210 = pneg %p109
      $region30: #{entryflow_forward.23} parent=15 // pred_check_branch
        %212 = sbr.rel (%p210) target = $region32
      $region31: #{entryflow_forward.23} parent=15 // pred_region
        %p213 = scmp.lt.s32.totalorder %s11, 1
        %s214 = scalar_select %p213, %s11, 1
        %s215 = smul.addr %s214, 3
        %s216 = smul.addr %s215, 2
        %s217 = scalar_lea.vmem %s3, %s216
      $region32: #{entryflow_forward.23} parent=15 // pred_fallthru
        _
      // Predicated region
      $region33: #{entryflow_forward.23} parent=15 // pred_check
        %p218 = pneg %p135
      $region34: #{entryflow_forward.23} parent=15 // pred_check_branch
        %220 = sbr.rel (%p218) target = $region36
      $region35: #{entryflow_forward.23} parent=15 // pred_region
        %p221 = scmp.lt.s32.totalorder %s11, 1
        %s222 = scalar_select %p221, %s11, 1
        %s223 = smul.addr %s222, 2
        %s224 = scalar_lea.vmem %s4, %s223
      $region36: #{entryflow_forward.23} parent=15 // pred_fallthru
        _
    $region16: #{entryflow_forward.23} parent=5 // pred_fallthru
      _
    %p225 = scmp.le.s32.totalorder 1, %s11
    %p226 = scmp.lt.s32.totalorder %s11, 3
    %p227 = pnand %p225, %p226
    %p228 = pneg %p227
    // Predicated region
    $region37: #{entryflow_forward.23} parent=5 // pred_check
      _
    $region38: #{entryflow_forward.23} parent=5 // pred_check_branch
      %230 = sbr.rel (%p227) target = $region40
    $region39: #{entryflow_forward.23} parent=5 // pred_region
      %s231 = ssub.s32 %s11, 1
      %p232 = scmp.lt.s32.totalorder %s16, 1
      %s233 = scalar_select %p232, %s16, 1
      %s234 = smul.addr %s233, 3
      %s235 = smul.addr %s234, 2
      %s236 = scalar_lea.vmem %s0, %s235
      %p237 = pneg %p37
      %p238 = pneg %p34
      %p239 = scmp.lt.s32.totalorder %s16, 1
      %s240 = scalar_select %p239, %s16, 1
      %s241 = smul.addr %s240, 3
      %s242 = smul.addr %s241, 2
      %s243 = scalar_lea.vmem %s1, %s242
      %p244 = pneg %p63
      %p245 = pneg %p60
      %p246 = scmp.lt.s32.totalorder %s16, 1
      %s247 = scalar_select %p246, %s16, 1
      %s248 = smul.addr %s247, 3
      %s249 = smul.addr %s248, 2
      %s250 = scalar_lea.vmem %s2, %s249
      %p251 = pneg %p89
      %p252 = pneg %p86
      %p253 = scmp.lt.s32.totalorder %s16, 1
      %s254 = scalar_select %p253, %s16, 1
      %s255 = smul.addr %s254, 3
      %s256 = smul.addr %s255, 2
      %s257 = scalar_lea.vmem %s3, %s256
      %p258 = pneg %p115
      %p259 = pneg %p112
      %p260 = scmp.lt.s32.totalorder %s16, 1
      %s261 = scalar_select %p260, %s16, 1
      %s262 = smul.addr %s261, 2
      %s263 = scalar_lea.vmem %s4, %s262
      %p264 = pneg %p141
      %p265 = pneg %p138
      %p266 = pneg %p167
      %p267 = pneg %p164
      %p268 = scmp.lt.s32.totalorder %s16, 1
      %s269 = scalar_select %p268, %s16, 1
      %s270 = smul.addr %s269, 2
      %s271 = scalar_lea.vmem %s5, %s270
      %p272 = scmp.lt.s32.totalorder %s16, 1
      %s273 = scalar_select %p272, %s16, 1
      %s274 = smul.addr %s273, 3
      %s275 = smul.addr %s274, 2
      %s276 = scalar_lea.vmem %s0, %s275
      %p277 = scmp.lt.s32.totalorder %s16, 1
      %s278 = scalar_select %p277, %s16, 1
      %s279 = smul.addr %s278, 3
      %s280 = smul.addr %s279, 2
      %s281 = scalar_lea.vmem %s1, %s280
      %p282 = scmp.lt.s32.totalorder %s16, 1
      %s283 = scalar_select %p282, %s16, 1
      %s284 = smul.addr %s283, 3
      %s285 = smul.addr %s284, 2
      %s286 = scalar_lea.vmem %s2, %s285
      %p287 = scmp.lt.s32.totalorder %s16, 1
      %s288 = scalar_select %p287, %s16, 1
      %s289 = smul.addr %s288, 3
      %s290 = smul.addr %s289, 2
      %s291 = scalar_lea.vmem %s3, %s290
      %p292 = scmp.lt.s32.totalorder %s16, 1
      %s293 = scalar_select %p292, %s16, 1
      %s294 = smul.addr %s293, 2
      %s295 = scalar_lea.vmem %s4, %s294
      %p296 = scmp.lt.s32.totalorder %s16, 1
      %s297 = scalar_select %p296, %s16, 1
      %s298 = smul.addr %s297, 2
      %s299 = scalar_lea.vmem %s5, %s298
      %v300 = vld [vmem:[%s276] sm:$0x3]
      %v301 = vld [vmem:[%s276 + $0x2] sm:$0x3]
      %v302 = vld [vmem:[%s276 + $0x4] sm:$0x3]
      %v303 = vld [vmem:[%s281] sm:$0x3]
      %v304 = vld [vmem:[%s281 + $0x2] sm:$0x3]
      %v305 = vld [vmem:[%s281 + $0x4] sm:$0x3]
      %v306 = vld [vmem:[%s286] sm:$0x3]
      %v307 = vld [vmem:[%s286 + $0x2] sm:$0x3]
      %v308 = vld [vmem:[%s291] sm:$0x3]
      %v309 = vld [vmem:[%s291 + $0x2] sm:$0x3]
      %v310 = vunpack.c.l.bf16 %v300
      %v311 = vunpack.c.l.bf16 %v301
      %v312 = vunpack.c.l.bf16 %v303
      %v313 = vunpack.c.l.bf16 %v304
      %v314 = vmax.f32 %v310, %v312
      %v315 = vmax.f32 %v311, %v313
      %v318 = vrot.slane %v310, 5
      %v319 = vrot.slane %v318, 4
      %v320 = vrot.slane %v311, 5
      %v321 = vrot.slane %v320, 4
      %v324 = vmax.f32 %v314, %v319
      %v325 = vmax.f32 %v315, %v321
      %v326 = vunpack.c.l.bf16 %v306
      %v327 = vunpack.c.l.bf16 %v307
      %v328 = vmax.f32 %v324, %v326
      %v329 = vmax.f32 %v325, %v327
      %v330 = vunpack.c.l.bf16 %v308
      %v331 = vunpack.c.l.bf16 %v309
      %v332 = vmax.f32 %v328, %v330
      %v333 = vmax.f32 %v329, %v331
      %v336 = vrot.slane %v326, 5
      %v337 = vrot.slane %v336, 4
      %v338 = vrot.slane %v327, 5
      %v339 = vrot.slane %v338, 4
      %v342 = vmax.f32 %v332, %v337
      %v343 = vmax.f32 %v333, %v339
      %v344 = vunpack.c.l.bf16 %v302
      %v345 = vmax.f32 %v342, %v311
      %v346 = vmax.f32 %v343, %v344
      %v347 = vunpack.c.l.bf16 %v305
      %v348 = vmax.f32 %v345, %v313
      %v349 = vmax.f32 %v346, %v347
      %v351 = vrot.slane %v344, 5
      %v352 = vrot.slane %v351, 4
      %v354 = vmax.f32 %v348, %v321
      %v355 = vmax.f32 %v349, %v352
      %v356 = vld [vmem:[%s295] sm:$0x1]
      %v357 = vld [vmem:[%s295 + $0x1] sm:$0x1]
      %v358 = vunpack.c.l.bf16 %v356
      %v359 = vunpack.c.l.bf16 %v357
      %v360 = vadd.f32 %v354, %v358
      %v361 = vadd.f32 %v355, %v359
      %v362 = vpack.c.bf16 %v360, %v360
      %v363 = vpack.c.bf16 %v361, %v361
      %vm364 = vcmask 253952
      %365 = vst.msk [vmem:[%s299] sm:$0x1] %vm364, %v362
      %366 = vst.msk [vmem:[%s299 + $0x1] sm:$0x1] %vm364, %v363
      %p367 = scmp.lt.s32.totalorder %s16, 1
      %s368 = scalar_select %p367, %s16, 1
      %s369 = smul.addr %s368, 2
      %s370 = scalar_lea.vmem %s5, %s369
      // Predicated region
      $region41: #{entryflow_forward.23} parent=39 // pred_check
        %p371 = pneg %p164
      $region42: #{entryflow_forward.23} parent=39 // pred_check_branch
        %373 = sbr.rel (%p371) target = $region44
      $region43: #{entryflow_forward.23} parent=39 // pred_region
        _
      $region44: #{entryflow_forward.23} parent=39 // pred_fallthru
        _
    $region40: #{entryflow_forward.23} parent=5 // pred_fallthru
      _
    %p374 = scmp.le.s32.totalorder 2, %s11
    // Predicated region
    $region45: #{entryflow_forward.23} parent=5 // pred_check
      %p375 = pneg %p374
    $region46: #{entryflow_forward.23} parent=5 // pred_check_branch
      %377 = sbr.rel (%p375) target = $region48
    $region47: #{entryflow_forward.23} parent=5 // pred_region
      %s378 = ssub.s32 %s11, 2
      // Predicated region
      $region49: #{entryflow_forward.23} parent=47 // pred_check
        %p379 = pneg %p170
      $region50: #{entryflow_forward.23} parent=47 // pred_check_branch
        %381 = sbr.rel (%p379) target = $region52
      $region51: #{entryflow_forward.23} parent=47 // pred_region
        %p382 = scmp.lt.s32.totalorder %s17, 1
        %s383 = scalar_select %p382, %s17, 1
        %s384 = smul.addr %s383, 2
        %s385 = scalar_lea.vmem %s5, %s384
      $region52: #{entryflow_forward.23} parent=47 // pred_fallthru
        _
    $region48: #{entryflow_forward.23} parent=5 // pred_fallthru
      _
  $region6: #{entryflow_forward.23} parent=0 // loop_footer
    %s15 = sadd.s32 1, %s11
  $region7: #{entryflow_forward.23} parent=0 // loop_footer_branch
    %10 = sbr.rel target = $region3
  $region8: #{entryflow_forward.23} parent=0 // loop_exit
    _

// kernel: entryflow_forward.24
$region0: #{entryflow_forward.24}
  #allocation0 [shape = 'u32[]', space=smem, size = 0x4, offset = 0x4, fixed_abs, tag = 'smem constant byte address 0x4 - core index']
  #allocation1 [shape = 'u32[72,128]{1,0:T(1,128)}', space=vmem, size = 0x9000, scoped, tag = 'internal scratch']
  %s0 = inlined_call_operand.vmem [shape: bf16[2,4,4,32], index: 0, kind: input, shape index: {}]
  %s1 = inlined_call_operand.vmem [shape: f32[9,32], index: 1, kind: input, shape index: {}]
  %s2 = inlined_call_operand.vmem [shape: f32[1,32], index: 2, kind: input, shape index: {}]
  %s3 = inlined_call_operand.vmem [shape: bf16[32,128], index: 3, kind: input, shape index: {}]
  %s4 = inlined_call_operand.vmem [shape: f32[1,128], index: 4, kind: input, shape index: {}]
  %s5 = inlined_call_operand.vmem [shape: bf16[2,2,2,128], index: 5, kind: output, shape index: {}]
  %s6 = sld [smem:[#allocation0]]
  $region53: #{entryflow_forward.24} parent=0
    _
  %s8 = ssub.s32 1, %s6
  %s9 = scalar_select 0, %s8, %s6
  loop: start=0, step=1, limit=4
  $region2: #{entryflow_forward.24} parent=0 // loop_pre_header
    _
  $region3: #{entryflow_forward.24} parent=0 // loop_header
    %s11 = sphi 0, %s15
    %p12 = scmp.ge.s32.totalorder %s11, 4
    %s21 = sphi 0, %s23
    %s24 = sphi 0, %s21
    %s25 = sphi 0, %s24
    %s41 = sphi 0, %s25
    %s45 = sphi 0, %s45
    %s47 = sphi 0, %s45
    %s48 = sphi 0, %s47
    %s62 = sphi 0, %s48
    %s66 = sphi 0, %s66
    %s68 = sphi 0, %s66
    %s69 = sphi 0, %s68
    %s83 = sphi 0, %s69
    %s87 = sphi 0, %s87
    %s89 = sphi 0, %s87
    %s90 = sphi 0, %s89
    %s104 = sphi 0, %s90
    %s108 = sphi 0, %s108
    %s110 = sphi 0, %s108
    %s111 = sphi 0, %s110
    %s125 = sphi 0, %s111
    %s131 = sphi 0, %s133
    %s134 = sphi 0, %s131
    %s135 = sphi 0, %s134
    %s151 = sphi 0, %s135
  $region4: #{entryflow_forward.24} parent=0 // loop_header_branch
    %14 = sbr.rel (%p12) target = $region8
  $region5: #{entryflow_forward.24} parent=0 // loop_body
    %s16 = ssub.s32 %s11, 1
    %s17 = ssub.s32 %s11, 2
    %s18 = sadd.s32 %s11, 1
    %s19 = ssub.s32 %s11, %s18
    %p20 = scmp.eq.s32.totalorder %s19, 0
    %s22 = sadd.s32 %s21, 1
    %s23 = scalar_select %p20, %s21, %s22
    %p26 = pneg %p20
    %p27 = scmp.eq.s32.totalorder %s11, 1
    %p28 = por %p26, %p27
    %p29 = scmp.ne.s32.totalorder %s21, %s24
    %p30 = scmp.eq.s32.totalorder %s11, 0
    %p31 = por %p29, %p30
    %p32 = scmp.ne.s32.totalorder %s21, %s24
    %p33 = scmp.eq.s32.totalorder %s16, 1
    %p34 = por %p32, %p33
    %p35 = scmp.ne.s32.totalorder %s24, %s25
    %p36 = scmp.eq.s32.totalorder %s16, 0
    %p37 = por %p35, %p36
    %p38 = scmp.ne.s32.totalorder %s24, %s25
    %p39 = scmp.eq.s32.totalorder %s17, 1
    %p40 = por %p38, %p39
    %p42 = scmp.ne.s32.totalorder %s25, %s41
    %p43 = scmp.eq.s32.totalorder %s17, 0
    %p44 = por %p42, %p43
    %s46 = sadd.s32 %s45, 1
    %p49 = scmp.eq.s32.totalorder %s11, 1
    %p50 = scmp.ne.s32.totalorder %s45, %s47
    %p51 = scmp.eq.s32.totalorder %s11, 0
    %p52 = por %p50, %p51
    %p53 = scmp.ne.s32.totalorder %s45, %s47
    %p54 = scmp.eq.s32.totalorder %s16, 1
    %p55 = por %p53, %p54
    %p56 = scmp.ne.s32.totalorder %s47, %s48
    %p57 = scmp.eq.s32.totalorder %s16, 0
    %p58 = por %p56, %p57
    %p59 = scmp.ne.s32.totalorder %s47, %s48
    %p60 = scmp.eq.s32.totalorder %s17, 1
    %p61 = por %p59, %p60
    %p63 = scmp.ne.s32.totalorder %s48, %s62
    %p64 = scmp.eq.s32.totalorder %s17, 0
    %p65 = por %p63, %p64
    %s67 = sadd.s32 %s66, 1
    %p70 = scmp.eq.s32.totalorder %s11, 1
    %p71 = scmp.ne.s32.totalorder %s66, %s68
    %p72 = scmp.eq.s32.totalorder %s11, 0
    %p73 = por %p71, %p72
    %p74 = scmp.ne.s32.totalorder %s66, %s68
    %p75 = scmp.eq.s32.totalorder %s16, 1
    %p76 = por %p74, %p75
    %p77 = scmp.ne.s32.totalorder %s68, %s69
    %p78 = scmp.eq.s32.totalorder %s16, 0
    %p79 = por %p77, %p78
    %p80 = scmp.ne.s32.totalorder %s68, %s69
    %p81 = scmp.eq.s32.totalorder %s17, 1
    %p82 = por %p80, %p81
    %p84 = scmp.ne.s32.totalorder %s69, %s83
    %p85 = scmp.eq.s32.totalorder %s17, 0
    %p86 = por %p84, %p85
    %s88 = sadd.s32 %s87, 1
    %p91 = scmp.eq.s32.totalorder %s11, 1
    %p92 = scmp.ne.s32.totalorder %s87, %s89
    %p93 = scmp.eq.s32.totalorder %s11, 0
    %p94 = por %p92, %p93
    %p95 = scmp.ne.s32.totalorder %s87, %s89
    %p96 = scmp.eq.s32.totalorder %s16, 1
    %p97 = por %p95, %p96
    %p98 = scmp.ne.s32.totalorder %s89, %s90
    %p99 = scmp.eq.s32.totalorder %s16, 0
    %p100 = por %p98, %p99
    %p101 = scmp.ne.s32.totalorder %s89, %s90
    %p102 = scmp.eq.s32.totalorder %s17, 1
    %p103 = por %p101, %p102
    %p105 = scmp.ne.s32.totalorder %s90, %s104
    %p106 = scmp.eq.s32.totalorder %s17, 0
    %p107 = por %p105, %p106
    %s109 = sadd.s32 %s108, 1
    %p112 = scmp.eq.s32.totalorder %s11, 1
    %p113 = scmp.ne.s32.totalorder %s108, %s110
    %p114 = scmp.eq.s32.totalorder %s11, 0
    %p115 = por %p113, %p114
    %p116 = scmp.ne.s32.totalorder %s108, %s110
    %p117 = scmp.eq.s32.totalorder %s16, 1
    %p118 = por %p116, %p117
    %p119 = scmp.ne.s32.totalorder %s110, %s111
    %p120 = scmp.eq.s32.totalorder %s16, 0
    %p121 = por %p119, %p120
    %p122 = scmp.ne.s32.totalorder %s110, %s111
    %p123 = scmp.eq.s32.totalorder %s17, 1
    %p124 = por %p122, %p123
    %p126 = scmp.ne.s32.totalorder %s111, %s125
    %p127 = scmp.eq.s32.totalorder %s17, 0
    %p128 = por %p126, %p127
    %s129 = ssub.s32 %s11, %s18
    %p130 = scmp.eq.s32.totalorder %s129, 0
    %s132 = sadd.s32 %s131, 1
    %s133 = scalar_select %p130, %s131, %s132
    %p136 = pneg %p130
    %p137 = scmp.eq.s32.totalorder %s11, 1
    %p138 = por %p136, %p137
    %p139 = scmp.ne.s32.totalorder %s131, %s134
    %p140 = scmp.eq.s32.totalorder %s11, 0
    %p141 = por %p139, %p140
    %p142 = scmp.ne.s32.totalorder %s131, %s134
    %p143 = scmp.eq.s32.totalorder %s16, 1
    %p144 = por %p142, %p143
    %p145 = scmp.ne.s32.totalorder %s134, %s135
    %p146 = scmp.eq.s32.totalorder %s16, 0
    %p147 = por %p145, %p146
    %p148 = scmp.ne.s32.totalorder %s134, %s135
    %p149 = scmp.eq.s32.totalorder %s17, 1
    %p150 = por %p148, %p149
    %p152 = scmp.ne.s32.totalorder %s135, %s151
    %p153 = scmp.eq.s32.totalorder %s17, 0
    %p154 = por %p152, %p153
    %p155 = scmp.le.s32.totalorder 1, %s11
    %p156 = scmp.lt.s32.totalorder %s11, 3
    %p157 = pnand %p155, %p156
    %p158 = pneg %p157
    // Predicated region
    $region9: #{entryflow_forward.24} parent=5 // pred_check
      _
    $region10: #{entryflow_forward.24} parent=5 // pred_check_branch
      %160 = sbr.rel (%p157) target = $region12
    $region11: #{entryflow_forward.24} parent=5 // pred_region
      %s161 = ssub.s32 %s11, 1
      // Predicated region
      $region13: #{entryflow_forward.24} parent=11 // pred_check
        %p162 = pneg %p58
      $region14: #{entryflow_forward.24} parent=11 // pred_check_branch
        %164 = sbr.rel (%p162) target = $region16
      $region15: #{entryflow_forward.24} parent=11 // pred_region
        _
      $region16: #{entryflow_forward.24} parent=11 // pred_fallthru
        _
      // Predicated region
      $region17: #{entryflow_forward.24} parent=11 // pred_check
        %p165 = pneg %p79
      $region18: #{entryflow_forward.24} parent=11 // pred_check_branch
        %167 = sbr.rel (%p165) target = $region20
      $region19: #{entryflow_forward.24} parent=11 // pred_region
        _
      $region20: #{entryflow_forward.24} parent=11 // pred_fallthru
        _
      // Predicated region
      $region21: #{entryflow_forward.24} parent=11 // pred_check
        %p168 = pneg %p100
      $region22: #{entryflow_forward.24} parent=11 // pred_check_branch
        %170 = sbr.rel (%p168) target = $region24
      $region23: #{entryflow_forward.24} parent=11 // pred_region
        _
      $region24: #{entryflow_forward.24} parent=11 // pred_fallthru
        _
      // Predicated region
      $region25: #{entryflow_forward.24} parent=11 // pred_check
        %p171 = pneg %p121
      $region26: #{entryflow_forward.24} parent=11 // pred_check_branch
        %173 = sbr.rel (%p171) target = $region28
      $region27: #{entryflow_forward.24} parent=11 // pred_region
        _
      $region28: #{entryflow_forward.24} parent=11 // pred_fallthru
        _
    $region12: #{entryflow_forward.24} parent=5 // pred_fallthru
      _
    %p174 = scmp.lt.s32.totalorder %s11, 2
    // Predicated region
    $region29: #{entryflow_forward.24} parent=5 // pred_check
      %p175 = pneg %p174
    $region30: #{entryflow_forward.24} parent=5 // pred_check_branch
      %177 = sbr.rel (%p175) target = $region32
    $region31: #{entryflow_forward.24} parent=5 // pred_region
      // Predicated region
      $region33: #{entryflow_forward.24} parent=31 // pred_check
        %p178 = pneg %p31
      $region34: #{entryflow_forward.24} parent=31 // pred_check_branch
        %180 = sbr.rel (%p178) target = $region36
      $region35: #{entryflow_forward.24} parent=31 // pred_region
        %p181 = scmp.lt.s32.totalorder %s11, 1
        %s182 = scalar_select %p181, %s11, 1
        %s183 = smul.addr %s182, 4
        %s184 = smul.addr %s183, 2
        %s185 = scalar_lea.vmem %s0, %s184
      $region36: #{entryflow_forward.24} parent=31 // pred_fallthru
        _
    $region32: #{entryflow_forward.24} parent=5 // pred_fallthru
      _
    %p186 = scmp.le.s32.totalorder 1, %s11
    %p187 = scmp.lt.s32.totalorder %s11, 3
    %p188 = pnand %p186, %p187
    %p189 = pneg %p188
    // Predicated region
    $region37: #{entryflow_forward.24} parent=5 // pred_check
      _
    $region38: #{entryflow_forward.24} parent=5 // pred_check_branch
      %191 = sbr.rel (%p188) target = $region40
    $region39: #{entryflow_forward.24} parent=5 // pred_region
      %s192 = ssub.s32 %s11, 1
      %p193 = scmp.lt.s32.totalorder %s16, 1
      %s194 = scalar_select %p193, %s16, 1
      %s195 = smul.addr %s194, 4
      %s196 = smul.addr %s195, 2
      %s197 = scalar_lea.vmem %s0, %s196
      %p198 = pneg %p37
      %p199 = pneg %p34
      %p200 = pneg %p58
      %p201 = pneg %p55
      %p202 = pneg %p79
      %p203 = pneg %p76
      %p204 = pneg %p100
      %p205 = pneg %p97
      %p206 = pneg %p121
      %p207 = pneg %p118
      %p208 = pneg %p147
      %p209 = pneg %p144
      %p210 = scmp.lt.s32.totalorder %s16, 1
      %s211 = scalar_select %p210, %s16, 1
      %s212 = smul.addr %s211, 2
      %s213 = scalar_lea.vmem %s5, %s212
      %p214 = scmp.lt.s32.totalorder %s16, 1
      %s215 = scalar_select %p214, %s16, 1
      %s216 = smul.addr %s215, 4
      %s217 = smul.addr %s216, 2
      %s218 = scalar_lea.vmem %s0, %s217
      %p219 = scmp.lt.s32.totalorder %s16, 1
      %s220 = scalar_select %p219, %s16, 1
      %s221 = smul.addr %s220, 2
      %s222 = scalar_lea.vmem %s5, %s221
      %v224 = vld [vmem:[%s218] sm:$0x3]
      %v225 = vld [vmem:[%s218 + $0x2] sm:$0x3]
      %v226 = vld [vmem:[%s218 + $0x4] sm:$0x3]
      %v227 = vld [vmem:[%s218 + $0x6] sm:$0x3]
      %v228 = vld [vmem:[%s1] sm:$0xff]
      %v229 = vld [vmem:[%s1 + $0x8] sm:$0x1]
      %v230 = vunpack.c.l.bf16 %v224
      %v231 = vunpack.c.l.bf16 %v225
      %v232 = vmax.f32 %v230, 0.0
      %v233 = vmax.f32 %v231, 0.0
      %v234 = vperm.slane %v228, 0
      %v235 = vmul.f32 %v232, %v234
      %v236 = vmul.f32 %v233, %v234
      %v237 = vadd.f32 %v235, 0.0
      %v238 = vadd.f32 %v236, 0.0
      %v239 = vperm.slane %v228, 1
      %v240 = vmul.f32 %v232, %v239
      %v241 = vmul.f32 %v233, %v239
      %v244 = vrot.slane %v240, 5
      %v245 = vrot.slane %v244, 4
      %v246 = vrot.slane %v241, 5
      %v247 = vrot.slane %v246, 4
      %v250 = vadd.f32 %v237, %v245
      %v251 = vadd.f32 %v238, %v247
      %v252 = vperm.slane %v228, 2
      %v253 = vmul.f32 %v232, %v252
      %v254 = vmul.f32 %v233, %v252
      %v257 = vrot.slane %v253, 6
      %v258 = vrot.slane %v257, 4
      %v259 = vrot.slane %v254, 6
      %v260 = vrot.slane %v259, 4
      %v263 = vadd.f32 %v250, %v258
      %v264 = vadd.f32 %v251, %v260
      %v265 = vunpack.c.l.bf16 %v226
      %v266 = vmax.f32 %v265, 0.0
      %v267 = vperm.slane %v228, 3
      %v268 = vmul.f32 %v233, %v267
      %v269 = vmul.f32 %v266, %v267
      %v270 = vadd.f32 %v263, %v268
      %v271 = vadd.f32 %v264, %v269
      %v272 = vperm.slane %v228, 4
      %v273 = vmul.f32 %v233, %v272
      %v274 = vmul.f32 %v266, %v272
      %v277 = vrot.slane %v273, 5
      %v278 = vrot.slane %v277, 4
      %v279 = vrot.slane %v274, 5
      %v280 = vrot.slane %v279, 4
      %v283 = vadd.f32 %v270, %v278
      %v284 = vadd.f32 %v271, %v280
      %v285 = vperm.slane %v228, 5
      %v286 = vmul.f32 %v233, %v285
      %v287 = vmul.f32 %v266, %v285
      %v290 = vrot.slane %v286, 6
      %v291 = vrot.slane %v290, 4
      %v292 = vrot.slane %v287, 6
      %v293 = vrot.slane %v292, 4
      %v296 = vadd.f32 %v283, %v291
      %v297 = vadd.f32 %v284, %v293
      %v298 = vunpack.c.l.bf16 %v227
      %v299 = vmax.f32 %v298, 0.0
      %v300 = vperm.slane %v228, 6
      %v301 = vmul.f32 %v266, %v300
      %v302 = vmul.f32 %v299, %v300
      %v303 = vadd.f32 %v296, %v301
      %v304 = vadd.f32 %v297, %v302
      %v305 = vperm.slane %v228, 7
      %v306 = vmul.f32 %v266, %v305
      %v307 = vmul.f32 %v299, %v305
      %v310 = vrot.slane %v306, 5
      %v311 = vrot.slane %v310, 4
      %v312 = vrot.slane %v307, 5
      %v313 = vrot.slane %v312, 4
      %v316 = vadd.f32 %v303, %v311
      %v317 = vadd.f32 %v304, %v313
      %v318 = vperm.slane %v229, 0
      %v319 = vmul.f32 %v266, %v318
      %v320 = vmul.f32 %v299, %v318
      %v323 = vrot.slane %v319, 6
      %v324 = vrot.slane %v323, 4
      %v325 = vrot.slane %v320, 6
      %v326 = vrot.slane %v325, 4
      %v329 = vadd.f32 %v316, %v324
      %v330 = vadd.f32 %v317, %v326
      %v331 = vld [vmem:[%s2] sm:$0x1]
      %v333 = vperm.slane %v331, 0
      %v335 = vadd.f32 %v329, %v333
      %v336 = vadd.f32 %v330, %v333
      %339 = vst [vmem:[#allocation1] ss:$4 sm:$0xff] %v335
      %s340 = scalar_lea.vmem [#allocation1], 1
      %341 = vst [vmem:[%s340] ss:$4 sm:$0xff] %v336
      %v342 = vld.sshfl [vmem:[#allocation1] sm:$0xff pattern:$0x73625140]
      %v344 = vpack.c.bf16 %v342, %v342
      %v345 = vld [vmem:[%s3] sm:$0xf]
      %v346 = vld [vmem:[%s3 + $0x4] sm:$0xf]
      %v347 = vld [vmem:[%s3 + $0x8] sm:$0xf]
      %v348 = vld [vmem:[%s3 + $0xc] sm:$0xf]
      %v349 = vld [vmem:[%s4] sm:$0x1]
      %v351 = vperm.slane %v349, 0
      %v357 = vunpack.c.l.b16 %v345
      %v358 = vunpack.c.l.b16 %v346
      %v359 = vunpack.c.l.b16 %v347
      %v360 = vunpack.c.l.b16 %v348
      %v361 = vpack.c.b16 %v358, %v357
      %v362 = vpack.c.b16 %v360, %v359
      %vm365 = vcmask 261120
      %v367 = vsel %vm365, %v344, 0
      %369 = vmatpush.bf16.msra.mxu0 0
      %370 = vmatpush.bf16.msra.mxu0 0
      %371 = vmatpush.bf16.msra.mxu0 0
      %372 = vmatpush.bf16.msra.mxu0 0
      %373 = vmatpush.bf16.msra.mxu0 0
      %374 = vmatpush.bf16.msra.mxu0 0
      %375 = vmatpush.bf16.msra.mxu0 %v362
      %376 = vmatpush.bf16.msra.mxu0 %v361
      %377 = vmatmul.bf16.gmra.mxu0 %v367
      %v378 = vpop.f32.mrf.mxu0
      %v379 = vadd.f32 %v351, %v378
      %v380 = vpop.f32.mrf.mxu0
      %381 = vdwg.mxu0
      %v382 = vmax.f32 %v379, 0.0
      %v384 = vrot.slane %v382, 2
      %v386 = vpack.c.bf16 %v382, %v382
      %v387 = vpack.c.bf16 %v384, %v384
      %388 = vst [vmem:[%s222] sm:$0x1] %v386
      %389 = vst [vmem:[%s222 + $0x1] sm:$0x1] %v387
      %p390 = scmp.lt.s32.totalorder %s16, 1
      %s391 = scalar_select %p390, %s16, 1
      %s392 = smul.addr %s391, 2
      %s393 = scalar_lea.vmem %s5, %s392
      // Predicated region
      $region41: #{entryflow_forward.24} parent=39 // pred_check
        %p394 = pneg %p144
      $region42: #{entryflow_forward.24} parent=39 // pred_check_branch
        %396 = sbr.rel (%p394) target = $region44
      $region43: #{entryflow_forward.24} parent=39 // pred_region
        _
      $region44: #{entryflow_forward.24} parent=39 // pred_fallthru
        _
    $region40: #{entryflow_forward.24} parent=5 // pred_fallthru
      _
    %p397 = scmp.le.s32.totalorder 2, %s11
    // Predicated region
    $region45: #{entryflow_forward.24} parent=5 // pred_check
      %p398 = pneg %p397
    $region46: #{entryflow_forward.24} parent=5 // pred_check_branch
      %400 = sbr.rel (%p398) target = $region48
    $region47: #{entryflow_forward.24} parent=5 // pred_region
      %s401 = ssub.s32 %s11, 2
      // Predicated region
      $region49: #{entryflow_forward.24} parent=47 // pred_check
        %p402 = pneg %p150
      $region50: #{entryflow_forward.24} parent=47 // pred_check_branch
        %404 = sbr.rel (%p402) target = $region52
      $region51: #{entryflow_forward.24} parent=47 // pred_region
        %p405 = scmp.lt.s32.totalorder %s17, 1
        %s406 = scalar_select %p405, %s17, 1
        %s407 = smul.addr %s406, 2
        %s408 = scalar_lea.vmem %s5, %s407
      $region52: #{entryflow_forward.24} parent=47 // pred_fallthru
        _
    $region48: #{entryflow_forward.24} parent=5 // pred_fallthru
      _
  $region6: #{entryflow_forward.24} parent=0 // loop_footer
    %s15 = sadd.s32 1, %s11
  $region7: #{entryflow_forward.24} parent=0 // loop_footer_branch
    %10 = sbr.rel target = $region3
  $region8: #{entryflow_forward.24} parent=0 // loop_exit
    _

// kernel: entryflow_forward.25
$region0: #{entryflow_forward.25}
  #allocation0 [shape = 'u32[]', space=smem, size = 0x4, offset = 0x4, fixed_abs, tag = 'smem constant byte address 0x4 - core index']
  #allocation1 [shape = 'u32[72,128]{1,0:T(1,128)}', space=vmem, size = 0x9000, scoped, tag = 'internal scratch']
  %s0 = inlined_call_operand.vmem [shape: bf16[2,4,4,32], index: 0, kind: input, shape index: {}]
  %s1 = inlined_call_operand.vmem [shape: f32[9,32], index: 1, kind: input, shape index: {}]
  %s2 = inlined_call_operand.vmem [shape: f32[1,32], index: 2, kind: input, shape index: {}]
  %s3 = inlined_call_operand.vmem [shape: bf16[32,128], index: 3, kind: input, shape index: {}]
  %s4 = inlined_call_operand.vmem [shape: f32[1,128], index: 4, kind: input, shape index: {}]
  %s5 = inlined_call_operand.vmem [shape: bf16[2,2,2,128], index: 5, kind: output, shape index: {}]
  %s6 = sld [smem:[#allocation0]]
  $region53: #{entryflow_forward.25} parent=0
    _
  %s8 = ssub.s32 1, %s6
  %s9 = scalar_select 0, %s8, %s6
  loop: start=0, step=1, limit=4
  $region2: #{entryflow_forward.25} parent=0 // loop_pre_header
    _
  $region3: #{entryflow_forward.25} parent=0 // loop_header
    %s11 = sphi 0, %s15
    %p12 = scmp.ge.s32.totalorder %s11, 4
    %s21 = sphi 0, %s23
    %s24 = sphi 0, %s21
    %s25 = sphi 0, %s24
    %s41 = sphi 0, %s25
    %s45 = sphi 0, %s45
    %s47 = sphi 0, %s45
    %s48 = sphi 0, %s47
    %s62 = sphi 0, %s48
    %s66 = sphi 0, %s66
    %s68 = sphi 0, %s66
    %s69 = sphi 0, %s68
    %s83 = sphi 0, %s69
    %s87 = sphi 0, %s87
    %s89 = sphi 0, %s87
    %s90 = sphi 0, %s89
    %s104 = sphi 0, %s90
    %s108 = sphi 0, %s108
    %s110 = sphi 0, %s108
    %s111 = sphi 0, %s110
    %s125 = sphi 0, %s111
    %s131 = sphi 0, %s133
    %s134 = sphi 0, %s131
    %s135 = sphi 0, %s134
    %s151 = sphi 0, %s135
  $region4: #{entryflow_forward.25} parent=0 // loop_header_branch
    %14 = sbr.rel (%p12) target = $region8
  $region5: #{entryflow_forward.25} parent=0 // loop_body
    %s16 = ssub.s32 %s11, 1
    %s17 = ssub.s32 %s11, 2
    %s18 = sadd.s32 %s11, 1
    %s19 = ssub.s32 %s11, %s18
    %p20 = scmp.eq.s32.totalorder %s19, 0
    %s22 = sadd.s32 %s21, 1
    %s23 = scalar_select %p20, %s21, %s22
    %p26 = pneg %p20
    %p27 = scmp.eq.s32.totalorder %s11, 1
    %p28 = por %p26, %p27
    %p29 = scmp.ne.s32.totalorder %s21, %s24
    %p30 = scmp.eq.s32.totalorder %s11, 0
    %p31 = por %p29, %p30
    %p32 = scmp.ne.s32.totalorder %s21, %s24
    %p33 = scmp.eq.s32.totalorder %s16, 1
    %p34 = por %p32, %p33
    %p35 = scmp.ne.s32.totalorder %s24, %s25
    %p36 = scmp.eq.s32.totalorder %s16, 0
    %p37 = por %p35, %p36
    %p38 = scmp.ne.s32.totalorder %s24, %s25
    %p39 = scmp.eq.s32.totalorder %s17, 1
    %p40 = por %p38, %p39
    %p42 = scmp.ne.s32.totalorder %s25, %s41
    %p43 = scmp.eq.s32.totalorder %s17, 0
    %p44 = por %p42, %p43
    %s46 = sadd.s32 %s45, 1
    %p49 = scmp.eq.s32.totalorder %s11, 1
    %p50 = scmp.ne.s32.totalorder %s45, %s47
    %p51 = scmp.eq.s32.totalorder %s11, 0
    %p52 = por %p50, %p51
    %p53 = scmp.ne.s32.totalorder %s45, %s47
    %p54 = scmp.eq.s32.totalorder %s16, 1
    %p55 = por %p53, %p54
    %p56 = scmp.ne.s32.totalorder %s47, %s48
    %p57 = scmp.eq.s32.totalorder %s16, 0
    %p58 = por %p56, %p57
    %p59 = scmp.ne.s32.totalorder %s47, %s48
    %p60 = scmp.eq.s32.totalorder %s17, 1
    %p61 = por %p59, %p60
    %p63 = scmp.ne.s32.totalorder %s48, %s62
    %p64 = scmp.eq.s32.totalorder %s17, 0
    %p65 = por %p63, %p64
    %s67 = sadd.s32 %s66, 1
    %p70 = scmp.eq.s32.totalorder %s11, 1
    %p71 = scmp.ne.s32.totalorder %s66, %s68
    %p72 = scmp.eq.s32.totalorder %s11, 0
    %p73 = por %p71, %p72
    %p74 = scmp.ne.s32.totalorder %s66, %s68
    %p75 = scmp.eq.s32.totalorder %s16, 1
    %p76 = por %p74, %p75
    %p77 = scmp.ne.s32.totalorder %s68, %s69
    %p78 = scmp.eq.s32.totalorder %s16, 0
    %p79 = por %p77, %p78
    %p80 = scmp.ne.s32.totalorder %s68, %s69
    %p81 = scmp.eq.s32.totalorder %s17, 1
    %p82 = por %p80, %p81
    %p84 = scmp.ne.s32.totalorder %s69, %s83
    %p85 = scmp.eq.s32.totalorder %s17, 0
    %p86 = por %p84, %p85
    %s88 = sadd.s32 %s87, 1
    %p91 = scmp.eq.s32.totalorder %s11, 1
    %p92 = scmp.ne.s32.totalorder %s87, %s89
    %p93 = scmp.eq.s32.totalorder %s11, 0
    %p94 = por %p92, %p93
    %p95 = scmp.ne.s32.totalorder %s87, %s89
    %p96 = scmp.eq.s32.totalorder %s16, 1
    %p97 = por %p95, %p96
    %p98 = scmp.ne.s32.totalorder %s89, %s90
    %p99 = scmp.eq.s32.totalorder %s16, 0
    %p100 = por %p98, %p99
    %p101 = scmp.ne.s32.totalorder %s89, %s90
    %p102 = scmp.eq.s32.totalorder %s17, 1
    %p103 = por %p101, %p102
    %p105 = scmp.ne.s32.totalorder %s90, %s104
    %p106 = scmp.eq.s32.totalorder %s17, 0
    %p107 = por %p105, %p106
    %s109 = sadd.s32 %s108, 1
    %p112 = scmp.eq.s32.totalorder %s11, 1
    %p113 = scmp.ne.s32.totalorder %s108, %s110
    %p114 = scmp.eq.s32.totalorder %s11, 0
    %p115 = por %p113, %p114
    %p116 = scmp.ne.s32.totalorder %s108, %s110
    %p117 = scmp.eq.s32.totalorder %s16, 1
    %p118 = por %p116, %p117
    %p119 = scmp.ne.s32.totalorder %s110, %s111
    %p120 = scmp.eq.s32.totalorder %s16, 0
    %p121 = por %p119, %p120
    %p122 = scmp.ne.s32.totalorder %s110, %s111
    %p123 = scmp.eq.s32.totalorder %s17, 1
    %p124 = por %p122, %p123
    %p126 = scmp.ne.s32.totalorder %s111, %s125
    %p127 = scmp.eq.s32.totalorder %s17, 0
    %p128 = por %p126, %p127
    %s129 = ssub.s32 %s11, %s18
    %p130 = scmp.eq.s32.totalorder %s129, 0
    %s132 = sadd.s32 %s131, 1
    %s133 = scalar_select %p130, %s131, %s132
    %p136 = pneg %p130
    %p137 = scmp.eq.s32.totalorder %s11, 1
    %p138 = por %p136, %p137
    %p139 = scmp.ne.s32.totalorder %s131, %s134
    %p140 = scmp.eq.s32.totalorder %s11, 0
    %p141 = por %p139, %p140
    %p142 = scmp.ne.s32.totalorder %s131, %s134
    %p143 = scmp.eq.s32.totalorder %s16, 1
    %p144 = por %p142, %p143
    %p145 = scmp.ne.s32.totalorder %s134, %s135
    %p146 = scmp.eq.s32.totalorder %s16, 0
    %p147 = por %p145, %p146
    %p148 = scmp.ne.s32.totalorder %s134, %s135
    %p149 = scmp.eq.s32.totalorder %s17, 1
    %p150 = por %p148, %p149
    %p152 = scmp.ne.s32.totalorder %s135, %s151
    %p153 = scmp.eq.s32.totalorder %s17, 0
    %p154 = por %p152, %p153
    %p155 = scmp.le.s32.totalorder 1, %s11
    %p156 = scmp.lt.s32.totalorder %s11, 3
    %p157 = pnand %p155, %p156
    %p158 = pneg %p157
    // Predicated region
    $region9: #{entryflow_forward.25} parent=5 // pred_check
      _
    $region10: #{entryflow_forward.25} parent=5 // pred_check_branch
      %160 = sbr.rel (%p157) target = $region12
    $region11: #{entryflow_forward.25} parent=5 // pred_region
      %s161 = ssub.s32 %s11, 1
      // Predicated region
      $region13: #{entryflow_forward.25} parent=11 // pred_check
        %p162 = pneg %p58
      $region14: #{entryflow_forward.25} parent=11 // pred_check_branch
        %164 = sbr.rel (%p162) target = $region16
      $region15: #{entryflow_forward.25} parent=11 // pred_region
        _
      $region16: #{entryflow_forward.25} parent=11 // pred_fallthru
        _
      // Predicated region
      $region17: #{entryflow_forward.25} parent=11 // pred_check
        %p165 = pneg %p79
      $region18: #{entryflow_forward.25} parent=11 // pred_check_branch
        %167 = sbr.rel (%p165) target = $region20
      $region19: #{entryflow_forward.25} parent=11 // pred_region
        _
      $region20: #{entryflow_forward.25} parent=11 // pred_fallthru
        _
      // Predicated region
      $region21: #{entryflow_forward.25} parent=11 // pred_check
        %p168 = pneg %p100
      $region22: #{entryflow_forward.25} parent=11 // pred_check_branch
        %170 = sbr.rel (%p168) target = $region24
      $region23: #{entryflow_forward.25} parent=11 // pred_region
        _
      $region24: #{entryflow_forward.25} parent=11 // pred_fallthru
        _
      // Predicated region
      $region25: #{entryflow_forward.25} parent=11 // pred_check
        %p171 = pneg %p121
      $region26: #{entryflow_forward.25} parent=11 // pred_check_branch
        %173 = sbr.rel (%p171) target = $region28
      $region27: #{entryflow_forward.25} parent=11 // pred_region
        _
      $region28: #{entryflow_forward.25} parent=11 // pred_fallthru
        _
    $region12: #{entryflow_forward.25} parent=5 // pred_fallthru
      _
    %p174 = scmp.lt.s32.totalorder %s11, 2
    // Predicated region
    $region29: #{entryflow_forward.25} parent=5 // pred_check
      %p175 = pneg %p174
    $region30: #{entryflow_forward.25} parent=5 // pred_check_branch
      %177 = sbr.rel (%p175) target = $region32
    $region31: #{entryflow_forward.25} parent=5 // pred_region
      // Predicated region
      $region33: #{entryflow_forward.25} parent=31 // pred_check
        %p178 = pneg %p31
      $region34: #{entryflow_forward.25} parent=31 // pred_check_branch
        %180 = sbr.rel (%p178) target = $region36
      $region35: #{entryflow_forward.25} parent=31 // pred_region
        %p181 = scmp.lt.s32.totalorder %s11, 1
        %s182 = scalar_select %p181, %s11, 1
        %s183 = smul.addr %s182, 4
        %s184 = smul.addr %s183, 2
        %s185 = scalar_lea.vmem %s0, %s184
      $region36: #{entryflow_forward.25} parent=31 // pred_fallthru
        _
    $region32: #{entryflow_forward.25} parent=5 // pred_fallthru
      _
    %p186 = scmp.le.s32.totalorder 1, %s11
    %p187 = scmp.lt.s32.totalorder %s11, 3
    %p188 = pnand %p186, %p187
    %p189 = pneg %p188
    // Predicated region
    $region37: #{entryflow_forward.25} parent=5 // pred_check
      _
    $region38: #{entryflow_forward.25} parent=5 // pred_check_branch
      %191 = sbr.rel (%p188) target = $region40
    $region39: #{entryflow_forward.25} parent=5 // pred_region
      %s192 = ssub.s32 %s11, 1
      %p193 = scmp.lt.s32.totalorder %s16, 1
      %s194 = scalar_select %p193, %s16, 1
      %s195 = smul.addr %s194, 4
      %s196 = smul.addr %s195, 2
      %s197 = scalar_lea.vmem %s0, %s196
      %p198 = pneg %p37
      %p199 = pneg %p34
      %p200 = pneg %p58
      %p201 = pneg %p55
      %p202 = pneg %p79
      %p203 = pneg %p76
      %p204 = pneg %p100
      %p205 = pneg %p97
      %p206 = pneg %p121
      %p207 = pneg %p118
      %p208 = pneg %p147
      %p209 = pneg %p144
      %p210 = scmp.lt.s32.totalorder %s16, 1
      %s211 = scalar_select %p210, %s16, 1
      %s212 = smul.addr %s211, 2
      %s213 = scalar_lea.vmem %s5, %s212
      %p214 = scmp.lt.s32.totalorder %s16, 1
      %s215 = scalar_select %p214, %s16, 1
      %s216 = smul.addr %s215, 4
      %s217 = smul.addr %s216, 2
      %s218 = scalar_lea.vmem %s0, %s217
      %p219 = scmp.lt.s32.totalorder %s16, 1
      %s220 = scalar_select %p219, %s16, 1
      %s221 = smul.addr %s220, 2
      %s222 = scalar_lea.vmem %s5, %s221
      %v224 = vld [vmem:[%s218] sm:$0x3]
      %v225 = vld [vmem:[%s218 + $0x2] sm:$0x3]
      %v226 = vld [vmem:[%s218 + $0x4] sm:$0x3]
      %v227 = vld [vmem:[%s218 + $0x6] sm:$0x3]
      %v228 = vld [vmem:[%s1] sm:$0xff]
      %v229 = vld [vmem:[%s1 + $0x8] sm:$0x1]
      %v230 = vunpack.c.l.bf16 %v224
      %v231 = vunpack.c.l.bf16 %v225
      %v232 = vperm.slane %v228, 0
      %v233 = vmul.f32 %v230, %v232
      %v234 = vmul.f32 %v231, %v232
      %v235 = vadd.f32 %v233, 0.0
      %v236 = vadd.f32 %v234, 0.0
      %v237 = vperm.slane %v228, 1
      %v238 = vmul.f32 %v230, %v237
      %v239 = vmul.f32 %v231, %v237
      %v242 = vrot.slane %v238, 5
      %v243 = vrot.slane %v242, 4
      %v244 = vrot.slane %v239, 5
      %v245 = vrot.slane %v244, 4
      %v248 = vadd.f32 %v235, %v243
      %v249 = vadd.f32 %v236, %v245
      %v250 = vperm.slane %v228, 2
      %v251 = vmul.f32 %v230, %v250
      %v252 = vmul.f32 %v231, %v250
      %v255 = vrot.slane %v251, 6
      %v256 = vrot.slane %v255, 4
      %v257 = vrot.slane %v252, 6
      %v258 = vrot.slane %v257, 4
      %v261 = vadd.f32 %v248, %v256
      %v262 = vadd.f32 %v249, %v258
      %v263 = vunpack.c.l.bf16 %v226
      %v264 = vperm.slane %v228, 3
      %v265 = vmul.f32 %v231, %v264
      %v266 = vmul.f32 %v263, %v264
      %v267 = vadd.f32 %v261, %v265
      %v268 = vadd.f32 %v262, %v266
      %v269 = vperm.slane %v228, 4
      %v270 = vmul.f32 %v231, %v269
      %v271 = vmul.f32 %v263, %v269
      %v274 = vrot.slane %v270, 5
      %v275 = vrot.slane %v274, 4
      %v276 = vrot.slane %v271, 5
      %v277 = vrot.slane %v276, 4
      %v280 = vadd.f32 %v267, %v275
      %v281 = vadd.f32 %v268, %v277
      %v282 = vperm.slane %v228, 5
      %v283 = vmul.f32 %v231, %v282
      %v284 = vmul.f32 %v263, %v282
      %v287 = vrot.slane %v283, 6
      %v288 = vrot.slane %v287, 4
      %v289 = vrot.slane %v284, 6
      %v290 = vrot.slane %v289, 4
      %v293 = vadd.f32 %v280, %v288
      %v294 = vadd.f32 %v281, %v290
      %v295 = vunpack.c.l.bf16 %v227
      %v296 = vperm.slane %v228, 6
      %v297 = vmul.f32 %v263, %v296
      %v298 = vmul.f32 %v295, %v296
      %v299 = vadd.f32 %v293, %v297
      %v300 = vadd.f32 %v294, %v298
      %v301 = vperm.slane %v228, 7
      %v302 = vmul.f32 %v263, %v301
      %v303 = vmul.f32 %v295, %v301
      %v306 = vrot.slane %v302, 5
      %v307 = vrot.slane %v306, 4
      %v308 = vrot.slane %v303, 5
      %v309 = vrot.slane %v308, 4
      %v312 = vadd.f32 %v299, %v307
      %v313 = vadd.f32 %v300, %v309
      %v314 = vperm.slane %v229, 0
      %v315 = vmul.f32 %v263, %v314
      %v316 = vmul.f32 %v295, %v314
      %v319 = vrot.slane %v315, 6
      %v320 = vrot.slane %v319, 4
      %v321 = vrot.slane %v316, 6
      %v322 = vrot.slane %v321, 4
      %v325 = vadd.f32 %v312, %v320
      %v326 = vadd.f32 %v313, %v322
      %v327 = vld [vmem:[%s2] sm:$0x1]
      %v329 = vperm.slane %v327, 0
      %v331 = vadd.f32 %v325, %v329
      %v332 = vadd.f32 %v326, %v329
      %335 = vst [vmem:[#allocation1] ss:$4 sm:$0xff] %v331
      %s336 = scalar_lea.vmem [#allocation1], 1
      %337 = vst [vmem:[%s336] ss:$4 sm:$0xff] %v332
      %v338 = vld.sshfl [vmem:[#allocation1] sm:$0xff pattern:$0x73625140]
      %v340 = vpack.c.bf16 %v338, %v338
      %v341 = vld [vmem:[%s3] sm:$0xf]
      %v342 = vld [vmem:[%s3 + $0x4] sm:$0xf]
      %v343 = vld [vmem:[%s3 + $0x8] sm:$0xf]
      %v344 = vld [vmem:[%s3 + $0xc] sm:$0xf]
      %v345 = vld [vmem:[%s4] sm:$0x1]
      %v347 = vperm.slane %v345, 0
      %v353 = vunpack.c.l.b16 %v341
      %v354 = vunpack.c.l.b16 %v342
      %v355 = vunpack.c.l.b16 %v343
      %v356 = vunpack.c.l.b16 %v344
      %v357 = vpack.c.b16 %v354, %v353
      %v358 = vpack.c.b16 %v356, %v355
      %vm361 = vcmask 261120
      %v363 = vsel %vm361, %v340, 0
      %365 = vmatpush.bf16.msra.mxu0 0
      %366 = vmatpush.bf16.msra.mxu0 0
      %367 = vmatpush.bf16.msra.mxu0 0
      %368 = vmatpush.bf16.msra.mxu0 0
      %369 = vmatpush.bf16.msra.mxu0 0
      %370 = vmatpush.bf16.msra.mxu0 0
      %371 = vmatpush.bf16.msra.mxu0 %v358
      %372 = vmatpush.bf16.msra.mxu0 %v357
      %373 = vmatmul.bf16.gmra.mxu0 %v363
      %v374 = vpop.f32.mrf.mxu0
      %v375 = vadd.f32 %v347, %v374
      %v376 = vpop.f32.mrf.mxu0
      %377 = vdwg.mxu0
      %v378 = vmax.f32 %v375, 0.0
      %v380 = vrot.slane %v378, 2
      %v382 = vpack.c.bf16 %v378, %v378
      %v383 = vpack.c.bf16 %v380, %v380
      %384 = vst [vmem:[%s222] sm:$0x1] %v382
      %385 = vst [vmem:[%s222 + $0x1] sm:$0x1] %v383
      %p386 = scmp.lt.s32.totalorder %s16, 1
      %s387 = scalar_select %p386, %s16, 1
      %s388 = smul.addr %s387, 2
      %s389 = scalar_lea.vmem %s5, %s388
      // Predicated region
      $region41: #{entryflow_forward.25} parent=39 // pred_check
        %p390 = pneg %p144
      $region42: #{entryflow_forward.25} parent=39 // pred_check_branch
        %392 = sbr.rel (%p390) target = $region44
      $region43: #{entryflow_forward.25} parent=39 // pred_region
        _
      $region44: #{entryflow_forward.25} parent=39 // pred_fallthru
        _
    $region40: #{entryflow_forward.25} parent=5 // pred_fallthru
      _
    %p393 = scmp.le.s32.totalorder 2, %s11
    // Predicated region
    $region45: #{entryflow_forward.25} parent=5 // pred_check
      %p394 = pneg %p393
    $region46: #{entryflow_forward.25} parent=5 // pred_check_branch
      %396 = sbr.rel (%p394) target = $region48
    $region47: #{entryflow_forward.25} parent=5 // pred_region
      %s397 = ssub.s32 %s11, 2
      // Predicated region
      $region49: #{entryflow_forward.25} parent=47 // pred_check
        %p398 = pneg %p150
      $region50: #{entryflow_forward.25} parent=47 // pred_check_branch
        %400 = sbr.rel (%p398) target = $region52
      $region51: #{entryflow_forward.25} parent=47 // pred_region
        %p401 = scmp.lt.s32.totalorder %s17, 1
        %s402 = scalar_select %p401, %s17, 1
        %s403 = smul.addr %s402, 2
        %s404 = scalar_lea.vmem %s5, %s403
      $region52: #{entryflow_forward.25} parent=47 // pred_fallthru
        _
    $region48: #{entryflow_forward.25} parent=5 // pred_fallthru
      _
  $region6: #{entryflow_forward.25} parent=0 // loop_footer
    %s15 = sadd.s32 1, %s11
  $region7: #{entryflow_forward.25} parent=0 // loop_footer_branch
    %10 = sbr.rel target = $region3
  $region8: #{entryflow_forward.25} parent=0 // loop_exit
    _

// kernel: entryflow_forward.26
$region0: #{entryflow_forward.26}
  #allocation0 [shape = 'u32[]', space=smem, size = 0x4, offset = 0x4, fixed_abs, tag = 'smem constant byte address 0x4 - core index']
  #allocation1 [shape = 'u32[72,128]{1,0:T(1,128)}', space=vmem, size = 0x9000, scoped, tag = 'internal scratch']
  %s0 = inlined_call_operand.vmem [shape: bf16[8,32], index: 0, kind: input, shape index: {}]
  %s1 = inlined_call_operand.vmem [shape: bf16[32,128], index: 1, kind: input, shape index: {}]
  %s2 = inlined_call_operand.vmem [shape: f32[1,128], index: 2, kind: input, shape index: {}]
  %s3 = inlined_call_operand.vmem [shape: bf16[8,128], index: 3, kind: output, shape index: {}]
  %s4 = sld [smem:[#allocation0]]
  $region22: #{entryflow_forward.26} parent=0
    _
  %s6 = ssub.s32 1, %s4
  %s7 = scalar_select 0, %s6, %s4
  // Predicated region
  $region2: #{entryflow_forward.26} parent=0 // pred_check
    _
  $region3: #{entryflow_forward.26} parent=0 // pred_check_branch
    %9 = sbr.rel (0) target = $region5
  $region4: #{entryflow_forward.26} parent=0 // pred_region
    _
  $region5: #{entryflow_forward.26} parent=0 // pred_fallthru
    _
  // Predicated region
  $region6: #{entryflow_forward.26} parent=0 // pred_check
    _
  $region7: #{entryflow_forward.26} parent=0 // pred_check_branch
    %11 = sbr.rel (0) target = $region9
  $region8: #{entryflow_forward.26} parent=0 // pred_region
    _
  $region9: #{entryflow_forward.26} parent=0 // pred_fallthru
    _
  // Predicated region
  $region10: #{entryflow_forward.26} parent=0 // pred_check
    _
  $region11: #{entryflow_forward.26} parent=0 // pred_check_branch
    %13 = sbr.rel (0) target = $region13
  $region12: #{entryflow_forward.26} parent=0 // pred_region
    _
  $region13: #{entryflow_forward.26} parent=0 // pred_fallthru
    _
  %v15 = vld [vmem:[%s0] sm:$0xf]
  %v16 = vld [vmem:[%s1] sm:$0xf]
  %v17 = vld [vmem:[%s1 + $0x4] sm:$0xf]
  %v18 = vld [vmem:[%s1 + $0x8] sm:$0xf]
  %v19 = vld [vmem:[%s1 + $0xc] sm:$0xf]
  %v20 = vld [vmem:[%s2] sm:$0x1]
  %v22 = vperm.slane %v20, 0
  %v28 = vunpack.c.l.b16 %v16
  %v29 = vunpack.c.l.b16 %v17
  %v30 = vunpack.c.l.b16 %v18
  %v31 = vunpack.c.l.b16 %v19
  %v32 = vpack.c.b16 %v29, %v28
  %v33 = vpack.c.b16 %v31, %v30
  %vm36 = vcmask 261120
  %v38 = vsel %vm36, %v15, 0
  %40 = vmatpush.bf16.msra.mxu0 0
  %41 = vmatpush.bf16.msra.mxu0 0
  %42 = vmatpush.bf16.msra.mxu0 0
  %43 = vmatpush.bf16.msra.mxu0 0
  %44 = vmatpush.bf16.msra.mxu0 0
  %45 = vmatpush.bf16.msra.mxu0 0
  %46 = vmatpush.bf16.msra.mxu0 %v33
  %47 = vmatpush.bf16.msra.mxu0 %v32
  %48 = vmatmul.bf16.gmra.mxu0 %v38
  %v49 = vpop.f32.mrf.mxu0
  %v50 = vadd.f32 %v22, %v49
  %v51 = vpop.f32.mrf.mxu0
  %52 = vdwg.mxu0
  %v53 = vpack.c.bf16 %v50, %v50
  %54 = vst [vmem:[%s3] sm:$0xf] %v53
  // Predicated region
  $region14: #{entryflow_forward.26} parent=0 // pred_check
    _
  $region15: #{entryflow_forward.26} parent=0 // pred_check_branch
    %56 = sbr.rel (0) target = $region17
  $region16: #{entryflow_forward.26} parent=0 // pred_region
    _
  $region17: #{entryflow_forward.26} parent=0 // pred_fallthru
    _
  // Predicated region
  $region18: #{entryflow_forward.26} parent=0 // pred_check
    _
  $region19: #{entryflow_forward.26} parent=0 // pred_check_branch
    %58 = sbr.rel (0) target = $region21
  $region20: #{entryflow_forward.26} parent=0 // pred_region
    _
  $region21: #{entryflow_forward.26} parent=0 // pred_fallthru
    _

// kernel: entryflow_forward.27
$region0: #{entryflow_forward.27}
  #allocation0 [shape = 'u32[]', space=smem, size = 0x4, offset = 0x4, fixed_abs, tag = 'smem constant byte address 0x4 - core index']
  #allocation1 [shape = 'u32[72,128]{1,0:T(1,128)}', space=vmem, size = 0x9000, scoped, tag = 'internal scratch']
  %s0 = inlined_call_operand.vmem [shape: bf16[2,2,2,32], index: 0, kind: input, shape index: {}]
  %s1 = inlined_call_operand.vmem [shape: bf16[2,2,2,32], index: 1, kind: input, shape index: {}]
  %s2 = inlined_call_operand.vmem [shape: bf16[2,2,2,32], index: 2, kind: input, shape index: {}]
  %s3 = inlined_call_operand.vmem [shape: bf16[2,2,2,32], index: 3, kind: input, shape index: {}]
  %s4 = inlined_call_operand.vmem [shape: bf16[2,1,1,32], index: 4, kind: input, shape index: {}]
  %s5 = inlined_call_operand.vmem [shape: bf16[2,1,1,32], index: 5, kind: output, shape index: {}]
  %s6 = sld [smem:[#allocation0]]
  $region53: #{entryflow_forward.27} parent=0
    _
  %s8 = ssub.s32 1, %s6
  %s9 = scalar_select 0, %s8, %s6
  loop: start=0, step=1, limit=4
  $region2: #{entryflow_forward.27} parent=0 // loop_pre_header
    _
  $region3: #{entryflow_forward.27} parent=0 // loop_header
    %s11 = sphi 0, %s15
    %p12 = scmp.ge.s32.totalorder %s11, 4
    %s21 = sphi 0, %s23
    %s24 = sphi 0, %s21
    %s25 = sphi 0, %s24
    %s41 = sphi 0, %s25
    %s47 = sphi 0, %s49
    %s50 = sphi 0, %s47
    %s51 = sphi 0, %s50
    %s67 = sphi 0, %s51
    %s73 = sphi 0, %s75
    %s76 = sphi 0, %s73
    %s77 = sphi 0, %s76
    %s93 = sphi 0, %s77
    %s99 = sphi 0, %s101
    %s102 = sphi 0, %s99
    %s103 = sphi 0, %s102
    %s119 = sphi 0, %s103
    %s125 = sphi 0, %s127
    %s128 = sphi 0, %s125
    %s129 = sphi 0, %s128
    %s145 = sphi 0, %s129
    %s151 = sphi 0, %s153
    %s154 = sphi 0, %s151
    %s155 = sphi 0, %s154
    %s171 = sphi 0, %s155
  $region4: #{entryflow_forward.27} parent=0 // loop_header_branch
    %14 = sbr.rel (%p12) target = $region8
  $region5: #{entryflow_forward.27} parent=0 // loop_body
    %s16 = ssub.s32 %s11, 1
    %s17 = ssub.s32 %s11, 2
    %s18 = sadd.s32 %s11, 1
    %s19 = ssub.s32 %s11, %s18
    %p20 = scmp.eq.s32.totalorder %s19, 0
    %s22 = sadd.s32 %s21, 1
    %s23 = scalar_select %p20, %s21, %s22
    %p26 = pneg %p20
    %p27 = scmp.eq.s32.totalorder %s11, 1
    %p28 = por %p26, %p27
    %p29 = scmp.ne.s32.totalorder %s21, %s24
    %p30 = scmp.eq.s32.totalorder %s11, 0
    %p31 = por %p29, %p30
    %p32 = scmp.ne.s32.totalorder %s21, %s24
    %p33 = scmp.eq.s32.totalorder %s16, 1
    %p34 = por %p32, %p33
    %p35 = scmp.ne.s32.totalorder %s24, %s25
    %p36 = scmp.eq.s32.totalorder %s16, 0
    %p37 = por %p35, %p36
    %p38 = scmp.ne.s32.totalorder %s24, %s25
    %p39 = scmp.eq.s32.totalorder %s17, 1
    %p40 = por %p38, %p39
    %p42 = scmp.ne.s32.totalorder %s25, %s41
    %p43 = scmp.eq.s32.totalorder %s17, 0
    %p44 = por %p42, %p43
    %s45 = ssub.s32 %s11, %s18
    %p46 = scmp.eq.s32.totalorder %s45, 0
    %s48 = sadd.s32 %s47, 1
    %s49 = scalar_select %p46, %s47, %s48
    %p52 = pneg %p46
    %p53 = scmp.eq.s32.totalorder %s11, 1
    %p54 = por %p52, %p53
    %p55 = scmp.ne.s32.totalorder %s47, %s50
    %p56 = scmp.eq.s32.totalorder %s11, 0
    %p57 = por %p55, %p56
    %p58 = scmp.ne.s32.totalorder %s47, %s50
    %p59 = scmp.eq.s32.totalorder %s16, 1
    %p60 = por %p58, %p59
    %p61 = scmp.ne.s32.totalorder %s50, %s51
    %p62 = scmp.eq.s32.totalorder %s16, 0
    %p63 = por %p61, %p62
    %p64 = scmp.ne.s32.totalorder %s50, %s51
    %p65 = scmp.eq.s32.totalorder %s17, 1
    %p66 = por %p64, %p65
    %p68 = scmp.ne.s32.totalorder %s51, %s67
    %p69 = scmp.eq.s32.totalorder %s17, 0
    %p70 = por %p68, %p69
    %s71 = ssub.s32 %s11, %s18
    %p72 = scmp.eq.s32.totalorder %s71, 0
    %s74 = sadd.s32 %s73, 1
    %s75 = scalar_select %p72, %s73, %s74
    %p78 = pneg %p72
    %p79 = scmp.eq.s32.totalorder %s11, 1
    %p80 = por %p78, %p79
    %p81 = scmp.ne.s32.totalorder %s73, %s76
    %p82 = scmp.eq.s32.totalorder %s11, 0
    %p83 = por %p81, %p82
    %p84 = scmp.ne.s32.totalorder %s73, %s76
    %p85 = scmp.eq.s32.totalorder %s16, 1
    %p86 = por %p84, %p85
    %p87 = scmp.ne.s32.totalorder %s76, %s77
    %p88 = scmp.eq.s32.totalorder %s16, 0
    %p89 = por %p87, %p88
    %p90 = scmp.ne.s32.totalorder %s76, %s77
    %p91 = scmp.eq.s32.totalorder %s17, 1
    %p92 = por %p90, %p91
    %p94 = scmp.ne.s32.totalorder %s77, %s93
    %p95 = scmp.eq.s32.totalorder %s17, 0
    %p96 = por %p94, %p95
    %s97 = ssub.s32 %s11, %s18
    %p98 = scmp.eq.s32.totalorder %s97, 0
    %s100 = sadd.s32 %s99, 1
    %s101 = scalar_select %p98, %s99, %s100
    %p104 = pneg %p98
    %p105 = scmp.eq.s32.totalorder %s11, 1
    %p106 = por %p104, %p105
    %p107 = scmp.ne.s32.totalorder %s99, %s102
    %p108 = scmp.eq.s32.totalorder %s11, 0
    %p109 = por %p107, %p108
    %p110 = scmp.ne.s32.totalorder %s99, %s102
    %p111 = scmp.eq.s32.totalorder %s16, 1
    %p112 = por %p110, %p111
    %p113 = scmp.ne.s32.totalorder %s102, %s103
    %p114 = scmp.eq.s32.totalorder %s16, 0
    %p115 = por %p113, %p114
    %p116 = scmp.ne.s32.totalorder %s102, %s103
    %p117 = scmp.eq.s32.totalorder %s17, 1
    %p118 = por %p116, %p117
    %p120 = scmp.ne.s32.totalorder %s103, %s119
    %p121 = scmp.eq.s32.totalorder %s17, 0
    %p122 = por %p120, %p121
    %s123 = ssub.s32 %s11, %s18
    %p124 = scmp.eq.s32.totalorder %s123, 0
    %s126 = sadd.s32 %s125, 1
    %s127 = scalar_select %p124, %s125, %s126
    %p130 = pneg %p124
    %p131 = scmp.eq.s32.totalorder %s11, 1
    %p132 = por %p130, %p131
    %p133 = scmp.ne.s32.totalorder %s125, %s128
    %p134 = scmp.eq.s32.totalorder %s11, 0
    %p135 = por %p133, %p134
    %p136 = scmp.ne.s32.totalorder %s125, %s128
    %p137 = scmp.eq.s32.totalorder %s16, 1
    %p138 = por %p136, %p137
    %p139 = scmp.ne.s32.totalorder %s128, %s129
    %p140 = scmp.eq.s32.totalorder %s16, 0
    %p141 = por %p139, %p140
    %p142 = scmp.ne.s32.totalorder %s128, %s129
    %p143 = scmp.eq.s32.totalorder %s17, 1
    %p144 = por %p142, %p143
    %p146 = scmp.ne.s32.totalorder %s129, %s145
    %p147 = scmp.eq.s32.totalorder %s17, 0
    %p148 = por %p146, %p147
    %s149 = ssub.s32 %s11, %s18
    %p150 = scmp.eq.s32.totalorder %s149, 0
    %s152 = sadd.s32 %s151, 1
    %s153 = scalar_select %p150, %s151, %s152
    %p156 = pneg %p150
    %p157 = scmp.eq.s32.totalorder %s11, 1
    %p158 = por %p156, %p157
    %p159 = scmp.ne.s32.totalorder %s151, %s154
    %p160 = scmp.eq.s32.totalorder %s11, 0
    %p161 = por %p159, %p160
    %p162 = scmp.ne.s32.totalorder %s151, %s154
    %p163 = scmp.eq.s32.totalorder %s16, 1
    %p164 = por %p162, %p163
    %p165 = scmp.ne.s32.totalorder %s154, %s155
    %p166 = scmp.eq.s32.totalorder %s16, 0
    %p167 = por %p165, %p166
    %p168 = scmp.ne.s32.totalorder %s154, %s155
    %p169 = scmp.eq.s32.totalorder %s17, 1
    %p170 = por %p168, %p169
    %p172 = scmp.ne.s32.totalorder %s155, %s171
    %p173 = scmp.eq.s32.totalorder %s17, 0
    %p174 = por %p172, %p173
    %p175 = scmp.le.s32.totalorder 1, %s11
    %p176 = scmp.lt.s32.totalorder %s11, 3
    %p177 = pnand %p175, %p176
    %p178 = pneg %p177
    // Predicated region
    $region9: #{entryflow_forward.27} parent=5 // pred_check
      _
    $region10: #{entryflow_forward.27} parent=5 // pred_check_branch
      %180 = sbr.rel (%p177) target = $region12
    $region11: #{entryflow_forward.27} parent=5 // pred_region
      %s181 = ssub.s32 %s11, 1
    $region12: #{entryflow_forward.27} parent=5 // pred_fallthru
      _
    %p182 = scmp.lt.s32.totalorder %s11, 2
    // Predicated region
    $region13: #{entryflow_forward.27} parent=5 // pred_check
      %p183 = pneg %p182
    $region14: #{entryflow_forward.27} parent=5 // pred_check_branch
      %185 = sbr.rel (%p183) target = $region16
    $region15: #{entryflow_forward.27} parent=5 // pred_region
      // Predicated region
      $region17: #{entryflow_forward.27} parent=15 // pred_check
        %p186 = pneg %p31
      $region18: #{entryflow_forward.27} parent=15 // pred_check_branch
        %188 = sbr.rel (%p186) target = $region20
      $region19: #{entryflow_forward.27} parent=15 // pred_region
        %p189 = scmp.lt.s32.totalorder %s11, 1
        %s190 = scalar_select %p189, %s11, 1
        %s191 = smul.addr %s190, 2
        %s192 = scalar_lea.vmem %s0, %s191
      $region20: #{entryflow_forward.27} parent=15 // pred_fallthru
        _
      // Predicated region
      $region21: #{entryflow_forward.27} parent=15 // pred_check
        %p193 = pneg %p57
      $region22: #{entryflow_forward.27} parent=15 // pred_check_branch
        %195 = sbr.rel (%p193) target = $region24
      $region23: #{entryflow_forward.27} parent=15 // pred_region
        %p196 = scmp.lt.s32.totalorder %s11, 1
        %s197 = scalar_select %p196, %s11, 1
        %s198 = smul.addr %s197, 2
        %s199 = scalar_lea.vmem %s1, %s198
      $region24: #{entryflow_forward.27} parent=15 // pred_fallthru
        _
      // Predicated region
      $region25: #{entryflow_forward.27} parent=15 // pred_check
        %p200 = pneg %p83
      $region26: #{entryflow_forward.27} parent=15 // pred_check_branch
        %202 = sbr.rel (%p200) target = $region28
      $region27: #{entryflow_forward.27} parent=15 // pred_region
        %p203 = scmp.lt.s32.totalorder %s11, 1
        %s204 = scalar_select %p203, %s11, 1
        %s205 = smul.addr %s204, 2
        %s206 = scalar_lea.vmem %s2, %s205
      $region28: #{entryflow_forward.27} parent=15 // pred_fallthru
        _
      // Predicated region
      $region29: #{entryflow_forward.27} parent=15 // pred_check
        %p207 = pneg %p109
      $region30: #{entryflow_forward.27} parent=15 // pred_check_branch
        %209 = sbr.rel (%p207) target = $region32
      $region31: #{entryflow_forward.27} parent=15 // pred_region
        %p210 = scmp.lt.s32.totalorder %s11, 1
        %s211 = scalar_select %p210, %s11, 1
        %s212 = smul.addr %s211, 2
        %s213 = scalar_lea.vmem %s3, %s212
      $region32: #{entryflow_forward.27} parent=15 // pred_fallthru
        _
      // Predicated region
      $region33: #{entryflow_forward.27} parent=15 // pred_check
        %p214 = pneg %p135
      $region34: #{entryflow_forward.27} parent=15 // pred_check_branch
        %216 = sbr.rel (%p214) target = $region36
      $region35: #{entryflow_forward.27} parent=15 // pred_region
        %p217 = scmp.lt.s32.totalorder %s11, 1
        %s218 = scalar_select %p217, %s11, 1
        %s219 = scalar_lea.vmem %s4, %s218
      $region36: #{entryflow_forward.27} parent=15 // pred_fallthru
        _
    $region16: #{entryflow_forward.27} parent=5 // pred_fallthru
      _
    %p220 = scmp.le.s32.totalorder 1, %s11
    %p221 = scmp.lt.s32.totalorder %s11, 3
    %p222 = pnand %p220, %p221
    %p223 = pneg %p222
    // Predicated region
    $region37: #{entryflow_forward.27} parent=5 // pred_check
      _
    $region38: #{entryflow_forward.27} parent=5 // pred_check_branch
      %225 = sbr.rel (%p222) target = $region40
    $region39: #{entryflow_forward.27} parent=5 // pred_region
      %s226 = ssub.s32 %s11, 1
      %p227 = scmp.lt.s32.totalorder %s16, 1
      %s228 = scalar_select %p227, %s16, 1
      %s229 = smul.addr %s228, 2
      %s230 = scalar_lea.vmem %s0, %s229
      %p231 = pneg %p37
      %p232 = pneg %p34
      %p233 = scmp.lt.s32.totalorder %s16, 1
      %s234 = scalar_select %p233, %s16, 1
      %s235 = smul.addr %s234, 2
      %s236 = scalar_lea.vmem %s1, %s235
      %p237 = pneg %p63
      %p238 = pneg %p60
      %p239 = scmp.lt.s32.totalorder %s16, 1
      %s240 = scalar_select %p239, %s16, 1
      %s241 = smul.addr %s240, 2
      %s242 = scalar_lea.vmem %s2, %s241
      %p243 = pneg %p89
      %p244 = pneg %p86
      %p245 = scmp.lt.s32.totalorder %s16, 1
      %s246 = scalar_select %p245, %s16, 1
      %s247 = smul.addr %s246, 2
      %s248 = scalar_lea.vmem %s3, %s247
      %p249 = pneg %p115
      %p250 = pneg %p112
      %p251 = scmp.lt.s32.totalorder %s16, 1
      %s252 = scalar_select %p251, %s16, 1
      %s253 = scalar_lea.vmem %s4, %s252
      %p254 = pneg %p141
      %p255 = pneg %p138
      %p256 = pneg %p167
      %p257 = pneg %p164
      %p258 = scmp.lt.s32.totalorder %s16, 1
      %s259 = scalar_select %p258, %s16, 1
      %s260 = scalar_lea.vmem %s5, %s259
      %p261 = scmp.lt.s32.totalorder %s16, 1
      %s262 = scalar_select %p261, %s16, 1
      %s263 = smul.addr %s262, 2
      %s264 = scalar_lea.vmem %s0, %s263
      %p265 = scmp.lt.s32.totalorder %s16, 1
      %s266 = scalar_select %p265, %s16, 1
      %s267 = smul.addr %s266, 2
      %s268 = scalar_lea.vmem %s1, %s267
      %p269 = scmp.lt.s32.totalorder %s16, 1
      %s270 = scalar_select %p269, %s16, 1
      %s271 = smul.addr %s270, 2
      %s272 = scalar_lea.vmem %s2, %s271
      %p273 = scmp.lt.s32.totalorder %s16, 1
      %s274 = scalar_select %p273, %s16, 1
      %s275 = smul.addr %s274, 2
      %s276 = scalar_lea.vmem %s3, %s275
      %p277 = scmp.lt.s32.totalorder %s16, 1
      %s278 = scalar_select %p277, %s16, 1
      %s279 = scalar_lea.vmem %s4, %s278
      %p280 = scmp.lt.s32.totalorder %s16, 1
      %s281 = scalar_select %p280, %s16, 1
      %s282 = scalar_lea.vmem %s5, %s281
      %v283 = vld [vmem:[%s264] sm:$0x1]
      %v284 = vld [vmem:[%s264 + $0x1] sm:$0x1]
      %v285 = vld [vmem:[%s268] sm:$0x1]
      %v286 = vld [vmem:[%s268 + $0x1] sm:$0x1]
      %v287 = vld [vmem:[%s272] sm:$0x1]
      %v288 = vld [vmem:[%s276] sm:$0x1]
      %v289 = vunpack.c.l.bf16 %v283
      %v290 = vunpack.c.l.bf16 %v285
      %v291 = vmax.f32 %v289, %v290
      %v293 = vrot.slane %v289, 7
      %v294 = vrot.slane %v293, 2
      %v296 = vmax.f32 %v291, %v294
      %v297 = vunpack.c.l.bf16 %v287
      %v298 = vmax.f32 %v296, %v297
      %v299 = vunpack.c.l.bf16 %v288
      %v300 = vmax.f32 %v298, %v299
      %v302 = vrot.slane %v297, 7
      %v303 = vrot.slane %v302, 2
      %v305 = vmax.f32 %v300, %v303
      %v306 = vunpack.c.l.bf16 %v284
      %v307 = vmax.f32 %v305, %v306
      %v308 = vunpack.c.l.bf16 %v286
      %v309 = vmax.f32 %v307, %v308
      %v311 = vrot.slane %v306, 7
      %v312 = vrot.slane %v311, 2
      %v314 = vmax.f32 %v309, %v312
      %v315 = vld [vmem:[%s279] sm:$0x1]
      %v316 = vunpack.c.l.bf16 %v315
      %v317 = vadd.f32 %v314, %v316
      %v318 = vpack.c.bf16 %v317, %v317
      %vm319 = vcmask 253952
      %vm320 = vsmask.f32 256
      %vm321 = vmand %vm319, %vm320
      %v322 = vld [vmem:[%s282] sm:$0x1]
      %v323 = vsel %vm321, %v318, %v322
      %324 = vst [vmem:[%s282] sm:$0x1] %v323
      %p325 = scmp.lt.s32.totalorder %s16, 1
      %s326 = scalar_select %p325, %s16, 1
      %s327 = scalar_lea.vmem %s5, %s326
      // Predicated region
      $region41: #{entryflow_forward.27} parent=39 // pred_check
        %p328 = pneg %p164
      $region42: #{entryflow_forward.27} parent=39 // pred_check_branch
        %330 = sbr.rel (%p328) target = $region44
      $region43: #{entryflow_forward.27} parent=39 // pred_region
        _
      $region44: #{entryflow_forward.27} parent=39 // pred_fallthru
        _
    $region40: #{entryflow_forward.27} parent=5 // pred_fallthru
      _
    %p331 = scmp.le.s32.totalorder 2, %s11
    // Predicated region
    $region45: #{entryflow_forward.27} parent=5 // pred_check
      %p332 = pneg %p331
    $region46: #{entryflow_forward.27} parent=5 // pred_check_branch
      %334 = sbr.rel (%p332) target = $region48
    $region47: #{entryflow_forward.27} parent=5 // pred_region
      %s335 = ssub.s32 %s11, 2
      // Predicated region
      $region49: #{entryflow_forward.27} parent=47 // pred_check
        %p336 = pneg %p170
      $region50: #{entryflow_forward.27} parent=47 // pred_check_branch
        %338 = sbr.rel (%p336) target = $region52
      $region51: #{entryflow_forward.27} parent=47 // pred_region
        %p339 = scmp.lt.s32.totalorder %s17, 1
        %s340 = scalar_select %p339, %s17, 1
        %s341 = scalar_lea.vmem %s5, %s340
      $region52: #{entryflow_forward.27} parent=47 // pred_fallthru
        _
    $region48: #{entryflow_forward.27} parent=5 // pred_fallthru
      _
  $region6: #{entryflow_forward.27} parent=0 // loop_footer
    %s15 = sadd.s32 1, %s11
  $region7: #{entryflow_forward.27} parent=0 // loop_footer_branch
    %10 = sbr.rel target = $region3
  $region8: #{entryflow_forward.27} parent=0 // loop_exit
    _

</llo_original>
